<compile_context>
chip_gen: v6e
topology: v6e:2x2x1
jax: 0.10.0
libtpu: 0.0.40
codegen_flags: <defaults>
</compile_context>

<pallas_src>
import functools

import jax
import jax.numpy as jnp
from jax.experimental import pallas as pl
from jax.experimental.pallas import tpu as pltpu


CLS_PAD = 128          # lane-dense padded class width for the final classifier
_BN_EPS = 1e-5


# ----------------------------------------------------------------------------
# Pallas kernel: whole PointNetDenseCls forward for one batch element.
# ----------------------------------------------------------------------------
def _pointnet_kernel(
    x_ref,                                             # (N, 3) input points
    # TNet(k=3) params (BN folded), weights bf16, biases f32 (1, C)
    tW1, tb1, tW2, tb2, tW3, tb3,                      # pointwise convs 3->64->128->1024
    tF1, tfb1, tF2, tfb2, tF3, tfb3,                   # fc 1024->512->256->9 (bias = eye(3) flat)
    # PointNetfeat params (BN folded)
    C1t, cb1, C2, cb2, C3, cb3,                        # C1 tiled 3x rows (9,64); 64->128->1024
    # Dense segmentation head params (BN folded)
    D1g, D1p, db1, D2, db2, D3, db3, D4, db4,          # D1 split 1024/64 -> 512; ... -> CLS_PAD
    # outputs
    out_ref,                                           # (N, CLS_PAD) log-probabilities (padded)
    trans_ref,                                         # (1, 9) input transform, row-major
):
    f32 = jnp.float32
    bf16 = jnp.bfloat16

    def lin(h, w_ref, b_ref):
        return jnp.dot(h.astype(bf16), w_ref[...],
                       preferred_element_type=f32) + b_ref[...]

    def lin_relu(h, w_ref, b_ref):
        return jnp.maximum(lin(h, w_ref, b_ref), 0.0)

    x = x_ref[...].astype(f32)                         # (N, 3)

    # ---- TNet(k=3): predict the 3x3 input transform -------------------------
    h = lin_relu(x, tW1, tb1)                          # (N, 64)
    h = lin_relu(h, tW2, tb2)                          # (N, 128)
    h = lin_relu(h, tW3, tb3)                          # (N, 1024)
    g = jnp.max(h, axis=0, keepdims=True)              # (1, 1024)  AdaptiveMaxPool1d(1)
    g = lin_relu(g, tF1, tfb1)                         # (1, 512)
    g = lin_relu(g, tF2, tfb2)                         # (1, 256)
    t9 = lin(g, tF3, tfb3)                             # (1, 9) = flattened 3x3 (+ eye bias)
    trans_ref[...] = t9.astype(trans_ref.dtype)        # lane-dense store; glue reshapes (3,3)

    # ---- fuse the transform into conv1: W1' = trans(3,3) @ C1(3,64) ---------
    # The (3,3) is never materialized: select each row's 3-wide window of t9
    # with an iota mask and contract against C1 tiled 3x along rows
    # (C1t[m, :] == C1[m % 3, :]), giving W1'[i,c] = sum_j trans[i,j] * C1[j,c].
    row = jax.lax.broadcasted_iota(jnp.int32, (3, 9), 0)
    col = jax.lax.broadcasted_iota(jnp.int32, (3, 9), 1)
    sel = (col >= 3 * row) & (col < 3 * row + 3)
    tsel = jnp.where(sel, jnp.broadcast_to(t9, (3, 9)), 0.0)          # (3, 9)
    W1p = jnp.dot(tsel.astype(bf16), C1t[...],
                  preferred_element_type=f32)                         # (3, 64)

    # ---- PointNetfeat (global_feat=False) ------------------------------------
    pointfeat = jnp.maximum(
        jnp.dot(x.astype(bf16), W1p.astype(bf16),
                preferred_element_type=f32) + cb1[...], 0.0)          # (N, 64)
    h = lin_relu(pointfeat, C2, cb2)                   # (N, 128)
    h = lin(h, C3, cb3)                                # (N, 1024)  conv3: BN, no ReLU
    gfeat = jnp.max(h, axis=0, keepdims=True)          # (1, 1024)  global max-pool

    # ---- dense head; D1 decomposed (global rows 0:1024, point rows 1024:1088)
    y_glob = jnp.dot(gfeat.astype(bf16), D1g[...],
                     preferred_element_type=f32) + db1[...]           # (1, 512)
    y_pt = jnp.dot(pointfeat.astype(bf16), D1p[...],
                   preferred_element_type=f32)                        # (N, 512)
    y = jnp.maximum(y_pt + y_glob, 0.0)                # (N, 512)  == relu(cat @ D1 + b)
    y = lin_relu(y, D2, db2)                           # (N, 256)
    y = lin_relu(y, D3, db3)                           # (N, 128)
    logits = lin(y, D4, db4)                           # (N, CLS_PAD), padded lanes biased -1e9

    # ---- log_softmax over the (lane-dense) class dim -------------------------
    m = jnp.max(logits, axis=-1, keepdims=True)
    z = logits - m
    lse = jnp.log(jnp.sum(jnp.exp(z), axis=-1, keepdims=True))
    out_ref[...] = (z - lse).astype(out_ref.dtype)


# ----------------------------------------------------------------------------
# Parameter construction (deterministic, in-script) + BN folding (glue).
# ----------------------------------------------------------------------------
def _linear_init(key, fan_in, fan_out):
    kw, kb = jax.random.split(key)
    bound = 1.0 / (fan_in ** 0.5)
    w = jax.random.uniform(kw, (fan_in, fan_out), jnp.float32, -bound, bound)
    b = jax.random.uniform(kb, (fan_out,), jnp.float32, -bound, bound)
    return w, b


def _bn_init(key, c):
    k1, k2, k3, k4 = jax.random.split(key, 4)
    gamma = jax.random.uniform(k1, (c,), jnp.float32, 0.5, 1.5)
    beta = 0.1 * jax.random.normal(k2, (c,), jnp.float32)
    mean = 0.1 * jax.random.normal(k3, (c,), jnp.float32)
    var = jax.random.uniform(k4, (c,), jnp.float32, 0.5, 1.5)
    return gamma, beta, mean, var


def _fold_bn(w, b, bn):
    gamma, beta, mean, var = bn
    scale = gamma / jnp.sqrt(var + _BN_EPS)
    w_f = w * scale[None, :]
    b_f = (b - mean) * scale + beta
    return w_f, b_f[None, :]                           # bias kept as (1, C) for broadcast


def init_params(key, k=2):
    keys = iter(jax.random.split(key, 64))
    bf = lambda w: w.astype(jnp.bfloat16)              # weights in bf16, biases stay f32

    def conv_bn(cin, cout):
        w, b = _linear_init(next(keys), cin, cout)
        return _fold_bn(w, b, _bn_init(next(keys), cout))

    # --- TNet(k=3) ---
    tW1, tb1 = conv_bn(3, 64)
    tW2, tb2 = conv_bn(64, 128)
    tW3, tb3 = conv_bn(128, 1024)
    tF1, tfb1 = conv_bn(1024, 512)
    tF2, tfb2 = conv_bn(512, 256)
    tF3, _ = _linear_init(next(keys), 256, 9)          # fc3 weight (256, 9)
    tfb3 = jnp.eye(3, dtype=jnp.float32).reshape(1, 9)  # fc3.bias = eye(3).view(-1)

    # --- PointNetfeat ---
    C1, cb1 = conv_bn(3, 64)
    C1t = jnp.tile(C1, (3, 1))                         # (9, 64): row m == C1[m % 3]
    C2, cb2 = conv_bn(64, 128)
    C3, cb3 = conv_bn(128, 1024)

    # --- Dense head ---
    D1, db1 = conv_bn(1088, 512)
    D1g, D1p = D1[:1024], D1[1024:]                    # global / point split (matches concat order)
    D2, db2 = conv_bn(512, 256)
    D3, db3 = conv_bn(256, 128)
    D4, d4b = _linear_init(next(keys), 128, k)         # conv4: no BN / no ReLU
    assert k <= CLS_PAD
    D4p = jnp.zeros((128, CLS_PAD), jnp.float32).at[:, :k].set(D4)
    db4p = jnp.full((1, CLS_PAD), -1e9, jnp.float32).at[0, :k].set(d4b)

    return (bf(tW1), tb1, bf(tW2), tb2, bf(tW3), tb3,
            bf(tF1), tfb1, bf(tF2), tfb2, bf(tF3), tfb3,
            bf(C1t), cb1, bf(C2), cb2, bf(C3), cb3,
            bf(D1g), bf(D1p), db1, bf(D2), db2, bf(D3), db3,
            bf(D4p), db4p)


# ----------------------------------------------------------------------------
# Wrapper: one grid step per batch element, weights replicated to every step.
# ----------------------------------------------------------------------------
@functools.partial(jax.jit, static_argnames=("k",))
def pointnet_dense_cls(x_bcn, params, k=2):
    B, Cin, N = x_bcn.shape
    assert Cin == 3, "PointNetDenseCls expects (B, 3, n_pts) inputs"
    x = jnp.transpose(x_bcn, (0, 2, 1)).astype(jnp.float32)   # (B, N, 3) point-major

    def weight_spec(arr):
        nd = arr.ndim
        # Grid-invariant: constant index_map + single-buffered VMEM allocation.
        return pl.BlockSpec(arr.shape, lambda b, _nd=nd: (0,) * _nd,
                            pipeline_mode=pl.Buffered(1))

    in_specs = [pl.BlockSpec((None, N, Cin), lambda b: (b, 0, 0))]
    in_specs += [weight_spec(p) for p in params]

    out_specs = (pl.BlockSpec((None, N, CLS_PAD), lambda b: (b, 0, 0)),
                 pl.BlockSpec((None, 1, 9), lambda b: (b, 0, 0)))
    out_shape = (jax.ShapeDtypeStruct((B, N, CLS_PAD), jnp.float32),
                 jax.ShapeDtypeStruct((B, 1, 9), jnp.float32))

    logp_pad, t9 = pl.pallas_call(
        _pointnet_kernel,
        grid=(B,),                      # "parallel" batch axis shards across TCs on v7x
        in_specs=in_specs,
        out_specs=out_specs,
        out_shape=out_shape,
        compiler_params=pltpu.CompilerParams(
            dimension_semantics=("parallel",),
            vmem_limit_bytes=32 * 1024 * 1024),   # v7x-legal (64 MiB physical); need << 32 MiB
    )(x, *params)

    logp = logp_pad[:, :, :k]           # drop padded classes (lane-dense store inside kernel)
    trans = t9.reshape(B, 3, 3)         # row-major, matches .view(batch, 3, 3)
    trans_feat = None                   # feature_transform=False in the reference module
    return logp, trans, trans_feat


if __name__ == "__main__":
    B, N, K = 2, 128, 2                                 # small shapes: batch=2, 128 points, k=2
    key = jax.random.PRNGKey(0)
    kx, kp = jax.random.split(key)
    x = jax.random.normal(kx, (B, 3, N), jnp.float32)   # PyTorch layout (B, C=3, n_pts)
    params = init_params(kp, k=K)

    logp, trans, trans_feat = pointnet_dense_cls(x, params, k=K)
    jax.block_until_ready((logp, trans))

    assert logp.shape == (B, N, K)
    assert trans.shape == (B, 3, 3)
    assert trans_feat is None
    # log_softmax sanity: rows sum to ~1 in prob space (padded lanes contribute 0)
    assert bool(jnp.allclose(jnp.sum(jnp.exp(logp), axis=-1), 1.0, atol=1e-4))
    print("KERNEL_OK")
</pallas_src>

<mosaic_0001>
module attributes {stable_mosaic.version = 11 : i64} {
  func.func @_pointnet_kernel(%arg0: i32, %arg1: memref<1x128x3xf32, #tpu.memory_space<vmem>>, %arg2: memref<3x64xbf16, #tpu.memory_space<vmem>>, %arg3: memref<1x64xf32, #tpu.memory_space<vmem>>, %arg4: memref<64x128xbf16, #tpu.memory_space<vmem>>, %arg5: memref<1x128xf32, #tpu.memory_space<vmem>>, %arg6: memref<128x1024xbf16, #tpu.memory_space<vmem>>, %arg7: memref<1x1024xf32, #tpu.memory_space<vmem>>, %arg8: memref<1024x512xbf16, #tpu.memory_space<vmem>>, %arg9: memref<1x512xf32, #tpu.memory_space<vmem>>, %arg10: memref<512x256xbf16, #tpu.memory_space<vmem>>, %arg11: memref<1x256xf32, #tpu.memory_space<vmem>>, %arg12: memref<256x9xbf16, #tpu.memory_space<vmem>>, %arg13: memref<1x9xf32, #tpu.memory_space<vmem>>, %arg14: memref<9x64xbf16, #tpu.memory_space<vmem>>, %arg15: memref<1x64xf32, #tpu.memory_space<vmem>>, %arg16: memref<64x128xbf16, #tpu.memory_space<vmem>>, %arg17: memref<1x128xf32, #tpu.memory_space<vmem>>, %arg18: memref<128x1024xbf16, #tpu.memory_space<vmem>>, %arg19: memref<1x1024xf32, #tpu.memory_space<vmem>>, %arg20: memref<1024x512xbf16, #tpu.memory_space<vmem>>, %arg21: memref<64x512xbf16, #tpu.memory_space<vmem>>, %arg22: memref<1x512xf32, #tpu.memory_space<vmem>>, %arg23: memref<512x256xbf16, #tpu.memory_space<vmem>>, %arg24: memref<1x256xf32, #tpu.memory_space<vmem>>, %arg25: memref<256x128xbf16, #tpu.memory_space<vmem>>, %arg26: memref<1x128xf32, #tpu.memory_space<vmem>>, %arg27: memref<128x128xbf16, #tpu.memory_space<vmem>>, %arg28: memref<1x128xf32, #tpu.memory_space<vmem>>, %arg29: memref<1x128x128xf32, #tpu.memory_space<vmem>>, %arg30: memref<1x1x9xf32, #tpu.memory_space<vmem>>) attributes {dimension_semantics = [#tpu.dimension_semantics<parallel>], iteration_bounds = array<i64: 2>, scalar_prefetch = 0 : i64, scratch_operands = 0 : i64, tpu.core_type = #tpu.core_type<tc>, window_params = [{transform_indices = @transform_0, window_bounds = array<i64: 1, 128, 3>}, {pipeline_mode = #tpu.pipeline_mode<synchronous>, transform_indices = @transform_1, window_bounds = array<i64: 3, 64>}, {pipeline_mode = #tpu.pipeline_mode<synchronous>, transform_indices = @transform_2, window_bounds = array<i64: 1, 64>}, {pipeline_mode = #tpu.pipeline_mode<synchronous>, transform_indices = @transform_3, window_bounds = array<i64: 64, 128>}, {pipeline_mode = #tpu.pipeline_mode<synchronous>, transform_indices = @transform_4, window_bounds = array<i64: 1, 128>}, {pipeline_mode = #tpu.pipeline_mode<synchronous>, transform_indices = @transform_5, window_bounds = array<i64: 128, 1024>}, {pipeline_mode = #tpu.pipeline_mode<synchronous>, transform_indices = @transform_6, window_bounds = array<i64: 1, 1024>}, {pipeline_mode = #tpu.pipeline_mode<synchronous>, transform_indices = @transform_7, window_bounds = array<i64: 1024, 512>}, {pipeline_mode = #tpu.pipeline_mode<synchronous>, transform_indices = @transform_8, window_bounds = array<i64: 1, 512>}, {pipeline_mode = #tpu.pipeline_mode<synchronous>, transform_indices = @transform_9, window_bounds = array<i64: 512, 256>}, {pipeline_mode = #tpu.pipeline_mode<synchronous>, transform_indices = @transform_10, window_bounds = array<i64: 1, 256>}, {pipeline_mode = #tpu.pipeline_mode<synchronous>, transform_indices = @transform_11, window_bounds = array<i64: 256, 9>}, {pipeline_mode = #tpu.pipeline_mode<synchronous>, transform_indices = @transform_12, window_bounds = array<i64: 1, 9>}, {pipeline_mode = #tpu.pipeline_mode<synchronous>, transform_indices = @transform_13, window_bounds = array<i64: 9, 64>}, {pipeline_mode = #tpu.pipeline_mode<synchronous>, transform_indices = @transform_14, window_bounds = array<i64: 1, 64>}, {pipeline_mode = #tpu.pipeline_mode<synchronous>, transform_indices = @transform_15, window_bounds = array<i64: 64, 128>}, {pipeline_mode = #tpu.pipeline_mode<synchronous>, transform_indices = @transform_16, window_bounds = array<i64: 1, 128>}, {pipeline_mode = #tpu.pipeline_mode<synchronous>, transform_indices = @transform_17, window_bounds = array<i64: 128, 1024>}, {pipeline_mode = #tpu.pipeline_mode<synchronous>, transform_indices = @transform_18, window_bounds = array<i64: 1, 1024>}, {pipeline_mode = #tpu.pipeline_mode<synchronous>, transform_indices = @transform_19, window_bounds = array<i64: 1024, 512>}, {pipeline_mode = #tpu.pipeline_mode<synchronous>, transform_indices = @transform_20, window_bounds = array<i64: 64, 512>}, {pipeline_mode = #tpu.pipeline_mode<synchronous>, transform_indices = @transform_21, window_bounds = array<i64: 1, 512>}, {pipeline_mode = #tpu.pipeline_mode<synchronous>, transform_indices = @transform_22, window_bounds = array<i64: 512, 256>}, {pipeline_mode = #tpu.pipeline_mode<synchronous>, transform_indices = @transform_23, window_bounds = array<i64: 1, 256>}, {pipeline_mode = #tpu.pipeline_mode<synchronous>, transform_indices = @transform_24, window_bounds = array<i64: 256, 128>}, {pipeline_mode = #tpu.pipeline_mode<synchronous>, transform_indices = @transform_25, window_bounds = array<i64: 1, 128>}, {pipeline_mode = #tpu.pipeline_mode<synchronous>, transform_indices = @transform_26, window_bounds = array<i64: 128, 128>}, {pipeline_mode = #tpu.pipeline_mode<synchronous>, transform_indices = @transform_27, window_bounds = array<i64: 1, 128>}, {transform_indices = @transform_28, window_bounds = array<i64: 1, 128, 128>}, {transform_indices = @transform_29, window_bounds = array<i64: 1, 1, 9>}]} {
    %c0 = arith.constant 0 : index
    %c0_0 = arith.constant 0 : index
    %c0_1 = arith.constant 0 : index
    %0 = vector.load %arg1[%c0, %c0_0, %c0_1] : memref<1x128x3xf32, #tpu.memory_space<vmem>>, vector<1x128x3xf32>
    %1 = vector.shape_cast %0 : vector<1x128x3xf32> to vector<128x3xf32>
    %2 = arith.truncf %1 : vector<128x3xf32> to vector<128x3xbf16>
    %c0_2 = arith.constant 0 : index
    %c0_3 = arith.constant 0 : index
    %3 = vector.load %arg2[%c0_2, %c0_3] : memref<3x64xbf16, #tpu.memory_space<vmem>>, vector<3x64xbf16>
    %cst = arith.constant dense<0.000000e+00> : vector<128x64xf32>
    %4 = tpu.matmul %2, %3, %cst {dimension_numbers = #tpu.dot_dimension_numbers<[1], [0], [0], [1], [0, 0, 1, 1], [], []>} : vector<128x3xbf16>, vector<3x64xbf16>, vector<128x64xf32> -> vector<128x64xf32>
    %c0_4 = arith.constant 0 : index
    %c0_5 = arith.constant 0 : index
    %5 = vector.load %arg3[%c0_4, %c0_5] : memref<1x64xf32, #tpu.memory_space<vmem>>, vector<1x64xf32>
    %6 = vector.broadcast %5 : vector<1x64xf32> to vector<128x64xf32>
    %7 = arith.addf %4, %6 : vector<128x64xf32>
    %cst_6 = arith.constant 0.000000e+00 : f32
    %8 = vector.broadcast %cst_6 : f32 to vector<128x64xf32>
    %9 = arith.maximumf %7, %8 : vector<128x64xf32>
    %10 = arith.truncf %9 : vector<128x64xf32> to vector<128x64xbf16>
    %c0_7 = arith.constant 0 : index
    %c0_8 = arith.constant 0 : index
    %11 = vector.load %arg4[%c0_7, %c0_8] : memref<64x128xbf16, #tpu.memory_space<vmem>>, vector<64x128xbf16>
    %cst_9 = arith.constant dense<0.000000e+00> : vector<128x128xf32>
    %12 = tpu.matmul %10, %11, %cst_9 {dimension_numbers = #tpu.dot_dimension_numbers<[1], [0], [0], [1], [0, 0, 1, 1], [], []>} : vector<128x64xbf16>, vector<64x128xbf16>, vector<128x128xf32> -> vector<128x128xf32>
    %c0_10 = arith.constant 0 : index
    %c0_11 = arith.constant 0 : index
    %13 = vector.load %arg5[%c0_10, %c0_11] : memref<1x128xf32, #tpu.memory_space<vmem>>, vector<1x128xf32>
    %14 = vector.broadcast %13 : vector<1x128xf32> to vector<128x128xf32>
    %15 = arith.addf %12, %14 : vector<128x128xf32>
    %cst_12 = arith.constant 0.000000e+00 : f32
    %16 = vector.broadcast %cst_12 : f32 to vector<128x128xf32>
    %17 = arith.maximumf %15, %16 : vector<128x128xf32>
    %18 = arith.truncf %17 : vector<128x128xf32> to vector<128x128xbf16>
    %c0_13 = arith.constant 0 : index
    %c0_14 = arith.constant 0 : index
    %19 = vector.load %arg6[%c0_13, %c0_14] : memref<128x1024xbf16, #tpu.memory_space<vmem>>, vector<128x1024xbf16>
    %cst_15 = arith.constant dense<0.000000e+00> : vector<128x1024xf32>
    %20 = tpu.matmul %18, %19, %cst_15 {dimension_numbers = #tpu.dot_dimension_numbers<[1], [0], [0], [1], [0, 0, 1, 1], [], []>} : vector<128x128xbf16>, vector<128x1024xbf16>, vector<128x1024xf32> -> vector<128x1024xf32>
    %c0_16 = arith.constant 0 : index
    %c0_17 = arith.constant 0 : index
    %21 = vector.load %arg7[%c0_16, %c0_17] : memref<1x1024xf32, #tpu.memory_space<vmem>>, vector<1x1024xf32>
    %22 = vector.broadcast %21 : vector<1x1024xf32> to vector<128x1024xf32>
    %23 = arith.addf %20, %22 : vector<128x1024xf32>
    %cst_18 = arith.constant 0.000000e+00 : f32
    %24 = vector.broadcast %cst_18 : f32 to vector<128x1024xf32>
    %25 = arith.maximumf %23, %24 : vector<128x1024xf32>
    %cst_19 = arith.constant dense<0xFF800000> : vector<1024xf32>
    %26 = vector.multi_reduction <maximumf>, %25, %cst_19 [0] : vector<128x1024xf32> to vector<1024xf32>
    %27 = vector.shape_cast %26 : vector<1024xf32> to vector<1x1024xf32>
    %28 = arith.truncf %27 : vector<1x1024xf32> to vector<1x1024xbf16>
    %c0_20 = arith.constant 0 : index
    %c0_21 = arith.constant 0 : index
    %29 = vector.load %arg8[%c0_20, %c0_21] : memref<1024x512xbf16, #tpu.memory_space<vmem>>, vector<1024x512xbf16>
    %cst_22 = arith.constant dense<0.000000e+00> : vector<1x512xf32>
    %30 = tpu.matmul %28, %29, %cst_22 {dimension_numbers = #tpu.dot_dimension_numbers<[1], [0], [0], [1], [0, 0, 1, 1], [], []>} : vector<1x1024xbf16>, vector<1024x512xbf16>, vector<1x512xf32> -> vector<1x512xf32>
    %c0_23 = arith.constant 0 : index
    %c0_24 = arith.constant 0 : index
    %31 = vector.load %arg9[%c0_23, %c0_24] : memref<1x512xf32, #tpu.memory_space<vmem>>, vector<1x512xf32>
    %32 = arith.addf %30, %31 : vector<1x512xf32>
    %cst_25 = arith.constant 0.000000e+00 : f32
    %33 = vector.broadcast %cst_25 : f32 to vector<1x512xf32>
    %34 = arith.maximumf %32, %33 : vector<1x512xf32>
    %35 = arith.truncf %34 : vector<1x512xf32> to vector<1x512xbf16>
    %c0_26 = arith.constant 0 : index
    %c0_27 = arith.constant 0 : index
    %36 = vector.load %arg10[%c0_26, %c0_27] : memref<512x256xbf16, #tpu.memory_space<vmem>>, vector<512x256xbf16>
    %cst_28 = arith.constant dense<0.000000e+00> : vector<1x256xf32>
    %37 = tpu.matmul %35, %36, %cst_28 {dimension_numbers = #tpu.dot_dimension_numbers<[1], [0], [0], [1], [0, 0, 1, 1], [], []>} : vector<1x512xbf16>, vector<512x256xbf16>, vector<1x256xf32> -> vector<1x256xf32>
    %c0_29 = arith.constant 0 : index
    %c0_30 = arith.constant 0 : index
    %38 = vector.load %arg11[%c0_29, %c0_30] : memref<1x256xf32, #tpu.memory_space<vmem>>, vector<1x256xf32>
    %39 = arith.addf %37, %38 : vector<1x256xf32>
    %cst_31 = arith.constant 0.000000e+00 : f32
    %40 = vector.broadcast %cst_31 : f32 to vector<1x256xf32>
    %41 = arith.maximumf %39, %40 : vector<1x256xf32>
    %42 = arith.truncf %41 : vector<1x256xf32> to vector<1x256xbf16>
    %c0_32 = arith.constant 0 : index
    %c0_33 = arith.constant 0 : index
    %43 = vector.load %arg12[%c0_32, %c0_33] : memref<256x9xbf16, #tpu.memory_space<vmem>>, vector<256x9xbf16>
    %cst_34 = arith.constant dense<0.000000e+00> : vector<1x9xf32>
    %44 = tpu.matmul %42, %43, %cst_34 {dimension_numbers = #tpu.dot_dimension_numbers<[1], [0], [0], [1], [0, 0, 1, 1], [], []>} : vector<1x256xbf16>, vector<256x9xbf16>, vector<1x9xf32> -> vector<1x9xf32>
    %c0_35 = arith.constant 0 : index
    %c0_36 = arith.constant 0 : index
    %45 = vector.load %arg13[%c0_35, %c0_36] : memref<1x9xf32, #tpu.memory_space<vmem>>, vector<1x9xf32>
    %46 = arith.addf %44, %45 : vector<1x9xf32>
    %c0_37 = arith.constant 0 : index
    %c0_38 = arith.constant 0 : index
    %c0_39 = arith.constant 0 : index
    %47 = vector.load %arg30[%c0_37, %c0_38, %c0_39] : memref<1x1x9xf32, #tpu.memory_space<vmem>>, vector<1x1x9xf32>
    %48 = vector.shape_cast %47 : vector<1x1x9xf32> to vector<1x9xf32>
    %49 = vector.shape_cast %46 : vector<1x9xf32> to vector<1x1x9xf32>
    tpu.vector_store %arg30[%c0_37, %c0_38, %c0_39], %49 {strides = array<i32>} : memref<1x1x9xf32, #tpu.memory_space<vmem>>, vector<1x1x9xf32>,
    %50 = tpu.iota {dimensions = array<i32: 0>} : vector<3x9xi32>
    %51 = tpu.iota {dimensions = array<i32: 1>} : vector<3x9xi32>
    %c3_i32 = arith.constant 3 : i32
    %52 = vector.broadcast %c3_i32 : i32 to vector<3x9xi32>
    %53 = arith.muli %52, %50 : vector<3x9xi32>
    %54 = arith.cmpi sge, %51, %53 : vector<3x9xi32>
    %c3_i32_40 = arith.constant 3 : i32
    %55 = vector.broadcast %c3_i32_40 : i32 to vector<3x9xi32>
    %56 = arith.muli %55, %50 : vector<3x9xi32>
    %c3_i32_41 = arith.constant 3 : i32
    %57 = vector.broadcast %c3_i32_41 : i32 to vector<3x9xi32>
    %58 = arith.addi %56, %57 : vector<3x9xi32>
    %59 = arith.cmpi slt, %51, %58 : vector<3x9xi32>
    %60 = arith.andi %54, %59 : vector<3x9xi1>
    %61 = vector.shape_cast %46 : vector<1x9xf32> to vector<1x9xf32>
    %62 = vector.broadcast %61 : vector<1x9xf32> to vector<3x9xf32>
    %cst_42 = arith.constant 0.000000e+00 : f32
    %63 = vector.broadcast %cst_42 : f32 to vector<3x9xf32>
    %64 = arith.select %60, %62, %63 : vector<3x9xi1>, vector<3x9xf32>
    %65 = arith.truncf %64 : vector<3x9xf32> to vector<3x9xbf16>
    %c0_43 = arith.constant 0 : index
    %c0_44 = arith.constant 0 : index
    %66 = vector.load %arg14[%c0_43, %c0_44] : memref<9x64xbf16, #tpu.memory_space<vmem>>, vector<9x64xbf16>
    %cst_45 = arith.constant dense<0.000000e+00> : vector<3x64xf32>
    %67 = tpu.matmul %65, %66, %cst_45 {dimension_numbers = #tpu.dot_dimension_numbers<[1], [0], [0], [1], [0, 0, 1, 1], [], []>} : vector<3x9xbf16>, vector<9x64xbf16>, vector<3x64xf32> -> vector<3x64xf32>
    %68 = arith.truncf %1 : vector<128x3xf32> to vector<128x3xbf16>
    %69 = arith.truncf %67 : vector<3x64xf32> to vector<3x64xbf16>
    %cst_46 = arith.constant dense<0.000000e+00> : vector<128x64xf32>
    %70 = tpu.matmul %68, %69, %cst_46 {dimension_numbers = #tpu.dot_dimension_numbers<[1], [0], [0], [1], [0, 0, 1, 1], [], []>} : vector<128x3xbf16>, vector<3x64xbf16>, vector<128x64xf32> -> vector<128x64xf32>
    %c0_47 = arith.constant 0 : index
    %c0_48 = arith.constant 0 : index
    %71 = vector.load %arg15[%c0_47, %c0_48] : memref<1x64xf32, #tpu.memory_space<vmem>>, vector<1x64xf32>
    %72 = vector.broadcast %71 : vector<1x64xf32> to vector<128x64xf32>
    %73 = arith.addf %70, %72 : vector<128x64xf32>
    %cst_49 = arith.constant 0.000000e+00 : f32
    %74 = vector.broadcast %cst_49 : f32 to vector<128x64xf32>
    %75 = arith.maximumf %73, %74 : vector<128x64xf32>
    %76 = arith.truncf %75 : vector<128x64xf32> to vector<128x64xbf16>
    %c0_50 = arith.constant 0 : index
    %c0_51 = arith.constant 0 : index
    %77 = vector.load %arg16[%c0_50, %c0_51] : memref<64x128xbf16, #tpu.memory_space<vmem>>, vector<64x128xbf16>
    %cst_52 = arith.constant dense<0.000000e+00> : vector<128x128xf32>
    %78 = tpu.matmul %76, %77, %cst_52 {dimension_numbers = #tpu.dot_dimension_numbers<[1], [0], [0], [1], [0, 0, 1, 1], [], []>} : vector<128x64xbf16>, vector<64x128xbf16>, vector<128x128xf32> -> vector<128x128xf32>
    %c0_53 = arith.constant 0 : index
    %c0_54 = arith.constant 0 : index
    %79 = vector.load %arg17[%c0_53, %c0_54] : memref<1x128xf32, #tpu.memory_space<vmem>>, vector<1x128xf32>
    %80 = vector.broadcast %79 : vector<1x128xf32> to vector<128x128xf32>
    %81 = arith.addf %78, %80 : vector<128x128xf32>
    %cst_55 = arith.constant 0.000000e+00 : f32
    %82 = vector.broadcast %cst_55 : f32 to vector<128x128xf32>
    %83 = arith.maximumf %81, %82 : vector<128x128xf32>
    %84 = arith.truncf %83 : vector<128x128xf32> to vector<128x128xbf16>
    %c0_56 = arith.constant 0 : index
    %c0_57 = arith.constant 0 : index
    %85 = vector.load %arg18[%c0_56, %c0_57] : memref<128x1024xbf16, #tpu.memory_space<vmem>>, vector<128x1024xbf16>
    %cst_58 = arith.constant dense<0.000000e+00> : vector<128x1024xf32>
    %86 = tpu.matmul %84, %85, %cst_58 {dimension_numbers = #tpu.dot_dimension_numbers<[1], [0], [0], [1], [0, 0, 1, 1], [], []>} : vector<128x128xbf16>, vector<128x1024xbf16>, vector<128x1024xf32> -> vector<128x1024xf32>
    %c0_59 = arith.constant 0 : index
    %c0_60 = arith.constant 0 : index
    %87 = vector.load %arg19[%c0_59, %c0_60] : memref<1x1024xf32, #tpu.memory_space<vmem>>, vector<1x1024xf32>
    %88 = vector.broadcast %87 : vector<1x1024xf32> to vector<128x1024xf32>
    %89 = arith.addf %86, %88 : vector<128x1024xf32>
    %cst_61 = arith.constant dense<0xFF800000> : vector<1024xf32>
    %90 = vector.multi_reduction <maximumf>, %89, %cst_61 [0] : vector<128x1024xf32> to vector<1024xf32>
    %91 = vector.shape_cast %90 : vector<1024xf32> to vector<1x1024xf32>
    %92 = arith.truncf %91 : vector<1x1024xf32> to vector<1x1024xbf16>
    %c0_62 = arith.constant 0 : index
    %c0_63 = arith.constant 0 : index
    %93 = vector.load %arg20[%c0_62, %c0_63] : memref<1024x512xbf16, #tpu.memory_space<vmem>>, vector<1024x512xbf16>
    %cst_64 = arith.constant dense<0.000000e+00> : vector<1x512xf32>
    %94 = tpu.matmul %92, %93, %cst_64 {dimension_numbers = #tpu.dot_dimension_numbers<[1], [0], [0], [1], [0, 0, 1, 1], [], []>} : vector<1x1024xbf16>, vector<1024x512xbf16>, vector<1x512xf32> -> vector<1x512xf32>
    %c0_65 = arith.constant 0 : index
    %c0_66 = arith.constant 0 : index
    %95 = vector.load %arg22[%c0_65, %c0_66] : memref<1x512xf32, #tpu.memory_space<vmem>>, vector<1x512xf32>
    %96 = arith.addf %94, %95 : vector<1x512xf32>
    %97 = arith.truncf %75 : vector<128x64xf32> to vector<128x64xbf16>
    %c0_67 = arith.constant 0 : index
    %c0_68 = arith.constant 0 : index
    %98 = vector.load %arg21[%c0_67, %c0_68] : memref<64x512xbf16, #tpu.memory_space<vmem>>, vector<64x512xbf16>
    %cst_69 = arith.constant dense<0.000000e+00> : vector<128x512xf32>
    %99 = tpu.matmul %97, %98, %cst_69 {dimension_numbers = #tpu.dot_dimension_numbers<[1], [0], [0], [1], [0, 0, 1, 1], [], []>} : vector<128x64xbf16>, vector<64x512xbf16>, vector<128x512xf32> -> vector<128x512xf32>
    %100 = vector.broadcast %96 : vector<1x512xf32> to vector<128x512xf32>
    %101 = arith.addf %99, %100 : vector<128x512xf32>
    %cst_70 = arith.constant 0.000000e+00 : f32
    %102 = vector.broadcast %cst_70 : f32 to vector<128x512xf32>
    %103 = arith.maximumf %101, %102 : vector<128x512xf32>
    %104 = arith.truncf %103 : vector<128x512xf32> to vector<128x512xbf16>
    %c0_71 = arith.constant 0 : index
    %c0_72 = arith.constant 0 : index
    %105 = vector.load %arg23[%c0_71, %c0_72] : memref<512x256xbf16, #tpu.memory_space<vmem>>, vector<512x256xbf16>
    %cst_73 = arith.constant dense<0.000000e+00> : vector<128x256xf32>
    %106 = tpu.matmul %104, %105, %cst_73 {dimension_numbers = #tpu.dot_dimension_numbers<[1], [0], [0], [1], [0, 0, 1, 1], [], []>} : vector<128x512xbf16>, vector<512x256xbf16>, vector<128x256xf32> -> vector<128x256xf32>
    %c0_74 = arith.constant 0 : index
    %c0_75 = arith.constant 0 : index
    %107 = vector.load %arg24[%c0_74, %c0_75] : memref<1x256xf32, #tpu.memory_space<vmem>>, vector<1x256xf32>
    %108 = vector.broadcast %107 : vector<1x256xf32> to vector<128x256xf32>
    %109 = arith.addf %106, %108 : vector<128x256xf32>
    %cst_76 = arith.constant 0.000000e+00 : f32
    %110 = vector.broadcast %cst_76 : f32 to vector<128x256xf32>
    %111 = arith.maximumf %109, %110 : vector<128x256xf32>
    %112 = arith.truncf %111 : vector<128x256xf32> to vector<128x256xbf16>
    %c0_77 = arith.constant 0 : index
    %c0_78 = arith.constant 0 : index
    %113 = vector.load %arg25[%c0_77, %c0_78] : memref<256x128xbf16, #tpu.memory_space<vmem>>, vector<256x128xbf16>
    %cst_79 = arith.constant dense<0.000000e+00> : vector<128x128xf32>
    %114 = tpu.matmul %112, %113, %cst_79 {dimension_numbers = #tpu.dot_dimension_numbers<[1], [0], [0], [1], [0, 0, 1, 1], [], []>} : vector<128x256xbf16>, vector<256x128xbf16>, vector<128x128xf32> -> vector<128x128xf32>
    %c0_80 = arith.constant 0 : index
    %c0_81 = arith.constant 0 : index
    %115 = vector.load %arg26[%c0_80, %c0_81] : memref<1x128xf32, #tpu.memory_space<vmem>>, vector<1x128xf32>
    %116 = vector.broadcast %115 : vector<1x128xf32> to vector<128x128xf32>
    %117 = arith.addf %114, %116 : vector<128x128xf32>
    %cst_82 = arith.constant 0.000000e+00 : f32
    %118 = vector.broadcast %cst_82 : f32 to vector<128x128xf32>
    %119 = arith.maximumf %117, %118 : vector<128x128xf32>
    %120 = arith.truncf %119 : vector<128x128xf32> to vector<128x128xbf16>
    %c0_83 = arith.constant 0 : index
    %c0_84 = arith.constant 0 : index
    %121 = vector.load %arg27[%c0_83, %c0_84] : memref<128x128xbf16, #tpu.memory_space<vmem>>, vector<128x128xbf16>
    %cst_85 = arith.constant dense<0.000000e+00> : vector<128x128xf32>
    %122 = tpu.matmul %120, %121, %cst_85 {dimension_numbers = #tpu.dot_dimension_numbers<[1], [0], [0], [1], [0, 0, 1, 1], [], []>} : vector<128x128xbf16>, vector<128x128xbf16>, vector<128x128xf32> -> vector<128x128xf32>
    %c0_86 = arith.constant 0 : index
    %c0_87 = arith.constant 0 : index
    %123 = vector.load %arg28[%c0_86, %c0_87] : memref<1x128xf32, #tpu.memory_space<vmem>>, vector<1x128xf32>
    %124 = vector.broadcast %123 : vector<1x128xf32> to vector<128x128xf32>
    %125 = arith.addf %122, %124 : vector<128x128xf32>
    %cst_88 = arith.constant dense<0xFF800000> : vector<128xf32>
    %126 = vector.multi_reduction <maximumf>, %125, %cst_88 [1] : vector<128x128xf32> to vector<128xf32>
    %127 = vector.shape_cast %126 : vector<128xf32> to vector<128x1xf32>
    %128 = vector.broadcast %127 : vector<128x1xf32> to vector<128x128xf32>
    %129 = arith.subf %125, %128 : vector<128x128xf32>
    %130 = math.exp %129 : vector<128x128xf32>
    %cst_89 = arith.constant dense<0.000000e+00> : vector<128xf32>
    %131 = vector.multi_reduction <add>, %130, %cst_89 [1] : vector<128x128xf32> to vector<128xf32>
    %132 = vector.shape_cast %131 : vector<128xf32> to vector<128x1xf32>
    %133 = math.log %132 : vector<128x1xf32>
    %134 = vector.broadcast %133 : vector<128x1xf32> to vector<128x128xf32>
    %135 = arith.subf %129, %134 : vector<128x128xf32>
    %c0_90 = arith.constant 0 : index
    %c0_91 = arith.constant 0 : index
    %c0_92 = arith.constant 0 : index
    %136 = vector.load %arg29[%c0_90, %c0_91, %c0_92] : memref<1x128x128xf32, #tpu.memory_space<vmem>>, vector<1x128x128xf32>
    %137 = vector.shape_cast %136 : vector<1x128x128xf32> to vector<128x128xf32>
    %138 = vector.shape_cast %135 : vector<128x128xf32> to vector<1x128x128xf32>
    tpu.vector_store %arg29[%c0_90, %c0_91, %c0_92], %138 {strides = array<i32>} : memref<1x128x128xf32, #tpu.memory_space<vmem>>, vector<1x128x128xf32>,
    return
  }
  func.func @transform_0(%arg0: i32) -> (i32, i32, i32) {
    %c0_i32 = arith.constant 0 : i32
    %c0_i32_0 = arith.constant 0 : i32
    %c0_i32_1 = arith.constant 0 : i32
    return %arg0, %c0_i32, %c0_i32_0 : i32, i32, i32
  }
  func.func @transform_1(%arg0: i32) -> (i32, i32) {
    %c0_i32 = arith.constant 0 : i32
    %c0_i32_0 = arith.constant 0 : i32
    %c0_i32_1 = arith.constant 0 : i32
    return %c0_i32, %c0_i32_0 : i32, i32
  }
  func.func @transform_2(%arg0: i32) -> (i32, i32) {
    %c0_i32 = arith.constant 0 : i32
    %c0_i32_0 = arith.constant 0 : i32
    %c0_i32_1 = arith.constant 0 : i32
    return %c0_i32, %c0_i32_0 : i32, i32
  }
  func.func @transform_3(%arg0: i32) -> (i32, i32) {
    %c0_i32 = arith.constant 0 : i32
    %c0_i32_0 = arith.constant 0 : i32
    %c0_i32_1 = arith.constant 0 : i32
    return %c0_i32, %c0_i32_0 : i32, i32
  }
  func.func @transform_4(%arg0: i32) -> (i32, i32) {
    %c0_i32 = arith.constant 0 : i32
    %c0_i32_0 = arith.constant 0 : i32
    %c0_i32_1 = arith.constant 0 : i32
    return %c0_i32, %c0_i32_0 : i32, i32
  }
  func.func @transform_5(%arg0: i32) -> (i32, i32) {
    %c0_i32 = arith.constant 0 : i32
    %c0_i32_0 = arith.constant 0 : i32
    %c0_i32_1 = arith.constant 0 : i32
    return %c0_i32, %c0_i32_0 : i32, i32
  }
  func.func @transform_6(%arg0: i32) -> (i32, i32) {
    %c0_i32 = arith.constant 0 : i32
    %c0_i32_0 = arith.constant 0 : i32
    %c0_i32_1 = arith.constant 0 : i32
    return %c0_i32, %c0_i32_0 : i32, i32
  }
  func.func @transform_7(%arg0: i32) -> (i32, i32) {
    %c0_i32 = arith.constant 0 : i32
    %c0_i32_0 = arith.constant 0 : i32
    %c0_i32_1 = arith.constant 0 : i32
    return %c0_i32, %c0_i32_0 : i32, i32
  }
  func.func @transform_8(%arg0: i32) -> (i32, i32) {
    %c0_i32 = arith.constant 0 : i32
    %c0_i32_0 = arith.constant 0 : i32
    %c0_i32_1 = arith.constant 0 : i32
    return %c0_i32, %c0_i32_0 : i32, i32
  }
  func.func @transform_9(%arg0: i32) -> (i32, i32) {
    %c0_i32 = arith.constant 0 : i32
    %c0_i32_0 = arith.constant 0 : i32
    %c0_i32_1 = arith.constant 0 : i32
    return %c0_i32, %c0_i32_0 : i32, i32
  }
  func.func @transform_10(%arg0: i32) -> (i32, i32) {
    %c0_i32 = arith.constant 0 : i32
    %c0_i32_0 = arith.constant 0 : i32
    %c0_i32_1 = arith.constant 0 : i32
    return %c0_i32, %c0_i32_0 : i32, i32
  }
  func.func @transform_11(%arg0: i32) -> (i32, i32) {
    %c0_i32 = arith.constant 0 : i32
    %c0_i32_0 = arith.constant 0 : i32
    %c0_i32_1 = arith.constant 0 : i32
    return %c0_i32, %c0_i32_0 : i32, i32
  }
  func.func @transform_12(%arg0: i32) -> (i32, i32) {
    %c0_i32 = arith.constant 0 : i32
    %c0_i32_0 = arith.constant 0 : i32
    %c0_i32_1 = arith.constant 0 : i32
    return %c0_i32, %c0_i32_0 : i32, i32
  }
  func.func @transform_13(%arg0: i32) -> (i32, i32) {
    %c0_i32 = arith.constant 0 : i32
    %c0_i32_0 = arith.constant 0 : i32
    %c0_i32_1 = arith.constant 0 : i32
    return %c0_i32, %c0_i32_0 : i32, i32
  }
  func.func @transform_14(%arg0: i32) -> (i32, i32) {
    %c0_i32 = arith.constant 0 : i32
    %c0_i32_0 = arith.constant 0 : i32
    %c0_i32_1 = arith.constant 0 : i32
    return %c0_i32, %c0_i32_0 : i32, i32
  }
  func.func @transform_15(%arg0: i32) -> (i32, i32) {
    %c0_i32 = arith.constant 0 : i32
    %c0_i32_0 = arith.constant 0 : i32
    %c0_i32_1 = arith.constant 0 : i32
    return %c0_i32, %c0_i32_0 : i32, i32
  }
  func.func @transform_16(%arg0: i32) -> (i32, i32) {
    %c0_i32 = arith.constant 0 : i32
    %c0_i32_0 = arith.constant 0 : i32
    %c0_i32_1 = arith.constant 0 : i32
    return %c0_i32, %c0_i32_0 : i32, i32
  }
  func.func @transform_17(%arg0: i32) -> (i32, i32) {
    %c0_i32 = arith.constant 0 : i32
    %c0_i32_0 = arith.constant 0 : i32
    %c0_i32_1 = arith.constant 0 : i32
    return %c0_i32, %c0_i32_0 : i32, i32
  }
  func.func @transform_18(%arg0: i32) -> (i32, i32) {
    %c0_i32 = arith.constant 0 : i32
    %c0_i32_0 = arith.constant 0 : i32
    %c0_i32_1 = arith.constant 0 : i32
    return %c0_i32, %c0_i32_0 : i32, i32
  }
  func.func @transform_19(%arg0: i32) -> (i32, i32) {
    %c0_i32 = arith.constant 0 : i32
    %c0_i32_0 = arith.constant 0 : i32
    %c0_i32_1 = arith.constant 0 : i32
    return %c0_i32, %c0_i32_0 : i32, i32
  }
  func.func @transform_20(%arg0: i32) -> (i32, i32) {
    %c0_i32 = arith.constant 0 : i32
    %c0_i32_0 = arith.constant 0 : i32
    %c0_i32_1 = arith.constant 0 : i32
    return %c0_i32, %c0_i32_0 : i32, i32
  }
  func.func @transform_21(%arg0: i32) -> (i32, i32) {
    %c0_i32 = arith.constant 0 : i32
    %c0_i32_0 = arith.constant 0 : i32
    %c0_i32_1 = arith.constant 0 : i32
    return %c0_i32, %c0_i32_0 : i32, i32
  }
  func.func @transform_22(%arg0: i32) -> (i32, i32) {
    %c0_i32 = arith.constant 0 : i32
    %c0_i32_0 = arith.constant 0 : i32
    %c0_i32_1 = arith.constant 0 : i32
    return %c0_i32, %c0_i32_0 : i32, i32
  }
  func.func @transform_23(%arg0: i32) -> (i32, i32) {
    %c0_i32 = arith.constant 0 : i32
    %c0_i32_0 = arith.constant 0 : i32
    %c0_i32_1 = arith.constant 0 : i32
    return %c0_i32, %c0_i32_0 : i32, i32
  }
  func.func @transform_24(%arg0: i32) -> (i32, i32) {
    %c0_i32 = arith.constant 0 : i32
    %c0_i32_0 = arith.constant 0 : i32
    %c0_i32_1 = arith.constant 0 : i32
    return %c0_i32, %c0_i32_0 : i32, i32
  }
  func.func @transform_25(%arg0: i32) -> (i32, i32) {
    %c0_i32 = arith.constant 0 : i32
    %c0_i32_0 = arith.constant 0 : i32
    %c0_i32_1 = arith.constant 0 : i32
    return %c0_i32, %c0_i32_0 : i32, i32
  }
  func.func @transform_26(%arg0: i32) -> (i32, i32) {
    %c0_i32 = arith.constant 0 : i32
    %c0_i32_0 = arith.constant 0 : i32
    %c0_i32_1 = arith.constant 0 : i32
    return %c0_i32, %c0_i32_0 : i32, i32
  }
  func.func @transform_27(%arg0: i32) -> (i32, i32) {
    %c0_i32 = arith.constant 0 : i32
    %c0_i32_0 = arith.constant 0 : i32
    %c0_i32_1 = arith.constant 0 : i32
    return %c0_i32, %c0_i32_0 : i32, i32
  }
  func.func @transform_28(%arg0: i32) -> (i32, i32, i32) {
    %c0_i32 = arith.constant 0 : i32
    %c0_i32_0 = arith.constant 0 : i32
    %c0_i32_1 = arith.constant 0 : i32
    return %arg0, %c0_i32, %c0_i32_0 : i32, i32, i32
  }
  func.func @transform_29(%arg0: i32) -> (i32, i32, i32) {
    %c0_i32 = arith.constant 0 : i32
    %c0_i32_0 = arith.constant 0 : i32
    %c0_i32_1 = arith.constant 0 : i32
    return %arg0, %c0_i32, %c0_i32_0 : i32, i32, i32
  }
}

</mosaic_0001>

<llo_original>
// kernel: pointnet_dense_cls.1
$region0: #{pointnet_dense_cls.1}
  #allocation0 [shape = 'u32[]', space=smem, size = 0x4, offset = 0x4, fixed_abs, tag = 'smem constant byte address 0x4 - core index']
  #allocation1 [shape = 'u32[144,128]{1,0:T(1,128)}', space=vmem, size = 0x12000, scoped, tag = 'internal scratch']
  %s0 = inlined_call_operand.smem [shape: u32[30], index: -1, kind: input, shape index: {}]
  %s1 = sld [smem:[%s0]]
  %s2 = scalar_lea.smem %s0, 1
  %s3 = sld [smem:[%s2]]
  %s4 = scalar_lea.smem %s0, 2
  %s5 = sld [smem:[%s4]]
  %s6 = scalar_lea.smem %s0, 3
  %s7 = sld [smem:[%s6]]
  %s8 = scalar_lea.smem %s0, 4
  %s9 = sld [smem:[%s8]]
  %s10 = scalar_lea.smem %s0, 5
  %s11 = sld [smem:[%s10]]
  %s12 = scalar_lea.smem %s0, 6
  %s13 = sld [smem:[%s12]]
  %s14 = scalar_lea.smem %s0, 7
  %s15 = sld [smem:[%s14]]
  %s16 = scalar_lea.smem %s0, 8
  %s17 = sld [smem:[%s16]]
  %s18 = scalar_lea.smem %s0, 9
  %s19 = sld [smem:[%s18]]
  %s20 = scalar_lea.smem %s0, 10
  %s21 = sld [smem:[%s20]]
  %s22 = scalar_lea.smem %s0, 11
  %s23 = sld [smem:[%s22]]
  %s24 = scalar_lea.smem %s0, 12
  %s25 = sld [smem:[%s24]]
  %s26 = scalar_lea.smem %s0, 13
  %s27 = sld [smem:[%s26]]
  %s28 = scalar_lea.smem %s0, 14
  %s29 = sld [smem:[%s28]]
  %s30 = scalar_lea.smem %s0, 15
  %s31 = sld [smem:[%s30]]
  %s32 = scalar_lea.smem %s0, 16
  %s33 = sld [smem:[%s32]]
  %s34 = scalar_lea.smem %s0, 17
  %s35 = sld [smem:[%s34]]
  %s36 = scalar_lea.smem %s0, 18
  %s37 = sld [smem:[%s36]]
  %s38 = scalar_lea.smem %s0, 19
  %s39 = sld [smem:[%s38]]
  %s40 = scalar_lea.smem %s0, 20
  %s41 = sld [smem:[%s40]]
  %s42 = scalar_lea.smem %s0, 21
  %s43 = sld [smem:[%s42]]
  %s44 = scalar_lea.smem %s0, 22
  %s45 = sld [smem:[%s44]]
  %s46 = scalar_lea.smem %s0, 23
  %s47 = sld [smem:[%s46]]
  %s48 = scalar_lea.smem %s0, 24
  %s49 = sld [smem:[%s48]]
  %s50 = scalar_lea.smem %s0, 25
  %s51 = sld [smem:[%s50]]
  %s52 = scalar_lea.smem %s0, 26
  %s53 = sld [smem:[%s52]]
  %s54 = scalar_lea.smem %s0, 27
  %s55 = sld [smem:[%s54]]
  %s56 = scalar_lea.smem %s0, 28
  %s57 = sld [smem:[%s56]]
  %s58 = scalar_lea.smem %s0, 29
  %s59 = sld [smem:[%s58]]
  %60 = xla_tuple %s57, %s59
  %s61 = sld [smem:[#allocation0]]
  $region205: #{pointnet_dense_cls.1} parent=0
    _
  %s63 = ssub.s32 1, %s61
  %s64 = scalar_select 0, %s63, %s61
  $region1: #{pointnet_dense_cls.1} parent=0
    #allocation2 [shape = 'u8[512]{0}', space=vmem, size = 0x400, scoped, tag = 'input window, operand 4, single buffered']
    #allocation3 [shape = 's32[2]{0}', space=sflag, size = 0x8, scoped, tag = 'scoped memory for pointnet_dense_cls.1']
    #allocation4 [shape = 'u8[262144]{0}', space=vmem, size = 0x40000, scoped, tag = 'input window, operand 5, single buffered']
    #allocation5 [shape = 's32[1]{0}', space=sflag, size = 0x4, scoped, tag = 'scoped memory for pointnet_dense_cls.1']
    #allocation6 [shape = 'u8[1048576]{0}', space=vmem, size = 0x100000, scoped, tag = 'input window, operand 7, single buffered']
    #allocation7 [shape = 'u8[2048]{0}', space=vmem, size = 0x800, scoped, tag = 'input window, operand 8, single buffered']
    #allocation8 [shape = 's32[1]{0}', space=sflag, size = 0x4, scoped, tag = 'scoped memory for pointnet_dense_cls.1']
    #allocation9 [shape = 'u8[262144]{0}', space=vmem, size = 0x40000, scoped, tag = 'input window, operand 9, single buffered']
    #allocation10 [shape = 'u8[1024]{0}', space=vmem, size = 0x400, scoped, tag = 'input window, operand 10, single buffered']
    #allocation11 [shape = 's32[1]{0}', space=sflag, size = 0x4, scoped, tag = 'scoped memory for pointnet_dense_cls.1']
    #allocation12 [shape = 'u8[262144]{0}', space=vmem, size = 0x40000, scoped, tag = 'input window, operand 17, single buffered']
    #allocation13 [shape = 'u8[1048576]{0}', space=vmem, size = 0x100000, scoped, tag = 'input window, operand 19, single buffered']
    #allocation14 [shape = 's32[1]{0}', space=sflag, size = 0x4, scoped, tag = 'scoped memory for pointnet_dense_cls.1']
    #allocation15 [shape = 'u8[2048]{0}', space=vmem, size = 0x800, scoped, tag = 'input window, operand 21, single buffered']
    #allocation16 [shape = 'u8[262144]{0}', space=vmem, size = 0x40000, scoped, tag = 'input window, operand 22, single buffered']
    #allocation17 [shape = 's32[1]{0}', space=sflag, size = 0x4, scoped, tag = 'scoped memory for pointnet_dense_cls.1']
    #allocation18 [shape = 'u8[1024]{0}', space=vmem, size = 0x400, scoped, tag = 'input window, operand 23, single buffered']
    #allocation19 [shape = 'u8[512]{0}', space=vmem, size = 0x400, scoped, tag = 'input window, operand 25, single buffered']
    #allocation20 [shape = 's32[1]{0}', space=sflag, size = 0x4, scoped, tag = 'scoped memory for pointnet_dense_cls.1']
    #allocation21 [shape = 'u8[512]{0}', space=vmem, size = 0x400, scoped, tag = 'input window, operand 27, single buffered']
    %65 = vsyncpa [#allocation3], 0
    %66 = vsyncpa [#allocation5], 0
    %67 = vsyncpa [#allocation8], 0
    %68 = vsyncpa [#allocation11], 0
    %69 = vsyncpa [#allocation14], 0
    %70 = vsyncpa [#allocation17], 0
    %71 = vsyncpa [#allocation20], 0
    loop: start=0, step=1, limit=4
    $region2: #{pointnet_dense_cls.1} parent=1 // loop_pre_header
      _
    $region3: #{pointnet_dense_cls.1} parent=1 // loop_header
      %s73 = sphi 0, %s77
      %p74 = scmp.ge.s32.totalorder %s73, 4
      %s83 = sphi 0, %s85
      %s86 = sphi 0, %s83
      %s87 = sphi 0, %s86
      %s103 = sphi 0, %s87
      %s107 = sphi 0, %s107
      %s109 = sphi 0, %s107
      %s110 = sphi 0, %s109
      %s124 = sphi 0, %s110
      %s128 = sphi 0, %s128
      %s130 = sphi 0, %s128
      %s131 = sphi 0, %s130
      %s145 = sphi 0, %s131
      %s149 = sphi 0, %s149
      %s151 = sphi 0, %s149
      %s152 = sphi 0, %s151
      %s166 = sphi 0, %s152
      %s170 = sphi 0, %s170
      %s172 = sphi 0, %s170
      %s173 = sphi 0, %s172
      %s187 = sphi 0, %s173
      %s191 = sphi 0, %s191
      %s193 = sphi 0, %s191
      %s194 = sphi 0, %s193
      %s208 = sphi 0, %s194
      %s212 = sphi 0, %s212
      %s214 = sphi 0, %s212
      %s215 = sphi 0, %s214
      %s229 = sphi 0, %s215
      %s233 = sphi 0, %s233
      %s235 = sphi 0, %s233
      %s236 = sphi 0, %s235
      %s250 = sphi 0, %s236
      %s254 = sphi 0, %s254
      %s256 = sphi 0, %s254
      %s257 = sphi 0, %s256
      %s271 = sphi 0, %s257
      %s275 = sphi 0, %s275
      %s277 = sphi 0, %s275
      %s278 = sphi 0, %s277
      %s292 = sphi 0, %s278
      %s296 = sphi 0, %s296
      %s298 = sphi 0, %s296
      %s299 = sphi 0, %s298
      %s313 = sphi 0, %s299
      %s317 = sphi 0, %s317
      %s319 = sphi 0, %s317
      %s320 = sphi 0, %s319
      %s334 = sphi 0, %s320
      %s338 = sphi 0, %s338
      %s340 = sphi 0, %s338
      %s341 = sphi 0, %s340
      %s355 = sphi 0, %s341
      %s359 = sphi 0, %s359
      %s361 = sphi 0, %s359
      %s362 = sphi 0, %s361
      %s376 = sphi 0, %s362
      %s380 = sphi 0, %s380
      %s382 = sphi 0, %s380
      %s383 = sphi 0, %s382
      %s397 = sphi 0, %s383
      %s401 = sphi 0, %s401
      %s403 = sphi 0, %s401
      %s404 = sphi 0, %s403
      %s418 = sphi 0, %s404
      %s422 = sphi 0, %s422
      %s424 = sphi 0, %s422
      %s425 = sphi 0, %s424
      %s439 = sphi 0, %s425
      %s443 = sphi 0, %s443
      %s445 = sphi 0, %s443
      %s446 = sphi 0, %s445
      %s460 = sphi 0, %s446
      %s464 = sphi 0, %s464
      %s466 = sphi 0, %s464
      %s467 = sphi 0, %s466
      %s481 = sphi 0, %s467
      %s485 = sphi 0, %s485
      %s487 = sphi 0, %s485
      %s488 = sphi 0, %s487
      %s502 = sphi 0, %s488
      %s506 = sphi 0, %s506
      %s508 = sphi 0, %s506
      %s509 = sphi 0, %s508
      %s523 = sphi 0, %s509
      %s527 = sphi 0, %s527
      %s529 = sphi 0, %s527
      %s530 = sphi 0, %s529
      %s544 = sphi 0, %s530
      %s548 = sphi 0, %s548
      %s550 = sphi 0, %s548
      %s551 = sphi 0, %s550
      %s565 = sphi 0, %s551
      %s569 = sphi 0, %s569
      %s571 = sphi 0, %s569
      %s572 = sphi 0, %s571
      %s586 = sphi 0, %s572
      %s590 = sphi 0, %s590
      %s592 = sphi 0, %s590
      %s593 = sphi 0, %s592
      %s607 = sphi 0, %s593
      %s611 = sphi 0, %s611
      %s613 = sphi 0, %s611
      %s614 = sphi 0, %s613
      %s628 = sphi 0, %s614
      %s632 = sphi 0, %s632
      %s634 = sphi 0, %s632
      %s635 = sphi 0, %s634
      %s649 = sphi 0, %s635
      %s653 = sphi 0, %s653
      %s655 = sphi 0, %s653
      %s656 = sphi 0, %s655
      %s670 = sphi 0, %s656
      %s676 = sphi 0, %s678
      %s679 = sphi 0, %s676
      %s680 = sphi 0, %s679
      %s696 = sphi 0, %s680
      %s702 = sphi 0, %s704
      %s705 = sphi 0, %s702
      %s706 = sphi 0, %s705
      %s722 = sphi 0, %s706
    $region4: #{pointnet_dense_cls.1} parent=1 // loop_header_branch
      %76 = sbr.rel (%p74) target = $region8
    $region5: #{pointnet_dense_cls.1} parent=1 // loop_body
      %s78 = ssub.s32 %s73, 1
      %s79 = ssub.s32 %s73, 2
      %s80 = sadd.s32 %s73, 1
      %s81 = ssub.s32 %s73, %s80
      %p82 = scmp.eq.s32.totalorder %s81, 0
      %s84 = sadd.s32 %s83, 1
      %s85 = scalar_select %p82, %s83, %s84
      %p88 = pneg %p82
      %p89 = scmp.eq.s32.totalorder %s73, 1
      %p90 = por %p88, %p89
      %p91 = scmp.ne.s32.totalorder %s83, %s86
      %p92 = scmp.eq.s32.totalorder %s73, 0
      %p93 = por %p91, %p92
      %p94 = scmp.ne.s32.totalorder %s83, %s86
      %p95 = scmp.eq.s32.totalorder %s78, 1
      %p96 = por %p94, %p95
      %p97 = scmp.ne.s32.totalorder %s86, %s87
      %p98 = scmp.eq.s32.totalorder %s78, 0
      %p99 = por %p97, %p98
      %p100 = scmp.ne.s32.totalorder %s86, %s87
      %p101 = scmp.eq.s32.totalorder %s79, 1
      %p102 = por %p100, %p101
      %p104 = scmp.ne.s32.totalorder %s87, %s103
      %p105 = scmp.eq.s32.totalorder %s79, 0
      %p106 = por %p104, %p105
      %s108 = sadd.s32 %s107, 1
      %p111 = scmp.eq.s32.totalorder %s73, 1
      %p112 = scmp.ne.s32.totalorder %s107, %s109
      %p113 = scmp.eq.s32.totalorder %s73, 0
      %p114 = por %p112, %p113
      %p115 = scmp.ne.s32.totalorder %s107, %s109
      %p116 = scmp.eq.s32.totalorder %s78, 1
      %p117 = por %p115, %p116
      %p118 = scmp.ne.s32.totalorder %s109, %s110
      %p119 = scmp.eq.s32.totalorder %s78, 0
      %p120 = por %p118, %p119
      %p121 = scmp.ne.s32.totalorder %s109, %s110
      %p122 = scmp.eq.s32.totalorder %s79, 1
      %p123 = por %p121, %p122
      %p125 = scmp.ne.s32.totalorder %s110, %s124
      %p126 = scmp.eq.s32.totalorder %s79, 0
      %p127 = por %p125, %p126
      %s129 = sadd.s32 %s128, 1
      %p132 = scmp.eq.s32.totalorder %s73, 1
      %p133 = scmp.ne.s32.totalorder %s128, %s130
      %p134 = scmp.eq.s32.totalorder %s73, 0
      %p135 = por %p133, %p134
      %p136 = scmp.ne.s32.totalorder %s128, %s130
      %p137 = scmp.eq.s32.totalorder %s78, 1
      %p138 = por %p136, %p137
      %p139 = scmp.ne.s32.totalorder %s130, %s131
      %p140 = scmp.eq.s32.totalorder %s78, 0
      %p141 = por %p139, %p140
      %p142 = scmp.ne.s32.totalorder %s130, %s131
      %p143 = scmp.eq.s32.totalorder %s79, 1
      %p144 = por %p142, %p143
      %p146 = scmp.ne.s32.totalorder %s131, %s145
      %p147 = scmp.eq.s32.totalorder %s79, 0
      %p148 = por %p146, %p147
      %s150 = sadd.s32 %s149, 1
      %p153 = scmp.eq.s32.totalorder %s73, 1
      %p154 = scmp.ne.s32.totalorder %s149, %s151
      %p155 = scmp.eq.s32.totalorder %s73, 0
      %p156 = por %p154, %p155
      %p157 = scmp.ne.s32.totalorder %s149, %s151
      %p158 = scmp.eq.s32.totalorder %s78, 1
      %p159 = por %p157, %p158
      %p160 = scmp.ne.s32.totalorder %s151, %s152
      %p161 = scmp.eq.s32.totalorder %s78, 0
      %p162 = por %p160, %p161
      %p163 = scmp.ne.s32.totalorder %s151, %s152
      %p164 = scmp.eq.s32.totalorder %s79, 1
      %p165 = por %p163, %p164
      %p167 = scmp.ne.s32.totalorder %s152, %s166
      %p168 = scmp.eq.s32.totalorder %s79, 0
      %p169 = por %p167, %p168
      %s171 = sadd.s32 %s170, 1
      %p174 = scmp.eq.s32.totalorder %s73, 1
      %p175 = scmp.ne.s32.totalorder %s170, %s172
      %p176 = scmp.eq.s32.totalorder %s73, 0
      %p177 = por %p175, %p176
      %p178 = scmp.ne.s32.totalorder %s170, %s172
      %p179 = scmp.eq.s32.totalorder %s78, 1
      %p180 = por %p178, %p179
      %p181 = scmp.ne.s32.totalorder %s172, %s173
      %p182 = scmp.eq.s32.totalorder %s78, 0
      %p183 = por %p181, %p182
      %p184 = scmp.ne.s32.totalorder %s172, %s173
      %p185 = scmp.eq.s32.totalorder %s79, 1
      %p186 = por %p184, %p185
      %p188 = scmp.ne.s32.totalorder %s173, %s187
      %p189 = scmp.eq.s32.totalorder %s79, 0
      %p190 = por %p188, %p189
      %s192 = sadd.s32 %s191, 1
      %p195 = scmp.eq.s32.totalorder %s73, 1
      %p196 = scmp.ne.s32.totalorder %s191, %s193
      %p197 = scmp.eq.s32.totalorder %s73, 0
      %p198 = por %p196, %p197
      %p199 = scmp.ne.s32.totalorder %s191, %s193
      %p200 = scmp.eq.s32.totalorder %s78, 1
      %p201 = por %p199, %p200
      %p202 = scmp.ne.s32.totalorder %s193, %s194
      %p203 = scmp.eq.s32.totalorder %s78, 0
      %p204 = por %p202, %p203
      %p205 = scmp.ne.s32.totalorder %s193, %s194
      %p206 = scmp.eq.s32.totalorder %s79, 1
      %p207 = por %p205, %p206
      %p209 = scmp.ne.s32.totalorder %s194, %s208
      %p210 = scmp.eq.s32.totalorder %s79, 0
      %p211 = por %p209, %p210
      %s213 = sadd.s32 %s212, 1
      %p216 = scmp.eq.s32.totalorder %s73, 1
      %p217 = scmp.ne.s32.totalorder %s212, %s214
      %p218 = scmp.eq.s32.totalorder %s73, 0
      %p219 = por %p217, %p218
      %p220 = scmp.ne.s32.totalorder %s212, %s214
      %p221 = scmp.eq.s32.totalorder %s78, 1
      %p222 = por %p220, %p221
      %p223 = scmp.ne.s32.totalorder %s214, %s215
      %p224 = scmp.eq.s32.totalorder %s78, 0
      %p225 = por %p223, %p224
      %p226 = scmp.ne.s32.totalorder %s214, %s215
      %p227 = scmp.eq.s32.totalorder %s79, 1
      %p228 = por %p226, %p227
      %p230 = scmp.ne.s32.totalorder %s215, %s229
      %p231 = scmp.eq.s32.totalorder %s79, 0
      %p232 = por %p230, %p231
      %s234 = sadd.s32 %s233, 1
      %p237 = scmp.eq.s32.totalorder %s73, 1
      %p238 = scmp.ne.s32.totalorder %s233, %s235
      %p239 = scmp.eq.s32.totalorder %s73, 0
      %p240 = por %p238, %p239
      %p241 = scmp.ne.s32.totalorder %s233, %s235
      %p242 = scmp.eq.s32.totalorder %s78, 1
      %p243 = por %p241, %p242
      %p244 = scmp.ne.s32.totalorder %s235, %s236
      %p245 = scmp.eq.s32.totalorder %s78, 0
      %p246 = por %p244, %p245
      %p247 = scmp.ne.s32.totalorder %s235, %s236
      %p248 = scmp.eq.s32.totalorder %s79, 1
      %p249 = por %p247, %p248
      %p251 = scmp.ne.s32.totalorder %s236, %s250
      %p252 = scmp.eq.s32.totalorder %s79, 0
      %p253 = por %p251, %p252
      %s255 = sadd.s32 %s254, 1
      %p258 = scmp.eq.s32.totalorder %s73, 1
      %p259 = scmp.ne.s32.totalorder %s254, %s256
      %p260 = scmp.eq.s32.totalorder %s73, 0
      %p261 = por %p259, %p260
      %p262 = scmp.ne.s32.totalorder %s254, %s256
      %p263 = scmp.eq.s32.totalorder %s78, 1
      %p264 = por %p262, %p263
      %p265 = scmp.ne.s32.totalorder %s256, %s257
      %p266 = scmp.eq.s32.totalorder %s78, 0
      %p267 = por %p265, %p266
      %p268 = scmp.ne.s32.totalorder %s256, %s257
      %p269 = scmp.eq.s32.totalorder %s79, 1
      %p270 = por %p268, %p269
      %p272 = scmp.ne.s32.totalorder %s257, %s271
      %p273 = scmp.eq.s32.totalorder %s79, 0
      %p274 = por %p272, %p273
      %s276 = sadd.s32 %s275, 1
      %p279 = scmp.eq.s32.totalorder %s73, 1
      %p280 = scmp.ne.s32.totalorder %s275, %s277
      %p281 = scmp.eq.s32.totalorder %s73, 0
      %p282 = por %p280, %p281
      %p283 = scmp.ne.s32.totalorder %s275, %s277
      %p284 = scmp.eq.s32.totalorder %s78, 1
      %p285 = por %p283, %p284
      %p286 = scmp.ne.s32.totalorder %s277, %s278
      %p287 = scmp.eq.s32.totalorder %s78, 0
      %p288 = por %p286, %p287
      %p289 = scmp.ne.s32.totalorder %s277, %s278
      %p290 = scmp.eq.s32.totalorder %s79, 1
      %p291 = por %p289, %p290
      %p293 = scmp.ne.s32.totalorder %s278, %s292
      %p294 = scmp.eq.s32.totalorder %s79, 0
      %p295 = por %p293, %p294
      %s297 = sadd.s32 %s296, 1
      %p300 = scmp.eq.s32.totalorder %s73, 1
      %p301 = scmp.ne.s32.totalorder %s296, %s298
      %p302 = scmp.eq.s32.totalorder %s73, 0
      %p303 = por %p301, %p302
      %p304 = scmp.ne.s32.totalorder %s296, %s298
      %p305 = scmp.eq.s32.totalorder %s78, 1
      %p306 = por %p304, %p305
      %p307 = scmp.ne.s32.totalorder %s298, %s299
      %p308 = scmp.eq.s32.totalorder %s78, 0
      %p309 = por %p307, %p308
      %p310 = scmp.ne.s32.totalorder %s298, %s299
      %p311 = scmp.eq.s32.totalorder %s79, 1
      %p312 = por %p310, %p311
      %p314 = scmp.ne.s32.totalorder %s299, %s313
      %p315 = scmp.eq.s32.totalorder %s79, 0
      %p316 = por %p314, %p315
      %s318 = sadd.s32 %s317, 1
      %p321 = scmp.eq.s32.totalorder %s73, 1
      %p322 = scmp.ne.s32.totalorder %s317, %s319
      %p323 = scmp.eq.s32.totalorder %s73, 0
      %p324 = por %p322, %p323
      %p325 = scmp.ne.s32.totalorder %s317, %s319
      %p326 = scmp.eq.s32.totalorder %s78, 1
      %p327 = por %p325, %p326
      %p328 = scmp.ne.s32.totalorder %s319, %s320
      %p329 = scmp.eq.s32.totalorder %s78, 0
      %p330 = por %p328, %p329
      %p331 = scmp.ne.s32.totalorder %s319, %s320
      %p332 = scmp.eq.s32.totalorder %s79, 1
      %p333 = por %p331, %p332
      %p335 = scmp.ne.s32.totalorder %s320, %s334
      %p336 = scmp.eq.s32.totalorder %s79, 0
      %p337 = por %p335, %p336
      %s339 = sadd.s32 %s338, 1
      %p342 = scmp.eq.s32.totalorder %s73, 1
      %p343 = scmp.ne.s32.totalorder %s338, %s340
      %p344 = scmp.eq.s32.totalorder %s73, 0
      %p345 = por %p343, %p344
      %p346 = scmp.ne.s32.totalorder %s338, %s340
      %p347 = scmp.eq.s32.totalorder %s78, 1
      %p348 = por %p346, %p347
      %p349 = scmp.ne.s32.totalorder %s340, %s341
      %p350 = scmp.eq.s32.totalorder %s78, 0
      %p351 = por %p349, %p350
      %p352 = scmp.ne.s32.totalorder %s340, %s341
      %p353 = scmp.eq.s32.totalorder %s79, 1
      %p354 = por %p352, %p353
      %p356 = scmp.ne.s32.totalorder %s341, %s355
      %p357 = scmp.eq.s32.totalorder %s79, 0
      %p358 = por %p356, %p357
      %s360 = sadd.s32 %s359, 1
      %p363 = scmp.eq.s32.totalorder %s73, 1
      %p364 = scmp.ne.s32.totalorder %s359, %s361
      %p365 = scmp.eq.s32.totalorder %s73, 0
      %p366 = por %p364, %p365
      %p367 = scmp.ne.s32.totalorder %s359, %s361
      %p368 = scmp.eq.s32.totalorder %s78, 1
      %p369 = por %p367, %p368
      %p370 = scmp.ne.s32.totalorder %s361, %s362
      %p371 = scmp.eq.s32.totalorder %s78, 0
      %p372 = por %p370, %p371
      %p373 = scmp.ne.s32.totalorder %s361, %s362
      %p374 = scmp.eq.s32.totalorder %s79, 1
      %p375 = por %p373, %p374
      %p377 = scmp.ne.s32.totalorder %s362, %s376
      %p378 = scmp.eq.s32.totalorder %s79, 0
      %p379 = por %p377, %p378
      %s381 = sadd.s32 %s380, 1
      %p384 = scmp.eq.s32.totalorder %s73, 1
      %p385 = scmp.ne.s32.totalorder %s380, %s382
      %p386 = scmp.eq.s32.totalorder %s73, 0
      %p387 = por %p385, %p386
      %p388 = scmp.ne.s32.totalorder %s380, %s382
      %p389 = scmp.eq.s32.totalorder %s78, 1
      %p390 = por %p388, %p389
      %p391 = scmp.ne.s32.totalorder %s382, %s383
      %p392 = scmp.eq.s32.totalorder %s78, 0
      %p393 = por %p391, %p392
      %p394 = scmp.ne.s32.totalorder %s382, %s383
      %p395 = scmp.eq.s32.totalorder %s79, 1
      %p396 = por %p394, %p395
      %p398 = scmp.ne.s32.totalorder %s383, %s397
      %p399 = scmp.eq.s32.totalorder %s79, 0
      %p400 = por %p398, %p399
      %s402 = sadd.s32 %s401, 1
      %p405 = scmp.eq.s32.totalorder %s73, 1
      %p406 = scmp.ne.s32.totalorder %s401, %s403
      %p407 = scmp.eq.s32.totalorder %s73, 0
      %p408 = por %p406, %p407
      %p409 = scmp.ne.s32.totalorder %s401, %s403
      %p410 = scmp.eq.s32.totalorder %s78, 1
      %p411 = por %p409, %p410
      %p412 = scmp.ne.s32.totalorder %s403, %s404
      %p413 = scmp.eq.s32.totalorder %s78, 0
      %p414 = por %p412, %p413
      %p415 = scmp.ne.s32.totalorder %s403, %s404
      %p416 = scmp.eq.s32.totalorder %s79, 1
      %p417 = por %p415, %p416
      %p419 = scmp.ne.s32.totalorder %s404, %s418
      %p420 = scmp.eq.s32.totalorder %s79, 0
      %p421 = por %p419, %p420
      %s423 = sadd.s32 %s422, 1
      %p426 = scmp.eq.s32.totalorder %s73, 1
      %p427 = scmp.ne.s32.totalorder %s422, %s424
      %p428 = scmp.eq.s32.totalorder %s73, 0
      %p429 = por %p427, %p428
      %p430 = scmp.ne.s32.totalorder %s422, %s424
      %p431 = scmp.eq.s32.totalorder %s78, 1
      %p432 = por %p430, %p431
      %p433 = scmp.ne.s32.totalorder %s424, %s425
      %p434 = scmp.eq.s32.totalorder %s78, 0
      %p435 = por %p433, %p434
      %p436 = scmp.ne.s32.totalorder %s424, %s425
      %p437 = scmp.eq.s32.totalorder %s79, 1
      %p438 = por %p436, %p437
      %p440 = scmp.ne.s32.totalorder %s425, %s439
      %p441 = scmp.eq.s32.totalorder %s79, 0
      %p442 = por %p440, %p441
      %s444 = sadd.s32 %s443, 1
      %p447 = scmp.eq.s32.totalorder %s73, 1
      %p448 = scmp.ne.s32.totalorder %s443, %s445
      %p449 = scmp.eq.s32.totalorder %s73, 0
      %p450 = por %p448, %p449
      %p451 = scmp.ne.s32.totalorder %s443, %s445
      %p452 = scmp.eq.s32.totalorder %s78, 1
      %p453 = por %p451, %p452
      %p454 = scmp.ne.s32.totalorder %s445, %s446
      %p455 = scmp.eq.s32.totalorder %s78, 0
      %p456 = por %p454, %p455
      %p457 = scmp.ne.s32.totalorder %s445, %s446
      %p458 = scmp.eq.s32.totalorder %s79, 1
      %p459 = por %p457, %p458
      %p461 = scmp.ne.s32.totalorder %s446, %s460
      %p462 = scmp.eq.s32.totalorder %s79, 0
      %p463 = por %p461, %p462
      %s465 = sadd.s32 %s464, 1
      %p468 = scmp.eq.s32.totalorder %s73, 1
      %p469 = scmp.ne.s32.totalorder %s464, %s466
      %p470 = scmp.eq.s32.totalorder %s73, 0
      %p471 = por %p469, %p470
      %p472 = scmp.ne.s32.totalorder %s464, %s466
      %p473 = scmp.eq.s32.totalorder %s78, 1
      %p474 = por %p472, %p473
      %p475 = scmp.ne.s32.totalorder %s466, %s467
      %p476 = scmp.eq.s32.totalorder %s78, 0
      %p477 = por %p475, %p476
      %p478 = scmp.ne.s32.totalorder %s466, %s467
      %p479 = scmp.eq.s32.totalorder %s79, 1
      %p480 = por %p478, %p479
      %p482 = scmp.ne.s32.totalorder %s467, %s481
      %p483 = scmp.eq.s32.totalorder %s79, 0
      %p484 = por %p482, %p483
      %s486 = sadd.s32 %s485, 1
      %p489 = scmp.eq.s32.totalorder %s73, 1
      %p490 = scmp.ne.s32.totalorder %s485, %s487
      %p491 = scmp.eq.s32.totalorder %s73, 0
      %p492 = por %p490, %p491
      %p493 = scmp.ne.s32.totalorder %s485, %s487
      %p494 = scmp.eq.s32.totalorder %s78, 1
      %p495 = por %p493, %p494
      %p496 = scmp.ne.s32.totalorder %s487, %s488
      %p497 = scmp.eq.s32.totalorder %s78, 0
      %p498 = por %p496, %p497
      %p499 = scmp.ne.s32.totalorder %s487, %s488
      %p500 = scmp.eq.s32.totalorder %s79, 1
      %p501 = por %p499, %p500
      %p503 = scmp.ne.s32.totalorder %s488, %s502
      %p504 = scmp.eq.s32.totalorder %s79, 0
      %p505 = por %p503, %p504
      %s507 = sadd.s32 %s506, 1
      %p510 = scmp.eq.s32.totalorder %s73, 1
      %p511 = scmp.ne.s32.totalorder %s506, %s508
      %p512 = scmp.eq.s32.totalorder %s73, 0
      %p513 = por %p511, %p512
      %p514 = scmp.ne.s32.totalorder %s506, %s508
      %p515 = scmp.eq.s32.totalorder %s78, 1
      %p516 = por %p514, %p515
      %p517 = scmp.ne.s32.totalorder %s508, %s509
      %p518 = scmp.eq.s32.totalorder %s78, 0
      %p519 = por %p517, %p518
      %p520 = scmp.ne.s32.totalorder %s508, %s509
      %p521 = scmp.eq.s32.totalorder %s79, 1
      %p522 = por %p520, %p521
      %p524 = scmp.ne.s32.totalorder %s509, %s523
      %p525 = scmp.eq.s32.totalorder %s79, 0
      %p526 = por %p524, %p525
      %s528 = sadd.s32 %s527, 1
      %p531 = scmp.eq.s32.totalorder %s73, 1
      %p532 = scmp.ne.s32.totalorder %s527, %s529
      %p533 = scmp.eq.s32.totalorder %s73, 0
      %p534 = por %p532, %p533
      %p535 = scmp.ne.s32.totalorder %s527, %s529
      %p536 = scmp.eq.s32.totalorder %s78, 1
      %p537 = por %p535, %p536
      %p538 = scmp.ne.s32.totalorder %s529, %s530
      %p539 = scmp.eq.s32.totalorder %s78, 0
      %p540 = por %p538, %p539
      %p541 = scmp.ne.s32.totalorder %s529, %s530
      %p542 = scmp.eq.s32.totalorder %s79, 1
      %p543 = por %p541, %p542
      %p545 = scmp.ne.s32.totalorder %s530, %s544
      %p546 = scmp.eq.s32.totalorder %s79, 0
      %p547 = por %p545, %p546
      %s549 = sadd.s32 %s548, 1
      %p552 = scmp.eq.s32.totalorder %s73, 1
      %p553 = scmp.ne.s32.totalorder %s548, %s550
      %p554 = scmp.eq.s32.totalorder %s73, 0
      %p555 = por %p553, %p554
      %p556 = scmp.ne.s32.totalorder %s548, %s550
      %p557 = scmp.eq.s32.totalorder %s78, 1
      %p558 = por %p556, %p557
      %p559 = scmp.ne.s32.totalorder %s550, %s551
      %p560 = scmp.eq.s32.totalorder %s78, 0
      %p561 = por %p559, %p560
      %p562 = scmp.ne.s32.totalorder %s550, %s551
      %p563 = scmp.eq.s32.totalorder %s79, 1
      %p564 = por %p562, %p563
      %p566 = scmp.ne.s32.totalorder %s551, %s565
      %p567 = scmp.eq.s32.totalorder %s79, 0
      %p568 = por %p566, %p567
      %s570 = sadd.s32 %s569, 1
      %p573 = scmp.eq.s32.totalorder %s73, 1
      %p574 = scmp.ne.s32.totalorder %s569, %s571
      %p575 = scmp.eq.s32.totalorder %s73, 0
      %p576 = por %p574, %p575
      %p577 = scmp.ne.s32.totalorder %s569, %s571
      %p578 = scmp.eq.s32.totalorder %s78, 1
      %p579 = por %p577, %p578
      %p580 = scmp.ne.s32.totalorder %s571, %s572
      %p581 = scmp.eq.s32.totalorder %s78, 0
      %p582 = por %p580, %p581
      %p583 = scmp.ne.s32.totalorder %s571, %s572
      %p584 = scmp.eq.s32.totalorder %s79, 1
      %p585 = por %p583, %p584
      %p587 = scmp.ne.s32.totalorder %s572, %s586
      %p588 = scmp.eq.s32.totalorder %s79, 0
      %p589 = por %p587, %p588
      %s591 = sadd.s32 %s590, 1
      %p594 = scmp.eq.s32.totalorder %s73, 1
      %p595 = scmp.ne.s32.totalorder %s590, %s592
      %p596 = scmp.eq.s32.totalorder %s73, 0
      %p597 = por %p595, %p596
      %p598 = scmp.ne.s32.totalorder %s590, %s592
      %p599 = scmp.eq.s32.totalorder %s78, 1
      %p600 = por %p598, %p599
      %p601 = scmp.ne.s32.totalorder %s592, %s593
      %p602 = scmp.eq.s32.totalorder %s78, 0
      %p603 = por %p601, %p602
      %p604 = scmp.ne.s32.totalorder %s592, %s593
      %p605 = scmp.eq.s32.totalorder %s79, 1
      %p606 = por %p604, %p605
      %p608 = scmp.ne.s32.totalorder %s593, %s607
      %p609 = scmp.eq.s32.totalorder %s79, 0
      %p610 = por %p608, %p609
      %s612 = sadd.s32 %s611, 1
      %p615 = scmp.eq.s32.totalorder %s73, 1
      %p616 = scmp.ne.s32.totalorder %s611, %s613
      %p617 = scmp.eq.s32.totalorder %s73, 0
      %p618 = por %p616, %p617
      %p619 = scmp.ne.s32.totalorder %s611, %s613
      %p620 = scmp.eq.s32.totalorder %s78, 1
      %p621 = por %p619, %p620
      %p622 = scmp.ne.s32.totalorder %s613, %s614
      %p623 = scmp.eq.s32.totalorder %s78, 0
      %p624 = por %p622, %p623
      %p625 = scmp.ne.s32.totalorder %s613, %s614
      %p626 = scmp.eq.s32.totalorder %s79, 1
      %p627 = por %p625, %p626
      %p629 = scmp.ne.s32.totalorder %s614, %s628
      %p630 = scmp.eq.s32.totalorder %s79, 0
      %p631 = por %p629, %p630
      %s633 = sadd.s32 %s632, 1
      %p636 = scmp.eq.s32.totalorder %s73, 1
      %p637 = scmp.ne.s32.totalorder %s632, %s634
      %p638 = scmp.eq.s32.totalorder %s73, 0
      %p639 = por %p637, %p638
      %p640 = scmp.ne.s32.totalorder %s632, %s634
      %p641 = scmp.eq.s32.totalorder %s78, 1
      %p642 = por %p640, %p641
      %p643 = scmp.ne.s32.totalorder %s634, %s635
      %p644 = scmp.eq.s32.totalorder %s78, 0
      %p645 = por %p643, %p644
      %p646 = scmp.ne.s32.totalorder %s634, %s635
      %p647 = scmp.eq.s32.totalorder %s79, 1
      %p648 = por %p646, %p647
      %p650 = scmp.ne.s32.totalorder %s635, %s649
      %p651 = scmp.eq.s32.totalorder %s79, 0
      %p652 = por %p650, %p651
      %s654 = sadd.s32 %s653, 1
      %p657 = scmp.eq.s32.totalorder %s73, 1
      %p658 = scmp.ne.s32.totalorder %s653, %s655
      %p659 = scmp.eq.s32.totalorder %s73, 0
      %p660 = por %p658, %p659
      %p661 = scmp.ne.s32.totalorder %s653, %s655
      %p662 = scmp.eq.s32.totalorder %s78, 1
      %p663 = por %p661, %p662
      %p664 = scmp.ne.s32.totalorder %s655, %s656
      %p665 = scmp.eq.s32.totalorder %s78, 0
      %p666 = por %p664, %p665
      %p667 = scmp.ne.s32.totalorder %s655, %s656
      %p668 = scmp.eq.s32.totalorder %s79, 1
      %p669 = por %p667, %p668
      %p671 = scmp.ne.s32.totalorder %s656, %s670
      %p672 = scmp.eq.s32.totalorder %s79, 0
      %p673 = por %p671, %p672
      %s674 = ssub.s32 %s73, %s80
      %p675 = scmp.eq.s32.totalorder %s674, 0
      %s677 = sadd.s32 %s676, 1
      %s678 = scalar_select %p675, %s676, %s677
      %p681 = pneg %p675
      %p682 = scmp.eq.s32.totalorder %s73, 1
      %p683 = por %p681, %p682
      %p684 = scmp.ne.s32.totalorder %s676, %s679
      %p685 = scmp.eq.s32.totalorder %s73, 0
      %p686 = por %p684, %p685
      %p687 = scmp.ne.s32.totalorder %s676, %s679
      %p688 = scmp.eq.s32.totalorder %s78, 1
      %p689 = por %p687, %p688
      %p690 = scmp.ne.s32.totalorder %s679, %s680
      %p691 = scmp.eq.s32.totalorder %s78, 0
      %p692 = por %p690, %p691
      %p693 = scmp.ne.s32.totalorder %s679, %s680
      %p694 = scmp.eq.s32.totalorder %s79, 1
      %p695 = por %p693, %p694
      %p697 = scmp.ne.s32.totalorder %s680, %s696
      %p698 = scmp.eq.s32.totalorder %s79, 0
      %p699 = por %p697, %p698
      %s700 = ssub.s32 %s73, %s80
      %p701 = scmp.eq.s32.totalorder %s700, 0
      %s703 = sadd.s32 %s702, 1
      %s704 = scalar_select %p701, %s702, %s703
      %p707 = pneg %p701
      %p708 = scmp.eq.s32.totalorder %s73, 1
      %p709 = por %p707, %p708
      %p710 = scmp.ne.s32.totalorder %s702, %s705
      %p711 = scmp.eq.s32.totalorder %s73, 0
      %p712 = por %p710, %p711
      %p713 = scmp.ne.s32.totalorder %s702, %s705
      %p714 = scmp.eq.s32.totalorder %s78, 1
      %p715 = por %p713, %p714
      %p716 = scmp.ne.s32.totalorder %s705, %s706
      %p717 = scmp.eq.s32.totalorder %s78, 0
      %p718 = por %p716, %p717
      %p719 = scmp.ne.s32.totalorder %s705, %s706
      %p720 = scmp.eq.s32.totalorder %s79, 1
      %p721 = por %p719, %p720
      %p723 = scmp.ne.s32.totalorder %s706, %s722
      %p724 = scmp.eq.s32.totalorder %s79, 0
      %p725 = por %p723, %p724
      %p726 = scmp.le.s32.totalorder 1, %s73
      %p727 = scmp.lt.s32.totalorder %s73, 3
      %p728 = pnand %p726, %p727
      %p729 = pneg %p728
      // Predicated region
      $region9: #{pointnet_dense_cls.1} parent=5 // pred_check
        _
      $region10: #{pointnet_dense_cls.1} parent=5 // pred_check_branch
        %731 = sbr.rel (%p728) target = $region12
      $region11: #{pointnet_dense_cls.1} parent=5 // pred_region
        %s732 = ssub.s32 %s73, 1
        // Predicated region
        $region13: #{pointnet_dense_cls.1} parent=11 // pred_check
          %p733 = pneg %p120
        $region14: #{pointnet_dense_cls.1} parent=11 // pred_check_branch
          %735 = sbr.rel (%p733) target = $region16
        $region15: #{pointnet_dense_cls.1} parent=11 // pred_region
          _
        $region16: #{pointnet_dense_cls.1} parent=11 // pred_fallthru
          _
        // Predicated region
        $region17: #{pointnet_dense_cls.1} parent=11 // pred_check
          %p736 = pneg %p141
        $region18: #{pointnet_dense_cls.1} parent=11 // pred_check_branch
          %738 = sbr.rel (%p736) target = $region20
        $region19: #{pointnet_dense_cls.1} parent=11 // pred_region
          _
        $region20: #{pointnet_dense_cls.1} parent=11 // pred_fallthru
          _
        // Predicated region
        $region21: #{pointnet_dense_cls.1} parent=11 // pred_check
          %p739 = pneg %p162
        $region22: #{pointnet_dense_cls.1} parent=11 // pred_check_branch
          %741 = sbr.rel (%p739) target = $region24
        $region23: #{pointnet_dense_cls.1} parent=11 // pred_region
          _
        $region24: #{pointnet_dense_cls.1} parent=11 // pred_fallthru
          _
        // Predicated region
        $region25: #{pointnet_dense_cls.1} parent=11 // pred_check
          %p742 = pneg %p183
        $region26: #{pointnet_dense_cls.1} parent=11 // pred_check_branch
          %744 = sbr.rel (%p742) target = $region28
        $region27: #{pointnet_dense_cls.1} parent=11 // pred_region
          %s746 = ssub.s32 16, 16
          %747 = vsyncadd [#allocation3], %s746
          %s749 = sshll.u32 [#allocation2], 4
          %s750 = int_to_ptr.vmem [resolvable:$true] %s749
          %752 = dma.hbm_to_vmem [thread:$0]  %s9, 16, %s750, [#allocation3]
        $region28: #{pointnet_dense_cls.1} parent=11 // pred_fallthru
          _
        // Predicated region
        $region29: #{pointnet_dense_cls.1} parent=11 // pred_check
          %p753 = pneg %p204
        $region30: #{pointnet_dense_cls.1} parent=11 // pred_check_branch
          %755 = sbr.rel (%p753) target = $region32
        $region31: #{pointnet_dense_cls.1} parent=11 // pred_region
          %s757 = ssub.s32 8192, 8192
          %758 = vsyncadd [#allocation5], %s757
          %s759 = sshll.u32 [#allocation4], 4
          %s760 = int_to_ptr.vmem [resolvable:$true] %s759
          %765 = dma.hbm_to_vmem [thread:$0]  %s11, 8192, %s760, [#allocation5], 512, 512, 32
        $region32: #{pointnet_dense_cls.1} parent=11 // pred_fallthru
          _
        // Predicated region
        $region33: #{pointnet_dense_cls.1} parent=11 // pred_check
          %p766 = pneg %p225
        $region34: #{pointnet_dense_cls.1} parent=11 // pred_check_branch
          %768 = sbr.rel (%p766) target = $region36
        $region35: #{pointnet_dense_cls.1} parent=11 // pred_region
          _
        $region36: #{pointnet_dense_cls.1} parent=11 // pred_fallthru
          _
        // Predicated region
        $region37: #{pointnet_dense_cls.1} parent=11 // pred_check
          %p769 = pneg %p246
        $region38: #{pointnet_dense_cls.1} parent=11 // pred_check_branch
          %771 = sbr.rel (%p769) target = $region40
        $region39: #{pointnet_dense_cls.1} parent=11 // pred_region
          %s773 = ssub.s32 32768, 32768
          %774 = vsyncadd [#allocation5], %s773
          %s775 = sshll.u32 [#allocation6], 4
          %s776 = int_to_ptr.vmem [resolvable:$true] %s775
          %781 = dma.hbm_to_vmem [thread:$0]  %s15, 32768, %s776, [#allocation5], 256, 256, 16
        $region40: #{pointnet_dense_cls.1} parent=11 // pred_fallthru
          _
        // Predicated region
        $region41: #{pointnet_dense_cls.1} parent=11 // pred_check
          %p782 = pneg %p267
        $region42: #{pointnet_dense_cls.1} parent=11 // pred_check_branch
          %784 = sbr.rel (%p782) target = $region44
        $region43: #{pointnet_dense_cls.1} parent=11 // pred_region
          %s786 = ssub.s32 64, 64
          %787 = vsyncadd [#allocation8], %s786
          %s789 = sshll.u32 [#allocation7], 4
          %s790 = int_to_ptr.vmem [resolvable:$true] %s789
          %792 = dma.hbm_to_vmem [thread:$0]  %s17, 64, %s790, [#allocation8]
        $region44: #{pointnet_dense_cls.1} parent=11 // pred_fallthru
          _
        // Predicated region
        $region45: #{pointnet_dense_cls.1} parent=11 // pred_check
          %p793 = pneg %p288
        $region46: #{pointnet_dense_cls.1} parent=11 // pred_check_branch
          %795 = sbr.rel (%p793) target = $region48
        $region47: #{pointnet_dense_cls.1} parent=11 // pred_region
          %s797 = ssub.s32 8192, 8192
          %798 = vsyncadd [#allocation8], %s797
          %s799 = sshll.u32 [#allocation9], 4
          %s800 = int_to_ptr.vmem [resolvable:$true] %s799
          %805 = dma.hbm_to_vmem [thread:$0]  %s19, 8192, %s800, [#allocation8], 128, 128, 8
        $region48: #{pointnet_dense_cls.1} parent=11 // pred_fallthru
          _
        // Predicated region
        $region49: #{pointnet_dense_cls.1} parent=11 // pred_check
          %p806 = pneg %p309
        $region50: #{pointnet_dense_cls.1} parent=11 // pred_check_branch
          %808 = sbr.rel (%p806) target = $region52
        $region51: #{pointnet_dense_cls.1} parent=11 // pred_region
          %s810 = ssub.s32 32, 32
          %811 = vsyncadd [#allocation11], %s810
          %s813 = sshll.u32 [#allocation10], 4
          %s814 = int_to_ptr.vmem [resolvable:$true] %s813
          %816 = dma.hbm_to_vmem [thread:$0]  %s21, 32, %s814, [#allocation11]
        $region52: #{pointnet_dense_cls.1} parent=11 // pred_fallthru
          _
        // Predicated region
        $region53: #{pointnet_dense_cls.1} parent=11 // pred_check
          %p817 = pneg %p330
        $region54: #{pointnet_dense_cls.1} parent=11 // pred_check_branch
          %819 = sbr.rel (%p817) target = $region56
        $region55: #{pointnet_dense_cls.1} parent=11 // pred_region
          _
        $region56: #{pointnet_dense_cls.1} parent=11 // pred_fallthru
          _
        // Predicated region
        $region57: #{pointnet_dense_cls.1} parent=11 // pred_check
          %p820 = pneg %p351
        $region58: #{pointnet_dense_cls.1} parent=11 // pred_check_branch
          %822 = sbr.rel (%p820) target = $region60
        $region59: #{pointnet_dense_cls.1} parent=11 // pred_region
          _
        $region60: #{pointnet_dense_cls.1} parent=11 // pred_fallthru
          _
        // Predicated region
        $region61: #{pointnet_dense_cls.1} parent=11 // pred_check
          %p823 = pneg %p372
        $region62: #{pointnet_dense_cls.1} parent=11 // pred_check_branch
          %825 = sbr.rel (%p823) target = $region64
        $region63: #{pointnet_dense_cls.1} parent=11 // pred_region
          _
        $region64: #{pointnet_dense_cls.1} parent=11 // pred_fallthru
          _
        // Predicated region
        $region65: #{pointnet_dense_cls.1} parent=11 // pred_check
          %p826 = pneg %p393
        $region66: #{pointnet_dense_cls.1} parent=11 // pred_check_branch
          %828 = sbr.rel (%p826) target = $region68
        $region67: #{pointnet_dense_cls.1} parent=11 // pred_region
          _
        $region68: #{pointnet_dense_cls.1} parent=11 // pred_fallthru
          _
        // Predicated region
        $region69: #{pointnet_dense_cls.1} parent=11 // pred_check
          %p829 = pneg %p414
        $region70: #{pointnet_dense_cls.1} parent=11 // pred_check_branch
          %831 = sbr.rel (%p829) target = $region72
        $region71: #{pointnet_dense_cls.1} parent=11 // pred_region
          _
        $region72: #{pointnet_dense_cls.1} parent=11 // pred_fallthru
          _
        // Predicated region
        $region73: #{pointnet_dense_cls.1} parent=11 // pred_check
          %p832 = pneg %p435
        $region74: #{pointnet_dense_cls.1} parent=11 // pred_check_branch
          %834 = sbr.rel (%p832) target = $region76
        $region75: #{pointnet_dense_cls.1} parent=11 // pred_region
          _
        $region76: #{pointnet_dense_cls.1} parent=11 // pred_fallthru
          _
        // Predicated region
        $region77: #{pointnet_dense_cls.1} parent=11 // pred_check
          %p835 = pneg %p456
        $region78: #{pointnet_dense_cls.1} parent=11 // pred_check_branch
          %837 = sbr.rel (%p835) target = $region80
        $region79: #{pointnet_dense_cls.1} parent=11 // pred_region
          %s839 = ssub.s32 8192, 8192
          %840 = vsyncadd [#allocation11], %s839
          %s841 = sshll.u32 [#allocation12], 4
          %s842 = int_to_ptr.vmem [resolvable:$true] %s841
          %847 = dma.hbm_to_vmem [thread:$0]  %s35, 8192, %s842, [#allocation11], 512, 512, 32
        $region80: #{pointnet_dense_cls.1} parent=11 // pred_fallthru
          _
        // Predicated region
        $region81: #{pointnet_dense_cls.1} parent=11 // pred_check
          %p848 = pneg %p477
        $region82: #{pointnet_dense_cls.1} parent=11 // pred_check_branch
          %850 = sbr.rel (%p848) target = $region84
        $region83: #{pointnet_dense_cls.1} parent=11 // pred_region
          _
        $region84: #{pointnet_dense_cls.1} parent=11 // pred_fallthru
          _
        // Predicated region
        $region85: #{pointnet_dense_cls.1} parent=11 // pred_check
          %p851 = pneg %p498
        $region86: #{pointnet_dense_cls.1} parent=11 // pred_check_branch
          %853 = sbr.rel (%p851) target = $region88
        $region87: #{pointnet_dense_cls.1} parent=11 // pred_region
          %s855 = ssub.s32 32768, 32768
          %856 = vsyncadd [#allocation14], %s855
          %s857 = sshll.u32 [#allocation13], 4
          %s858 = int_to_ptr.vmem [resolvable:$true] %s857
          %863 = dma.hbm_to_vmem [thread:$0]  %s39, 32768, %s858, [#allocation14], 256, 256, 16
        $region88: #{pointnet_dense_cls.1} parent=11 // pred_fallthru
          _
        // Predicated region
        $region89: #{pointnet_dense_cls.1} parent=11 // pred_check
          %p864 = pneg %p519
        $region90: #{pointnet_dense_cls.1} parent=11 // pred_check_branch
          %866 = sbr.rel (%p864) target = $region92
        $region91: #{pointnet_dense_cls.1} parent=11 // pred_region
          _
        $region92: #{pointnet_dense_cls.1} parent=11 // pred_fallthru
          _
        // Predicated region
        $region93: #{pointnet_dense_cls.1} parent=11 // pred_check
          %p867 = pneg %p540
        $region94: #{pointnet_dense_cls.1} parent=11 // pred_check_branch
          %869 = sbr.rel (%p867) target = $region96
        $region95: #{pointnet_dense_cls.1} parent=11 // pred_region
          %s871 = ssub.s32 64, 64
          %872 = vsyncadd [#allocation14], %s871
          %s874 = sshll.u32 [#allocation15], 4
          %s875 = int_to_ptr.vmem [resolvable:$true] %s874
          %877 = dma.hbm_to_vmem [thread:$0]  %s43, 64, %s875, [#allocation14]
        $region96: #{pointnet_dense_cls.1} parent=11 // pred_fallthru
          _
        // Predicated region
        $region97: #{pointnet_dense_cls.1} parent=11 // pred_check
          %p878 = pneg %p561
        $region98: #{pointnet_dense_cls.1} parent=11 // pred_check_branch
          %880 = sbr.rel (%p878) target = $region100
        $region99: #{pointnet_dense_cls.1} parent=11 // pred_region
          %s882 = ssub.s32 8192, 8192
          %883 = vsyncadd [#allocation17], %s882
          %s884 = sshll.u32 [#allocation16], 4
          %s885 = int_to_ptr.vmem [resolvable:$true] %s884
          %890 = dma.hbm_to_vmem [thread:$0]  %s45, 8192, %s885, [#allocation17], 128, 128, 8
        $region100: #{pointnet_dense_cls.1} parent=11 // pred_fallthru
          _
        // Predicated region
        $region101: #{pointnet_dense_cls.1} parent=11 // pred_check
          %p891 = pneg %p582
        $region102: #{pointnet_dense_cls.1} parent=11 // pred_check_branch
          %893 = sbr.rel (%p891) target = $region104
        $region103: #{pointnet_dense_cls.1} parent=11 // pred_region
          %s895 = ssub.s32 32, 32
          %896 = vsyncadd [#allocation17], %s895
          %s898 = sshll.u32 [#allocation18], 4
          %s899 = int_to_ptr.vmem [resolvable:$true] %s898
          %901 = dma.hbm_to_vmem [thread:$0]  %s47, 32, %s899, [#allocation17]
        $region104: #{pointnet_dense_cls.1} parent=11 // pred_fallthru
          _
        // Predicated region
        $region105: #{pointnet_dense_cls.1} parent=11 // pred_check
          %p902 = pneg %p603
        $region106: #{pointnet_dense_cls.1} parent=11 // pred_check_branch
          %904 = sbr.rel (%p902) target = $region108
        $region107: #{pointnet_dense_cls.1} parent=11 // pred_region
          _
        $region108: #{pointnet_dense_cls.1} parent=11 // pred_fallthru
          _
        // Predicated region
        $region109: #{pointnet_dense_cls.1} parent=11 // pred_check
          %p905 = pneg %p624
        $region110: #{pointnet_dense_cls.1} parent=11 // pred_check_branch
          %907 = sbr.rel (%p905) target = $region112
        $region111: #{pointnet_dense_cls.1} parent=11 // pred_region
          %s909 = ssub.s32 16, 16
          %910 = vsyncadd [#allocation20], %s909
          %s912 = sshll.u32 [#allocation19], 4
          %s913 = int_to_ptr.vmem [resolvable:$true] %s912
          %915 = dma.hbm_to_vmem [thread:$0]  %s51, 16, %s913, [#allocation20]
        $region112: #{pointnet_dense_cls.1} parent=11 // pred_fallthru
          _
        // Predicated region
        $region113: #{pointnet_dense_cls.1} parent=11 // pred_check
          %p916 = pneg %p645
        $region114: #{pointnet_dense_cls.1} parent=11 // pred_check_branch
          %918 = sbr.rel (%p916) target = $region116
        $region115: #{pointnet_dense_cls.1} parent=11 // pred_region
          _
        $region116: #{pointnet_dense_cls.1} parent=11 // pred_fallthru
          _
        // Predicated region
        $region117: #{pointnet_dense_cls.1} parent=11 // pred_check
          %p919 = pneg %p666
        $region118: #{pointnet_dense_cls.1} parent=11 // pred_check_branch
          %921 = sbr.rel (%p919) target = $region120
        $region119: #{pointnet_dense_cls.1} parent=11 // pred_region
          %s923 = ssub.s32 16, 16
          %924 = vsyncadd [#allocation20], %s923
          %s926 = sshll.u32 [#allocation21], 4
          %s927 = int_to_ptr.vmem [resolvable:$true] %s926
          %929 = dma.hbm_to_vmem [thread:$0]  %s55, 16, %s927, [#allocation20]
        $region120: #{pointnet_dense_cls.1} parent=11 // pred_fallthru
          _
      $region12: #{pointnet_dense_cls.1} parent=5 // pred_fallthru
        _
      %p930 = scmp.lt.s32.totalorder %s73, 2
      // Predicated region
      $region121: #{pointnet_dense_cls.1} parent=5 // pred_check
        %p931 = pneg %p930
      $region122: #{pointnet_dense_cls.1} parent=5 // pred_check_branch
        %933 = sbr.rel (%p931) target = $region124
      $region123: #{pointnet_dense_cls.1} parent=5 // pred_region
        // Predicated region
        $region125: #{pointnet_dense_cls.1} parent=123 // pred_check
          %p934 = pneg %p93
        $region126: #{pointnet_dense_cls.1} parent=123 // pred_check_branch
          %936 = sbr.rel (%p934) target = $region128
        $region127: #{pointnet_dense_cls.1} parent=123 // pred_region
          %p937 = scmp.lt.s32.totalorder %s73, 1
          %s938 = scalar_select %p937, %s73, 1
          %s939 = smul.addr %s938, 16
          %s940 = smul.addr %s939, 8
          %s941 = scalar_lea.vmem %s1, %s940
        $region128: #{pointnet_dense_cls.1} parent=123 // pred_fallthru
          _
      $region124: #{pointnet_dense_cls.1} parent=5 // pred_fallthru
        _
      %p942 = scmp.le.s32.totalorder 1, %s73
      %p943 = scmp.lt.s32.totalorder %s73, 3
      %p944 = pnand %p942, %p943
      %p945 = pneg %p944
      // Predicated region
      $region129: #{pointnet_dense_cls.1} parent=5 // pred_check
        _
      $region130: #{pointnet_dense_cls.1} parent=5 // pred_check_branch
        %947 = sbr.rel (%p944) target = $region132
      $region131: #{pointnet_dense_cls.1} parent=5 // pred_region
        %s948 = ssub.s32 %s73, 1
        // Predicated region
        $region133: #{pointnet_dense_cls.1} parent=131 // pred_check
          %p949 = pneg %p183
        $region134: #{pointnet_dense_cls.1} parent=131 // pred_check_branch
          %951 = sbr.rel (%p949) target = $region136
        $region135: #{pointnet_dense_cls.1} parent=131 // pred_region
          %952 = dma.done [#allocation3], 16
        $region136: #{pointnet_dense_cls.1} parent=131 // pred_fallthru
          _
        // Predicated region
        $region137: #{pointnet_dense_cls.1} parent=131 // pred_check
          %p953 = pneg %p204
        $region138: #{pointnet_dense_cls.1} parent=131 // pred_check_branch
          %955 = sbr.rel (%p953) target = $region140
        $region139: #{pointnet_dense_cls.1} parent=131 // pred_region
          %956 = dma.done [#allocation5], 8192
        $region140: #{pointnet_dense_cls.1} parent=131 // pred_fallthru
          _
        // Predicated region
        $region141: #{pointnet_dense_cls.1} parent=131 // pred_check
          %p957 = pneg %p246
        $region142: #{pointnet_dense_cls.1} parent=131 // pred_check_branch
          %959 = sbr.rel (%p957) target = $region144
        $region143: #{pointnet_dense_cls.1} parent=131 // pred_region
          %960 = dma.done [#allocation5], 32768
        $region144: #{pointnet_dense_cls.1} parent=131 // pred_fallthru
          _
        // Predicated region
        $region145: #{pointnet_dense_cls.1} parent=131 // pred_check
          %p961 = pneg %p267
        $region146: #{pointnet_dense_cls.1} parent=131 // pred_check_branch
          %963 = sbr.rel (%p961) target = $region148
        $region147: #{pointnet_dense_cls.1} parent=131 // pred_region
          %964 = dma.done [#allocation8], 64
        $region148: #{pointnet_dense_cls.1} parent=131 // pred_fallthru
          _
        // Predicated region
        $region149: #{pointnet_dense_cls.1} parent=131 // pred_check
          %p965 = pneg %p288
        $region150: #{pointnet_dense_cls.1} parent=131 // pred_check_branch
          %967 = sbr.rel (%p965) target = $region152
        $region151: #{pointnet_dense_cls.1} parent=131 // pred_region
          %968 = dma.done [#allocation8], 8192
        $region152: #{pointnet_dense_cls.1} parent=131 // pred_fallthru
          _
        // Predicated region
        $region153: #{pointnet_dense_cls.1} parent=131 // pred_check
          %p969 = pneg %p309
        $region154: #{pointnet_dense_cls.1} parent=131 // pred_check_branch
          %971 = sbr.rel (%p969) target = $region156
        $region155: #{pointnet_dense_cls.1} parent=131 // pred_region
          %972 = dma.done [#allocation11], 32
        $region156: #{pointnet_dense_cls.1} parent=131 // pred_fallthru
          _
        // Predicated region
        $region157: #{pointnet_dense_cls.1} parent=131 // pred_check
          %p973 = pneg %p456
        $region158: #{pointnet_dense_cls.1} parent=131 // pred_check_branch
          %975 = sbr.rel (%p973) target = $region160
        $region159: #{pointnet_dense_cls.1} parent=131 // pred_region
          %976 = dma.done [#allocation11], 8192
        $region160: #{pointnet_dense_cls.1} parent=131 // pred_fallthru
          _
        // Predicated region
        $region161: #{pointnet_dense_cls.1} parent=131 // pred_check
          %p977 = pneg %p498
        $region162: #{pointnet_dense_cls.1} parent=131 // pred_check_branch
          %979 = sbr.rel (%p977) target = $region164
        $region163: #{pointnet_dense_cls.1} parent=131 // pred_region
          %980 = dma.done [#allocation14], 32768
        $region164: #{pointnet_dense_cls.1} parent=131 // pred_fallthru
          _
        // Predicated region
        $region165: #{pointnet_dense_cls.1} parent=131 // pred_check
          %p981 = pneg %p540
        $region166: #{pointnet_dense_cls.1} parent=131 // pred_check_branch
          %983 = sbr.rel (%p981) target = $region168
        $region167: #{pointnet_dense_cls.1} parent=131 // pred_region
          %984 = dma.done [#allocation14], 64
        $region168: #{pointnet_dense_cls.1} parent=131 // pred_fallthru
          _
        // Predicated region
        $region169: #{pointnet_dense_cls.1} parent=131 // pred_check
          %p985 = pneg %p561
        $region170: #{pointnet_dense_cls.1} parent=131 // pred_check_branch
          %987 = sbr.rel (%p985) target = $region172
        $region171: #{pointnet_dense_cls.1} parent=131 // pred_region
          %988 = dma.done [#allocation17], 8192
        $region172: #{pointnet_dense_cls.1} parent=131 // pred_fallthru
          _
        // Predicated region
        $region173: #{pointnet_dense_cls.1} parent=131 // pred_check
          %p989 = pneg %p582
        $region174: #{pointnet_dense_cls.1} parent=131 // pred_check_branch
          %991 = sbr.rel (%p989) target = $region176
        $region175: #{pointnet_dense_cls.1} parent=131 // pred_region
          %992 = dma.done [#allocation17], 32
        $region176: #{pointnet_dense_cls.1} parent=131 // pred_fallthru
          _
        // Predicated region
        $region177: #{pointnet_dense_cls.1} parent=131 // pred_check
          %p993 = pneg %p624
        $region178: #{pointnet_dense_cls.1} parent=131 // pred_check_branch
          %995 = sbr.rel (%p993) target = $region180
        $region179: #{pointnet_dense_cls.1} parent=131 // pred_region
          %996 = dma.done [#allocation20], 16
        $region180: #{pointnet_dense_cls.1} parent=131 // pred_fallthru
          _
        // Predicated region
        $region181: #{pointnet_dense_cls.1} parent=131 // pred_check
          %p997 = pneg %p666
        $region182: #{pointnet_dense_cls.1} parent=131 // pred_check_branch
          %999 = sbr.rel (%p997) target = $region184
        $region183: #{pointnet_dense_cls.1} parent=131 // pred_region
          %1000 = dma.done [#allocation20], 16
        $region184: #{pointnet_dense_cls.1} parent=131 // pred_fallthru
          _
        %p1001 = scmp.lt.s32.totalorder %s78, 1
        %s1002 = scalar_select %p1001, %s78, 1
        %s1003 = smul.addr %s1002, 16
        %s1004 = smul.addr %s1003, 8
        %s1005 = scalar_lea.vmem %s1, %s1004
        %p1006 = pneg %p99
        %p1007 = pneg %p96
        %p1008 = pneg %p120
        %p1009 = pneg %p117
        %p1010 = pneg %p141
        %p1011 = pneg %p138
        %p1012 = pneg %p162
        %p1013 = pneg %p159
        %p1014 = pneg %p183
        %p1015 = pneg %p180
        %p1016 = pneg %p204
        %p1017 = pneg %p201
        %p1018 = pneg %p225
        %p1019 = pneg %p222
        %p1020 = pneg %p246
        %p1021 = pneg %p243
        %p1022 = pneg %p267
        %p1023 = pneg %p264
        %p1024 = pneg %p288
        %p1025 = pneg %p285
        %p1026 = pneg %p309
        %p1027 = pneg %p306
        %p1028 = pneg %p330
        %p1029 = pneg %p327
        %p1030 = pneg %p351
        %p1031 = pneg %p348
        %p1032 = pneg %p372
        %p1033 = pneg %p369
        %p1034 = pneg %p393
        %p1035 = pneg %p390
        %p1036 = pneg %p414
        %p1037 = pneg %p411
        %p1038 = pneg %p435
        %p1039 = pneg %p432
        %p1040 = pneg %p456
        %p1041 = pneg %p453
        %p1042 = pneg %p477
        %p1043 = pneg %p474
        %p1044 = pneg %p498
        %p1045 = pneg %p495
        %p1046 = pneg %p519
        %p1047 = pneg %p516
        %p1048 = pneg %p540
        %p1049 = pneg %p537
        %p1050 = pneg %p561
        %p1051 = pneg %p558
        %p1052 = pneg %p582
        %p1053 = pneg %p579
        %p1054 = pneg %p603
        %p1055 = pneg %p600
        %p1056 = pneg %p624
        %p1057 = pneg %p621
        %p1058 = pneg %p645
        %p1059 = pneg %p642
        %p1060 = pneg %p666
        %p1061 = pneg %p663
        %p1062 = pneg %p692
        %p1063 = pneg %p689
        %p1064 = scmp.lt.s32.totalorder %s78, 1
        %s1065 = scalar_select %p1064, %s78, 1
        %s1066 = smul.addr %s1065, 16
        %s1067 = smul.addr %s1066, 8
        %s1068 = scalar_lea.vmem %s57, %s1067
        %p1069 = pneg %p718
        %p1070 = pneg %p715
        %p1071 = scmp.lt.s32.totalorder %s78, 1
        %s1072 = scalar_select %p1071, %s78, 1
        %s1073 = scalar_lea.vmem %s59, %s1072
        %p1074 = scmp.lt.s32.totalorder %s78, 1
        %s1075 = scalar_select %p1074, %s78, 1
        %s1076 = smul.addr %s1075, 16
        %s1077 = smul.addr %s1076, 8
        %s1078 = scalar_lea.vmem %s1, %s1077
        %p1079 = scmp.lt.s32.totalorder %s78, 1
        %s1080 = scalar_select %p1079, %s78, 1
        %s1081 = smul.addr %s1080, 16
        %s1082 = smul.addr %s1081, 8
        %s1083 = scalar_lea.vmem %s57, %s1082
        %p1084 = scmp.lt.s32.totalorder %s78, 1
        %s1085 = scalar_select %p1084, %s78, 1
        %s1086 = scalar_lea.vmem %s59, %s1085
        %v1088 = vld [vmem:[%s1078] sm:$0xff]
        %v1089 = vld [vmem:[%s1078 + $0x8] sm:$0xff]
        %v1090 = vld [vmem:[%s1078 + $0x10] sm:$0xff]
        %v1091 = vld [vmem:[%s1078 + $0x18] sm:$0xff]
        %v1092 = vld [vmem:[%s1078 + $0x20] sm:$0xff]
        %v1093 = vld [vmem:[%s1078 + $0x28] sm:$0xff]
        %v1094 = vld [vmem:[%s1078 + $0x30] sm:$0xff]
        %v1095 = vld [vmem:[%s1078 + $0x38] sm:$0xff]
        %v1096 = vld [vmem:[%s1078 + $0x40] sm:$0xff]
        %v1097 = vld [vmem:[%s1078 + $0x48] sm:$0xff]
        %v1098 = vld [vmem:[%s1078 + $0x50] sm:$0xff]
        %v1099 = vld [vmem:[%s1078 + $0x58] sm:$0xff]
        %v1100 = vld [vmem:[%s1078 + $0x60] sm:$0xff]
        %v1101 = vld [vmem:[%s1078 + $0x68] sm:$0xff]
        %v1102 = vld [vmem:[%s1078 + $0x70] sm:$0xff]
        %v1103 = vld [vmem:[%s1078 + $0x78] sm:$0xff]
        %v1104 = vpack.c.bf16 %v1089, %v1088
        %v1105 = vpack.c.bf16 %v1091, %v1090
        %v1106 = vpack.c.bf16 %v1093, %v1092
        %v1107 = vpack.c.bf16 %v1095, %v1094
        %v1108 = vpack.c.bf16 %v1097, %v1096
        %v1109 = vpack.c.bf16 %v1099, %v1098
        %v1110 = vpack.c.bf16 %v1101, %v1100
        %v1111 = vpack.c.bf16 %v1103, %v1102
        %v1112 = vld [vmem:[%s3] sm:$0x3]
        %v1113 = vld [vmem:[%s5] sm:$0x1]
        %v1115 = vlaneseq
        %v1116 = vshrl.u32 %v1115, 7
        %v1117 = vsub.s32 0, %v1116
        %v1118 = vrot.slane %v1113, %v1117
        %vm1120 = vcmask 23552
        %v1122 = vsel %vm1120, %v1104, 0
        %v1125 = vsel %vm1120, %v1105, 0
        %v1128 = vsel %vm1120, %v1106, 0
        %v1131 = vsel %vm1120, %v1107, 0
        %v1134 = vsel %vm1120, %v1108, 0
        %v1137 = vsel %vm1120, %v1109, 0
        %v1140 = vsel %vm1120, %v1110, 0
        %v1143 = vsel %vm1120, %v1111, 0
        %vm1145 = vcmask 1040384
        %vm1146 = vcmask 1041408
        %v1147 = vsel %vm1145, 4294967295, 65535
        %v1148 = vsel %vm1146, %v1147, 0
        %v1150 = vand.u32 %v1112, %v1148
        %1152 = vmatprep.subr.bf16.mxu0 0
        %1153 = vmatpush1.bf16.msra.mxu0 0
        %1154 = vmatprep.subr.bf16.mxu0 0
        %1155 = vmatpush1.bf16.msra.mxu0 0
        %1156 = vmatprep.subr.bf16.mxu0 0
        %1157 = vmatpush1.bf16.msra.mxu0 0
        %1158 = vmatprep.subr.bf16.mxu0 0
        %1159 = vmatpush1.bf16.msra.mxu0 0
        %1160 = vmatprep.subr.bf16.mxu0 0
        %1161 = vmatpush1.bf16.msra.mxu0 0
        %1162 = vmatprep.subr.bf16.mxu0 0
        %1163 = vmatpush1.bf16.msra.mxu0 0
        %1164 = vmatprep.subr.bf16.mxu0 0
        %1165 = vmatpush1.bf16.msra.mxu0 0
        %1166 = vmatprep.subr.bf16.mxu0 0
        %1167 = vmatpush1.bf16.msra.mxu0 %v1150
        %1168 = vmatprep.subr.bf16.mxu0 0
        %1169 = vmatpush2.bf16.msra.mxu0 0
        %1170 = vmatprep.subr.bf16.mxu0 0
        %1171 = vmatpush2.bf16.msra.mxu0 0
        %1172 = vmatprep.subr.bf16.mxu0 0
        %1173 = vmatpush2.bf16.msra.mxu0 0
        %1174 = vmatprep.subr.bf16.mxu0 0
        %1175 = vmatpush2.bf16.msra.mxu0 0
        %1176 = vmatprep.subr.bf16.mxu0 0
        %1177 = vmatpush2.bf16.msra.mxu0 0
        %1178 = vmatprep.subr.bf16.mxu0 0
        %1179 = vmatpush2.bf16.msra.mxu0 0
        %1180 = vmatprep.subr.bf16.mxu0 0
        %1181 = vmatpush2.bf16.msra.mxu0 0
        %1182 = vmatprep.subr.bf16.mxu0 0
        %1183 = vmatpush2.bf16.msra.mxu0 0
        %1184 = vmatprep.mubr.bf16.mxu0 0
        %1185 = vmatmul.mubr.bf16.gmra.mxu0 %v1122
        %v1186 = vpop.f32.mrf.mxu0
        %v1187 = vadd.f32 %v1118, %v1186
        %v1188 = vpop.f32.mrf.mxu0
        %v1189 = vpop.f32.mrf.mxu0
        %v1190 = vadd.f32 %v1118, %v1189
        %v1191 = vpop.f32.mrf.mxu0
        %1192 = vmatprep.mubr.bf16.mxu0 0
        %1193 = vmatmul.mubr.bf16.gmra.mxu0 %v1125
        %v1194 = vpop.f32.mrf.mxu0
        %v1195 = vadd.f32 %v1118, %v1194
        %v1196 = vpop.f32.mrf.mxu0
        %v1197 = vpop.f32.mrf.mxu0
        %v1198 = vadd.f32 %v1118, %v1197
        %v1199 = vpop.f32.mrf.mxu0
        %1200 = vmatprep.mubr.bf16.mxu0 0
        %1201 = vmatmul.mubr.bf16.gmra.mxu0 %v1128
        %v1202 = vpop.f32.mrf.mxu0
        %v1203 = vadd.f32 %v1118, %v1202
        %v1204 = vpop.f32.mrf.mxu0
        %v1205 = vpop.f32.mrf.mxu0
        %v1206 = vadd.f32 %v1118, %v1205
        %v1207 = vpop.f32.mrf.mxu0
        %1208 = vmatprep.mubr.bf16.mxu0 0
        %1209 = vmatmul.mubr.bf16.gmra.mxu0 %v1131
        %v1210 = vpop.f32.mrf.mxu0
        %v1211 = vadd.f32 %v1118, %v1210
        %v1212 = vpop.f32.mrf.mxu0
        %v1213 = vpop.f32.mrf.mxu0
        %v1214 = vadd.f32 %v1118, %v1213
        %v1215 = vpop.f32.mrf.mxu0
        %1216 = vmatprep.mubr.bf16.mxu0 0
        %1217 = vmatmul.mubr.bf16.gmra.mxu0 %v1134
        %v1218 = vpop.f32.mrf.mxu0
        %v1219 = vadd.f32 %v1118, %v1218
        %v1220 = vpop.f32.mrf.mxu0
        %v1221 = vpop.f32.mrf.mxu0
        %v1222 = vadd.f32 %v1118, %v1221
        %v1223 = vpop.f32.mrf.mxu0
        %1224 = vmatprep.mubr.bf16.mxu0 0
        %1225 = vmatmul.mubr.bf16.gmra.mxu0 %v1137
        %v1226 = vpop.f32.mrf.mxu0
        %v1227 = vadd.f32 %v1118, %v1226
        %v1228 = vpop.f32.mrf.mxu0
        %v1229 = vpop.f32.mrf.mxu0
        %v1230 = vadd.f32 %v1118, %v1229
        %v1231 = vpop.f32.mrf.mxu0
        %1232 = vmatprep.mubr.bf16.mxu0 0
        %1233 = vmatmul.mubr.bf16.gmra.mxu0 %v1140
        %v1234 = vpop.f32.mrf.mxu0
        %v1235 = vadd.f32 %v1118, %v1234
        %v1236 = vpop.f32.mrf.mxu0
        %v1237 = vpop.f32.mrf.mxu0
        %v1238 = vadd.f32 %v1118, %v1237
        %v1239 = vpop.f32.mrf.mxu0
        %1240 = vmatprep.mubr.bf16.mxu0 0
        %1241 = vmatmul.mubr.bf16.gmra.mxu0 %v1143
        %v1242 = vpop.f32.mrf.mxu0
        %v1243 = vadd.f32 %v1118, %v1242
        %v1244 = vpop.f32.mrf.mxu0
        %v1245 = vpop.f32.mrf.mxu0
        %v1246 = vadd.f32 %v1118, %v1245
        %v1247 = vpop.f32.mrf.mxu0
        %1248 = vdwg.mxu0
        %v1249 = vmax.f32 %v1187, 0.0
        %v1250 = vmax.f32 %v1190, 0.0
        %v1251 = vmax.f32 %v1195, 0.0
        %v1252 = vmax.f32 %v1198, 0.0
        %v1253 = vmax.f32 %v1203, 0.0
        %v1254 = vmax.f32 %v1206, 0.0
        %v1255 = vmax.f32 %v1211, 0.0
        %v1256 = vmax.f32 %v1214, 0.0
        %v1257 = vmax.f32 %v1219, 0.0
        %v1258 = vmax.f32 %v1222, 0.0
        %v1259 = vmax.f32 %v1227, 0.0
        %v1260 = vmax.f32 %v1230, 0.0
        %v1261 = vmax.f32 %v1235, 0.0
        %v1262 = vmax.f32 %v1238, 0.0
        %v1263 = vmax.f32 %v1243, 0.0
        %v1264 = vmax.f32 %v1246, 0.0
        %v1265 = vpack.c.bf16 %v1250, %v1249
        %v1266 = vpack.c.bf16 %v1252, %v1251
        %v1267 = vpack.c.bf16 %v1254, %v1253
        %v1268 = vpack.c.bf16 %v1256, %v1255
        %v1269 = vpack.c.bf16 %v1258, %v1257
        %v1270 = vpack.c.bf16 %v1260, %v1259
        %v1271 = vpack.c.bf16 %v1262, %v1261
        %v1272 = vpack.c.bf16 %v1264, %v1263
        %v1273 = vld [vmem:[%s7] sm:$0xf]
        %v1274 = vld [vmem:[%s7 + $0x4] sm:$0xf]
        %v1275 = vld [vmem:[%s7 + $0x8] sm:$0xf]
        %v1276 = vld [vmem:[%s7 + $0xc] sm:$0xf]
        %v1277 = vld [vmem:[%s7 + $0x10] sm:$0xf]
        %v1278 = vld [vmem:[%s7 + $0x14] sm:$0xf]
        %v1279 = vld [vmem:[%s7 + $0x18] sm:$0xf]
        %v1280 = vld [vmem:[%s7 + $0x1c] sm:$0xf]
        %v1281 = vld [vmem:[#allocation2] sm:$0x1]
        %v1283 = vlaneseq
        %v1284 = vshrl.u32 %v1283, 7
        %v1285 = vsub.s32 0, %v1284
        %v1286 = vrot.slane %v1281, %v1285
        %v1296 = vunpack.c.l.b16 %v1273
        %v1297 = vunpack.c.l.b16 %v1274
        %v1298 = vunpack.c.l.b16 %v1275
        %v1299 = vunpack.c.l.b16 %v1276
        %v1300 = vunpack.c.l.b16 %v1277
        %v1301 = vunpack.c.l.b16 %v1278
        %v1302 = vunpack.c.l.b16 %v1279
        %v1303 = vunpack.c.l.b16 %v1280
        %v1304 = vpack.c.b16 %v1297, %v1296
        %v1305 = vpack.c.b16 %v1299, %v1298
        %v1306 = vpack.c.b16 %v1301, %v1300
        %v1307 = vpack.c.b16 %v1303, %v1302
        %vm1312 = vcmask 523264
        %v1314 = vsel %vm1312, %v1265, 0
        %v1317 = vsel %vm1312, %v1266, 0
        %v1320 = vsel %vm1312, %v1267, 0
        %v1323 = vsel %vm1312, %v1268, 0
        %v1326 = vsel %vm1312, %v1269, 0
        %v1329 = vsel %vm1312, %v1270, 0
        %v1332 = vsel %vm1312, %v1271, 0
        %v1335 = vsel %vm1312, %v1272, 0
        %1337 = vmatprep.subr.bf16.mxu0 0
        %1338 = vmatpush1.bf16.msra.mxu0 0
        %1339 = vmatprep.subr.bf16.mxu0 0
        %1340 = vmatpush1.bf16.msra.mxu0 0
        %1341 = vmatprep.subr.bf16.mxu0 0
        %1342 = vmatpush1.bf16.msra.mxu0 0
        %1343 = vmatprep.subr.bf16.mxu0 0
        %1344 = vmatpush1.bf16.msra.mxu0 0
        %1345 = vmatprep.subr.bf16.mxu0 0
        %1346 = vmatpush1.bf16.msra.mxu0 %v1307
        %1347 = vmatprep.subr.bf16.mxu0 0
        %1348 = vmatpush1.bf16.msra.mxu0 %v1306
        %1349 = vmatprep.subr.bf16.mxu0 0
        %1350 = vmatpush1.bf16.msra.mxu0 %v1305
        %1351 = vmatprep.subr.bf16.mxu0 0
        %1352 = vmatpush1.bf16.msra.mxu0 %v1304
        %1353 = vmatprep.subr.bf16.mxu0 0
        %1354 = vmatpush2.bf16.msra.mxu0 0
        %1355 = vmatprep.subr.bf16.mxu0 0
        %1356 = vmatpush2.bf16.msra.mxu0 0
        %1357 = vmatprep.subr.bf16.mxu0 0
        %1358 = vmatpush2.bf16.msra.mxu0 0
        %1359 = vmatprep.subr.bf16.mxu0 0
        %1360 = vmatpush2.bf16.msra.mxu0 0
        %1361 = vmatprep.subr.bf16.mxu0 0
        %1362 = vmatpush2.bf16.msra.mxu0 0
        %1363 = vmatprep.subr.bf16.mxu0 0
        %1364 = vmatpush2.bf16.msra.mxu0 0
        %1365 = vmatprep.subr.bf16.mxu0 0
        %1366 = vmatpush2.bf16.msra.mxu0 0
        %1367 = vmatprep.subr.bf16.mxu0 0
        %1368 = vmatpush2.bf16.msra.mxu0 0
        %1369 = vmatprep.mubr.bf16.mxu0 0
        %1370 = vmatmul.mubr.bf16.gmra.mxu0 %v1314
        %v1371 = vpop.f32.mrf.mxu0
        %v1372 = vadd.f32 %v1286, %v1371
        %v1373 = vpop.f32.mrf.mxu0
        %v1374 = vpop.f32.mrf.mxu0
        %v1375 = vadd.f32 %v1286, %v1374
        %v1376 = vpop.f32.mrf.mxu0
        %1377 = vmatprep.mubr.bf16.mxu0 0
        %1378 = vmatmul.mubr.bf16.gmra.mxu0 %v1317
        %v1379 = vpop.f32.mrf.mxu0
        %v1380 = vadd.f32 %v1286, %v1379
        %v1381 = vpop.f32.mrf.mxu0
        %v1382 = vpop.f32.mrf.mxu0
        %v1383 = vadd.f32 %v1286, %v1382
        %v1384 = vpop.f32.mrf.mxu0
        %1385 = vmatprep.mubr.bf16.mxu0 0
        %1386 = vmatmul.mubr.bf16.gmra.mxu0 %v1320
        %v1387 = vpop.f32.mrf.mxu0
        %v1388 = vadd.f32 %v1286, %v1387
        %v1389 = vpop.f32.mrf.mxu0
        %v1390 = vpop.f32.mrf.mxu0
        %v1391 = vadd.f32 %v1286, %v1390
        %v1392 = vpop.f32.mrf.mxu0
        %1393 = vmatprep.mubr.bf16.mxu0 0
        %1394 = vmatmul.mubr.bf16.gmra.mxu0 %v1323
        %v1395 = vpop.f32.mrf.mxu0
        %v1396 = vadd.f32 %v1286, %v1395
        %v1397 = vpop.f32.mrf.mxu0
        %v1398 = vpop.f32.mrf.mxu0
        %v1399 = vadd.f32 %v1286, %v1398
        %v1400 = vpop.f32.mrf.mxu0
        %1401 = vmatprep.mubr.bf16.mxu0 0
        %1402 = vmatmul.mubr.bf16.gmra.mxu0 %v1326
        %v1403 = vpop.f32.mrf.mxu0
        %v1404 = vadd.f32 %v1286, %v1403
        %v1405 = vpop.f32.mrf.mxu0
        %v1406 = vpop.f32.mrf.mxu0
        %v1407 = vadd.f32 %v1286, %v1406
        %v1408 = vpop.f32.mrf.mxu0
        %1409 = vmatprep.mubr.bf16.mxu0 0
        %1410 = vmatmul.mubr.bf16.gmra.mxu0 %v1329
        %v1411 = vpop.f32.mrf.mxu0
        %v1412 = vadd.f32 %v1286, %v1411
        %v1413 = vpop.f32.mrf.mxu0
        %v1414 = vpop.f32.mrf.mxu0
        %v1415 = vadd.f32 %v1286, %v1414
        %v1416 = vpop.f32.mrf.mxu0
        %1417 = vmatprep.mubr.bf16.mxu0 0
        %1418 = vmatmul.mubr.bf16.gmra.mxu0 %v1332
        %v1419 = vpop.f32.mrf.mxu0
        %v1420 = vadd.f32 %v1286, %v1419
        %v1421 = vpop.f32.mrf.mxu0
        %v1422 = vpop.f32.mrf.mxu0
        %v1423 = vadd.f32 %v1286, %v1422
        %v1424 = vpop.f32.mrf.mxu0
        %1425 = vmatprep.mubr.bf16.mxu0 0
        %1426 = vmatmul.mubr.bf16.gmra.mxu0 %v1335
        %v1427 = vpop.f32.mrf.mxu0
        %v1428 = vadd.f32 %v1286, %v1427
        %v1429 = vpop.f32.mrf.mxu0
        %v1430 = vpop.f32.mrf.mxu0
        %v1431 = vadd.f32 %v1286, %v1430
        %v1432 = vpop.f32.mrf.mxu0
        %1433 = vdwg.mxu0
        %v1434 = vmax.f32 %v1372, 0.0
        %v1435 = vmax.f32 %v1375, 0.0
        %v1436 = vmax.f32 %v1380, 0.0
        %v1437 = vmax.f32 %v1383, 0.0
        %v1438 = vmax.f32 %v1388, 0.0
        %v1439 = vmax.f32 %v1391, 0.0
        %v1440 = vmax.f32 %v1396, 0.0
        %v1441 = vmax.f32 %v1399, 0.0
        %v1442 = vmax.f32 %v1404, 0.0
        %v1443 = vmax.f32 %v1407, 0.0
        %v1444 = vmax.f32 %v1412, 0.0
        %v1445 = vmax.f32 %v1415, 0.0
        %v1446 = vmax.f32 %v1420, 0.0
        %v1447 = vmax.f32 %v1423, 0.0
        %v1448 = vmax.f32 %v1428, 0.0
        %v1449 = vmax.f32 %v1431, 0.0
        %v1450 = vpack.c.bf16 %v1435, %v1434
        %v1451 = vpack.c.bf16 %v1437, %v1436
        %v1452 = vpack.c.bf16 %v1439, %v1438
        %v1453 = vpack.c.bf16 %v1441, %v1440
        %v1454 = vpack.c.bf16 %v1443, %v1442
        %v1455 = vpack.c.bf16 %v1445, %v1444
        %v1456 = vpack.c.bf16 %v1447, %v1446
        %v1457 = vpack.c.bf16 %v1449, %v1448
        %v1458 = vld [vmem:[#allocation4] sm:$0xff]
        %v1459 = vld [vmem:[#allocation4 + $0x8] sm:$0xff]
        %v1460 = vld [vmem:[#allocation4 + $0x10] sm:$0xff]
        %v1461 = vld [vmem:[#allocation4 + $0x18] sm:$0xff]
        %v1462 = vld [vmem:[#allocation4 + $0x20] sm:$0xff]
        %v1463 = vld [vmem:[#allocation4 + $0x28] sm:$0xff]
        %v1464 = vld [vmem:[#allocation4 + $0x30] sm:$0xff]
        %v1465 = vld [vmem:[#allocation4 + $0x38] sm:$0xff]
        %v1466 = vld [vmem:[#allocation4 + $0x40] sm:$0xff]
        %v1467 = vld [vmem:[#allocation4 + $0x48] sm:$0xff]
        %v1468 = vld [vmem:[#allocation4 + $0x50] sm:$0xff]
        %v1469 = vld [vmem:[#allocation4 + $0x58] sm:$0xff]
        %v1470 = vld [vmem:[#allocation4 + $0x60] sm:$0xff]
        %v1471 = vld [vmem:[#allocation4 + $0x68] sm:$0xff]
        %v1472 = vld [vmem:[#allocation4 + $0x70] sm:$0xff]
        %v1473 = vld [vmem:[#allocation4 + $0x78] sm:$0xff]
        %v1474 = vld [vmem:[#allocation4 + $0x80] sm:$0xff]
        %v1475 = vld [vmem:[#allocation4 + $0x88] sm:$0xff]
        %v1476 = vld [vmem:[#allocation4 + $0x90] sm:$0xff]
        %v1477 = vld [vmem:[#allocation4 + $0x98] sm:$0xff]
        %v1478 = vld [vmem:[#allocation4 + $0xa0] sm:$0xff]
        %v1479 = vld [vmem:[#allocation4 + $0xa8] sm:$0xff]
        %v1480 = vld [vmem:[#allocation4 + $0xb0] sm:$0xff]
        %v1481 = vld [vmem:[#allocation4 + $0xb8] sm:$0xff]
        %v1482 = vld [vmem:[#allocation4 + $0xc0] sm:$0xff]
        %v1483 = vld [vmem:[#allocation4 + $0xc8] sm:$0xff]
        %v1484 = vld [vmem:[#allocation4 + $0xd0] sm:$0xff]
        %v1485 = vld [vmem:[#allocation4 + $0xd8] sm:$0xff]
        %v1486 = vld [vmem:[#allocation4 + $0xe0] sm:$0xff]
        %v1487 = vld [vmem:[#allocation4 + $0xe8] sm:$0xff]
        %v1488 = vld [vmem:[#allocation4 + $0xf0] sm:$0xff]
        %v1489 = vld [vmem:[#allocation4 + $0xf8] sm:$0xff]
        %v1490 = vld [vmem:[#allocation4 + $0x100] sm:$0xff]
        %v1491 = vld [vmem:[#allocation4 + $0x108] sm:$0xff]
        %v1492 = vld [vmem:[#allocation4 + $0x110] sm:$0xff]
        %v1493 = vld [vmem:[#allocation4 + $0x118] sm:$0xff]
        %v1494 = vld [vmem:[#allocation4 + $0x120] sm:$0xff]
        %v1495 = vld [vmem:[#allocation4 + $0x128] sm:$0xff]
        %v1496 = vld [vmem:[#allocation4 + $0x130] sm:$0xff]
        %v1497 = vld [vmem:[#allocation4 + $0x138] sm:$0xff]
        %v1498 = vld [vmem:[#allocation4 + $0x140] sm:$0xff]
        %v1499 = vld [vmem:[#allocation4 + $0x148] sm:$0xff]
        %v1500 = vld [vmem:[#allocation4 + $0x150] sm:$0xff]
        %v1501 = vld [vmem:[#allocation4 + $0x158] sm:$0xff]
        %v1502 = vld [vmem:[#allocation4 + $0x160] sm:$0xff]
        %v1503 = vld [vmem:[#allocation4 + $0x168] sm:$0xff]
        %v1504 = vld [vmem:[#allocation4 + $0x170] sm:$0xff]
        %v1505 = vld [vmem:[#allocation4 + $0x178] sm:$0xff]
        %v1506 = vld [vmem:[#allocation4 + $0x180] sm:$0xff]
        %v1507 = vld [vmem:[#allocation4 + $0x188] sm:$0xff]
        %v1508 = vld [vmem:[#allocation4 + $0x190] sm:$0xff]
        %v1509 = vld [vmem:[#allocation4 + $0x198] sm:$0xff]
        %v1510 = vld [vmem:[#allocation4 + $0x1a0] sm:$0xff]
        %v1511 = vld [vmem:[#allocation4 + $0x1a8] sm:$0xff]
        %v1512 = vld [vmem:[#allocation4 + $0x1b0] sm:$0xff]
        %v1513 = vld [vmem:[#allocation4 + $0x1b8] sm:$0xff]
        %v1514 = vld [vmem:[#allocation4 + $0x1c0] sm:$0xff]
        %v1515 = vld [vmem:[#allocation4 + $0x1c8] sm:$0xff]
        %v1516 = vld [vmem:[#allocation4 + $0x1d0] sm:$0xff]
        %v1517 = vld [vmem:[#allocation4 + $0x1d8] sm:$0xff]
        %v1518 = vld [vmem:[#allocation4 + $0x1e0] sm:$0xff]
        %v1519 = vld [vmem:[#allocation4 + $0x1e8] sm:$0xff]
        %v1520 = vld [vmem:[#allocation4 + $0x1f0] sm:$0xff]
        %v1521 = vld [vmem:[#allocation4 + $0x1f8] sm:$0xff]
        %v1522 = vld [vmem:[%s13] sm:$0xff]
        %v1524 = vlaneseq
        %v1525 = vshrl.u32 %v1524, 7
        %v1526 = vsub.s32 0, %v1525
        %v1527 = vrot.slane %v1522, %v1526
        %v1528 = vlaneseq
        %v1529 = vshrl.u32 %v1528, 7
        %v1530 = vsub.s32 1, %v1529
        %v1531 = vrot.slane %v1522, %v1530
        %v1532 = vlaneseq
        %v1533 = vshrl.u32 %v1532, 7
        %v1534 = vsub.s32 2, %v1533
        %v1535 = vrot.slane %v1522, %v1534
        %v1536 = vlaneseq
        %v1537 = vshrl.u32 %v1536, 7
        %v1538 = vsub.s32 3, %v1537
        %v1539 = vrot.slane %v1522, %v1538
        %v1540 = vlaneseq
        %v1541 = vshrl.u32 %v1540, 7
        %v1542 = vsub.s32 4, %v1541
        %v1543 = vrot.slane %v1522, %v1542
        %v1544 = vlaneseq
        %v1545 = vshrl.u32 %v1544, 7
        %v1546 = vsub.s32 5, %v1545
        %v1547 = vrot.slane %v1522, %v1546
        %v1548 = vlaneseq
        %v1549 = vshrl.u32 %v1548, 7
        %v1550 = vsub.s32 6, %v1549
        %v1551 = vrot.slane %v1522, %v1550
        %v1552 = vlaneseq
        %v1553 = vshrl.u32 %v1552, 7
        %v1554 = vsub.s32 7, %v1553
        %v1555 = vrot.slane %v1522, %v1554
        %v1628 = vunpack.c.l.b16 %v1458
        %v1629 = vunpack.c.h.b16 %v1458
        %v1630 = vunpack.c.l.b16 %v1459
        %v1631 = vunpack.c.h.b16 %v1459
        %v1632 = vunpack.c.l.b16 %v1460
        %v1633 = vunpack.c.h.b16 %v1460
        %v1634 = vunpack.c.l.b16 %v1461
        %v1635 = vunpack.c.h.b16 %v1461
        %v1636 = vunpack.c.l.b16 %v1462
        %v1637 = vunpack.c.h.b16 %v1462
        %v1638 = vunpack.c.l.b16 %v1463
        %v1639 = vunpack.c.h.b16 %v1463
        %v1640 = vunpack.c.l.b16 %v1464
        %v1641 = vunpack.c.h.b16 %v1464
        %v1642 = vunpack.c.l.b16 %v1465
        %v1643 = vunpack.c.h.b16 %v1465
        %v1644 = vunpack.c.l.b16 %v1466
        %v1645 = vunpack.c.h.b16 %v1466
        %v1646 = vunpack.c.l.b16 %v1467
        %v1647 = vunpack.c.h.b16 %v1467
        %v1648 = vunpack.c.l.b16 %v1468
        %v1649 = vunpack.c.h.b16 %v1468
        %v1650 = vunpack.c.l.b16 %v1469
        %v1651 = vunpack.c.h.b16 %v1469
        %v1652 = vunpack.c.l.b16 %v1470
        %v1653 = vunpack.c.h.b16 %v1470
        %v1654 = vunpack.c.l.b16 %v1471
        %v1655 = vunpack.c.h.b16 %v1471
        %v1656 = vunpack.c.l.b16 %v1472
        %v1657 = vunpack.c.h.b16 %v1472
        %v1658 = vunpack.c.l.b16 %v1473
        %v1659 = vunpack.c.h.b16 %v1473
        %v1660 = vunpack.c.l.b16 %v1474
        %v1661 = vunpack.c.h.b16 %v1474
        %v1662 = vunpack.c.l.b16 %v1475
        %v1663 = vunpack.c.h.b16 %v1475
        %v1664 = vunpack.c.l.b16 %v1476
        %v1665 = vunpack.c.h.b16 %v1476
        %v1666 = vunpack.c.l.b16 %v1477
        %v1667 = vunpack.c.h.b16 %v1477
        %v1668 = vunpack.c.l.b16 %v1478
        %v1669 = vunpack.c.h.b16 %v1478
        %v1670 = vunpack.c.l.b16 %v1479
        %v1671 = vunpack.c.h.b16 %v1479
        %v1672 = vunpack.c.l.b16 %v1480
        %v1673 = vunpack.c.h.b16 %v1480
        %v1674 = vunpack.c.l.b16 %v1481
        %v1675 = vunpack.c.h.b16 %v1481
        %v1676 = vunpack.c.l.b16 %v1482
        %v1677 = vunpack.c.h.b16 %v1482
        %v1678 = vunpack.c.l.b16 %v1483
        %v1679 = vunpack.c.h.b16 %v1483
        %v1680 = vunpack.c.l.b16 %v1484
        %v1681 = vunpack.c.h.b16 %v1484
        %v1682 = vunpack.c.l.b16 %v1485
        %v1683 = vunpack.c.h.b16 %v1485
        %v1684 = vunpack.c.l.b16 %v1486
        %v1685 = vunpack.c.h.b16 %v1486
        %v1686 = vunpack.c.l.b16 %v1487
        %v1687 = vunpack.c.h.b16 %v1487
        %v1688 = vunpack.c.l.b16 %v1488
        %v1689 = vunpack.c.h.b16 %v1488
        %v1690 = vunpack.c.l.b16 %v1489
        %v1691 = vunpack.c.h.b16 %v1489
        %v1692 = vunpack.c.l.b16 %v1490
        %v1693 = vunpack.c.h.b16 %v1490
        %v1694 = vunpack.c.l.b16 %v1491
        %v1695 = vunpack.c.h.b16 %v1491
        %v1696 = vunpack.c.l.b16 %v1492
        %v1697 = vunpack.c.h.b16 %v1492
        %v1698 = vunpack.c.l.b16 %v1493
        %v1699 = vunpack.c.h.b16 %v1493
        %v1700 = vunpack.c.l.b16 %v1494
        %v1701 = vunpack.c.h.b16 %v1494
        %v1702 = vunpack.c.l.b16 %v1495
        %v1703 = vunpack.c.h.b16 %v1495
        %v1704 = vunpack.c.l.b16 %v1496
        %v1705 = vunpack.c.h.b16 %v1496
        %v1706 = vunpack.c.l.b16 %v1497
        %v1707 = vunpack.c.h.b16 %v1497
        %v1708 = vunpack.c.l.b16 %v1498
        %v1709 = vunpack.c.h.b16 %v1498
        %v1710 = vunpack.c.l.b16 %v1499
        %v1711 = vunpack.c.h.b16 %v1499
        %v1712 = vunpack.c.l.b16 %v1500
        %v1713 = vunpack.c.h.b16 %v1500
        %v1714 = vunpack.c.l.b16 %v1501
        %v1715 = vunpack.c.h.b16 %v1501
        %v1716 = vunpack.c.l.b16 %v1502
        %v1717 = vunpack.c.h.b16 %v1502
        %v1718 = vunpack.c.l.b16 %v1503
        %v1719 = vunpack.c.h.b16 %v1503
        %v1720 = vunpack.c.l.b16 %v1504
        %v1721 = vunpack.c.h.b16 %v1504
        %v1722 = vunpack.c.l.b16 %v1505
        %v1723 = vunpack.c.h.b16 %v1505
        %v1724 = vunpack.c.l.b16 %v1506
        %v1725 = vunpack.c.h.b16 %v1506
        %v1726 = vunpack.c.l.b16 %v1507
        %v1727 = vunpack.c.h.b16 %v1507
        %v1728 = vunpack.c.l.b16 %v1508
        %v1729 = vunpack.c.h.b16 %v1508
        %v1730 = vunpack.c.l.b16 %v1509
        %v1731 = vunpack.c.h.b16 %v1509
        %v1732 = vunpack.c.l.b16 %v1510
        %v1733 = vunpack.c.h.b16 %v1510
        %v1734 = vunpack.c.l.b16 %v1511
        %v1735 = vunpack.c.h.b16 %v1511
        %v1736 = vunpack.c.l.b16 %v1512
        %v1737 = vunpack.c.h.b16 %v1512
        %v1738 = vunpack.c.l.b16 %v1513
        %v1739 = vunpack.c.h.b16 %v1513
        %v1740 = vunpack.c.l.b16 %v1514
        %v1741 = vunpack.c.h.b16 %v1514
        %v1742 = vunpack.c.l.b16 %v1515
        %v1743 = vunpack.c.h.b16 %v1515
        %v1744 = vunpack.c.l.b16 %v1516
        %v1745 = vunpack.c.h.b16 %v1516
        %v1746 = vunpack.c.l.b16 %v1517
        %v1747 = vunpack.c.h.b16 %v1517
        %v1748 = vunpack.c.l.b16 %v1518
        %v1749 = vunpack.c.h.b16 %v1518
        %v1750 = vunpack.c.l.b16 %v1519
        %v1751 = vunpack.c.h.b16 %v1519
        %v1752 = vunpack.c.l.b16 %v1520
        %v1753 = vunpack.c.h.b16 %v1520
        %v1754 = vunpack.c.l.b16 %v1521
        %v1755 = vunpack.c.h.b16 %v1521
        %v1756 = vpack.c.b16 %v1636, %v1628
        %v1757 = vpack.c.b16 %v1637, %v1629
        %v1758 = vpack.c.b16 %v1638, %v1630
        %v1759 = vpack.c.b16 %v1639, %v1631
        %v1760 = vpack.c.b16 %v1640, %v1632
        %v1761 = vpack.c.b16 %v1641, %v1633
        %v1762 = vpack.c.b16 %v1642, %v1634
        %v1763 = vpack.c.b16 %v1643, %v1635
        %v1764 = vpack.c.b16 %v1652, %v1644
        %v1765 = vpack.c.b16 %v1653, %v1645
        %v1766 = vpack.c.b16 %v1654, %v1646
        %v1767 = vpack.c.b16 %v1655, %v1647
        %v1768 = vpack.c.b16 %v1656, %v1648
        %v1769 = vpack.c.b16 %v1657, %v1649
        %v1770 = vpack.c.b16 %v1658, %v1650
        %v1771 = vpack.c.b16 %v1659, %v1651
        %v1772 = vpack.c.b16 %v1668, %v1660
        %v1773 = vpack.c.b16 %v1669, %v1661
        %v1774 = vpack.c.b16 %v1670, %v1662
        %v1775 = vpack.c.b16 %v1671, %v1663
        %v1776 = vpack.c.b16 %v1672, %v1664
        %v1777 = vpack.c.b16 %v1673, %v1665
        %v1778 = vpack.c.b16 %v1674, %v1666
        %v1779 = vpack.c.b16 %v1675, %v1667
        %v1780 = vpack.c.b16 %v1684, %v1676
        %v1781 = vpack.c.b16 %v1685, %v1677
        %v1782 = vpack.c.b16 %v1686, %v1678
        %v1783 = vpack.c.b16 %v1687, %v1679
        %v1784 = vpack.c.b16 %v1688, %v1680
        %v1785 = vpack.c.b16 %v1689, %v1681
        %v1786 = vpack.c.b16 %v1690, %v1682
        %v1787 = vpack.c.b16 %v1691, %v1683
        %v1788 = vpack.c.b16 %v1700, %v1692
        %v1789 = vpack.c.b16 %v1701, %v1693
        %v1790 = vpack.c.b16 %v1702, %v1694
        %v1791 = vpack.c.b16 %v1703, %v1695
        %v1792 = vpack.c.b16 %v1704, %v1696
        %v1793 = vpack.c.b16 %v1705, %v1697
        %v1794 = vpack.c.b16 %v1706, %v1698
        %v1795 = vpack.c.b16 %v1707, %v1699
        %v1796 = vpack.c.b16 %v1716, %v1708
        %v1797 = vpack.c.b16 %v1717, %v1709
        %v1798 = vpack.c.b16 %v1718, %v1710
        %v1799 = vpack.c.b16 %v1719, %v1711
        %v1800 = vpack.c.b16 %v1720, %v1712
        %v1801 = vpack.c.b16 %v1721, %v1713
        %v1802 = vpack.c.b16 %v1722, %v1714
        %v1803 = vpack.c.b16 %v1723, %v1715
        %v1804 = vpack.c.b16 %v1732, %v1724
        %v1805 = vpack.c.b16 %v1733, %v1725
        %v1806 = vpack.c.b16 %v1734, %v1726
        %v1807 = vpack.c.b16 %v1735, %v1727
        %v1808 = vpack.c.b16 %v1736, %v1728
        %v1809 = vpack.c.b16 %v1737, %v1729
        %v1810 = vpack.c.b16 %v1738, %v1730
        %v1811 = vpack.c.b16 %v1739, %v1731
        %v1812 = vpack.c.b16 %v1748, %v1740
        %v1813 = vpack.c.b16 %v1749, %v1741
        %v1814 = vpack.c.b16 %v1750, %v1742
        %v1815 = vpack.c.b16 %v1751, %v1743
        %v1816 = vpack.c.b16 %v1752, %v1744
        %v1817 = vpack.c.b16 %v1753, %v1745
        %v1818 = vpack.c.b16 %v1754, %v1746
        %v1819 = vpack.c.b16 %v1755, %v1747
        %1884 = vmatprep.subr.bf16.mxu0 %v1813
        %1885 = vmatpush1.bf16.msra.mxu0 %v1812
        %1886 = vmatprep.subr.bf16.mxu0 %v1805
        %1887 = vmatpush1.bf16.msra.mxu0 %v1804
        %1888 = vmatprep.subr.bf16.mxu0 %v1797
        %1889 = vmatpush1.bf16.msra.mxu0 %v1796
        %1890 = vmatprep.subr.bf16.mxu0 %v1789
        %1891 = vmatpush1.bf16.msra.mxu0 %v1788
        %1892 = vmatprep.subr.bf16.mxu0 %v1781
        %1893 = vmatpush1.bf16.msra.mxu0 %v1780
        %1894 = vmatprep.subr.bf16.mxu0 %v1773
        %1895 = vmatpush1.bf16.msra.mxu0 %v1772
        %1896 = vmatprep.subr.bf16.mxu0 %v1765
        %1897 = vmatpush1.bf16.msra.mxu0 %v1764
        %1898 = vmatprep.subr.bf16.mxu0 %v1757
        %1899 = vmatpush1.bf16.msra.mxu0 %v1756
        %1900 = vmatprep.subr.bf16.mxu0 0
        %1901 = vmatpush2.bf16.msra.mxu0 0
        %1902 = vmatprep.subr.bf16.mxu0 0
        %1903 = vmatpush2.bf16.msra.mxu0 0
        %1904 = vmatprep.subr.bf16.mxu0 0
        %1905 = vmatpush2.bf16.msra.mxu0 0
        %1906 = vmatprep.subr.bf16.mxu0 0
        %1907 = vmatpush2.bf16.msra.mxu0 0
        %1908 = vmatprep.subr.bf16.mxu0 0
        %1909 = vmatpush2.bf16.msra.mxu0 0
        %1910 = vmatprep.subr.bf16.mxu0 0
        %1911 = vmatpush2.bf16.msra.mxu0 0
        %1912 = vmatprep.subr.bf16.mxu0 0
        %1913 = vmatpush2.bf16.msra.mxu0 0
        %1914 = vmatprep.subr.bf16.mxu0 0
        %1915 = vmatpush2.bf16.msra.mxu0 0
        %1916 = vmatprep.mubr.bf16.mxu0 0
        %1917 = vmatmul.mubr.bf16.gmra.mxu0 %v1450
        %v1918 = vpop.f32.mrf.mxu0
        %v1919 = vadd.f32 %v1527, %v1918
        %v1920 = vpop.f32.mrf.mxu0
        %v1921 = vadd.f32 %v1531, %v1920
        %v1922 = vpop.f32.mrf.mxu0
        %v1923 = vadd.f32 %v1527, %v1922
        %v1924 = vpop.f32.mrf.mxu0
        %v1925 = vadd.f32 %v1531, %v1924
        %1926 = vmatprep.mubr.bf16.mxu0 0
        %1927 = vmatmul.mubr.bf16.gmra.mxu0 %v1451
        %v1928 = vpop.f32.mrf.mxu0
        %v1929 = vadd.f32 %v1527, %v1928
        %v1930 = vpop.f32.mrf.mxu0
        %v1931 = vadd.f32 %v1531, %v1930
        %v1932 = vpop.f32.mrf.mxu0
        %v1933 = vadd.f32 %v1527, %v1932
        %v1934 = vpop.f32.mrf.mxu0
        %v1935 = vadd.f32 %v1531, %v1934
        %1936 = vmatprep.mubr.bf16.mxu0 0
        %1937 = vmatmul.mubr.bf16.gmra.mxu0 %v1452
        %v1938 = vpop.f32.mrf.mxu0
        %v1939 = vadd.f32 %v1527, %v1938
        %v1940 = vpop.f32.mrf.mxu0
        %v1941 = vadd.f32 %v1531, %v1940
        %v1942 = vpop.f32.mrf.mxu0
        %v1943 = vadd.f32 %v1527, %v1942
        %v1944 = vpop.f32.mrf.mxu0
        %v1945 = vadd.f32 %v1531, %v1944
        %1946 = vmatprep.mubr.bf16.mxu0 0
        %1947 = vmatmul.mubr.bf16.gmra.mxu0 %v1453
        %v1948 = vpop.f32.mrf.mxu0
        %v1949 = vadd.f32 %v1527, %v1948
        %v1950 = vpop.f32.mrf.mxu0
        %v1951 = vadd.f32 %v1531, %v1950
        %v1952 = vpop.f32.mrf.mxu0
        %v1953 = vadd.f32 %v1527, %v1952
        %v1954 = vpop.f32.mrf.mxu0
        %v1955 = vadd.f32 %v1531, %v1954
        %1956 = vmatprep.mubr.bf16.mxu0 0
        %1957 = vmatmul.mubr.bf16.gmra.mxu0 %v1454
        %v1958 = vpop.f32.mrf.mxu0
        %v1959 = vadd.f32 %v1527, %v1958
        %v1960 = vpop.f32.mrf.mxu0
        %v1961 = vadd.f32 %v1531, %v1960
        %v1962 = vpop.f32.mrf.mxu0
        %v1963 = vadd.f32 %v1527, %v1962
        %v1964 = vpop.f32.mrf.mxu0
        %v1965 = vadd.f32 %v1531, %v1964
        %1966 = vmatprep.mubr.bf16.mxu0 0
        %1967 = vmatmul.mubr.bf16.gmra.mxu0 %v1455
        %v1968 = vpop.f32.mrf.mxu0
        %v1969 = vadd.f32 %v1527, %v1968
        %v1970 = vpop.f32.mrf.mxu0
        %v1971 = vadd.f32 %v1531, %v1970
        %v1972 = vpop.f32.mrf.mxu0
        %v1973 = vadd.f32 %v1527, %v1972
        %v1974 = vpop.f32.mrf.mxu0
        %v1975 = vadd.f32 %v1531, %v1974
        %1976 = vmatprep.mubr.bf16.mxu0 0
        %1977 = vmatmul.mubr.bf16.gmra.mxu0 %v1456
        %v1978 = vpop.f32.mrf.mxu0
        %v1979 = vadd.f32 %v1527, %v1978
        %v1980 = vpop.f32.mrf.mxu0
        %v1981 = vadd.f32 %v1531, %v1980
        %v1982 = vpop.f32.mrf.mxu0
        %v1983 = vadd.f32 %v1527, %v1982
        %v1984 = vpop.f32.mrf.mxu0
        %v1985 = vadd.f32 %v1531, %v1984
        %1986 = vmatprep.mubr.bf16.mxu0 0
        %1987 = vmatmul.mubr.bf16.gmra.mxu0 %v1457
        %v1988 = vpop.f32.mrf.mxu0
        %v1989 = vadd.f32 %v1527, %v1988
        %v1990 = vpop.f32.mrf.mxu0
        %v1991 = vadd.f32 %v1531, %v1990
        %v1992 = vpop.f32.mrf.mxu0
        %v1993 = vadd.f32 %v1527, %v1992
        %v1994 = vpop.f32.mrf.mxu0
        %v1995 = vadd.f32 %v1531, %v1994
        %1996 = vdwg.mxu0
        %1997 = vmatprep.subr.bf16.mxu0 %v1815
        %1998 = vmatpush1.bf16.msra.mxu0 %v1814
        %1999 = vmatprep.subr.bf16.mxu0 %v1807
        %2000 = vmatpush1.bf16.msra.mxu0 %v1806
        %2001 = vmatprep.subr.bf16.mxu0 %v1799
        %2002 = vmatpush1.bf16.msra.mxu0 %v1798
        %2003 = vmatprep.subr.bf16.mxu0 %v1791
        %2004 = vmatpush1.bf16.msra.mxu0 %v1790
        %2005 = vmatprep.subr.bf16.mxu0 %v1783
        %2006 = vmatpush1.bf16.msra.mxu0 %v1782
        %2007 = vmatprep.subr.bf16.mxu0 %v1775
        %2008 = vmatpush1.bf16.msra.mxu0 %v1774
        %2009 = vmatprep.subr.bf16.mxu0 %v1767
        %2010 = vmatpush1.bf16.msra.mxu0 %v1766
        %2011 = vmatprep.subr.bf16.mxu0 %v1759
        %2012 = vmatpush1.bf16.msra.mxu0 %v1758
        %2013 = vmatprep.subr.bf16.mxu0 0
        %2014 = vmatpush2.bf16.msra.mxu0 0
        %2015 = vmatprep.subr.bf16.mxu0 0
        %2016 = vmatpush2.bf16.msra.mxu0 0
        %2017 = vmatprep.subr.bf16.mxu0 0
        %2018 = vmatpush2.bf16.msra.mxu0 0
        %2019 = vmatprep.subr.bf16.mxu0 0
        %2020 = vmatpush2.bf16.msra.mxu0 0
        %2021 = vmatprep.subr.bf16.mxu0 0
        %2022 = vmatpush2.bf16.msra.mxu0 0
        %2023 = vmatprep.subr.bf16.mxu0 0
        %2024 = vmatpush2.bf16.msra.mxu0 0
        %2025 = vmatprep.subr.bf16.mxu0 0
        %2026 = vmatpush2.bf16.msra.mxu0 0
        %2027 = vmatprep.subr.bf16.mxu0 0
        %2028 = vmatpush2.bf16.msra.mxu0 0
        %2029 = vmatprep.mubr.bf16.mxu0 0
        %2030 = vmatmul.mubr.bf16.gmra.mxu0 %v1450
        %v2031 = vpop.f32.mrf.mxu0
        %v2032 = vadd.f32 %v1535, %v2031
        %v2033 = vpop.f32.mrf.mxu0
        %v2034 = vadd.f32 %v1539, %v2033
        %v2035 = vpop.f32.mrf.mxu0
        %v2036 = vadd.f32 %v1535, %v2035
        %v2037 = vpop.f32.mrf.mxu0
        %v2038 = vadd.f32 %v1539, %v2037
        %2039 = vmatprep.mubr.bf16.mxu0 0
        %2040 = vmatmul.mubr.bf16.gmra.mxu0 %v1451
        %v2041 = vpop.f32.mrf.mxu0
        %v2042 = vadd.f32 %v1535, %v2041
        %v2043 = vpop.f32.mrf.mxu0
        %v2044 = vadd.f32 %v1539, %v2043
        %v2045 = vpop.f32.mrf.mxu0
        %v2046 = vadd.f32 %v1535, %v2045
        %v2047 = vpop.f32.mrf.mxu0
        %v2048 = vadd.f32 %v1539, %v2047
        %2049 = vmatprep.mubr.bf16.mxu0 0
        %2050 = vmatmul.mubr.bf16.gmra.mxu0 %v1452
        %v2051 = vpop.f32.mrf.mxu0
        %v2052 = vadd.f32 %v1535, %v2051
        %v2053 = vpop.f32.mrf.mxu0
        %v2054 = vadd.f32 %v1539, %v2053
        %v2055 = vpop.f32.mrf.mxu0
        %v2056 = vadd.f32 %v1535, %v2055
        %v2057 = vpop.f32.mrf.mxu0
        %v2058 = vadd.f32 %v1539, %v2057
        %2059 = vmatprep.mubr.bf16.mxu0 0
        %2060 = vmatmul.mubr.bf16.gmra.mxu0 %v1453
        %v2061 = vpop.f32.mrf.mxu0
        %v2062 = vadd.f32 %v1535, %v2061
        %v2063 = vpop.f32.mrf.mxu0
        %v2064 = vadd.f32 %v1539, %v2063
        %v2065 = vpop.f32.mrf.mxu0
        %v2066 = vadd.f32 %v1535, %v2065
        %v2067 = vpop.f32.mrf.mxu0
        %v2068 = vadd.f32 %v1539, %v2067
        %2069 = vmatprep.mubr.bf16.mxu0 0
        %2070 = vmatmul.mubr.bf16.gmra.mxu0 %v1454
        %v2071 = vpop.f32.mrf.mxu0
        %v2072 = vadd.f32 %v1535, %v2071
        %v2073 = vpop.f32.mrf.mxu0
        %v2074 = vadd.f32 %v1539, %v2073
        %v2075 = vpop.f32.mrf.mxu0
        %v2076 = vadd.f32 %v1535, %v2075
        %v2077 = vpop.f32.mrf.mxu0
        %v2078 = vadd.f32 %v1539, %v2077
        %2079 = vmatprep.mubr.bf16.mxu0 0
        %2080 = vmatmul.mubr.bf16.gmra.mxu0 %v1455
        %v2081 = vpop.f32.mrf.mxu0
        %v2082 = vadd.f32 %v1535, %v2081
        %v2083 = vpop.f32.mrf.mxu0
        %v2084 = vadd.f32 %v1539, %v2083
        %v2085 = vpop.f32.mrf.mxu0
        %v2086 = vadd.f32 %v1535, %v2085
        %v2087 = vpop.f32.mrf.mxu0
        %v2088 = vadd.f32 %v1539, %v2087
        %2089 = vmatprep.mubr.bf16.mxu0 0
        %2090 = vmatmul.mubr.bf16.gmra.mxu0 %v1456
        %v2091 = vpop.f32.mrf.mxu0
        %v2092 = vadd.f32 %v1535, %v2091
        %v2093 = vpop.f32.mrf.mxu0
        %v2094 = vadd.f32 %v1539, %v2093
        %v2095 = vpop.f32.mrf.mxu0
        %v2096 = vadd.f32 %v1535, %v2095
        %v2097 = vpop.f32.mrf.mxu0
        %v2098 = vadd.f32 %v1539, %v2097
        %2099 = vmatprep.mubr.bf16.mxu0 0
        %2100 = vmatmul.mubr.bf16.gmra.mxu0 %v1457
        %v2101 = vpop.f32.mrf.mxu0
        %v2102 = vadd.f32 %v1535, %v2101
        %v2103 = vpop.f32.mrf.mxu0
        %v2104 = vadd.f32 %v1539, %v2103
        %v2105 = vpop.f32.mrf.mxu0
        %v2106 = vadd.f32 %v1535, %v2105
        %v2107 = vpop.f32.mrf.mxu0
        %v2108 = vadd.f32 %v1539, %v2107
        %2109 = vdwg.mxu0
        %2110 = vmatprep.subr.bf16.mxu0 %v1817
        %2111 = vmatpush1.bf16.msra.mxu0 %v1816
        %2112 = vmatprep.subr.bf16.mxu0 %v1809
        %2113 = vmatpush1.bf16.msra.mxu0 %v1808
        %2114 = vmatprep.subr.bf16.mxu0 %v1801
        %2115 = vmatpush1.bf16.msra.mxu0 %v1800
        %2116 = vmatprep.subr.bf16.mxu0 %v1793
        %2117 = vmatpush1.bf16.msra.mxu0 %v1792
        %2118 = vmatprep.subr.bf16.mxu0 %v1785
        %2119 = vmatpush1.bf16.msra.mxu0 %v1784
        %2120 = vmatprep.subr.bf16.mxu0 %v1777
        %2121 = vmatpush1.bf16.msra.mxu0 %v1776
        %2122 = vmatprep.subr.bf16.mxu0 %v1769
        %2123 = vmatpush1.bf16.msra.mxu0 %v1768
        %2124 = vmatprep.subr.bf16.mxu0 %v1761
        %2125 = vmatpush1.bf16.msra.mxu0 %v1760
        %2126 = vmatprep.subr.bf16.mxu0 0
        %2127 = vmatpush2.bf16.msra.mxu0 0
        %2128 = vmatprep.subr.bf16.mxu0 0
        %2129 = vmatpush2.bf16.msra.mxu0 0
        %2130 = vmatprep.subr.bf16.mxu0 0
        %2131 = vmatpush2.bf16.msra.mxu0 0
        %2132 = vmatprep.subr.bf16.mxu0 0
        %2133 = vmatpush2.bf16.msra.mxu0 0
        %2134 = vmatprep.subr.bf16.mxu0 0
        %2135 = vmatpush2.bf16.msra.mxu0 0
        %2136 = vmatprep.subr.bf16.mxu0 0
        %2137 = vmatpush2.bf16.msra.mxu0 0
        %2138 = vmatprep.subr.bf16.mxu0 0
        %2139 = vmatpush2.bf16.msra.mxu0 0
        %2140 = vmatprep.subr.bf16.mxu0 0
        %2141 = vmatpush2.bf16.msra.mxu0 0
        %2142 = vmatprep.mubr.bf16.mxu0 0
        %2143 = vmatmul.mubr.bf16.gmra.mxu0 %v1450
        %v2144 = vpop.f32.mrf.mxu0
        %v2145 = vadd.f32 %v1543, %v2144
        %v2146 = vpop.f32.mrf.mxu0
        %v2147 = vadd.f32 %v1547, %v2146
        %v2148 = vpop.f32.mrf.mxu0
        %v2149 = vadd.f32 %v1543, %v2148
        %v2150 = vpop.f32.mrf.mxu0
        %v2151 = vadd.f32 %v1547, %v2150
        %2152 = vmatprep.mubr.bf16.mxu0 0
        %2153 = vmatmul.mubr.bf16.gmra.mxu0 %v1451
        %v2154 = vpop.f32.mrf.mxu0
        %v2155 = vadd.f32 %v1543, %v2154
        %v2156 = vpop.f32.mrf.mxu0
        %v2157 = vadd.f32 %v1547, %v2156
        %v2158 = vpop.f32.mrf.mxu0
        %v2159 = vadd.f32 %v1543, %v2158
        %v2160 = vpop.f32.mrf.mxu0
        %v2161 = vadd.f32 %v1547, %v2160
        %2162 = vmatprep.mubr.bf16.mxu0 0
        %2163 = vmatmul.mubr.bf16.gmra.mxu0 %v1452
        %v2164 = vpop.f32.mrf.mxu0
        %v2165 = vadd.f32 %v1543, %v2164
        %v2166 = vpop.f32.mrf.mxu0
        %v2167 = vadd.f32 %v1547, %v2166
        %v2168 = vpop.f32.mrf.mxu0
        %v2169 = vadd.f32 %v1543, %v2168
        %v2170 = vpop.f32.mrf.mxu0
        %v2171 = vadd.f32 %v1547, %v2170
        %2172 = vmatprep.mubr.bf16.mxu0 0
        %2173 = vmatmul.mubr.bf16.gmra.mxu0 %v1453
        %v2174 = vpop.f32.mrf.mxu0
        %v2175 = vadd.f32 %v1543, %v2174
        %v2176 = vpop.f32.mrf.mxu0
        %v2177 = vadd.f32 %v1547, %v2176
        %v2178 = vpop.f32.mrf.mxu0
        %v2179 = vadd.f32 %v1543, %v2178
        %v2180 = vpop.f32.mrf.mxu0
        %v2181 = vadd.f32 %v1547, %v2180
        %2182 = vmatprep.mubr.bf16.mxu0 0
        %2183 = vmatmul.mubr.bf16.gmra.mxu0 %v1454
        %v2184 = vpop.f32.mrf.mxu0
        %v2185 = vadd.f32 %v1543, %v2184
        %v2186 = vpop.f32.mrf.mxu0
        %v2187 = vadd.f32 %v1547, %v2186
        %v2188 = vpop.f32.mrf.mxu0
        %v2189 = vadd.f32 %v1543, %v2188
        %v2190 = vpop.f32.mrf.mxu0
        %v2191 = vadd.f32 %v1547, %v2190
        %2192 = vmatprep.mubr.bf16.mxu0 0
        %2193 = vmatmul.mubr.bf16.gmra.mxu0 %v1455
        %v2194 = vpop.f32.mrf.mxu0
        %v2195 = vadd.f32 %v1543, %v2194
        %v2196 = vpop.f32.mrf.mxu0
        %v2197 = vadd.f32 %v1547, %v2196
        %v2198 = vpop.f32.mrf.mxu0
        %v2199 = vadd.f32 %v1543, %v2198
        %v2200 = vpop.f32.mrf.mxu0
        %v2201 = vadd.f32 %v1547, %v2200
        %2202 = vmatprep.mubr.bf16.mxu0 0
        %2203 = vmatmul.mubr.bf16.gmra.mxu0 %v1456
        %v2204 = vpop.f32.mrf.mxu0
        %v2205 = vadd.f32 %v1543, %v2204
        %v2206 = vpop.f32.mrf.mxu0
        %v2207 = vadd.f32 %v1547, %v2206
        %v2208 = vpop.f32.mrf.mxu0
        %v2209 = vadd.f32 %v1543, %v2208
        %v2210 = vpop.f32.mrf.mxu0
        %v2211 = vadd.f32 %v1547, %v2210
        %2212 = vmatprep.mubr.bf16.mxu0 0
        %2213 = vmatmul.mubr.bf16.gmra.mxu0 %v1457
        %v2214 = vpop.f32.mrf.mxu0
        %v2215 = vadd.f32 %v1543, %v2214
        %v2216 = vpop.f32.mrf.mxu0
        %v2217 = vadd.f32 %v1547, %v2216
        %v2218 = vpop.f32.mrf.mxu0
        %v2219 = vadd.f32 %v1543, %v2218
        %v2220 = vpop.f32.mrf.mxu0
        %v2221 = vadd.f32 %v1547, %v2220
        %2222 = vdwg.mxu0
        %2223 = vmatprep.subr.bf16.mxu0 %v1819
        %2224 = vmatpush1.bf16.msra.mxu0 %v1818
        %2225 = vmatprep.subr.bf16.mxu0 %v1811
        %2226 = vmatpush1.bf16.msra.mxu0 %v1810
        %2227 = vmatprep.subr.bf16.mxu0 %v1803
        %2228 = vmatpush1.bf16.msra.mxu0 %v1802
        %2229 = vmatprep.subr.bf16.mxu0 %v1795
        %2230 = vmatpush1.bf16.msra.mxu0 %v1794
        %2231 = vmatprep.subr.bf16.mxu0 %v1787
        %2232 = vmatpush1.bf16.msra.mxu0 %v1786
        %2233 = vmatprep.subr.bf16.mxu0 %v1779
        %2234 = vmatpush1.bf16.msra.mxu0 %v1778
        %2235 = vmatprep.subr.bf16.mxu0 %v1771
        %2236 = vmatpush1.bf16.msra.mxu0 %v1770
        %2237 = vmatprep.subr.bf16.mxu0 %v1763
        %2238 = vmatpush1.bf16.msra.mxu0 %v1762
        %2239 = vmatprep.subr.bf16.mxu0 0
        %2240 = vmatpush2.bf16.msra.mxu0 0
        %2241 = vmatprep.subr.bf16.mxu0 0
        %2242 = vmatpush2.bf16.msra.mxu0 0
        %2243 = vmatprep.subr.bf16.mxu0 0
        %2244 = vmatpush2.bf16.msra.mxu0 0
        %2245 = vmatprep.subr.bf16.mxu0 0
        %2246 = vmatpush2.bf16.msra.mxu0 0
        %2247 = vmatprep.subr.bf16.mxu0 0
        %2248 = vmatpush2.bf16.msra.mxu0 0
        %2249 = vmatprep.subr.bf16.mxu0 0
        %2250 = vmatpush2.bf16.msra.mxu0 0
        %2251 = vmatprep.subr.bf16.mxu0 0
        %2252 = vmatpush2.bf16.msra.mxu0 0
        %2253 = vmatprep.subr.bf16.mxu0 0
        %2254 = vmatpush2.bf16.msra.mxu0 0
        %2255 = vmatprep.mubr.bf16.mxu0 0
        %2256 = vmatmul.mubr.bf16.gmra.mxu0 %v1450
        %v2257 = vpop.f32.mrf.mxu0
        %v2258 = vadd.f32 %v1551, %v2257
        %v2259 = vpop.f32.mrf.mxu0
        %v2260 = vadd.f32 %v1555, %v2259
        %v2261 = vpop.f32.mrf.mxu0
        %v2262 = vadd.f32 %v1551, %v2261
        %v2263 = vpop.f32.mrf.mxu0
        %v2264 = vadd.f32 %v1555, %v2263
        %2265 = vmatprep.mubr.bf16.mxu0 0
        %2266 = vmatmul.mubr.bf16.gmra.mxu0 %v1451
        %v2267 = vpop.f32.mrf.mxu0
        %v2268 = vadd.f32 %v1551, %v2267
        %v2269 = vpop.f32.mrf.mxu0
        %v2270 = vadd.f32 %v1555, %v2269
        %v2271 = vpop.f32.mrf.mxu0
        %v2272 = vadd.f32 %v1551, %v2271
        %v2273 = vpop.f32.mrf.mxu0
        %v2274 = vadd.f32 %v1555, %v2273
        %2275 = vmatprep.mubr.bf16.mxu0 0
        %2276 = vmatmul.mubr.bf16.gmra.mxu0 %v1452
        %v2277 = vpop.f32.mrf.mxu0
        %v2278 = vadd.f32 %v1551, %v2277
        %v2279 = vpop.f32.mrf.mxu0
        %v2280 = vadd.f32 %v1555, %v2279
        %v2281 = vpop.f32.mrf.mxu0
        %v2282 = vadd.f32 %v1551, %v2281
        %v2283 = vpop.f32.mrf.mxu0
        %v2284 = vadd.f32 %v1555, %v2283
        %2285 = vmatprep.mubr.bf16.mxu0 0
        %2286 = vmatmul.mubr.bf16.gmra.mxu0 %v1453
        %v2287 = vpop.f32.mrf.mxu0
        %v2288 = vadd.f32 %v1551, %v2287
        %v2289 = vpop.f32.mrf.mxu0
        %v2290 = vadd.f32 %v1555, %v2289
        %v2291 = vpop.f32.mrf.mxu0
        %v2292 = vadd.f32 %v1551, %v2291
        %v2293 = vpop.f32.mrf.mxu0
        %v2294 = vadd.f32 %v1555, %v2293
        %2295 = vmatprep.mubr.bf16.mxu0 0
        %2296 = vmatmul.mubr.bf16.gmra.mxu0 %v1454
        %v2297 = vpop.f32.mrf.mxu0
        %v2298 = vadd.f32 %v1551, %v2297
        %v2299 = vpop.f32.mrf.mxu0
        %v2300 = vadd.f32 %v1555, %v2299
        %v2301 = vpop.f32.mrf.mxu0
        %v2302 = vadd.f32 %v1551, %v2301
        %v2303 = vpop.f32.mrf.mxu0
        %v2304 = vadd.f32 %v1555, %v2303
        %2305 = vmatprep.mubr.bf16.mxu0 0
        %2306 = vmatmul.mubr.bf16.gmra.mxu0 %v1455
        %v2307 = vpop.f32.mrf.mxu0
        %v2308 = vadd.f32 %v1551, %v2307
        %v2309 = vpop.f32.mrf.mxu0
        %v2310 = vadd.f32 %v1555, %v2309
        %v2311 = vpop.f32.mrf.mxu0
        %v2312 = vadd.f32 %v1551, %v2311
        %v2313 = vpop.f32.mrf.mxu0
        %v2314 = vadd.f32 %v1555, %v2313
        %2315 = vmatprep.mubr.bf16.mxu0 0
        %2316 = vmatmul.mubr.bf16.gmra.mxu0 %v1456
        %v2317 = vpop.f32.mrf.mxu0
        %v2318 = vadd.f32 %v1551, %v2317
        %v2319 = vpop.f32.mrf.mxu0
        %v2320 = vadd.f32 %v1555, %v2319
        %v2321 = vpop.f32.mrf.mxu0
        %v2322 = vadd.f32 %v1551, %v2321
        %v2323 = vpop.f32.mrf.mxu0
        %v2324 = vadd.f32 %v1555, %v2323
        %2325 = vmatprep.mubr.bf16.mxu0 0
        %2326 = vmatmul.mubr.bf16.gmra.mxu0 %v1457
        %v2327 = vpop.f32.mrf.mxu0
        %v2328 = vadd.f32 %v1551, %v2327
        %v2329 = vpop.f32.mrf.mxu0
        %v2330 = vadd.f32 %v1555, %v2329
        %v2331 = vpop.f32.mrf.mxu0
        %v2332 = vadd.f32 %v1551, %v2331
        %v2333 = vpop.f32.mrf.mxu0
        %v2334 = vadd.f32 %v1555, %v2333
        %2335 = vdwg.mxu0
        %v2336 = vmax.f32 %v1919, 0.0
        %v2337 = vmax.f32 %v1921, 0.0
        %v2338 = vmax.f32 %v2032, 0.0
        %v2339 = vmax.f32 %v2034, 0.0
        %v2340 = vmax.f32 %v2145, 0.0
        %v2341 = vmax.f32 %v2147, 0.0
        %v2342 = vmax.f32 %v2258, 0.0
        %v2343 = vmax.f32 %v2260, 0.0
        %v2344 = vmax.f32 %v1923, 0.0
        %v2345 = vmax.f32 %v1925, 0.0
        %v2346 = vmax.f32 %v2036, 0.0
        %v2347 = vmax.f32 %v2038, 0.0
        %v2348 = vmax.f32 %v2149, 0.0
        %v2349 = vmax.f32 %v2151, 0.0
        %v2350 = vmax.f32 %v2262, 0.0
        %v2351 = vmax.f32 %v2264, 0.0
        %v2352 = vmax.f32 %v1929, 0.0
        %v2353 = vmax.f32 %v1931, 0.0
        %v2354 = vmax.f32 %v2042, 0.0
        %v2355 = vmax.f32 %v2044, 0.0
        %v2356 = vmax.f32 %v2155, 0.0
        %v2357 = vmax.f32 %v2157, 0.0
        %v2358 = vmax.f32 %v2268, 0.0
        %v2359 = vmax.f32 %v2270, 0.0
        %v2360 = vmax.f32 %v1933, 0.0
        %v2361 = vmax.f32 %v1935, 0.0
        %v2362 = vmax.f32 %v2046, 0.0
        %v2363 = vmax.f32 %v2048, 0.0
        %v2364 = vmax.f32 %v2159, 0.0
        %v2365 = vmax.f32 %v2161, 0.0
        %v2366 = vmax.f32 %v2272, 0.0
        %v2367 = vmax.f32 %v2274, 0.0
        %v2368 = vmax.f32 %v1939, 0.0
        %v2369 = vmax.f32 %v1941, 0.0
        %v2370 = vmax.f32 %v2052, 0.0
        %v2371 = vmax.f32 %v2054, 0.0
        %v2372 = vmax.f32 %v2165, 0.0
        %v2373 = vmax.f32 %v2167, 0.0
        %v2374 = vmax.f32 %v2278, 0.0
        %v2375 = vmax.f32 %v2280, 0.0
        %v2376 = vmax.f32 %v1943, 0.0
        %v2377 = vmax.f32 %v1945, 0.0
        %v2378 = vmax.f32 %v2056, 0.0
        %v2379 = vmax.f32 %v2058, 0.0
        %v2380 = vmax.f32 %v2169, 0.0
        %v2381 = vmax.f32 %v2171, 0.0
        %v2382 = vmax.f32 %v2282, 0.0
        %v2383 = vmax.f32 %v2284, 0.0
        %v2384 = vmax.f32 %v1949, 0.0
        %v2385 = vmax.f32 %v1951, 0.0
        %v2386 = vmax.f32 %v2062, 0.0
        %v2387 = vmax.f32 %v2064, 0.0
        %v2388 = vmax.f32 %v2175, 0.0
        %v2389 = vmax.f32 %v2177, 0.0
        %v2390 = vmax.f32 %v2288, 0.0
        %v2391 = vmax.f32 %v2290, 0.0
        %v2392 = vmax.f32 %v1953, 0.0
        %v2393 = vmax.f32 %v1955, 0.0
        %v2394 = vmax.f32 %v2066, 0.0
        %v2395 = vmax.f32 %v2068, 0.0
        %v2396 = vmax.f32 %v2179, 0.0
        %v2397 = vmax.f32 %v2181, 0.0
        %v2398 = vmax.f32 %v2292, 0.0
        %v2399 = vmax.f32 %v2294, 0.0
        %v2400 = vmax.f32 %v1959, 0.0
        %v2401 = vmax.f32 %v1961, 0.0
        %v2402 = vmax.f32 %v2072, 0.0
        %v2403 = vmax.f32 %v2074, 0.0
        %v2404 = vmax.f32 %v2185, 0.0
        %v2405 = vmax.f32 %v2187, 0.0
        %v2406 = vmax.f32 %v2298, 0.0
        %v2407 = vmax.f32 %v2300, 0.0
        %v2408 = vmax.f32 %v1963, 0.0
        %v2409 = vmax.f32 %v1965, 0.0
        %v2410 = vmax.f32 %v2076, 0.0
        %v2411 = vmax.f32 %v2078, 0.0
        %v2412 = vmax.f32 %v2189, 0.0
        %v2413 = vmax.f32 %v2191, 0.0
        %v2414 = vmax.f32 %v2302, 0.0
        %v2415 = vmax.f32 %v2304, 0.0
        %v2416 = vmax.f32 %v1969, 0.0
        %v2417 = vmax.f32 %v1971, 0.0
        %v2418 = vmax.f32 %v2082, 0.0
        %v2419 = vmax.f32 %v2084, 0.0
        %v2420 = vmax.f32 %v2195, 0.0
        %v2421 = vmax.f32 %v2197, 0.0
        %v2422 = vmax.f32 %v2308, 0.0
        %v2423 = vmax.f32 %v2310, 0.0
        %v2424 = vmax.f32 %v1973, 0.0
        %v2425 = vmax.f32 %v1975, 0.0
        %v2426 = vmax.f32 %v2086, 0.0
        %v2427 = vmax.f32 %v2088, 0.0
        %v2428 = vmax.f32 %v2199, 0.0
        %v2429 = vmax.f32 %v2201, 0.0
        %v2430 = vmax.f32 %v2312, 0.0
        %v2431 = vmax.f32 %v2314, 0.0
        %v2432 = vmax.f32 %v1979, 0.0
        %v2433 = vmax.f32 %v1981, 0.0
        %v2434 = vmax.f32 %v2092, 0.0
        %v2435 = vmax.f32 %v2094, 0.0
        %v2436 = vmax.f32 %v2205, 0.0
        %v2437 = vmax.f32 %v2207, 0.0
        %v2438 = vmax.f32 %v2318, 0.0
        %v2439 = vmax.f32 %v2320, 0.0
        %v2440 = vmax.f32 %v1983, 0.0
        %v2441 = vmax.f32 %v1985, 0.0
        %v2442 = vmax.f32 %v2096, 0.0
        %v2443 = vmax.f32 %v2098, 0.0
        %v2444 = vmax.f32 %v2209, 0.0
        %v2445 = vmax.f32 %v2211, 0.0
        %v2446 = vmax.f32 %v2322, 0.0
        %v2447 = vmax.f32 %v2324, 0.0
        %v2448 = vmax.f32 %v1989, 0.0
        %v2449 = vmax.f32 %v1991, 0.0
        %v2450 = vmax.f32 %v2102, 0.0
        %v2451 = vmax.f32 %v2104, 0.0
        %v2452 = vmax.f32 %v2215, 0.0
        %v2453 = vmax.f32 %v2217, 0.0
        %v2454 = vmax.f32 %v2328, 0.0
        %v2455 = vmax.f32 %v2330, 0.0
        %v2456 = vmax.f32 %v1993, 0.0
        %v2457 = vmax.f32 %v1995, 0.0
        %v2458 = vmax.f32 %v2106, 0.0
        %v2459 = vmax.f32 %v2108, 0.0
        %v2460 = vmax.f32 %v2219, 0.0
        %v2461 = vmax.f32 %v2221, 0.0
        %v2462 = vmax.f32 %v2332, 0.0
        %v2463 = vmax.f32 %v2334, 0.0
        %v2464 = vmax.f32 %v2336, %v2344
        %v2465 = vmax.f32 %v2464, %v2352
        %v2466 = vmax.f32 %v2465, %v2360
        %v2467 = vmax.f32 %v2466, %v2368
        %v2468 = vmax.f32 %v2467, %v2376
        %v2469 = vmax.f32 %v2468, %v2384
        %v2470 = vmax.f32 %v2469, %v2392
        %v2471 = vmax.f32 %v2470, %v2400
        %v2472 = vmax.f32 %v2471, %v2408
        %v2473 = vmax.f32 %v2472, %v2416
        %v2474 = vmax.f32 %v2473, %v2424
        %v2475 = vmax.f32 %v2474, %v2432
        %v2476 = vmax.f32 %v2475, %v2440
        %v2477 = vmax.f32 %v2476, %v2448
        %v2478 = vmax.f32 %v2477, %v2456
        %v2479 = vrot.slane %v2478, 4
        %v2480 = vmax.f32 %v2478, %v2479
        %v2481 = vrot.slane %v2480, 2
        %v2482 = vmax.f32 %v2480, %v2481
        %v2483 = vrot.slane %v2482, 1
        %v2484 = vmax.f32 %v2482, %v2483
        %v2485 = vmax.f32 %v2337, %v2345
        %v2486 = vmax.f32 %v2485, %v2353
        %v2487 = vmax.f32 %v2486, %v2361
        %v2488 = vmax.f32 %v2487, %v2369
        %v2489 = vmax.f32 %v2488, %v2377
        %v2490 = vmax.f32 %v2489, %v2385
        %v2491 = vmax.f32 %v2490, %v2393
        %v2492 = vmax.f32 %v2491, %v2401
        %v2493 = vmax.f32 %v2492, %v2409
        %v2494 = vmax.f32 %v2493, %v2417
        %v2495 = vmax.f32 %v2494, %v2425
        %v2496 = vmax.f32 %v2495, %v2433
        %v2497 = vmax.f32 %v2496, %v2441
        %v2498 = vmax.f32 %v2497, %v2449
        %v2499 = vmax.f32 %v2498, %v2457
        %v2500 = vrot.slane %v2499, 4
        %v2501 = vmax.f32 %v2499, %v2500
        %v2502 = vrot.slane %v2501, 2
        %v2503 = vmax.f32 %v2501, %v2502
        %v2504 = vrot.slane %v2503, 1
        %v2505 = vmax.f32 %v2503, %v2504
        %v2506 = vmax.f32 %v2338, %v2346
        %v2507 = vmax.f32 %v2506, %v2354
        %v2508 = vmax.f32 %v2507, %v2362
        %v2509 = vmax.f32 %v2508, %v2370
        %v2510 = vmax.f32 %v2509, %v2378
        %v2511 = vmax.f32 %v2510, %v2386
        %v2512 = vmax.f32 %v2511, %v2394
        %v2513 = vmax.f32 %v2512, %v2402
        %v2514 = vmax.f32 %v2513, %v2410
        %v2515 = vmax.f32 %v2514, %v2418
        %v2516 = vmax.f32 %v2515, %v2426
        %v2517 = vmax.f32 %v2516, %v2434
        %v2518 = vmax.f32 %v2517, %v2442
        %v2519 = vmax.f32 %v2518, %v2450
        %v2520 = vmax.f32 %v2519, %v2458
        %v2521 = vrot.slane %v2520, 4
        %v2522 = vmax.f32 %v2520, %v2521
        %v2523 = vrot.slane %v2522, 2
        %v2524 = vmax.f32 %v2522, %v2523
        %v2525 = vrot.slane %v2524, 1
        %v2526 = vmax.f32 %v2524, %v2525
        %v2527 = vmax.f32 %v2339, %v2347
        %v2528 = vmax.f32 %v2527, %v2355
        %v2529 = vmax.f32 %v2528, %v2363
        %v2530 = vmax.f32 %v2529, %v2371
        %v2531 = vmax.f32 %v2530, %v2379
        %v2532 = vmax.f32 %v2531, %v2387
        %v2533 = vmax.f32 %v2532, %v2395
        %v2534 = vmax.f32 %v2533, %v2403
        %v2535 = vmax.f32 %v2534, %v2411
        %v2536 = vmax.f32 %v2535, %v2419
        %v2537 = vmax.f32 %v2536, %v2427
        %v2538 = vmax.f32 %v2537, %v2435
        %v2539 = vmax.f32 %v2538, %v2443
        %v2540 = vmax.f32 %v2539, %v2451
        %v2541 = vmax.f32 %v2540, %v2459
        %v2542 = vrot.slane %v2541, 4
        %v2543 = vmax.f32 %v2541, %v2542
        %v2544 = vrot.slane %v2543, 2
        %v2545 = vmax.f32 %v2543, %v2544
        %v2546 = vrot.slane %v2545, 1
        %v2547 = vmax.f32 %v2545, %v2546
        %v2548 = vmax.f32 %v2340, %v2348
        %v2549 = vmax.f32 %v2548, %v2356
        %v2550 = vmax.f32 %v2549, %v2364
        %v2551 = vmax.f32 %v2550, %v2372
        %v2552 = vmax.f32 %v2551, %v2380
        %v2553 = vmax.f32 %v2552, %v2388
        %v2554 = vmax.f32 %v2553, %v2396
        %v2555 = vmax.f32 %v2554, %v2404
        %v2556 = vmax.f32 %v2555, %v2412
        %v2557 = vmax.f32 %v2556, %v2420
        %v2558 = vmax.f32 %v2557, %v2428
        %v2559 = vmax.f32 %v2558, %v2436
        %v2560 = vmax.f32 %v2559, %v2444
        %v2561 = vmax.f32 %v2560, %v2452
        %v2562 = vmax.f32 %v2561, %v2460
        %v2563 = vrot.slane %v2562, 4
        %v2564 = vmax.f32 %v2562, %v2563
        %v2565 = vrot.slane %v2564, 2
        %v2566 = vmax.f32 %v2564, %v2565
        %v2567 = vrot.slane %v2566, 1
        %v2568 = vmax.f32 %v2566, %v2567
        %v2569 = vmax.f32 %v2341, %v2349
        %v2570 = vmax.f32 %v2569, %v2357
        %v2571 = vmax.f32 %v2570, %v2365
        %v2572 = vmax.f32 %v2571, %v2373
        %v2573 = vmax.f32 %v2572, %v2381
        %v2574 = vmax.f32 %v2573, %v2389
        %v2575 = vmax.f32 %v2574, %v2397
        %v2576 = vmax.f32 %v2575, %v2405
        %v2577 = vmax.f32 %v2576, %v2413
        %v2578 = vmax.f32 %v2577, %v2421
        %v2579 = vmax.f32 %v2578, %v2429
        %v2580 = vmax.f32 %v2579, %v2437
        %v2581 = vmax.f32 %v2580, %v2445
        %v2582 = vmax.f32 %v2581, %v2453
        %v2583 = vmax.f32 %v2582, %v2461
        %v2584 = vrot.slane %v2583, 4
        %v2585 = vmax.f32 %v2583, %v2584
        %v2586 = vrot.slane %v2585, 2
        %v2587 = vmax.f32 %v2585, %v2586
        %v2588 = vrot.slane %v2587, 1
        %v2589 = vmax.f32 %v2587, %v2588
        %v2590 = vmax.f32 %v2342, %v2350
        %v2591 = vmax.f32 %v2590, %v2358
        %v2592 = vmax.f32 %v2591, %v2366
        %v2593 = vmax.f32 %v2592, %v2374
        %v2594 = vmax.f32 %v2593, %v2382
        %v2595 = vmax.f32 %v2594, %v2390
        %v2596 = vmax.f32 %v2595, %v2398
        %v2597 = vmax.f32 %v2596, %v2406
        %v2598 = vmax.f32 %v2597, %v2414
        %v2599 = vmax.f32 %v2598, %v2422
        %v2600 = vmax.f32 %v2599, %v2430
        %v2601 = vmax.f32 %v2600, %v2438
        %v2602 = vmax.f32 %v2601, %v2446
        %v2603 = vmax.f32 %v2602, %v2454
        %v2604 = vmax.f32 %v2603, %v2462
        %v2605 = vrot.slane %v2604, 4
        %v2606 = vmax.f32 %v2604, %v2605
        %v2607 = vrot.slane %v2606, 2
        %v2608 = vmax.f32 %v2606, %v2607
        %v2609 = vrot.slane %v2608, 1
        %v2610 = vmax.f32 %v2608, %v2609
        %v2611 = vmax.f32 %v2343, %v2351
        %v2612 = vmax.f32 %v2611, %v2359
        %v2613 = vmax.f32 %v2612, %v2367
        %v2614 = vmax.f32 %v2613, %v2375
        %v2615 = vmax.f32 %v2614, %v2383
        %v2616 = vmax.f32 %v2615, %v2391
        %v2617 = vmax.f32 %v2616, %v2399
        %v2618 = vmax.f32 %v2617, %v2407
        %v2619 = vmax.f32 %v2618, %v2415
        %v2620 = vmax.f32 %v2619, %v2423
        %v2621 = vmax.f32 %v2620, %v2431
        %v2622 = vmax.f32 %v2621, %v2439
        %v2623 = vmax.f32 %v2622, %v2447
        %v2624 = vmax.f32 %v2623, %v2455
        %v2625 = vmax.f32 %v2624, %v2463
        %v2626 = vrot.slane %v2625, 4
        %v2627 = vmax.f32 %v2625, %v2626
        %v2628 = vrot.slane %v2627, 2
        %v2629 = vmax.f32 %v2627, %v2628
        %v2630 = vrot.slane %v2629, 1
        %v2631 = vmax.f32 %v2629, %v2630
        %v2632 = vpack.c.bf16 %v2484, %v2484
        %v2633 = vpack.c.bf16 %v2505, %v2505
        %v2634 = vpack.c.bf16 %v2526, %v2526
        %v2635 = vpack.c.bf16 %v2547, %v2547
        %v2636 = vpack.c.bf16 %v2568, %v2568
        %v2637 = vpack.c.bf16 %v2589, %v2589
        %v2638 = vpack.c.bf16 %v2610, %v2610
        %v2639 = vpack.c.bf16 %v2631, %v2631
        %v2640 = vld [vmem:[#allocation6] sm:$0xff]
        %v2641 = vld [vmem:[#allocation6 + $0x8] sm:$0xff]
        %v2642 = vld [vmem:[#allocation6 + $0x10] sm:$0xff]
        %v2643 = vld [vmem:[#allocation6 + $0x18] sm:$0xff]
        %v2644 = vld [vmem:[#allocation6 + $0x20] sm:$0xff]
        %v2645 = vld [vmem:[#allocation6 + $0x28] sm:$0xff]
        %v2646 = vld [vmem:[#allocation6 + $0x30] sm:$0xff]
        %v2647 = vld [vmem:[#allocation6 + $0x38] sm:$0xff]
        %v2648 = vld [vmem:[#allocation6 + $0x40] sm:$0xff]
        %v2649 = vld [vmem:[#allocation6 + $0x48] sm:$0xff]
        %v2650 = vld [vmem:[#allocation6 + $0x50] sm:$0xff]
        %v2651 = vld [vmem:[#allocation6 + $0x58] sm:$0xff]
        %v2652 = vld [vmem:[#allocation6 + $0x60] sm:$0xff]
        %v2653 = vld [vmem:[#allocation6 + $0x68] sm:$0xff]
        %v2654 = vld [vmem:[#allocation6 + $0x70] sm:$0xff]
        %v2655 = vld [vmem:[#allocation6 + $0x78] sm:$0xff]
        %v2656 = vld [vmem:[#allocation6 + $0x80] sm:$0xff]
        %v2657 = vld [vmem:[#allocation6 + $0x88] sm:$0xff]
        %v2658 = vld [vmem:[#allocation6 + $0x90] sm:$0xff]
        %v2659 = vld [vmem:[#allocation6 + $0x98] sm:$0xff]
        %v2660 = vld [vmem:[#allocation6 + $0xa0] sm:$0xff]
        %v2661 = vld [vmem:[#allocation6 + $0xa8] sm:$0xff]
        %v2662 = vld [vmem:[#allocation6 + $0xb0] sm:$0xff]
        %v2663 = vld [vmem:[#allocation6 + $0xb8] sm:$0xff]
        %v2664 = vld [vmem:[#allocation6 + $0xc0] sm:$0xff]
        %v2665 = vld [vmem:[#allocation6 + $0xc8] sm:$0xff]
        %v2666 = vld [vmem:[#allocation6 + $0xd0] sm:$0xff]
        %v2667 = vld [vmem:[#allocation6 + $0xd8] sm:$0xff]
        %v2668 = vld [vmem:[#allocation6 + $0xe0] sm:$0xff]
        %v2669 = vld [vmem:[#allocation6 + $0xe8] sm:$0xff]
        %v2670 = vld [vmem:[#allocation6 + $0xf0] sm:$0xff]
        %v2671 = vld [vmem:[#allocation6 + $0xf8] sm:$0xff]
        %v2672 = vld [vmem:[#allocation6 + $0x100] sm:$0xff]
        %v2673 = vld [vmem:[#allocation6 + $0x108] sm:$0xff]
        %v2674 = vld [vmem:[#allocation6 + $0x110] sm:$0xff]
        %v2675 = vld [vmem:[#allocation6 + $0x118] sm:$0xff]
        %v2676 = vld [vmem:[#allocation6 + $0x120] sm:$0xff]
        %v2677 = vld [vmem:[#allocation6 + $0x128] sm:$0xff]
        %v2678 = vld [vmem:[#allocation6 + $0x130] sm:$0xff]
        %v2679 = vld [vmem:[#allocation6 + $0x138] sm:$0xff]
        %v2680 = vld [vmem:[#allocation6 + $0x140] sm:$0xff]
        %v2681 = vld [vmem:[#allocation6 + $0x148] sm:$0xff]
        %v2682 = vld [vmem:[#allocation6 + $0x150] sm:$0xff]
        %v2683 = vld [vmem:[#allocation6 + $0x158] sm:$0xff]
        %v2684 = vld [vmem:[#allocation6 + $0x160] sm:$0xff]
        %v2685 = vld [vmem:[#allocation6 + $0x168] sm:$0xff]
        %v2686 = vld [vmem:[#allocation6 + $0x170] sm:$0xff]
        %v2687 = vld [vmem:[#allocation6 + $0x178] sm:$0xff]
        %v2688 = vld [vmem:[#allocation6 + $0x180] sm:$0xff]
        %v2689 = vld [vmem:[#allocation6 + $0x188] sm:$0xff]
        %v2690 = vld [vmem:[#allocation6 + $0x190] sm:$0xff]
        %v2691 = vld [vmem:[#allocation6 + $0x198] sm:$0xff]
        %v2692 = vld [vmem:[#allocation6 + $0x1a0] sm:$0xff]
        %v2693 = vld [vmem:[#allocation6 + $0x1a8] sm:$0xff]
        %v2694 = vld [vmem:[#allocation6 + $0x1b0] sm:$0xff]
        %v2695 = vld [vmem:[#allocation6 + $0x1b8] sm:$0xff]
        %v2696 = vld [vmem:[#allocation6 + $0x1c0] sm:$0xff]
        %v2697 = vld [vmem:[#allocation6 + $0x1c8] sm:$0xff]
        %v2698 = vld [vmem:[#allocation6 + $0x1d0] sm:$0xff]
        %v2699 = vld [vmem:[#allocation6 + $0x1d8] sm:$0xff]
        %v2700 = vld [vmem:[#allocation6 + $0x1e0] sm:$0xff]
        %v2701 = vld [vmem:[#allocation6 + $0x1e8] sm:$0xff]
        %v2702 = vld [vmem:[#allocation6 + $0x1f0] sm:$0xff]
        %v2703 = vld [vmem:[#allocation6 + $0x1f8] sm:$0xff]
        %v2704 = vld [vmem:[#allocation6 + $0x200] sm:$0xff]
        %v2705 = vld [vmem:[#allocation6 + $0x208] sm:$0xff]
        %v2706 = vld [vmem:[#allocation6 + $0x210] sm:$0xff]
        %v2707 = vld [vmem:[#allocation6 + $0x218] sm:$0xff]
        %v2708 = vld [vmem:[#allocation6 + $0x220] sm:$0xff]
        %v2709 = vld [vmem:[#allocation6 + $0x228] sm:$0xff]
        %v2710 = vld [vmem:[#allocation6 + $0x230] sm:$0xff]
        %v2711 = vld [vmem:[#allocation6 + $0x238] sm:$0xff]
        %v2712 = vld [vmem:[#allocation6 + $0x240] sm:$0xff]
        %v2713 = vld [vmem:[#allocation6 + $0x248] sm:$0xff]
        %v2714 = vld [vmem:[#allocation6 + $0x250] sm:$0xff]
        %v2715 = vld [vmem:[#allocation6 + $0x258] sm:$0xff]
        %v2716 = vld [vmem:[#allocation6 + $0x260] sm:$0xff]
        %v2717 = vld [vmem:[#allocation6 + $0x268] sm:$0xff]
        %v2718 = vld [vmem:[#allocation6 + $0x270] sm:$0xff]
        %v2719 = vld [vmem:[#allocation6 + $0x278] sm:$0xff]
        %v2720 = vld [vmem:[#allocation6 + $0x280] sm:$0xff]
        %v2721 = vld [vmem:[#allocation6 + $0x288] sm:$0xff]
        %v2722 = vld [vmem:[#allocation6 + $0x290] sm:$0xff]
        %v2723 = vld [vmem:[#allocation6 + $0x298] sm:$0xff]
        %v2724 = vld [vmem:[#allocation6 + $0x2a0] sm:$0xff]
        %v2725 = vld [vmem:[#allocation6 + $0x2a8] sm:$0xff]
        %v2726 = vld [vmem:[#allocation6 + $0x2b0] sm:$0xff]
        %v2727 = vld [vmem:[#allocation6 + $0x2b8] sm:$0xff]
        %v2728 = vld [vmem:[#allocation6 + $0x2c0] sm:$0xff]
        %v2729 = vld [vmem:[#allocation6 + $0x2c8] sm:$0xff]
        %v2730 = vld [vmem:[#allocation6 + $0x2d0] sm:$0xff]
        %v2731 = vld [vmem:[#allocation6 + $0x2d8] sm:$0xff]
        %v2732 = vld [vmem:[#allocation6 + $0x2e0] sm:$0xff]
        %v2733 = vld [vmem:[#allocation6 + $0x2e8] sm:$0xff]
        %v2734 = vld [vmem:[#allocation6 + $0x2f0] sm:$0xff]
        %v2735 = vld [vmem:[#allocation6 + $0x2f8] sm:$0xff]
        %v2736 = vld [vmem:[#allocation6 + $0x300] sm:$0xff]
        %v2737 = vld [vmem:[#allocation6 + $0x308] sm:$0xff]
        %v2738 = vld [vmem:[#allocation6 + $0x310] sm:$0xff]
        %v2739 = vld [vmem:[#allocation6 + $0x318] sm:$0xff]
        %v2740 = vld [vmem:[#allocation6 + $0x320] sm:$0xff]
        %v2741 = vld [vmem:[#allocation6 + $0x328] sm:$0xff]
        %v2742 = vld [vmem:[#allocation6 + $0x330] sm:$0xff]
        %v2743 = vld [vmem:[#allocation6 + $0x338] sm:$0xff]
        %v2744 = vld [vmem:[#allocation6 + $0x340] sm:$0xff]
        %v2745 = vld [vmem:[#allocation6 + $0x348] sm:$0xff]
        %v2746 = vld [vmem:[#allocation6 + $0x350] sm:$0xff]
        %v2747 = vld [vmem:[#allocation6 + $0x358] sm:$0xff]
        %v2748 = vld [vmem:[#allocation6 + $0x360] sm:$0xff]
        %v2749 = vld [vmem:[#allocation6 + $0x368] sm:$0xff]
        %v2750 = vld [vmem:[#allocation6 + $0x370] sm:$0xff]
        %v2751 = vld [vmem:[#allocation6 + $0x378] sm:$0xff]
        %v2752 = vld [vmem:[#allocation6 + $0x380] sm:$0xff]
        %v2753 = vld [vmem:[#allocation6 + $0x388] sm:$0xff]
        %v2754 = vld [vmem:[#allocation6 + $0x390] sm:$0xff]
        %v2755 = vld [vmem:[#allocation6 + $0x398] sm:$0xff]
        %v2756 = vld [vmem:[#allocation6 + $0x3a0] sm:$0xff]
        %v2757 = vld [vmem:[#allocation6 + $0x3a8] sm:$0xff]
        %v2758 = vld [vmem:[#allocation6 + $0x3b0] sm:$0xff]
        %v2759 = vld [vmem:[#allocation6 + $0x3b8] sm:$0xff]
        %v2760 = vld [vmem:[#allocation6 + $0x3c0] sm:$0xff]
        %v2761 = vld [vmem:[#allocation6 + $0x3c8] sm:$0xff]
        %v2762 = vld [vmem:[#allocation6 + $0x3d0] sm:$0xff]
        %v2763 = vld [vmem:[#allocation6 + $0x3d8] sm:$0xff]
        %v2764 = vld [vmem:[#allocation6 + $0x3e0] sm:$0xff]
        %v2765 = vld [vmem:[#allocation6 + $0x3e8] sm:$0xff]
        %v2766 = vld [vmem:[#allocation6 + $0x3f0] sm:$0xff]
        %v2767 = vld [vmem:[#allocation6 + $0x3f8] sm:$0xff]
        %v2768 = vld [vmem:[#allocation6 + $0x400] sm:$0xff]
        %v2769 = vld [vmem:[#allocation6 + $0x408] sm:$0xff]
        %v2770 = vld [vmem:[#allocation6 + $0x410] sm:$0xff]
        %v2771 = vld [vmem:[#allocation6 + $0x418] sm:$0xff]
        %v2772 = vld [vmem:[#allocation6 + $0x420] sm:$0xff]
        %v2773 = vld [vmem:[#allocation6 + $0x428] sm:$0xff]
        %v2774 = vld [vmem:[#allocation6 + $0x430] sm:$0xff]
        %v2775 = vld [vmem:[#allocation6 + $0x438] sm:$0xff]
        %v2776 = vld [vmem:[#allocation6 + $0x440] sm:$0xff]
        %v2777 = vld [vmem:[#allocation6 + $0x448] sm:$0xff]
        %v2778 = vld [vmem:[#allocation6 + $0x450] sm:$0xff]
        %v2779 = vld [vmem:[#allocation6 + $0x458] sm:$0xff]
        %v2780 = vld [vmem:[#allocation6 + $0x460] sm:$0xff]
        %v2781 = vld [vmem:[#allocation6 + $0x468] sm:$0xff]
        %v2782 = vld [vmem:[#allocation6 + $0x470] sm:$0xff]
        %v2783 = vld [vmem:[#allocation6 + $0x478] sm:$0xff]
        %v2784 = vld [vmem:[#allocation6 + $0x480] sm:$0xff]
        %v2785 = vld [vmem:[#allocation6 + $0x488] sm:$0xff]
        %v2786 = vld [vmem:[#allocation6 + $0x490] sm:$0xff]
        %v2787 = vld [vmem:[#allocation6 + $0x498] sm:$0xff]
        %v2788 = vld [vmem:[#allocation6 + $0x4a0] sm:$0xff]
        %v2789 = vld [vmem:[#allocation6 + $0x4a8] sm:$0xff]
        %v2790 = vld [vmem:[#allocation6 + $0x4b0] sm:$0xff]
        %v2791 = vld [vmem:[#allocation6 + $0x4b8] sm:$0xff]
        %v2792 = vld [vmem:[#allocation6 + $0x4c0] sm:$0xff]
        %v2793 = vld [vmem:[#allocation6 + $0x4c8] sm:$0xff]
        %v2794 = vld [vmem:[#allocation6 + $0x4d0] sm:$0xff]
        %v2795 = vld [vmem:[#allocation6 + $0x4d8] sm:$0xff]
        %v2796 = vld [vmem:[#allocation6 + $0x4e0] sm:$0xff]
        %v2797 = vld [vmem:[#allocation6 + $0x4e8] sm:$0xff]
        %v2798 = vld [vmem:[#allocation6 + $0x4f0] sm:$0xff]
        %v2799 = vld [vmem:[#allocation6 + $0x4f8] sm:$0xff]
        %v2800 = vld [vmem:[#allocation6 + $0x500] sm:$0xff]
        %v2801 = vld [vmem:[#allocation6 + $0x508] sm:$0xff]
        %v2802 = vld [vmem:[#allocation6 + $0x510] sm:$0xff]
        %v2803 = vld [vmem:[#allocation6 + $0x518] sm:$0xff]
        %v2804 = vld [vmem:[#allocation6 + $0x520] sm:$0xff]
        %v2805 = vld [vmem:[#allocation6 + $0x528] sm:$0xff]
        %v2806 = vld [vmem:[#allocation6 + $0x530] sm:$0xff]
        %v2807 = vld [vmem:[#allocation6 + $0x538] sm:$0xff]
        %v2808 = vld [vmem:[#allocation6 + $0x540] sm:$0xff]
        %v2809 = vld [vmem:[#allocation6 + $0x548] sm:$0xff]
        %v2810 = vld [vmem:[#allocation6 + $0x550] sm:$0xff]
        %v2811 = vld [vmem:[#allocation6 + $0x558] sm:$0xff]
        %v2812 = vld [vmem:[#allocation6 + $0x560] sm:$0xff]
        %v2813 = vld [vmem:[#allocation6 + $0x568] sm:$0xff]
        %v2814 = vld [vmem:[#allocation6 + $0x570] sm:$0xff]
        %v2815 = vld [vmem:[#allocation6 + $0x578] sm:$0xff]
        %v2816 = vld [vmem:[#allocation6 + $0x580] sm:$0xff]
        %v2817 = vld [vmem:[#allocation6 + $0x588] sm:$0xff]
        %v2818 = vld [vmem:[#allocation6 + $0x590] sm:$0xff]
        %v2819 = vld [vmem:[#allocation6 + $0x598] sm:$0xff]
        %v2820 = vld [vmem:[#allocation6 + $0x5a0] sm:$0xff]
        %v2821 = vld [vmem:[#allocation6 + $0x5a8] sm:$0xff]
        %v2822 = vld [vmem:[#allocation6 + $0x5b0] sm:$0xff]
        %v2823 = vld [vmem:[#allocation6 + $0x5b8] sm:$0xff]
        %v2824 = vld [vmem:[#allocation6 + $0x5c0] sm:$0xff]
        %v2825 = vld [vmem:[#allocation6 + $0x5c8] sm:$0xff]
        %v2826 = vld [vmem:[#allocation6 + $0x5d0] sm:$0xff]
        %v2827 = vld [vmem:[#allocation6 + $0x5d8] sm:$0xff]
        %v2828 = vld [vmem:[#allocation6 + $0x5e0] sm:$0xff]
        %v2829 = vld [vmem:[#allocation6 + $0x5e8] sm:$0xff]
        %v2830 = vld [vmem:[#allocation6 + $0x5f0] sm:$0xff]
        %v2831 = vld [vmem:[#allocation6 + $0x5f8] sm:$0xff]
        %v2832 = vld [vmem:[#allocation6 + $0x600] sm:$0xff]
        %v2833 = vld [vmem:[#allocation6 + $0x608] sm:$0xff]
        %v2834 = vld [vmem:[#allocation6 + $0x610] sm:$0xff]
        %v2835 = vld [vmem:[#allocation6 + $0x618] sm:$0xff]
        %v2836 = vld [vmem:[#allocation6 + $0x620] sm:$0xff]
        %v2837 = vld [vmem:[#allocation6 + $0x628] sm:$0xff]
        %v2838 = vld [vmem:[#allocation6 + $0x630] sm:$0xff]
        %v2839 = vld [vmem:[#allocation6 + $0x638] sm:$0xff]
        %v2840 = vld [vmem:[#allocation6 + $0x640] sm:$0xff]
        %v2841 = vld [vmem:[#allocation6 + $0x648] sm:$0xff]
        %v2842 = vld [vmem:[#allocation6 + $0x650] sm:$0xff]
        %v2843 = vld [vmem:[#allocation6 + $0x658] sm:$0xff]
        %v2844 = vld [vmem:[#allocation6 + $0x660] sm:$0xff]
        %v2845 = vld [vmem:[#allocation6 + $0x668] sm:$0xff]
        %v2846 = vld [vmem:[#allocation6 + $0x670] sm:$0xff]
        %v2847 = vld [vmem:[#allocation6 + $0x678] sm:$0xff]
        %v2848 = vld [vmem:[#allocation6 + $0x680] sm:$0xff]
        %v2849 = vld [vmem:[#allocation6 + $0x688] sm:$0xff]
        %v2850 = vld [vmem:[#allocation6 + $0x690] sm:$0xff]
        %v2851 = vld [vmem:[#allocation6 + $0x698] sm:$0xff]
        %v2852 = vld [vmem:[#allocation6 + $0x6a0] sm:$0xff]
        %v2853 = vld [vmem:[#allocation6 + $0x6a8] sm:$0xff]
        %v2854 = vld [vmem:[#allocation6 + $0x6b0] sm:$0xff]
        %v2855 = vld [vmem:[#allocation6 + $0x6b8] sm:$0xff]
        %v2856 = vld [vmem:[#allocation6 + $0x6c0] sm:$0xff]
        %v2857 = vld [vmem:[#allocation6 + $0x6c8] sm:$0xff]
        %v2858 = vld [vmem:[#allocation6 + $0x6d0] sm:$0xff]
        %v2859 = vld [vmem:[#allocation6 + $0x6d8] sm:$0xff]
        %v2860 = vld [vmem:[#allocation6 + $0x6e0] sm:$0xff]
        %v2861 = vld [vmem:[#allocation6 + $0x6e8] sm:$0xff]
        %v2862 = vld [vmem:[#allocation6 + $0x6f0] sm:$0xff]
        %v2863 = vld [vmem:[#allocation6 + $0x6f8] sm:$0xff]
        %v2864 = vld [vmem:[#allocation6 + $0x700] sm:$0xff]
        %v2865 = vld [vmem:[#allocation6 + $0x708] sm:$0xff]
        %v2866 = vld [vmem:[#allocation6 + $0x710] sm:$0xff]
        %v2867 = vld [vmem:[#allocation6 + $0x718] sm:$0xff]
        %v2868 = vld [vmem:[#allocation6 + $0x720] sm:$0xff]
        %v2869 = vld [vmem:[#allocation6 + $0x728] sm:$0xff]
        %v2870 = vld [vmem:[#allocation6 + $0x730] sm:$0xff]
        %v2871 = vld [vmem:[#allocation6 + $0x738] sm:$0xff]
        %v2872 = vld [vmem:[#allocation6 + $0x740] sm:$0xff]
        %v2873 = vld [vmem:[#allocation6 + $0x748] sm:$0xff]
        %v2874 = vld [vmem:[#allocation6 + $0x750] sm:$0xff]
        %v2875 = vld [vmem:[#allocation6 + $0x758] sm:$0xff]
        %v2876 = vld [vmem:[#allocation6 + $0x760] sm:$0xff]
        %v2877 = vld [vmem:[#allocation6 + $0x768] sm:$0xff]
        %v2878 = vld [vmem:[#allocation6 + $0x770] sm:$0xff]
        %v2879 = vld [vmem:[#allocation6 + $0x778] sm:$0xff]
        %v2880 = vld [vmem:[#allocation6 + $0x780] sm:$0xff]
        %v2881 = vld [vmem:[#allocation6 + $0x788] sm:$0xff]
        %v2882 = vld [vmem:[#allocation6 + $0x790] sm:$0xff]
        %v2883 = vld [vmem:[#allocation6 + $0x798] sm:$0xff]
        %v2884 = vld [vmem:[#allocation6 + $0x7a0] sm:$0xff]
        %v2885 = vld [vmem:[#allocation6 + $0x7a8] sm:$0xff]
        %v2886 = vld [vmem:[#allocation6 + $0x7b0] sm:$0xff]
        %v2887 = vld [vmem:[#allocation6 + $0x7b8] sm:$0xff]
        %v2888 = vld [vmem:[#allocation6 + $0x7c0] sm:$0xff]
        %v2889 = vld [vmem:[#allocation6 + $0x7c8] sm:$0xff]
        %v2890 = vld [vmem:[#allocation6 + $0x7d0] sm:$0xff]
        %v2891 = vld [vmem:[#allocation6 + $0x7d8] sm:$0xff]
        %v2892 = vld [vmem:[#allocation6 + $0x7e0] sm:$0xff]
        %v2893 = vld [vmem:[#allocation6 + $0x7e8] sm:$0xff]
        %v2894 = vld [vmem:[#allocation6 + $0x7f0] sm:$0xff]
        %v2895 = vld [vmem:[#allocation6 + $0x7f8] sm:$0xff]
        %v2896 = vld [vmem:[#allocation7] sm:$0xf]
        %v3153 = vunpack.c.l.b16 %v2640
        %v3154 = vunpack.c.h.b16 %v2640
        %v3155 = vunpack.c.l.b16 %v2641
        %v3156 = vunpack.c.h.b16 %v2641
        %v3157 = vunpack.c.l.b16 %v2642
        %v3158 = vunpack.c.h.b16 %v2642
        %v3159 = vunpack.c.l.b16 %v2643
        %v3160 = vunpack.c.h.b16 %v2643
        %v3161 = vunpack.c.l.b16 %v2644
        %v3162 = vunpack.c.h.b16 %v2644
        %v3163 = vunpack.c.l.b16 %v2645
        %v3164 = vunpack.c.h.b16 %v2645
        %v3165 = vunpack.c.l.b16 %v2646
        %v3166 = vunpack.c.h.b16 %v2646
        %v3167 = vunpack.c.l.b16 %v2647
        %v3168 = vunpack.c.h.b16 %v2647
        %v3169 = vunpack.c.l.b16 %v2648
        %v3170 = vunpack.c.h.b16 %v2648
        %v3171 = vunpack.c.l.b16 %v2649
        %v3172 = vunpack.c.h.b16 %v2649
        %v3173 = vunpack.c.l.b16 %v2650
        %v3174 = vunpack.c.h.b16 %v2650
        %v3175 = vunpack.c.l.b16 %v2651
        %v3176 = vunpack.c.h.b16 %v2651
        %v3177 = vunpack.c.l.b16 %v2652
        %v3178 = vunpack.c.h.b16 %v2652
        %v3179 = vunpack.c.l.b16 %v2653
        %v3180 = vunpack.c.h.b16 %v2653
        %v3181 = vunpack.c.l.b16 %v2654
        %v3182 = vunpack.c.h.b16 %v2654
        %v3183 = vunpack.c.l.b16 %v2655
        %v3184 = vunpack.c.h.b16 %v2655
        %v3185 = vunpack.c.l.b16 %v2656
        %v3186 = vunpack.c.h.b16 %v2656
        %v3187 = vunpack.c.l.b16 %v2657
        %v3188 = vunpack.c.h.b16 %v2657
        %v3189 = vunpack.c.l.b16 %v2658
        %v3190 = vunpack.c.h.b16 %v2658
        %v3191 = vunpack.c.l.b16 %v2659
        %v3192 = vunpack.c.h.b16 %v2659
        %v3193 = vunpack.c.l.b16 %v2660
        %v3194 = vunpack.c.h.b16 %v2660
        %v3195 = vunpack.c.l.b16 %v2661
        %v3196 = vunpack.c.h.b16 %v2661
        %v3197 = vunpack.c.l.b16 %v2662
        %v3198 = vunpack.c.h.b16 %v2662
        %v3199 = vunpack.c.l.b16 %v2663
        %v3200 = vunpack.c.h.b16 %v2663
        %v3201 = vunpack.c.l.b16 %v2664
        %v3202 = vunpack.c.h.b16 %v2664
        %v3203 = vunpack.c.l.b16 %v2665
        %v3204 = vunpack.c.h.b16 %v2665
        %v3205 = vunpack.c.l.b16 %v2666
        %v3206 = vunpack.c.h.b16 %v2666
        %v3207 = vunpack.c.l.b16 %v2667
        %v3208 = vunpack.c.h.b16 %v2667
        %v3209 = vunpack.c.l.b16 %v2668
        %v3210 = vunpack.c.h.b16 %v2668
        %v3211 = vunpack.c.l.b16 %v2669
        %v3212 = vunpack.c.h.b16 %v2669
        %v3213 = vunpack.c.l.b16 %v2670
        %v3214 = vunpack.c.h.b16 %v2670
        %v3215 = vunpack.c.l.b16 %v2671
        %v3216 = vunpack.c.h.b16 %v2671
        %v3217 = vunpack.c.l.b16 %v2672
        %v3218 = vunpack.c.h.b16 %v2672
        %v3219 = vunpack.c.l.b16 %v2673
        %v3220 = vunpack.c.h.b16 %v2673
        %v3221 = vunpack.c.l.b16 %v2674
        %v3222 = vunpack.c.h.b16 %v2674
        %v3223 = vunpack.c.l.b16 %v2675
        %v3224 = vunpack.c.h.b16 %v2675
        %v3225 = vunpack.c.l.b16 %v2676
        %v3226 = vunpack.c.h.b16 %v2676
        %v3227 = vunpack.c.l.b16 %v2677
        %v3228 = vunpack.c.h.b16 %v2677
        %v3229 = vunpack.c.l.b16 %v2678
        %v3230 = vunpack.c.h.b16 %v2678
        %v3231 = vunpack.c.l.b16 %v2679
        %v3232 = vunpack.c.h.b16 %v2679
        %v3233 = vunpack.c.l.b16 %v2680
        %v3234 = vunpack.c.h.b16 %v2680
        %v3235 = vunpack.c.l.b16 %v2681
        %v3236 = vunpack.c.h.b16 %v2681
        %v3237 = vunpack.c.l.b16 %v2682
        %v3238 = vunpack.c.h.b16 %v2682
        %v3239 = vunpack.c.l.b16 %v2683
        %v3240 = vunpack.c.h.b16 %v2683
        %v3241 = vunpack.c.l.b16 %v2684
        %v3242 = vunpack.c.h.b16 %v2684
        %v3243 = vunpack.c.l.b16 %v2685
        %v3244 = vunpack.c.h.b16 %v2685
        %v3245 = vunpack.c.l.b16 %v2686
        %v3246 = vunpack.c.h.b16 %v2686
        %v3247 = vunpack.c.l.b16 %v2687
        %v3248 = vunpack.c.h.b16 %v2687
        %v3249 = vunpack.c.l.b16 %v2688
        %v3250 = vunpack.c.h.b16 %v2688
        %v3251 = vunpack.c.l.b16 %v2689
        %v3252 = vunpack.c.h.b16 %v2689
        %v3253 = vunpack.c.l.b16 %v2690
        %v3254 = vunpack.c.h.b16 %v2690
        %v3255 = vunpack.c.l.b16 %v2691
        %v3256 = vunpack.c.h.b16 %v2691
        %v3257 = vunpack.c.l.b16 %v2692
        %v3258 = vunpack.c.h.b16 %v2692
        %v3259 = vunpack.c.l.b16 %v2693
        %v3260 = vunpack.c.h.b16 %v2693
        %v3261 = vunpack.c.l.b16 %v2694
        %v3262 = vunpack.c.h.b16 %v2694
        %v3263 = vunpack.c.l.b16 %v2695
        %v3264 = vunpack.c.h.b16 %v2695
        %v3265 = vunpack.c.l.b16 %v2696
        %v3266 = vunpack.c.h.b16 %v2696
        %v3267 = vunpack.c.l.b16 %v2697
        %v3268 = vunpack.c.h.b16 %v2697
        %v3269 = vunpack.c.l.b16 %v2698
        %v3270 = vunpack.c.h.b16 %v2698
        %v3271 = vunpack.c.l.b16 %v2699
        %v3272 = vunpack.c.h.b16 %v2699
        %v3273 = vunpack.c.l.b16 %v2700
        %v3274 = vunpack.c.h.b16 %v2700
        %v3275 = vunpack.c.l.b16 %v2701
        %v3276 = vunpack.c.h.b16 %v2701
        %v3277 = vunpack.c.l.b16 %v2702
        %v3278 = vunpack.c.h.b16 %v2702
        %v3279 = vunpack.c.l.b16 %v2703
        %v3280 = vunpack.c.h.b16 %v2703
        %v3281 = vunpack.c.l.b16 %v2704
        %v3282 = vunpack.c.h.b16 %v2704
        %v3283 = vunpack.c.l.b16 %v2705
        %v3284 = vunpack.c.h.b16 %v2705
        %v3285 = vunpack.c.l.b16 %v2706
        %v3286 = vunpack.c.h.b16 %v2706
        %v3287 = vunpack.c.l.b16 %v2707
        %v3288 = vunpack.c.h.b16 %v2707
        %v3289 = vunpack.c.l.b16 %v2708
        %v3290 = vunpack.c.h.b16 %v2708
        %v3291 = vunpack.c.l.b16 %v2709
        %v3292 = vunpack.c.h.b16 %v2709
        %v3293 = vunpack.c.l.b16 %v2710
        %v3294 = vunpack.c.h.b16 %v2710
        %v3295 = vunpack.c.l.b16 %v2711
        %v3296 = vunpack.c.h.b16 %v2711
        %v3297 = vunpack.c.l.b16 %v2712
        %v3298 = vunpack.c.h.b16 %v2712
        %v3299 = vunpack.c.l.b16 %v2713
        %v3300 = vunpack.c.h.b16 %v2713
        %v3301 = vunpack.c.l.b16 %v2714
        %v3302 = vunpack.c.h.b16 %v2714
        %v3303 = vunpack.c.l.b16 %v2715
        %v3304 = vunpack.c.h.b16 %v2715
        %v3305 = vunpack.c.l.b16 %v2716
        %v3306 = vunpack.c.h.b16 %v2716
        %v3307 = vunpack.c.l.b16 %v2717
        %v3308 = vunpack.c.h.b16 %v2717
        %v3309 = vunpack.c.l.b16 %v2718
        %v3310 = vunpack.c.h.b16 %v2718
        %v3311 = vunpack.c.l.b16 %v2719
        %v3312 = vunpack.c.h.b16 %v2719
        %v3313 = vunpack.c.l.b16 %v2720
        %v3314 = vunpack.c.h.b16 %v2720
        %v3315 = vunpack.c.l.b16 %v2721
        %v3316 = vunpack.c.h.b16 %v2721
        %v3317 = vunpack.c.l.b16 %v2722
        %v3318 = vunpack.c.h.b16 %v2722
        %v3319 = vunpack.c.l.b16 %v2723
        %v3320 = vunpack.c.h.b16 %v2723
        %v3321 = vunpack.c.l.b16 %v2724
        %v3322 = vunpack.c.h.b16 %v2724
        %v3323 = vunpack.c.l.b16 %v2725
        %v3324 = vunpack.c.h.b16 %v2725
        %v3325 = vunpack.c.l.b16 %v2726
        %v3326 = vunpack.c.h.b16 %v2726
        %v3327 = vunpack.c.l.b16 %v2727
        %v3328 = vunpack.c.h.b16 %v2727
        %v3329 = vunpack.c.l.b16 %v2728
        %v3330 = vunpack.c.h.b16 %v2728
        %v3331 = vunpack.c.l.b16 %v2729
        %v3332 = vunpack.c.h.b16 %v2729
        %v3333 = vunpack.c.l.b16 %v2730
        %v3334 = vunpack.c.h.b16 %v2730
        %v3335 = vunpack.c.l.b16 %v2731
        %v3336 = vunpack.c.h.b16 %v2731
        %v3337 = vunpack.c.l.b16 %v2732
        %v3338 = vunpack.c.h.b16 %v2732
        %v3339 = vunpack.c.l.b16 %v2733
        %v3340 = vunpack.c.h.b16 %v2733
        %v3341 = vunpack.c.l.b16 %v2734
        %v3342 = vunpack.c.h.b16 %v2734
        %v3343 = vunpack.c.l.b16 %v2735
        %v3344 = vunpack.c.h.b16 %v2735
        %v3345 = vunpack.c.l.b16 %v2736
        %v3346 = vunpack.c.h.b16 %v2736
        %v3347 = vunpack.c.l.b16 %v2737
        %v3348 = vunpack.c.h.b16 %v2737
        %v3349 = vunpack.c.l.b16 %v2738
        %v3350 = vunpack.c.h.b16 %v2738
        %v3351 = vunpack.c.l.b16 %v2739
        %v3352 = vunpack.c.h.b16 %v2739
        %v3353 = vunpack.c.l.b16 %v2740
        %v3354 = vunpack.c.h.b16 %v2740
        %v3355 = vunpack.c.l.b16 %v2741
        %v3356 = vunpack.c.h.b16 %v2741
        %v3357 = vunpack.c.l.b16 %v2742
        %v3358 = vunpack.c.h.b16 %v2742
        %v3359 = vunpack.c.l.b16 %v2743
        %v3360 = vunpack.c.h.b16 %v2743
        %v3361 = vunpack.c.l.b16 %v2744
        %v3362 = vunpack.c.h.b16 %v2744
        %v3363 = vunpack.c.l.b16 %v2745
        %v3364 = vunpack.c.h.b16 %v2745
        %v3365 = vunpack.c.l.b16 %v2746
        %v3366 = vunpack.c.h.b16 %v2746
        %v3367 = vunpack.c.l.b16 %v2747
        %v3368 = vunpack.c.h.b16 %v2747
        %v3369 = vunpack.c.l.b16 %v2748
        %v3370 = vunpack.c.h.b16 %v2748
        %v3371 = vunpack.c.l.b16 %v2749
        %v3372 = vunpack.c.h.b16 %v2749
        %v3373 = vunpack.c.l.b16 %v2750
        %v3374 = vunpack.c.h.b16 %v2750
        %v3375 = vunpack.c.l.b16 %v2751
        %v3376 = vunpack.c.h.b16 %v2751
        %v3377 = vunpack.c.l.b16 %v2752
        %v3378 = vunpack.c.h.b16 %v2752
        %v3379 = vunpack.c.l.b16 %v2753
        %v3380 = vunpack.c.h.b16 %v2753
        %v3381 = vunpack.c.l.b16 %v2754
        %v3382 = vunpack.c.h.b16 %v2754
        %v3383 = vunpack.c.l.b16 %v2755
        %v3384 = vunpack.c.h.b16 %v2755
        %v3385 = vunpack.c.l.b16 %v2756
        %v3386 = vunpack.c.h.b16 %v2756
        %v3387 = vunpack.c.l.b16 %v2757
        %v3388 = vunpack.c.h.b16 %v2757
        %v3389 = vunpack.c.l.b16 %v2758
        %v3390 = vunpack.c.h.b16 %v2758
        %v3391 = vunpack.c.l.b16 %v2759
        %v3392 = vunpack.c.h.b16 %v2759
        %v3393 = vunpack.c.l.b16 %v2760
        %v3394 = vunpack.c.h.b16 %v2760
        %v3395 = vunpack.c.l.b16 %v2761
        %v3396 = vunpack.c.h.b16 %v2761
        %v3397 = vunpack.c.l.b16 %v2762
        %v3398 = vunpack.c.h.b16 %v2762
        %v3399 = vunpack.c.l.b16 %v2763
        %v3400 = vunpack.c.h.b16 %v2763
        %v3401 = vunpack.c.l.b16 %v2764
        %v3402 = vunpack.c.h.b16 %v2764
        %v3403 = vunpack.c.l.b16 %v2765
        %v3404 = vunpack.c.h.b16 %v2765
        %v3405 = vunpack.c.l.b16 %v2766
        %v3406 = vunpack.c.h.b16 %v2766
        %v3407 = vunpack.c.l.b16 %v2767
        %v3408 = vunpack.c.h.b16 %v2767
        %v3409 = vunpack.c.l.b16 %v2768
        %v3410 = vunpack.c.h.b16 %v2768
        %v3411 = vunpack.c.l.b16 %v2769
        %v3412 = vunpack.c.h.b16 %v2769
        %v3413 = vunpack.c.l.b16 %v2770
        %v3414 = vunpack.c.h.b16 %v2770
        %v3415 = vunpack.c.l.b16 %v2771
        %v3416 = vunpack.c.h.b16 %v2771
        %v3417 = vunpack.c.l.b16 %v2772
        %v3418 = vunpack.c.h.b16 %v2772
        %v3419 = vunpack.c.l.b16 %v2773
        %v3420 = vunpack.c.h.b16 %v2773
        %v3421 = vunpack.c.l.b16 %v2774
        %v3422 = vunpack.c.h.b16 %v2774
        %v3423 = vunpack.c.l.b16 %v2775
        %v3424 = vunpack.c.h.b16 %v2775
        %v3425 = vunpack.c.l.b16 %v2776
        %v3426 = vunpack.c.h.b16 %v2776
        %v3427 = vunpack.c.l.b16 %v2777
        %v3428 = vunpack.c.h.b16 %v2777
        %v3429 = vunpack.c.l.b16 %v2778
        %v3430 = vunpack.c.h.b16 %v2778
        %v3431 = vunpack.c.l.b16 %v2779
        %v3432 = vunpack.c.h.b16 %v2779
        %v3433 = vunpack.c.l.b16 %v2780
        %v3434 = vunpack.c.h.b16 %v2780
        %v3435 = vunpack.c.l.b16 %v2781
        %v3436 = vunpack.c.h.b16 %v2781
        %v3437 = vunpack.c.l.b16 %v2782
        %v3438 = vunpack.c.h.b16 %v2782
        %v3439 = vunpack.c.l.b16 %v2783
        %v3440 = vunpack.c.h.b16 %v2783
        %v3441 = vunpack.c.l.b16 %v2784
        %v3442 = vunpack.c.h.b16 %v2784
        %v3443 = vunpack.c.l.b16 %v2785
        %v3444 = vunpack.c.h.b16 %v2785
        %v3445 = vunpack.c.l.b16 %v2786
        %v3446 = vunpack.c.h.b16 %v2786
        %v3447 = vunpack.c.l.b16 %v2787
        %v3448 = vunpack.c.h.b16 %v2787
        %v3449 = vunpack.c.l.b16 %v2788
        %v3450 = vunpack.c.h.b16 %v2788
        %v3451 = vunpack.c.l.b16 %v2789
        %v3452 = vunpack.c.h.b16 %v2789
        %v3453 = vunpack.c.l.b16 %v2790
        %v3454 = vunpack.c.h.b16 %v2790
        %v3455 = vunpack.c.l.b16 %v2791
        %v3456 = vunpack.c.h.b16 %v2791
        %v3457 = vunpack.c.l.b16 %v2792
        %v3458 = vunpack.c.h.b16 %v2792
        %v3459 = vunpack.c.l.b16 %v2793
        %v3460 = vunpack.c.h.b16 %v2793
        %v3461 = vunpack.c.l.b16 %v2794
        %v3462 = vunpack.c.h.b16 %v2794
        %v3463 = vunpack.c.l.b16 %v2795
        %v3464 = vunpack.c.h.b16 %v2795
        %v3465 = vunpack.c.l.b16 %v2796
        %v3466 = vunpack.c.h.b16 %v2796
        %v3467 = vunpack.c.l.b16 %v2797
        %v3468 = vunpack.c.h.b16 %v2797
        %v3469 = vunpack.c.l.b16 %v2798
        %v3470 = vunpack.c.h.b16 %v2798
        %v3471 = vunpack.c.l.b16 %v2799
        %v3472 = vunpack.c.h.b16 %v2799
        %v3473 = vunpack.c.l.b16 %v2800
        %v3474 = vunpack.c.h.b16 %v2800
        %v3475 = vunpack.c.l.b16 %v2801
        %v3476 = vunpack.c.h.b16 %v2801
        %v3477 = vunpack.c.l.b16 %v2802
        %v3478 = vunpack.c.h.b16 %v2802
        %v3479 = vunpack.c.l.b16 %v2803
        %v3480 = vunpack.c.h.b16 %v2803
        %v3481 = vunpack.c.l.b16 %v2804
        %v3482 = vunpack.c.h.b16 %v2804
        %v3483 = vunpack.c.l.b16 %v2805
        %v3484 = vunpack.c.h.b16 %v2805
        %v3485 = vunpack.c.l.b16 %v2806
        %v3486 = vunpack.c.h.b16 %v2806
        %v3487 = vunpack.c.l.b16 %v2807
        %v3488 = vunpack.c.h.b16 %v2807
        %v3489 = vunpack.c.l.b16 %v2808
        %v3490 = vunpack.c.h.b16 %v2808
        %v3491 = vunpack.c.l.b16 %v2809
        %v3492 = vunpack.c.h.b16 %v2809
        %v3493 = vunpack.c.l.b16 %v2810
        %v3494 = vunpack.c.h.b16 %v2810
        %v3495 = vunpack.c.l.b16 %v2811
        %v3496 = vunpack.c.h.b16 %v2811
        %v3497 = vunpack.c.l.b16 %v2812
        %v3498 = vunpack.c.h.b16 %v2812
        %v3499 = vunpack.c.l.b16 %v2813
        %v3500 = vunpack.c.h.b16 %v2813
        %v3501 = vunpack.c.l.b16 %v2814
        %v3502 = vunpack.c.h.b16 %v2814
        %v3503 = vunpack.c.l.b16 %v2815
        %v3504 = vunpack.c.h.b16 %v2815
        %v3505 = vunpack.c.l.b16 %v2816
        %v3506 = vunpack.c.h.b16 %v2816
        %v3507 = vunpack.c.l.b16 %v2817
        %v3508 = vunpack.c.h.b16 %v2817
        %v3509 = vunpack.c.l.b16 %v2818
        %v3510 = vunpack.c.h.b16 %v2818
        %v3511 = vunpack.c.l.b16 %v2819
        %v3512 = vunpack.c.h.b16 %v2819
        %v3513 = vunpack.c.l.b16 %v2820
        %v3514 = vunpack.c.h.b16 %v2820
        %v3515 = vunpack.c.l.b16 %v2821
        %v3516 = vunpack.c.h.b16 %v2821
        %v3517 = vunpack.c.l.b16 %v2822
        %v3518 = vunpack.c.h.b16 %v2822
        %v3519 = vunpack.c.l.b16 %v2823
        %v3520 = vunpack.c.h.b16 %v2823
        %v3521 = vunpack.c.l.b16 %v2824
        %v3522 = vunpack.c.h.b16 %v2824
        %v3523 = vunpack.c.l.b16 %v2825
        %v3524 = vunpack.c.h.b16 %v2825
        %v3525 = vunpack.c.l.b16 %v2826
        %v3526 = vunpack.c.h.b16 %v2826
        %v3527 = vunpack.c.l.b16 %v2827
        %v3528 = vunpack.c.h.b16 %v2827
        %v3529 = vunpack.c.l.b16 %v2828
        %v3530 = vunpack.c.h.b16 %v2828
        %v3531 = vunpack.c.l.b16 %v2829
        %v3532 = vunpack.c.h.b16 %v2829
        %v3533 = vunpack.c.l.b16 %v2830
        %v3534 = vunpack.c.h.b16 %v2830
        %v3535 = vunpack.c.l.b16 %v2831
        %v3536 = vunpack.c.h.b16 %v2831
        %v3537 = vunpack.c.l.b16 %v2832
        %v3538 = vunpack.c.h.b16 %v2832
        %v3539 = vunpack.c.l.b16 %v2833
        %v3540 = vunpack.c.h.b16 %v2833
        %v3541 = vunpack.c.l.b16 %v2834
        %v3542 = vunpack.c.h.b16 %v2834
        %v3543 = vunpack.c.l.b16 %v2835
        %v3544 = vunpack.c.h.b16 %v2835
        %v3545 = vunpack.c.l.b16 %v2836
        %v3546 = vunpack.c.h.b16 %v2836
        %v3547 = vunpack.c.l.b16 %v2837
        %v3548 = vunpack.c.h.b16 %v2837
        %v3549 = vunpack.c.l.b16 %v2838
        %v3550 = vunpack.c.h.b16 %v2838
        %v3551 = vunpack.c.l.b16 %v2839
        %v3552 = vunpack.c.h.b16 %v2839
        %v3553 = vunpack.c.l.b16 %v2840
        %v3554 = vunpack.c.h.b16 %v2840
        %v3555 = vunpack.c.l.b16 %v2841
        %v3556 = vunpack.c.h.b16 %v2841
        %v3557 = vunpack.c.l.b16 %v2842
        %v3558 = vunpack.c.h.b16 %v2842
        %v3559 = vunpack.c.l.b16 %v2843
        %v3560 = vunpack.c.h.b16 %v2843
        %v3561 = vunpack.c.l.b16 %v2844
        %v3562 = vunpack.c.h.b16 %v2844
        %v3563 = vunpack.c.l.b16 %v2845
        %v3564 = vunpack.c.h.b16 %v2845
        %v3565 = vunpack.c.l.b16 %v2846
        %v3566 = vunpack.c.h.b16 %v2846
        %v3567 = vunpack.c.l.b16 %v2847
        %v3568 = vunpack.c.h.b16 %v2847
        %v3569 = vunpack.c.l.b16 %v2848
        %v3570 = vunpack.c.h.b16 %v2848
        %v3571 = vunpack.c.l.b16 %v2849
        %v3572 = vunpack.c.h.b16 %v2849
        %v3573 = vunpack.c.l.b16 %v2850
        %v3574 = vunpack.c.h.b16 %v2850
        %v3575 = vunpack.c.l.b16 %v2851
        %v3576 = vunpack.c.h.b16 %v2851
        %v3577 = vunpack.c.l.b16 %v2852
        %v3578 = vunpack.c.h.b16 %v2852
        %v3579 = vunpack.c.l.b16 %v2853
        %v3580 = vunpack.c.h.b16 %v2853
        %v3581 = vunpack.c.l.b16 %v2854
        %v3582 = vunpack.c.h.b16 %v2854
        %v3583 = vunpack.c.l.b16 %v2855
        %v3584 = vunpack.c.h.b16 %v2855
        %v3585 = vunpack.c.l.b16 %v2856
        %v3586 = vunpack.c.h.b16 %v2856
        %v3587 = vunpack.c.l.b16 %v2857
        %v3588 = vunpack.c.h.b16 %v2857
        %v3589 = vunpack.c.l.b16 %v2858
        %v3590 = vunpack.c.h.b16 %v2858
        %v3591 = vunpack.c.l.b16 %v2859
        %v3592 = vunpack.c.h.b16 %v2859
        %v3593 = vunpack.c.l.b16 %v2860
        %v3594 = vunpack.c.h.b16 %v2860
        %v3595 = vunpack.c.l.b16 %v2861
        %v3596 = vunpack.c.h.b16 %v2861
        %v3597 = vunpack.c.l.b16 %v2862
        %v3598 = vunpack.c.h.b16 %v2862
        %v3599 = vunpack.c.l.b16 %v2863
        %v3600 = vunpack.c.h.b16 %v2863
        %v3601 = vunpack.c.l.b16 %v2864
        %v3602 = vunpack.c.h.b16 %v2864
        %v3603 = vunpack.c.l.b16 %v2865
        %v3604 = vunpack.c.h.b16 %v2865
        %v3605 = vunpack.c.l.b16 %v2866
        %v3606 = vunpack.c.h.b16 %v2866
        %v3607 = vunpack.c.l.b16 %v2867
        %v3608 = vunpack.c.h.b16 %v2867
        %v3609 = vunpack.c.l.b16 %v2868
        %v3610 = vunpack.c.h.b16 %v2868
        %v3611 = vunpack.c.l.b16 %v2869
        %v3612 = vunpack.c.h.b16 %v2869
        %v3613 = vunpack.c.l.b16 %v2870
        %v3614 = vunpack.c.h.b16 %v2870
        %v3615 = vunpack.c.l.b16 %v2871
        %v3616 = vunpack.c.h.b16 %v2871
        %v3617 = vunpack.c.l.b16 %v2872
        %v3618 = vunpack.c.h.b16 %v2872
        %v3619 = vunpack.c.l.b16 %v2873
        %v3620 = vunpack.c.h.b16 %v2873
        %v3621 = vunpack.c.l.b16 %v2874
        %v3622 = vunpack.c.h.b16 %v2874
        %v3623 = vunpack.c.l.b16 %v2875
        %v3624 = vunpack.c.h.b16 %v2875
        %v3625 = vunpack.c.l.b16 %v2876
        %v3626 = vunpack.c.h.b16 %v2876
        %v3627 = vunpack.c.l.b16 %v2877
        %v3628 = vunpack.c.h.b16 %v2877
        %v3629 = vunpack.c.l.b16 %v2878
        %v3630 = vunpack.c.h.b16 %v2878
        %v3631 = vunpack.c.l.b16 %v2879
        %v3632 = vunpack.c.h.b16 %v2879
        %v3633 = vunpack.c.l.b16 %v2880
        %v3634 = vunpack.c.h.b16 %v2880
        %v3635 = vunpack.c.l.b16 %v2881
        %v3636 = vunpack.c.h.b16 %v2881
        %v3637 = vunpack.c.l.b16 %v2882
        %v3638 = vunpack.c.h.b16 %v2882
        %v3639 = vunpack.c.l.b16 %v2883
        %v3640 = vunpack.c.h.b16 %v2883
        %v3641 = vunpack.c.l.b16 %v2884
        %v3642 = vunpack.c.h.b16 %v2884
        %v3643 = vunpack.c.l.b16 %v2885
        %v3644 = vunpack.c.h.b16 %v2885
        %v3645 = vunpack.c.l.b16 %v2886
        %v3646 = vunpack.c.h.b16 %v2886
        %v3647 = vunpack.c.l.b16 %v2887
        %v3648 = vunpack.c.h.b16 %v2887
        %v3649 = vunpack.c.l.b16 %v2888
        %v3650 = vunpack.c.h.b16 %v2888
        %v3651 = vunpack.c.l.b16 %v2889
        %v3652 = vunpack.c.h.b16 %v2889
        %v3653 = vunpack.c.l.b16 %v2890
        %v3654 = vunpack.c.h.b16 %v2890
        %v3655 = vunpack.c.l.b16 %v2891
        %v3656 = vunpack.c.h.b16 %v2891
        %v3657 = vunpack.c.l.b16 %v2892
        %v3658 = vunpack.c.h.b16 %v2892
        %v3659 = vunpack.c.l.b16 %v2893
        %v3660 = vunpack.c.h.b16 %v2893
        %v3661 = vunpack.c.l.b16 %v2894
        %v3662 = vunpack.c.h.b16 %v2894
        %v3663 = vunpack.c.l.b16 %v2895
        %v3664 = vunpack.c.h.b16 %v2895
        %v3665 = vpack.c.b16 %v3157, %v3153
        %v3666 = vpack.c.b16 %v3158, %v3154
        %v3667 = vpack.c.b16 %v3159, %v3155
        %v3668 = vpack.c.b16 %v3160, %v3156
        %v3669 = vpack.c.b16 %v3165, %v3161
        %v3670 = vpack.c.b16 %v3166, %v3162
        %v3671 = vpack.c.b16 %v3167, %v3163
        %v3672 = vpack.c.b16 %v3168, %v3164
        %v3673 = vpack.c.b16 %v3173, %v3169
        %v3674 = vpack.c.b16 %v3174, %v3170
        %v3675 = vpack.c.b16 %v3175, %v3171
        %v3676 = vpack.c.b16 %v3176, %v3172
        %v3677 = vpack.c.b16 %v3181, %v3177
        %v3678 = vpack.c.b16 %v3182, %v3178
        %v3679 = vpack.c.b16 %v3183, %v3179
        %v3680 = vpack.c.b16 %v3184, %v3180
        %v3681 = vpack.c.b16 %v3189, %v3185
        %v3682 = vpack.c.b16 %v3190, %v3186
        %v3683 = vpack.c.b16 %v3191, %v3187
        %v3684 = vpack.c.b16 %v3192, %v3188
        %v3685 = vpack.c.b16 %v3197, %v3193
        %v3686 = vpack.c.b16 %v3198, %v3194
        %v3687 = vpack.c.b16 %v3199, %v3195
        %v3688 = vpack.c.b16 %v3200, %v3196
        %v3689 = vpack.c.b16 %v3205, %v3201
        %v3690 = vpack.c.b16 %v3206, %v3202
        %v3691 = vpack.c.b16 %v3207, %v3203
        %v3692 = vpack.c.b16 %v3208, %v3204
        %v3693 = vpack.c.b16 %v3213, %v3209
        %v3694 = vpack.c.b16 %v3214, %v3210
        %v3695 = vpack.c.b16 %v3215, %v3211
        %v3696 = vpack.c.b16 %v3216, %v3212
        %v3697 = vpack.c.b16 %v3221, %v3217
        %v3698 = vpack.c.b16 %v3222, %v3218
        %v3699 = vpack.c.b16 %v3223, %v3219
        %v3700 = vpack.c.b16 %v3224, %v3220
        %v3701 = vpack.c.b16 %v3229, %v3225
        %v3702 = vpack.c.b16 %v3230, %v3226
        %v3703 = vpack.c.b16 %v3231, %v3227
        %v3704 = vpack.c.b16 %v3232, %v3228
        %v3705 = vpack.c.b16 %v3237, %v3233
        %v3706 = vpack.c.b16 %v3238, %v3234
        %v3707 = vpack.c.b16 %v3239, %v3235
        %v3708 = vpack.c.b16 %v3240, %v3236
        %v3709 = vpack.c.b16 %v3245, %v3241
        %v3710 = vpack.c.b16 %v3246, %v3242
        %v3711 = vpack.c.b16 %v3247, %v3243
        %v3712 = vpack.c.b16 %v3248, %v3244
        %v3713 = vpack.c.b16 %v3253, %v3249
        %v3714 = vpack.c.b16 %v3254, %v3250
        %v3715 = vpack.c.b16 %v3255, %v3251
        %v3716 = vpack.c.b16 %v3256, %v3252
        %v3717 = vpack.c.b16 %v3261, %v3257
        %v3718 = vpack.c.b16 %v3262, %v3258
        %v3719 = vpack.c.b16 %v3263, %v3259
        %v3720 = vpack.c.b16 %v3264, %v3260
        %v3721 = vpack.c.b16 %v3269, %v3265
        %v3722 = vpack.c.b16 %v3270, %v3266
        %v3723 = vpack.c.b16 %v3271, %v3267
        %v3724 = vpack.c.b16 %v3272, %v3268
        %v3725 = vpack.c.b16 %v3277, %v3273
        %v3726 = vpack.c.b16 %v3278, %v3274
        %v3727 = vpack.c.b16 %v3279, %v3275
        %v3728 = vpack.c.b16 %v3280, %v3276
        %v3729 = vpack.c.b16 %v3285, %v3281
        %v3730 = vpack.c.b16 %v3286, %v3282
        %v3731 = vpack.c.b16 %v3287, %v3283
        %v3732 = vpack.c.b16 %v3288, %v3284
        %v3733 = vpack.c.b16 %v3293, %v3289
        %v3734 = vpack.c.b16 %v3294, %v3290
        %v3735 = vpack.c.b16 %v3295, %v3291
        %v3736 = vpack.c.b16 %v3296, %v3292
        %v3737 = vpack.c.b16 %v3301, %v3297
        %v3738 = vpack.c.b16 %v3302, %v3298
        %v3739 = vpack.c.b16 %v3303, %v3299
        %v3740 = vpack.c.b16 %v3304, %v3300
        %v3741 = vpack.c.b16 %v3309, %v3305
        %v3742 = vpack.c.b16 %v3310, %v3306
        %v3743 = vpack.c.b16 %v3311, %v3307
        %v3744 = vpack.c.b16 %v3312, %v3308
        %v3745 = vpack.c.b16 %v3317, %v3313
        %v3746 = vpack.c.b16 %v3318, %v3314
        %v3747 = vpack.c.b16 %v3319, %v3315
        %v3748 = vpack.c.b16 %v3320, %v3316
        %v3749 = vpack.c.b16 %v3325, %v3321
        %v3750 = vpack.c.b16 %v3326, %v3322
        %v3751 = vpack.c.b16 %v3327, %v3323
        %v3752 = vpack.c.b16 %v3328, %v3324
        %v3753 = vpack.c.b16 %v3333, %v3329
        %v3754 = vpack.c.b16 %v3334, %v3330
        %v3755 = vpack.c.b16 %v3335, %v3331
        %v3756 = vpack.c.b16 %v3336, %v3332
        %v3757 = vpack.c.b16 %v3341, %v3337
        %v3758 = vpack.c.b16 %v3342, %v3338
        %v3759 = vpack.c.b16 %v3343, %v3339
        %v3760 = vpack.c.b16 %v3344, %v3340
        %v3761 = vpack.c.b16 %v3349, %v3345
        %v3762 = vpack.c.b16 %v3350, %v3346
        %v3763 = vpack.c.b16 %v3351, %v3347
        %v3764 = vpack.c.b16 %v3352, %v3348
        %v3765 = vpack.c.b16 %v3357, %v3353
        %v3766 = vpack.c.b16 %v3358, %v3354
        %v3767 = vpack.c.b16 %v3359, %v3355
        %v3768 = vpack.c.b16 %v3360, %v3356
        %v3769 = vpack.c.b16 %v3365, %v3361
        %v3770 = vpack.c.b16 %v3366, %v3362
        %v3771 = vpack.c.b16 %v3367, %v3363
        %v3772 = vpack.c.b16 %v3368, %v3364
        %v3773 = vpack.c.b16 %v3373, %v3369
        %v3774 = vpack.c.b16 %v3374, %v3370
        %v3775 = vpack.c.b16 %v3375, %v3371
        %v3776 = vpack.c.b16 %v3376, %v3372
        %v3777 = vpack.c.b16 %v3381, %v3377
        %v3778 = vpack.c.b16 %v3382, %v3378
        %v3779 = vpack.c.b16 %v3383, %v3379
        %v3780 = vpack.c.b16 %v3384, %v3380
        %v3781 = vpack.c.b16 %v3389, %v3385
        %v3782 = vpack.c.b16 %v3390, %v3386
        %v3783 = vpack.c.b16 %v3391, %v3387
        %v3784 = vpack.c.b16 %v3392, %v3388
        %v3785 = vpack.c.b16 %v3397, %v3393
        %v3786 = vpack.c.b16 %v3398, %v3394
        %v3787 = vpack.c.b16 %v3399, %v3395
        %v3788 = vpack.c.b16 %v3400, %v3396
        %v3789 = vpack.c.b16 %v3405, %v3401
        %v3790 = vpack.c.b16 %v3406, %v3402
        %v3791 = vpack.c.b16 %v3407, %v3403
        %v3792 = vpack.c.b16 %v3408, %v3404
        %v3793 = vpack.c.b16 %v3413, %v3409
        %v3794 = vpack.c.b16 %v3414, %v3410
        %v3795 = vpack.c.b16 %v3415, %v3411
        %v3796 = vpack.c.b16 %v3416, %v3412
        %v3797 = vpack.c.b16 %v3421, %v3417
        %v3798 = vpack.c.b16 %v3422, %v3418
        %v3799 = vpack.c.b16 %v3423, %v3419
        %v3800 = vpack.c.b16 %v3424, %v3420
        %v3801 = vpack.c.b16 %v3429, %v3425
        %v3802 = vpack.c.b16 %v3430, %v3426
        %v3803 = vpack.c.b16 %v3431, %v3427
        %v3804 = vpack.c.b16 %v3432, %v3428
        %v3805 = vpack.c.b16 %v3437, %v3433
        %v3806 = vpack.c.b16 %v3438, %v3434
        %v3807 = vpack.c.b16 %v3439, %v3435
        %v3808 = vpack.c.b16 %v3440, %v3436
        %v3809 = vpack.c.b16 %v3445, %v3441
        %v3810 = vpack.c.b16 %v3446, %v3442
        %v3811 = vpack.c.b16 %v3447, %v3443
        %v3812 = vpack.c.b16 %v3448, %v3444
        %v3813 = vpack.c.b16 %v3453, %v3449
        %v3814 = vpack.c.b16 %v3454, %v3450
        %v3815 = vpack.c.b16 %v3455, %v3451
        %v3816 = vpack.c.b16 %v3456, %v3452
        %v3817 = vpack.c.b16 %v3461, %v3457
        %v3818 = vpack.c.b16 %v3462, %v3458
        %v3819 = vpack.c.b16 %v3463, %v3459
        %v3820 = vpack.c.b16 %v3464, %v3460
        %v3821 = vpack.c.b16 %v3469, %v3465
        %v3822 = vpack.c.b16 %v3470, %v3466
        %v3823 = vpack.c.b16 %v3471, %v3467
        %v3824 = vpack.c.b16 %v3472, %v3468
        %v3825 = vpack.c.b16 %v3477, %v3473
        %v3826 = vpack.c.b16 %v3478, %v3474
        %v3827 = vpack.c.b16 %v3479, %v3475
        %v3828 = vpack.c.b16 %v3480, %v3476
        %v3829 = vpack.c.b16 %v3485, %v3481
        %v3830 = vpack.c.b16 %v3486, %v3482
        %v3831 = vpack.c.b16 %v3487, %v3483
        %v3832 = vpack.c.b16 %v3488, %v3484
        %v3833 = vpack.c.b16 %v3493, %v3489
        %v3834 = vpack.c.b16 %v3494, %v3490
        %v3835 = vpack.c.b16 %v3495, %v3491
        %v3836 = vpack.c.b16 %v3496, %v3492
        %v3837 = vpack.c.b16 %v3501, %v3497
        %v3838 = vpack.c.b16 %v3502, %v3498
        %v3839 = vpack.c.b16 %v3503, %v3499
        %v3840 = vpack.c.b16 %v3504, %v3500
        %v3841 = vpack.c.b16 %v3509, %v3505
        %v3842 = vpack.c.b16 %v3510, %v3506
        %v3843 = vpack.c.b16 %v3511, %v3507
        %v3844 = vpack.c.b16 %v3512, %v3508
        %v3845 = vpack.c.b16 %v3517, %v3513
        %v3846 = vpack.c.b16 %v3518, %v3514
        %v3847 = vpack.c.b16 %v3519, %v3515
        %v3848 = vpack.c.b16 %v3520, %v3516
        %v3849 = vpack.c.b16 %v3525, %v3521
        %v3850 = vpack.c.b16 %v3526, %v3522
        %v3851 = vpack.c.b16 %v3527, %v3523
        %v3852 = vpack.c.b16 %v3528, %v3524
        %v3853 = vpack.c.b16 %v3533, %v3529
        %v3854 = vpack.c.b16 %v3534, %v3530
        %v3855 = vpack.c.b16 %v3535, %v3531
        %v3856 = vpack.c.b16 %v3536, %v3532
        %v3857 = vpack.c.b16 %v3541, %v3537
        %v3858 = vpack.c.b16 %v3542, %v3538
        %v3859 = vpack.c.b16 %v3543, %v3539
        %v3860 = vpack.c.b16 %v3544, %v3540
        %v3861 = vpack.c.b16 %v3549, %v3545
        %v3862 = vpack.c.b16 %v3550, %v3546
        %v3863 = vpack.c.b16 %v3551, %v3547
        %v3864 = vpack.c.b16 %v3552, %v3548
        %v3865 = vpack.c.b16 %v3557, %v3553
        %v3866 = vpack.c.b16 %v3558, %v3554
        %v3867 = vpack.c.b16 %v3559, %v3555
        %v3868 = vpack.c.b16 %v3560, %v3556
        %v3869 = vpack.c.b16 %v3565, %v3561
        %v3870 = vpack.c.b16 %v3566, %v3562
        %v3871 = vpack.c.b16 %v3567, %v3563
        %v3872 = vpack.c.b16 %v3568, %v3564
        %v3873 = vpack.c.b16 %v3573, %v3569
        %v3874 = vpack.c.b16 %v3574, %v3570
        %v3875 = vpack.c.b16 %v3575, %v3571
        %v3876 = vpack.c.b16 %v3576, %v3572
        %v3877 = vpack.c.b16 %v3581, %v3577
        %v3878 = vpack.c.b16 %v3582, %v3578
        %v3879 = vpack.c.b16 %v3583, %v3579
        %v3880 = vpack.c.b16 %v3584, %v3580
        %v3881 = vpack.c.b16 %v3589, %v3585
        %v3882 = vpack.c.b16 %v3590, %v3586
        %v3883 = vpack.c.b16 %v3591, %v3587
        %v3884 = vpack.c.b16 %v3592, %v3588
        %v3885 = vpack.c.b16 %v3597, %v3593
        %v3886 = vpack.c.b16 %v3598, %v3594
        %v3887 = vpack.c.b16 %v3599, %v3595
        %v3888 = vpack.c.b16 %v3600, %v3596
        %v3889 = vpack.c.b16 %v3605, %v3601
        %v3890 = vpack.c.b16 %v3606, %v3602
        %v3891 = vpack.c.b16 %v3607, %v3603
        %v3892 = vpack.c.b16 %v3608, %v3604
        %v3893 = vpack.c.b16 %v3613, %v3609
        %v3894 = vpack.c.b16 %v3614, %v3610
        %v3895 = vpack.c.b16 %v3615, %v3611
        %v3896 = vpack.c.b16 %v3616, %v3612
        %v3897 = vpack.c.b16 %v3621, %v3617
        %v3898 = vpack.c.b16 %v3622, %v3618
        %v3899 = vpack.c.b16 %v3623, %v3619
        %v3900 = vpack.c.b16 %v3624, %v3620
        %v3901 = vpack.c.b16 %v3629, %v3625
        %v3902 = vpack.c.b16 %v3630, %v3626
        %v3903 = vpack.c.b16 %v3631, %v3627
        %v3904 = vpack.c.b16 %v3632, %v3628
        %v3905 = vpack.c.b16 %v3637, %v3633
        %v3906 = vpack.c.b16 %v3638, %v3634
        %v3907 = vpack.c.b16 %v3639, %v3635
        %v3908 = vpack.c.b16 %v3640, %v3636
        %v3909 = vpack.c.b16 %v3645, %v3641
        %v3910 = vpack.c.b16 %v3646, %v3642
        %v3911 = vpack.c.b16 %v3647, %v3643
        %v3912 = vpack.c.b16 %v3648, %v3644
        %v3913 = vpack.c.b16 %v3653, %v3649
        %v3914 = vpack.c.b16 %v3654, %v3650
        %v3915 = vpack.c.b16 %v3655, %v3651
        %v3916 = vpack.c.b16 %v3656, %v3652
        %v3917 = vpack.c.b16 %v3661, %v3657
        %v3918 = vpack.c.b16 %v3662, %v3658
        %v3919 = vpack.c.b16 %v3663, %v3659
        %v3920 = vpack.c.b16 %v3664, %v3660
        %v4178 = vlaneseq
        %v4179 = vshrl.u32 %v4178, 7
        %v4180 = vsub.s32 0, %v4179
        %v4181 = vrot.slane %v2896, %v4180
        %v4182 = vlaneseq
        %v4183 = vshrl.u32 %v4182, 7
        %v4184 = vsub.s32 1, %v4183
        %v4185 = vrot.slane %v2896, %v4184
        %v4186 = vlaneseq
        %v4187 = vshrl.u32 %v4186, 7
        %v4188 = vsub.s32 2, %v4187
        %v4189 = vrot.slane %v2896, %v4188
        %v4190 = vlaneseq
        %v4191 = vshrl.u32 %v4190, 7
        %v4192 = vsub.s32 3, %v4191
        %v4193 = vrot.slane %v2896, %v4192
        %4198 = vmatprep.subr.bf16.mxu0 %v3694
        %4199 = vmatpush1.bf16.msra.mxu0 %v3693
        %4200 = vmatprep.subr.bf16.mxu0 %v3690
        %4201 = vmatpush1.bf16.msra.mxu0 %v3689
        %4202 = vmatprep.subr.bf16.mxu0 %v3686
        %4203 = vmatpush1.bf16.msra.mxu0 %v3685
        %4204 = vmatprep.subr.bf16.mxu0 %v3682
        %4205 = vmatpush1.bf16.msra.mxu0 %v3681
        %4206 = vmatprep.subr.bf16.mxu0 %v3678
        %4207 = vmatpush1.bf16.msra.mxu0 %v3677
        %4208 = vmatprep.subr.bf16.mxu0 %v3674
        %4209 = vmatpush1.bf16.msra.mxu0 %v3673
        %4210 = vmatprep.subr.bf16.mxu0 %v3670
        %4211 = vmatpush1.bf16.msra.mxu0 %v3669
        %4212 = vmatprep.subr.bf16.mxu0 %v3666
        %4213 = vmatpush1.bf16.msra.mxu0 %v3665
        %4214 = vmatprep.subr.bf16.mxu0 %v3726
        %4215 = vmatpush2.bf16.msra.mxu0 %v3725
        %4216 = vmatprep.subr.bf16.mxu0 %v3722
        %4217 = vmatpush2.bf16.msra.mxu0 %v3721
        %4218 = vmatprep.subr.bf16.mxu0 %v3718
        %4219 = vmatpush2.bf16.msra.mxu0 %v3717
        %4220 = vmatprep.subr.bf16.mxu0 %v3714
        %4221 = vmatpush2.bf16.msra.mxu0 %v3713
        %4222 = vmatprep.subr.bf16.mxu0 %v3710
        %4223 = vmatpush2.bf16.msra.mxu0 %v3709
        %4224 = vmatprep.subr.bf16.mxu0 %v3706
        %4225 = vmatpush2.bf16.msra.mxu0 %v3705
        %4226 = vmatprep.subr.bf16.mxu0 %v3702
        %4227 = vmatpush2.bf16.msra.mxu0 %v3701
        %4228 = vmatprep.subr.bf16.mxu0 %v3698
        %4229 = vmatpush2.bf16.msra.mxu0 %v3697
        %4230 = vmatprep.mubr.bf16.mxu0 %v2633
        %4231 = vmatmul.mubr.bf16.gmra.mxu0 %v2632
        %v4232 = vpop.f32.mrf.mxu0
        %v4233 = vadd.f32 %v4181, %v4232
        %v4234 = vpop.f32.mrf.mxu0
        %v4235 = vadd.f32 %v4185, %v4234
        %v4236 = vpop.f32.mrf.mxu0
        %v4237 = vpop.f32.mrf.mxu0
        %4238 = vdwg.mxu0
        %4239 = vmatprep.subr.bf16.mxu0 %v3758
        %4240 = vmatpush1.bf16.msra.mxu0 %v3757
        %4241 = vmatprep.subr.bf16.mxu0 %v3754
        %4242 = vmatpush1.bf16.msra.mxu0 %v3753
        %4243 = vmatprep.subr.bf16.mxu0 %v3750
        %4244 = vmatpush1.bf16.msra.mxu0 %v3749
        %4245 = vmatprep.subr.bf16.mxu0 %v3746
        %4246 = vmatpush1.bf16.msra.mxu0 %v3745
        %4247 = vmatprep.subr.bf16.mxu0 %v3742
        %4248 = vmatpush1.bf16.msra.mxu0 %v3741
        %4249 = vmatprep.subr.bf16.mxu0 %v3738
        %4250 = vmatpush1.bf16.msra.mxu0 %v3737
        %4251 = vmatprep.subr.bf16.mxu0 %v3734
        %4252 = vmatpush1.bf16.msra.mxu0 %v3733
        %4253 = vmatprep.subr.bf16.mxu0 %v3730
        %4254 = vmatpush1.bf16.msra.mxu0 %v3729
        %4255 = vmatprep.subr.bf16.mxu0 %v3790
        %4256 = vmatpush2.bf16.msra.mxu0 %v3789
        %4257 = vmatprep.subr.bf16.mxu0 %v3786
        %4258 = vmatpush2.bf16.msra.mxu0 %v3785
        %4259 = vmatprep.subr.bf16.mxu0 %v3782
        %4260 = vmatpush2.bf16.msra.mxu0 %v3781
        %4261 = vmatprep.subr.bf16.mxu0 %v3778
        %4262 = vmatpush2.bf16.msra.mxu0 %v3777
        %4263 = vmatprep.subr.bf16.mxu0 %v3774
        %4264 = vmatpush2.bf16.msra.mxu0 %v3773
        %4265 = vmatprep.subr.bf16.mxu0 %v3770
        %4266 = vmatpush2.bf16.msra.mxu0 %v3769
        %4267 = vmatprep.subr.bf16.mxu0 %v3766
        %4268 = vmatpush2.bf16.msra.mxu0 %v3765
        %4269 = vmatprep.subr.bf16.mxu0 %v3762
        %4270 = vmatpush2.bf16.msra.mxu0 %v3761
        %4271 = vmatprep.mubr.bf16.mxu0 %v2635
        %4272 = vmatmul.mubr.bf16.gmra.mxu0 %v2634
        %v4273 = vpop.f32.mrf.mxu0
        %v4274 = vadd.f32 %v4233, %v4273
        %v4275 = vpop.f32.mrf.mxu0
        %v4276 = vadd.f32 %v4235, %v4275
        %v4277 = vpop.f32.mrf.mxu0
        %v4278 = vpop.f32.mrf.mxu0
        %4279 = vdwg.mxu0
        %4280 = vmatprep.subr.bf16.mxu0 %v3822
        %4281 = vmatpush1.bf16.msra.mxu0 %v3821
        %4282 = vmatprep.subr.bf16.mxu0 %v3818
        %4283 = vmatpush1.bf16.msra.mxu0 %v3817
        %4284 = vmatprep.subr.bf16.mxu0 %v3814
        %4285 = vmatpush1.bf16.msra.mxu0 %v3813
        %4286 = vmatprep.subr.bf16.mxu0 %v3810
        %4287 = vmatpush1.bf16.msra.mxu0 %v3809
        %4288 = vmatprep.subr.bf16.mxu0 %v3806
        %4289 = vmatpush1.bf16.msra.mxu0 %v3805
        %4290 = vmatprep.subr.bf16.mxu0 %v3802
        %4291 = vmatpush1.bf16.msra.mxu0 %v3801
        %4292 = vmatprep.subr.bf16.mxu0 %v3798
        %4293 = vmatpush1.bf16.msra.mxu0 %v3797
        %4294 = vmatprep.subr.bf16.mxu0 %v3794
        %4295 = vmatpush1.bf16.msra.mxu0 %v3793
        %4296 = vmatprep.subr.bf16.mxu0 %v3854
        %4297 = vmatpush2.bf16.msra.mxu0 %v3853
        %4298 = vmatprep.subr.bf16.mxu0 %v3850
        %4299 = vmatpush2.bf16.msra.mxu0 %v3849
        %4300 = vmatprep.subr.bf16.mxu0 %v3846
        %4301 = vmatpush2.bf16.msra.mxu0 %v3845
        %4302 = vmatprep.subr.bf16.mxu0 %v3842
        %4303 = vmatpush2.bf16.msra.mxu0 %v3841
        %4304 = vmatprep.subr.bf16.mxu0 %v3838
        %4305 = vmatpush2.bf16.msra.mxu0 %v3837
        %4306 = vmatprep.subr.bf16.mxu0 %v3834
        %4307 = vmatpush2.bf16.msra.mxu0 %v3833
        %4308 = vmatprep.subr.bf16.mxu0 %v3830
        %4309 = vmatpush2.bf16.msra.mxu0 %v3829
        %4310 = vmatprep.subr.bf16.mxu0 %v3826
        %4311 = vmatpush2.bf16.msra.mxu0 %v3825
        %4312 = vmatprep.mubr.bf16.mxu0 %v2637
        %4313 = vmatmul.mubr.bf16.gmra.mxu0 %v2636
        %v4314 = vpop.f32.mrf.mxu0
        %v4315 = vadd.f32 %v4274, %v4314
        %v4316 = vpop.f32.mrf.mxu0
        %v4317 = vadd.f32 %v4276, %v4316
        %v4318 = vpop.f32.mrf.mxu0
        %v4319 = vpop.f32.mrf.mxu0
        %4320 = vdwg.mxu0
        %4321 = vmatprep.subr.bf16.mxu0 %v3886
        %4322 = vmatpush1.bf16.msra.mxu0 %v3885
        %4323 = vmatprep.subr.bf16.mxu0 %v3882
        %4324 = vmatpush1.bf16.msra.mxu0 %v3881
        %4325 = vmatprep.subr.bf16.mxu0 %v3878
        %4326 = vmatpush1.bf16.msra.mxu0 %v3877
        %4327 = vmatprep.subr.bf16.mxu0 %v3874
        %4328 = vmatpush1.bf16.msra.mxu0 %v3873
        %4329 = vmatprep.subr.bf16.mxu0 %v3870
        %4330 = vmatpush1.bf16.msra.mxu0 %v3869
        %4331 = vmatprep.subr.bf16.mxu0 %v3866
        %4332 = vmatpush1.bf16.msra.mxu0 %v3865
        %4333 = vmatprep.subr.bf16.mxu0 %v3862
        %4334 = vmatpush1.bf16.msra.mxu0 %v3861
        %4335 = vmatprep.subr.bf16.mxu0 %v3858
        %4336 = vmatpush1.bf16.msra.mxu0 %v3857
        %4337 = vmatprep.subr.bf16.mxu0 %v3918
        %4338 = vmatpush2.bf16.msra.mxu0 %v3917
        %4339 = vmatprep.subr.bf16.mxu0 %v3914
        %4340 = vmatpush2.bf16.msra.mxu0 %v3913
        %4341 = vmatprep.subr.bf16.mxu0 %v3910
        %4342 = vmatpush2.bf16.msra.mxu0 %v3909
        %4343 = vmatprep.subr.bf16.mxu0 %v3906
        %4344 = vmatpush2.bf16.msra.mxu0 %v3905
        %4345 = vmatprep.subr.bf16.mxu0 %v3902
        %4346 = vmatpush2.bf16.msra.mxu0 %v3901
        %4347 = vmatprep.subr.bf16.mxu0 %v3898
        %4348 = vmatpush2.bf16.msra.mxu0 %v3897
        %4349 = vmatprep.subr.bf16.mxu0 %v3894
        %4350 = vmatpush2.bf16.msra.mxu0 %v3893
        %4351 = vmatprep.subr.bf16.mxu0 %v3890
        %4352 = vmatpush2.bf16.msra.mxu0 %v3889
        %4353 = vmatprep.mubr.bf16.mxu0 %v2639
        %4354 = vmatmul.mubr.bf16.gmra.mxu0 %v2638
        %v4355 = vpop.f32.mrf.mxu0
        %v4356 = vadd.f32 %v4315, %v4355
        %v4357 = vpop.f32.mrf.mxu0
        %v4358 = vadd.f32 %v4317, %v4357
        %v4359 = vpop.f32.mrf.mxu0
        %v4360 = vpop.f32.mrf.mxu0
        %4361 = vdwg.mxu0
        %4362 = vmatprep.subr.bf16.mxu0 %v3696
        %4363 = vmatpush1.bf16.msra.mxu0 %v3695
        %4364 = vmatprep.subr.bf16.mxu0 %v3692
        %4365 = vmatpush1.bf16.msra.mxu0 %v3691
        %4366 = vmatprep.subr.bf16.mxu0 %v3688
        %4367 = vmatpush1.bf16.msra.mxu0 %v3687
        %4368 = vmatprep.subr.bf16.mxu0 %v3684
        %4369 = vmatpush1.bf16.msra.mxu0 %v3683
        %4370 = vmatprep.subr.bf16.mxu0 %v3680
        %4371 = vmatpush1.bf16.msra.mxu0 %v3679
        %4372 = vmatprep.subr.bf16.mxu0 %v3676
        %4373 = vmatpush1.bf16.msra.mxu0 %v3675
        %4374 = vmatprep.subr.bf16.mxu0 %v3672
        %4375 = vmatpush1.bf16.msra.mxu0 %v3671
        %4376 = vmatprep.subr.bf16.mxu0 %v3668
        %4377 = vmatpush1.bf16.msra.mxu0 %v3667
        %4378 = vmatprep.subr.bf16.mxu0 %v3728
        %4379 = vmatpush2.bf16.msra.mxu0 %v3727
        %4380 = vmatprep.subr.bf16.mxu0 %v3724
        %4381 = vmatpush2.bf16.msra.mxu0 %v3723
        %4382 = vmatprep.subr.bf16.mxu0 %v3720
        %4383 = vmatpush2.bf16.msra.mxu0 %v3719
        %4384 = vmatprep.subr.bf16.mxu0 %v3716
        %4385 = vmatpush2.bf16.msra.mxu0 %v3715
        %4386 = vmatprep.subr.bf16.mxu0 %v3712
        %4387 = vmatpush2.bf16.msra.mxu0 %v3711
        %4388 = vmatprep.subr.bf16.mxu0 %v3708
        %4389 = vmatpush2.bf16.msra.mxu0 %v3707
        %4390 = vmatprep.subr.bf16.mxu0 %v3704
        %4391 = vmatpush2.bf16.msra.mxu0 %v3703
        %4392 = vmatprep.subr.bf16.mxu0 %v3700
        %4393 = vmatpush2.bf16.msra.mxu0 %v3699
        %4394 = vmatprep.mubr.bf16.mxu0 %v2633
        %4395 = vmatmul.mubr.bf16.gmra.mxu0 %v2632
        %v4396 = vpop.f32.mrf.mxu0
        %v4397 = vadd.f32 %v4189, %v4396
        %v4398 = vpop.f32.mrf.mxu0
        %v4399 = vadd.f32 %v4193, %v4398
        %v4400 = vpop.f32.mrf.mxu0
        %v4401 = vpop.f32.mrf.mxu0
        %4402 = vdwg.mxu0
        %4403 = vmatprep.subr.bf16.mxu0 %v3760
        %4404 = vmatpush1.bf16.msra.mxu0 %v3759
        %4405 = vmatprep.subr.bf16.mxu0 %v3756
        %4406 = vmatpush1.bf16.msra.mxu0 %v3755
        %4407 = vmatprep.subr.bf16.mxu0 %v3752
        %4408 = vmatpush1.bf16.msra.mxu0 %v3751
        %4409 = vmatprep.subr.bf16.mxu0 %v3748
        %4410 = vmatpush1.bf16.msra.mxu0 %v3747
        %4411 = vmatprep.subr.bf16.mxu0 %v3744
        %4412 = vmatpush1.bf16.msra.mxu0 %v3743
        %4413 = vmatprep.subr.bf16.mxu0 %v3740
        %4414 = vmatpush1.bf16.msra.mxu0 %v3739
        %4415 = vmatprep.subr.bf16.mxu0 %v3736
        %4416 = vmatpush1.bf16.msra.mxu0 %v3735
        %4417 = vmatprep.subr.bf16.mxu0 %v3732
        %4418 = vmatpush1.bf16.msra.mxu0 %v3731
        %4419 = vmatprep.subr.bf16.mxu0 %v3792
        %4420 = vmatpush2.bf16.msra.mxu0 %v3791
        %4421 = vmatprep.subr.bf16.mxu0 %v3788
        %4422 = vmatpush2.bf16.msra.mxu0 %v3787
        %4423 = vmatprep.subr.bf16.mxu0 %v3784
        %4424 = vmatpush2.bf16.msra.mxu0 %v3783
        %4425 = vmatprep.subr.bf16.mxu0 %v3780
        %4426 = vmatpush2.bf16.msra.mxu0 %v3779
        %4427 = vmatprep.subr.bf16.mxu0 %v3776
        %4428 = vmatpush2.bf16.msra.mxu0 %v3775
        %4429 = vmatprep.subr.bf16.mxu0 %v3772
        %4430 = vmatpush2.bf16.msra.mxu0 %v3771
        %4431 = vmatprep.subr.bf16.mxu0 %v3768
        %4432 = vmatpush2.bf16.msra.mxu0 %v3767
        %4433 = vmatprep.subr.bf16.mxu0 %v3764
        %4434 = vmatpush2.bf16.msra.mxu0 %v3763
        %4435 = vmatprep.mubr.bf16.mxu0 %v2635
        %4436 = vmatmul.mubr.bf16.gmra.mxu0 %v2634
        %v4437 = vpop.f32.mrf.mxu0
        %v4438 = vadd.f32 %v4397, %v4437
        %v4439 = vpop.f32.mrf.mxu0
        %v4440 = vadd.f32 %v4399, %v4439
        %v4441 = vpop.f32.mrf.mxu0
        %v4442 = vpop.f32.mrf.mxu0
        %4443 = vdwg.mxu0
        %4444 = vmatprep.subr.bf16.mxu0 %v3824
        %4445 = vmatpush1.bf16.msra.mxu0 %v3823
        %4446 = vmatprep.subr.bf16.mxu0 %v3820
        %4447 = vmatpush1.bf16.msra.mxu0 %v3819
        %4448 = vmatprep.subr.bf16.mxu0 %v3816
        %4449 = vmatpush1.bf16.msra.mxu0 %v3815
        %4450 = vmatprep.subr.bf16.mxu0 %v3812
        %4451 = vmatpush1.bf16.msra.mxu0 %v3811
        %4452 = vmatprep.subr.bf16.mxu0 %v3808
        %4453 = vmatpush1.bf16.msra.mxu0 %v3807
        %4454 = vmatprep.subr.bf16.mxu0 %v3804
        %4455 = vmatpush1.bf16.msra.mxu0 %v3803
        %4456 = vmatprep.subr.bf16.mxu0 %v3800
        %4457 = vmatpush1.bf16.msra.mxu0 %v3799
        %4458 = vmatprep.subr.bf16.mxu0 %v3796
        %4459 = vmatpush1.bf16.msra.mxu0 %v3795
        %4460 = vmatprep.subr.bf16.mxu0 %v3856
        %4461 = vmatpush2.bf16.msra.mxu0 %v3855
        %4462 = vmatprep.subr.bf16.mxu0 %v3852
        %4463 = vmatpush2.bf16.msra.mxu0 %v3851
        %4464 = vmatprep.subr.bf16.mxu0 %v3848
        %4465 = vmatpush2.bf16.msra.mxu0 %v3847
        %4466 = vmatprep.subr.bf16.mxu0 %v3844
        %4467 = vmatpush2.bf16.msra.mxu0 %v3843
        %4468 = vmatprep.subr.bf16.mxu0 %v3840
        %4469 = vmatpush2.bf16.msra.mxu0 %v3839
        %4470 = vmatprep.subr.bf16.mxu0 %v3836
        %4471 = vmatpush2.bf16.msra.mxu0 %v3835
        %4472 = vmatprep.subr.bf16.mxu0 %v3832
        %4473 = vmatpush2.bf16.msra.mxu0 %v3831
        %4474 = vmatprep.subr.bf16.mxu0 %v3828
        %4475 = vmatpush2.bf16.msra.mxu0 %v3827
        %4476 = vmatprep.mubr.bf16.mxu0 %v2637
        %4477 = vmatmul.mubr.bf16.gmra.mxu0 %v2636
        %v4478 = vpop.f32.mrf.mxu0
        %v4479 = vadd.f32 %v4438, %v4478
        %v4480 = vpop.f32.mrf.mxu0
        %v4481 = vadd.f32 %v4440, %v4480
        %v4482 = vpop.f32.mrf.mxu0
        %v4483 = vpop.f32.mrf.mxu0
        %4484 = vdwg.mxu0
        %4485 = vmatprep.subr.bf16.mxu0 %v3888
        %4486 = vmatpush1.bf16.msra.mxu0 %v3887
        %4487 = vmatprep.subr.bf16.mxu0 %v3884
        %4488 = vmatpush1.bf16.msra.mxu0 %v3883
        %4489 = vmatprep.subr.bf16.mxu0 %v3880
        %4490 = vmatpush1.bf16.msra.mxu0 %v3879
        %4491 = vmatprep.subr.bf16.mxu0 %v3876
        %4492 = vmatpush1.bf16.msra.mxu0 %v3875
        %4493 = vmatprep.subr.bf16.mxu0 %v3872
        %4494 = vmatpush1.bf16.msra.mxu0 %v3871
        %4495 = vmatprep.subr.bf16.mxu0 %v3868
        %4496 = vmatpush1.bf16.msra.mxu0 %v3867
        %4497 = vmatprep.subr.bf16.mxu0 %v3864
        %4498 = vmatpush1.bf16.msra.mxu0 %v3863
        %4499 = vmatprep.subr.bf16.mxu0 %v3860
        %4500 = vmatpush1.bf16.msra.mxu0 %v3859
        %4501 = vmatprep.subr.bf16.mxu0 %v3920
        %4502 = vmatpush2.bf16.msra.mxu0 %v3919
        %4503 = vmatprep.subr.bf16.mxu0 %v3916
        %4504 = vmatpush2.bf16.msra.mxu0 %v3915
        %4505 = vmatprep.subr.bf16.mxu0 %v3912
        %4506 = vmatpush2.bf16.msra.mxu0 %v3911
        %4507 = vmatprep.subr.bf16.mxu0 %v3908
        %4508 = vmatpush2.bf16.msra.mxu0 %v3907
        %4509 = vmatprep.subr.bf16.mxu0 %v3904
        %4510 = vmatpush2.bf16.msra.mxu0 %v3903
        %4511 = vmatprep.subr.bf16.mxu0 %v3900
        %4512 = vmatpush2.bf16.msra.mxu0 %v3899
        %4513 = vmatprep.subr.bf16.mxu0 %v3896
        %4514 = vmatpush2.bf16.msra.mxu0 %v3895
        %4515 = vmatprep.subr.bf16.mxu0 %v3892
        %4516 = vmatpush2.bf16.msra.mxu0 %v3891
        %4517 = vmatprep.mubr.bf16.mxu0 %v2639
        %4518 = vmatmul.mubr.bf16.gmra.mxu0 %v2638
        %v4519 = vpop.f32.mrf.mxu0
        %v4520 = vadd.f32 %v4479, %v4519
        %v4521 = vpop.f32.mrf.mxu0
        %v4522 = vadd.f32 %v4481, %v4521
        %v4523 = vpop.f32.mrf.mxu0
        %v4524 = vpop.f32.mrf.mxu0
        %4525 = vdwg.mxu0
        %v4526 = vmax.f32 %v4356, 0.0
        %v4527 = vmax.f32 %v4358, 0.0
        %v4528 = vmax.f32 %v4520, 0.0
        %v4529 = vmax.f32 %v4522, 0.0
        %v4530 = vpack.c.bf16 %v4526, %v4526
        %v4531 = vpack.c.bf16 %v4527, %v4527
        %v4532 = vpack.c.bf16 %v4528, %v4528
        %v4533 = vpack.c.bf16 %v4529, %v4529
        %v4534 = vld [vmem:[#allocation9] sm:$0xff]
        %v4535 = vld [vmem:[#allocation9 + $0x8] sm:$0xff]
        %v4536 = vld [vmem:[#allocation9 + $0x10] sm:$0xff]
        %v4537 = vld [vmem:[#allocation9 + $0x18] sm:$0xff]
        %v4538 = vld [vmem:[#allocation9 + $0x20] sm:$0xff]
        %v4539 = vld [vmem:[#allocation9 + $0x28] sm:$0xff]
        %v4540 = vld [vmem:[#allocation9 + $0x30] sm:$0xff]
        %v4541 = vld [vmem:[#allocation9 + $0x38] sm:$0xff]
        %v4542 = vld [vmem:[#allocation9 + $0x40] sm:$0xff]
        %v4543 = vld [vmem:[#allocation9 + $0x48] sm:$0xff]
        %v4544 = vld [vmem:[#allocation9 + $0x50] sm:$0xff]
        %v4545 = vld [vmem:[#allocation9 + $0x58] sm:$0xff]
        %v4546 = vld [vmem:[#allocation9 + $0x60] sm:$0xff]
        %v4547 = vld [vmem:[#allocation9 + $0x68] sm:$0xff]
        %v4548 = vld [vmem:[#allocation9 + $0x70] sm:$0xff]
        %v4549 = vld [vmem:[#allocation9 + $0x78] sm:$0xff]
        %v4550 = vld [vmem:[#allocation9 + $0x80] sm:$0xff]
        %v4551 = vld [vmem:[#allocation9 + $0x88] sm:$0xff]
        %v4552 = vld [vmem:[#allocation9 + $0x90] sm:$0xff]
        %v4553 = vld [vmem:[#allocation9 + $0x98] sm:$0xff]
        %v4554 = vld [vmem:[#allocation9 + $0xa0] sm:$0xff]
        %v4555 = vld [vmem:[#allocation9 + $0xa8] sm:$0xff]
        %v4556 = vld [vmem:[#allocation9 + $0xb0] sm:$0xff]
        %v4557 = vld [vmem:[#allocation9 + $0xb8] sm:$0xff]
        %v4558 = vld [vmem:[#allocation9 + $0xc0] sm:$0xff]
        %v4559 = vld [vmem:[#allocation9 + $0xc8] sm:$0xff]
        %v4560 = vld [vmem:[#allocation9 + $0xd0] sm:$0xff]
        %v4561 = vld [vmem:[#allocation9 + $0xd8] sm:$0xff]
        %v4562 = vld [vmem:[#allocation9 + $0xe0] sm:$0xff]
        %v4563 = vld [vmem:[#allocation9 + $0xe8] sm:$0xff]
        %v4564 = vld [vmem:[#allocation9 + $0xf0] sm:$0xff]
        %v4565 = vld [vmem:[#allocation9 + $0xf8] sm:$0xff]
        %v4566 = vld [vmem:[#allocation9 + $0x100] sm:$0xff]
        %v4567 = vld [vmem:[#allocation9 + $0x108] sm:$0xff]
        %v4568 = vld [vmem:[#allocation9 + $0x110] sm:$0xff]
        %v4569 = vld [vmem:[#allocation9 + $0x118] sm:$0xff]
        %v4570 = vld [vmem:[#allocation9 + $0x120] sm:$0xff]
        %v4571 = vld [vmem:[#allocation9 + $0x128] sm:$0xff]
        %v4572 = vld [vmem:[#allocation9 + $0x130] sm:$0xff]
        %v4573 = vld [vmem:[#allocation9 + $0x138] sm:$0xff]
        %v4574 = vld [vmem:[#allocation9 + $0x140] sm:$0xff]
        %v4575 = vld [vmem:[#allocation9 + $0x148] sm:$0xff]
        %v4576 = vld [vmem:[#allocation9 + $0x150] sm:$0xff]
        %v4577 = vld [vmem:[#allocation9 + $0x158] sm:$0xff]
        %v4578 = vld [vmem:[#allocation9 + $0x160] sm:$0xff]
        %v4579 = vld [vmem:[#allocation9 + $0x168] sm:$0xff]
        %v4580 = vld [vmem:[#allocation9 + $0x170] sm:$0xff]
        %v4581 = vld [vmem:[#allocation9 + $0x178] sm:$0xff]
        %v4582 = vld [vmem:[#allocation9 + $0x180] sm:$0xff]
        %v4583 = vld [vmem:[#allocation9 + $0x188] sm:$0xff]
        %v4584 = vld [vmem:[#allocation9 + $0x190] sm:$0xff]
        %v4585 = vld [vmem:[#allocation9 + $0x198] sm:$0xff]
        %v4586 = vld [vmem:[#allocation9 + $0x1a0] sm:$0xff]
        %v4587 = vld [vmem:[#allocation9 + $0x1a8] sm:$0xff]
        %v4588 = vld [vmem:[#allocation9 + $0x1b0] sm:$0xff]
        %v4589 = vld [vmem:[#allocation9 + $0x1b8] sm:$0xff]
        %v4590 = vld [vmem:[#allocation9 + $0x1c0] sm:$0xff]
        %v4591 = vld [vmem:[#allocation9 + $0x1c8] sm:$0xff]
        %v4592 = vld [vmem:[#allocation9 + $0x1d0] sm:$0xff]
        %v4593 = vld [vmem:[#allocation9 + $0x1d8] sm:$0xff]
        %v4594 = vld [vmem:[#allocation9 + $0x1e0] sm:$0xff]
        %v4595 = vld [vmem:[#allocation9 + $0x1e8] sm:$0xff]
        %v4596 = vld [vmem:[#allocation9 + $0x1f0] sm:$0xff]
        %v4597 = vld [vmem:[#allocation9 + $0x1f8] sm:$0xff]
        %v4598 = vld [vmem:[#allocation10] sm:$0x3]
        %v4663 = vunpack.c.l.b16 %v4534
        %v4664 = vunpack.c.h.b16 %v4534
        %v4665 = vunpack.c.l.b16 %v4535
        %v4666 = vunpack.c.h.b16 %v4535
        %v4667 = vunpack.c.l.b16 %v4536
        %v4668 = vunpack.c.h.b16 %v4536
        %v4669 = vunpack.c.l.b16 %v4537
        %v4670 = vunpack.c.h.b16 %v4537
        %v4671 = vunpack.c.l.b16 %v4538
        %v4672 = vunpack.c.h.b16 %v4538
        %v4673 = vunpack.c.l.b16 %v4539
        %v4674 = vunpack.c.h.b16 %v4539
        %v4675 = vunpack.c.l.b16 %v4540
        %v4676 = vunpack.c.h.b16 %v4540
        %v4677 = vunpack.c.l.b16 %v4541
        %v4678 = vunpack.c.h.b16 %v4541
        %v4679 = vunpack.c.l.b16 %v4542
        %v4680 = vunpack.c.h.b16 %v4542
        %v4681 = vunpack.c.l.b16 %v4543
        %v4682 = vunpack.c.h.b16 %v4543
        %v4683 = vunpack.c.l.b16 %v4544
        %v4684 = vunpack.c.h.b16 %v4544
        %v4685 = vunpack.c.l.b16 %v4545
        %v4686 = vunpack.c.h.b16 %v4545
        %v4687 = vunpack.c.l.b16 %v4546
        %v4688 = vunpack.c.h.b16 %v4546
        %v4689 = vunpack.c.l.b16 %v4547
        %v4690 = vunpack.c.h.b16 %v4547
        %v4691 = vunpack.c.l.b16 %v4548
        %v4692 = vunpack.c.h.b16 %v4548
        %v4693 = vunpack.c.l.b16 %v4549
        %v4694 = vunpack.c.h.b16 %v4549
        %v4695 = vunpack.c.l.b16 %v4550
        %v4696 = vunpack.c.h.b16 %v4550
        %v4697 = vunpack.c.l.b16 %v4551
        %v4698 = vunpack.c.h.b16 %v4551
        %v4699 = vunpack.c.l.b16 %v4552
        %v4700 = vunpack.c.h.b16 %v4552
        %v4701 = vunpack.c.l.b16 %v4553
        %v4702 = vunpack.c.h.b16 %v4553
        %v4703 = vunpack.c.l.b16 %v4554
        %v4704 = vunpack.c.h.b16 %v4554
        %v4705 = vunpack.c.l.b16 %v4555
        %v4706 = vunpack.c.h.b16 %v4555
        %v4707 = vunpack.c.l.b16 %v4556
        %v4708 = vunpack.c.h.b16 %v4556
        %v4709 = vunpack.c.l.b16 %v4557
        %v4710 = vunpack.c.h.b16 %v4557
        %v4711 = vunpack.c.l.b16 %v4558
        %v4712 = vunpack.c.h.b16 %v4558
        %v4713 = vunpack.c.l.b16 %v4559
        %v4714 = vunpack.c.h.b16 %v4559
        %v4715 = vunpack.c.l.b16 %v4560
        %v4716 = vunpack.c.h.b16 %v4560
        %v4717 = vunpack.c.l.b16 %v4561
        %v4718 = vunpack.c.h.b16 %v4561
        %v4719 = vunpack.c.l.b16 %v4562
        %v4720 = vunpack.c.h.b16 %v4562
        %v4721 = vunpack.c.l.b16 %v4563
        %v4722 = vunpack.c.h.b16 %v4563
        %v4723 = vunpack.c.l.b16 %v4564
        %v4724 = vunpack.c.h.b16 %v4564
        %v4725 = vunpack.c.l.b16 %v4565
        %v4726 = vunpack.c.h.b16 %v4565
        %v4727 = vunpack.c.l.b16 %v4566
        %v4728 = vunpack.c.h.b16 %v4566
        %v4729 = vunpack.c.l.b16 %v4567
        %v4730 = vunpack.c.h.b16 %v4567
        %v4731 = vunpack.c.l.b16 %v4568
        %v4732 = vunpack.c.h.b16 %v4568
        %v4733 = vunpack.c.l.b16 %v4569
        %v4734 = vunpack.c.h.b16 %v4569
        %v4735 = vunpack.c.l.b16 %v4570
        %v4736 = vunpack.c.h.b16 %v4570
        %v4737 = vunpack.c.l.b16 %v4571
        %v4738 = vunpack.c.h.b16 %v4571
        %v4739 = vunpack.c.l.b16 %v4572
        %v4740 = vunpack.c.h.b16 %v4572
        %v4741 = vunpack.c.l.b16 %v4573
        %v4742 = vunpack.c.h.b16 %v4573
        %v4743 = vunpack.c.l.b16 %v4574
        %v4744 = vunpack.c.h.b16 %v4574
        %v4745 = vunpack.c.l.b16 %v4575
        %v4746 = vunpack.c.h.b16 %v4575
        %v4747 = vunpack.c.l.b16 %v4576
        %v4748 = vunpack.c.h.b16 %v4576
        %v4749 = vunpack.c.l.b16 %v4577
        %v4750 = vunpack.c.h.b16 %v4577
        %v4751 = vunpack.c.l.b16 %v4578
        %v4752 = vunpack.c.h.b16 %v4578
        %v4753 = vunpack.c.l.b16 %v4579
        %v4754 = vunpack.c.h.b16 %v4579
        %v4755 = vunpack.c.l.b16 %v4580
        %v4756 = vunpack.c.h.b16 %v4580
        %v4757 = vunpack.c.l.b16 %v4581
        %v4758 = vunpack.c.h.b16 %v4581
        %v4759 = vunpack.c.l.b16 %v4582
        %v4760 = vunpack.c.h.b16 %v4582
        %v4761 = vunpack.c.l.b16 %v4583
        %v4762 = vunpack.c.h.b16 %v4583
        %v4763 = vunpack.c.l.b16 %v4584
        %v4764 = vunpack.c.h.b16 %v4584
        %v4765 = vunpack.c.l.b16 %v4585
        %v4766 = vunpack.c.h.b16 %v4585
        %v4767 = vunpack.c.l.b16 %v4586
        %v4768 = vunpack.c.h.b16 %v4586
        %v4769 = vunpack.c.l.b16 %v4587
        %v4770 = vunpack.c.h.b16 %v4587
        %v4771 = vunpack.c.l.b16 %v4588
        %v4772 = vunpack.c.h.b16 %v4588
        %v4773 = vunpack.c.l.b16 %v4589
        %v4774 = vunpack.c.h.b16 %v4589
        %v4775 = vunpack.c.l.b16 %v4590
        %v4776 = vunpack.c.h.b16 %v4590
        %v4777 = vunpack.c.l.b16 %v4591
        %v4778 = vunpack.c.h.b16 %v4591
        %v4779 = vunpack.c.l.b16 %v4592
        %v4780 = vunpack.c.h.b16 %v4592
        %v4781 = vunpack.c.l.b16 %v4593
        %v4782 = vunpack.c.h.b16 %v4593
        %v4783 = vunpack.c.l.b16 %v4594
        %v4784 = vunpack.c.h.b16 %v4594
        %v4785 = vunpack.c.l.b16 %v4595
        %v4786 = vunpack.c.h.b16 %v4595
        %v4787 = vunpack.c.l.b16 %v4596
        %v4788 = vunpack.c.h.b16 %v4596
        %v4789 = vunpack.c.l.b16 %v4597
        %v4790 = vunpack.c.h.b16 %v4597
        %v4791 = vpack.c.b16 %v4665, %v4663
        %v4792 = vpack.c.b16 %v4666, %v4664
        %v4793 = vpack.c.b16 %v4669, %v4667
        %v4794 = vpack.c.b16 %v4670, %v4668
        %v4795 = vpack.c.b16 %v4673, %v4671
        %v4796 = vpack.c.b16 %v4674, %v4672
        %v4797 = vpack.c.b16 %v4677, %v4675
        %v4798 = vpack.c.b16 %v4678, %v4676
        %v4799 = vpack.c.b16 %v4681, %v4679
        %v4800 = vpack.c.b16 %v4682, %v4680
        %v4801 = vpack.c.b16 %v4685, %v4683
        %v4802 = vpack.c.b16 %v4686, %v4684
        %v4803 = vpack.c.b16 %v4689, %v4687
        %v4804 = vpack.c.b16 %v4690, %v4688
        %v4805 = vpack.c.b16 %v4693, %v4691
        %v4806 = vpack.c.b16 %v4694, %v4692
        %v4807 = vpack.c.b16 %v4697, %v4695
        %v4808 = vpack.c.b16 %v4698, %v4696
        %v4809 = vpack.c.b16 %v4701, %v4699
        %v4810 = vpack.c.b16 %v4702, %v4700
        %v4811 = vpack.c.b16 %v4705, %v4703
        %v4812 = vpack.c.b16 %v4706, %v4704
        %v4813 = vpack.c.b16 %v4709, %v4707
        %v4814 = vpack.c.b16 %v4710, %v4708
        %v4815 = vpack.c.b16 %v4713, %v4711
        %v4816 = vpack.c.b16 %v4714, %v4712
        %v4817 = vpack.c.b16 %v4717, %v4715
        %v4818 = vpack.c.b16 %v4718, %v4716
        %v4819 = vpack.c.b16 %v4721, %v4719
        %v4820 = vpack.c.b16 %v4722, %v4720
        %v4821 = vpack.c.b16 %v4725, %v4723
        %v4822 = vpack.c.b16 %v4726, %v4724
        %v4823 = vpack.c.b16 %v4729, %v4727
        %v4824 = vpack.c.b16 %v4730, %v4728
        %v4825 = vpack.c.b16 %v4733, %v4731
        %v4826 = vpack.c.b16 %v4734, %v4732
        %v4827 = vpack.c.b16 %v4737, %v4735
        %v4828 = vpack.c.b16 %v4738, %v4736
        %v4829 = vpack.c.b16 %v4741, %v4739
        %v4830 = vpack.c.b16 %v4742, %v4740
        %v4831 = vpack.c.b16 %v4745, %v4743
        %v4832 = vpack.c.b16 %v4746, %v4744
        %v4833 = vpack.c.b16 %v4749, %v4747
        %v4834 = vpack.c.b16 %v4750, %v4748
        %v4835 = vpack.c.b16 %v4753, %v4751
        %v4836 = vpack.c.b16 %v4754, %v4752
        %v4837 = vpack.c.b16 %v4757, %v4755
        %v4838 = vpack.c.b16 %v4758, %v4756
        %v4839 = vpack.c.b16 %v4761, %v4759
        %v4840 = vpack.c.b16 %v4762, %v4760
        %v4841 = vpack.c.b16 %v4765, %v4763
        %v4842 = vpack.c.b16 %v4766, %v4764
        %v4843 = vpack.c.b16 %v4769, %v4767
        %v4844 = vpack.c.b16 %v4770, %v4768
        %v4845 = vpack.c.b16 %v4773, %v4771
        %v4846 = vpack.c.b16 %v4774, %v4772
        %v4847 = vpack.c.b16 %v4777, %v4775
        %v4848 = vpack.c.b16 %v4778, %v4776
        %v4849 = vpack.c.b16 %v4781, %v4779
        %v4850 = vpack.c.b16 %v4782, %v4780
        %v4851 = vpack.c.b16 %v4785, %v4783
        %v4852 = vpack.c.b16 %v4786, %v4784
        %v4853 = vpack.c.b16 %v4789, %v4787
        %v4854 = vpack.c.b16 %v4790, %v4788
        %v4920 = vlaneseq
        %v4921 = vshrl.u32 %v4920, 7
        %v4922 = vsub.s32 0, %v4921
        %v4923 = vrot.slane %v4598, %v4922
        %v4924 = vlaneseq
        %v4925 = vshrl.u32 %v4924, 7
        %v4926 = vsub.s32 1, %v4925
        %v4927 = vrot.slane %v4598, %v4926
        %4930 = vmatprep.subr.bf16.mxu0 %v4806
        %4931 = vmatpush1.bf16.msra.mxu0 %v4805
        %4932 = vmatprep.subr.bf16.mxu0 %v4804
        %4933 = vmatpush1.bf16.msra.mxu0 %v4803
        %4934 = vmatprep.subr.bf16.mxu0 %v4802
        %4935 = vmatpush1.bf16.msra.mxu0 %v4801
        %4936 = vmatprep.subr.bf16.mxu0 %v4800
        %4937 = vmatpush1.bf16.msra.mxu0 %v4799
        %4938 = vmatprep.subr.bf16.mxu0 %v4798
        %4939 = vmatpush1.bf16.msra.mxu0 %v4797
        %4940 = vmatprep.subr.bf16.mxu0 %v4796
        %4941 = vmatpush1.bf16.msra.mxu0 %v4795
        %4942 = vmatprep.subr.bf16.mxu0 %v4794
        %4943 = vmatpush1.bf16.msra.mxu0 %v4793
        %4944 = vmatprep.subr.bf16.mxu0 %v4792
        %4945 = vmatpush1.bf16.msra.mxu0 %v4791
        %4946 = vmatprep.subr.bf16.mxu0 %v4822
        %4947 = vmatpush2.bf16.msra.mxu0 %v4821
        %4948 = vmatprep.subr.bf16.mxu0 %v4820
        %4949 = vmatpush2.bf16.msra.mxu0 %v4819
        %4950 = vmatprep.subr.bf16.mxu0 %v4818
        %4951 = vmatpush2.bf16.msra.mxu0 %v4817
        %4952 = vmatprep.subr.bf16.mxu0 %v4816
        %4953 = vmatpush2.bf16.msra.mxu0 %v4815
        %4954 = vmatprep.subr.bf16.mxu0 %v4814
        %4955 = vmatpush2.bf16.msra.mxu0 %v4813
        %4956 = vmatprep.subr.bf16.mxu0 %v4812
        %4957 = vmatpush2.bf16.msra.mxu0 %v4811
        %4958 = vmatprep.subr.bf16.mxu0 %v4810
        %4959 = vmatpush2.bf16.msra.mxu0 %v4809
        %4960 = vmatprep.subr.bf16.mxu0 %v4808
        %4961 = vmatpush2.bf16.msra.mxu0 %v4807
        %4962 = vmatprep.mubr.bf16.mxu0 %v4531
        %4963 = vmatmul.mubr.bf16.gmra.mxu0 %v4530
        %v4964 = vpop.f32.mrf.mxu0
        %v4965 = vadd.f32 %v4923, %v4964
        %v4966 = vpop.f32.mrf.mxu0
        %v4967 = vadd.f32 %v4927, %v4966
        %v4968 = vpop.f32.mrf.mxu0
        %v4969 = vpop.f32.mrf.mxu0
        %4970 = vdwg.mxu0
        %4971 = vmatprep.subr.bf16.mxu0 %v4838
        %4972 = vmatpush1.bf16.msra.mxu0 %v4837
        %4973 = vmatprep.subr.bf16.mxu0 %v4836
        %4974 = vmatpush1.bf16.msra.mxu0 %v4835
        %4975 = vmatprep.subr.bf16.mxu0 %v4834
        %4976 = vmatpush1.bf16.msra.mxu0 %v4833
        %4977 = vmatprep.subr.bf16.mxu0 %v4832
        %4978 = vmatpush1.bf16.msra.mxu0 %v4831
        %4979 = vmatprep.subr.bf16.mxu0 %v4830
        %4980 = vmatpush1.bf16.msra.mxu0 %v4829
        %4981 = vmatprep.subr.bf16.mxu0 %v4828
        %4982 = vmatpush1.bf16.msra.mxu0 %v4827
        %4983 = vmatprep.subr.bf16.mxu0 %v4826
        %4984 = vmatpush1.bf16.msra.mxu0 %v4825
        %4985 = vmatprep.subr.bf16.mxu0 %v4824
        %4986 = vmatpush1.bf16.msra.mxu0 %v4823
        %4987 = vmatprep.subr.bf16.mxu0 %v4854
        %4988 = vmatpush2.bf16.msra.mxu0 %v4853
        %4989 = vmatprep.subr.bf16.mxu0 %v4852
        %4990 = vmatpush2.bf16.msra.mxu0 %v4851
        %4991 = vmatprep.subr.bf16.mxu0 %v4850
        %4992 = vmatpush2.bf16.msra.mxu0 %v4849
        %4993 = vmatprep.subr.bf16.mxu0 %v4848
        %4994 = vmatpush2.bf16.msra.mxu0 %v4847
        %4995 = vmatprep.subr.bf16.mxu0 %v4846
        %4996 = vmatpush2.bf16.msra.mxu0 %v4845
        %4997 = vmatprep.subr.bf16.mxu0 %v4844
        %4998 = vmatpush2.bf16.msra.mxu0 %v4843
        %4999 = vmatprep.subr.bf16.mxu0 %v4842
        %5000 = vmatpush2.bf16.msra.mxu0 %v4841
        %5001 = vmatprep.subr.bf16.mxu0 %v4840
        %5002 = vmatpush2.bf16.msra.mxu0 %v4839
        %5003 = vmatprep.mubr.bf16.mxu0 %v4533
        %5004 = vmatmul.mubr.bf16.gmra.mxu0 %v4532
        %v5005 = vpop.f32.mrf.mxu0
        %v5006 = vadd.f32 %v4965, %v5005
        %v5007 = vpop.f32.mrf.mxu0
        %v5008 = vadd.f32 %v4967, %v5007
        %v5009 = vpop.f32.mrf.mxu0
        %v5010 = vpop.f32.mrf.mxu0
        %5011 = vdwg.mxu0
        %v5012 = vmax.f32 %v5006, 0.0
        %v5013 = vmax.f32 %v5008, 0.0
        %v5014 = vpack.c.bf16 %v5012, %v5012
        %v5015 = vpack.c.bf16 %v5013, %v5013
        %v5016 = vld [vmem:[%s23] sm:$0xf]
        %v5017 = vld [vmem:[%s23 + $0x4] sm:$0xf]
        %v5018 = vld [vmem:[%s23 + $0x8] sm:$0xf]
        %v5019 = vld [vmem:[%s23 + $0xc] sm:$0xf]
        %v5020 = vld [vmem:[%s23 + $0x10] sm:$0xf]
        %v5021 = vld [vmem:[%s23 + $0x14] sm:$0xf]
        %v5022 = vld [vmem:[%s23 + $0x18] sm:$0xf]
        %v5023 = vld [vmem:[%s23 + $0x1c] sm:$0xf]
        %v5024 = vld [vmem:[%s23 + $0x20] sm:$0xf]
        %v5025 = vld [vmem:[%s23 + $0x24] sm:$0xf]
        %v5026 = vld [vmem:[%s23 + $0x28] sm:$0xf]
        %v5027 = vld [vmem:[%s23 + $0x2c] sm:$0xf]
        %v5028 = vld [vmem:[%s23 + $0x30] sm:$0xf]
        %v5029 = vld [vmem:[%s23 + $0x34] sm:$0xf]
        %v5030 = vld [vmem:[%s23 + $0x38] sm:$0xf]
        %v5031 = vld [vmem:[%s23 + $0x3c] sm:$0xf]
        %v5032 = vld [vmem:[%s23 + $0x40] sm:$0xf]
        %v5033 = vld [vmem:[%s23 + $0x44] sm:$0xf]
        %v5034 = vld [vmem:[%s23 + $0x48] sm:$0xf]
        %v5035 = vld [vmem:[%s23 + $0x4c] sm:$0xf]
        %v5036 = vld [vmem:[%s23 + $0x50] sm:$0xf]
        %v5037 = vld [vmem:[%s23 + $0x54] sm:$0xf]
        %v5038 = vld [vmem:[%s23 + $0x58] sm:$0xf]
        %v5039 = vld [vmem:[%s23 + $0x5c] sm:$0xf]
        %v5040 = vld [vmem:[%s23 + $0x60] sm:$0xf]
        %v5041 = vld [vmem:[%s23 + $0x64] sm:$0xf]
        %v5042 = vld [vmem:[%s23 + $0x68] sm:$0xf]
        %v5043 = vld [vmem:[%s23 + $0x6c] sm:$0xf]
        %v5044 = vld [vmem:[%s23 + $0x70] sm:$0xf]
        %v5045 = vld [vmem:[%s23 + $0x74] sm:$0xf]
        %v5046 = vld [vmem:[%s23 + $0x78] sm:$0xf]
        %v5047 = vld [vmem:[%s23 + $0x7c] sm:$0xf]
        %v5048 = vld [vmem:[%s25] sm:$0x1]
        %v5081 = vunpack.c.l.b16 %v5016
        %v5082 = vunpack.c.l.b16 %v5017
        %v5083 = vunpack.c.l.b16 %v5018
        %v5084 = vunpack.c.l.b16 %v5019
        %v5085 = vunpack.c.l.b16 %v5020
        %v5086 = vunpack.c.l.b16 %v5021
        %v5087 = vunpack.c.l.b16 %v5022
        %v5088 = vunpack.c.l.b16 %v5023
        %v5089 = vunpack.c.l.b16 %v5024
        %v5090 = vunpack.c.l.b16 %v5025
        %v5091 = vunpack.c.l.b16 %v5026
        %v5092 = vunpack.c.l.b16 %v5027
        %v5093 = vunpack.c.l.b16 %v5028
        %v5094 = vunpack.c.l.b16 %v5029
        %v5095 = vunpack.c.l.b16 %v5030
        %v5096 = vunpack.c.l.b16 %v5031
        %v5097 = vunpack.c.l.b16 %v5032
        %v5098 = vunpack.c.l.b16 %v5033
        %v5099 = vunpack.c.l.b16 %v5034
        %v5100 = vunpack.c.l.b16 %v5035
        %v5101 = vunpack.c.l.b16 %v5036
        %v5102 = vunpack.c.l.b16 %v5037
        %v5103 = vunpack.c.l.b16 %v5038
        %v5104 = vunpack.c.l.b16 %v5039
        %v5105 = vunpack.c.l.b16 %v5040
        %v5106 = vunpack.c.l.b16 %v5041
        %v5107 = vunpack.c.l.b16 %v5042
        %v5108 = vunpack.c.l.b16 %v5043
        %v5109 = vunpack.c.l.b16 %v5044
        %v5110 = vunpack.c.l.b16 %v5045
        %v5111 = vunpack.c.l.b16 %v5046
        %v5112 = vunpack.c.l.b16 %v5047
        %v5113 = vpack.c.b16 %v5082, %v5081
        %v5114 = vpack.c.b16 %v5084, %v5083
        %v5115 = vpack.c.b16 %v5086, %v5085
        %v5116 = vpack.c.b16 %v5088, %v5087
        %v5117 = vpack.c.b16 %v5090, %v5089
        %v5118 = vpack.c.b16 %v5092, %v5091
        %v5119 = vpack.c.b16 %v5094, %v5093
        %v5120 = vpack.c.b16 %v5096, %v5095
        %v5121 = vpack.c.b16 %v5098, %v5097
        %v5122 = vpack.c.b16 %v5100, %v5099
        %v5123 = vpack.c.b16 %v5102, %v5101
        %v5124 = vpack.c.b16 %v5104, %v5103
        %v5125 = vpack.c.b16 %v5106, %v5105
        %v5126 = vpack.c.b16 %v5108, %v5107
        %v5127 = vpack.c.b16 %v5110, %v5109
        %v5128 = vpack.c.b16 %v5112, %v5111
        %5145 = vmatprep.subr.bf16.mxu0 0
        %5146 = vmatpush1.bf16.msra.mxu0 %v5120
        %5147 = vmatprep.subr.bf16.mxu0 0
        %5148 = vmatpush1.bf16.msra.mxu0 %v5119
        %5149 = vmatprep.subr.bf16.mxu0 0
        %5150 = vmatpush1.bf16.msra.mxu0 %v5118
        %5151 = vmatprep.subr.bf16.mxu0 0
        %5152 = vmatpush1.bf16.msra.mxu0 %v5117
        %5153 = vmatprep.subr.bf16.mxu0 0
        %5154 = vmatpush1.bf16.msra.mxu0 %v5116
        %5155 = vmatprep.subr.bf16.mxu0 0
        %5156 = vmatpush1.bf16.msra.mxu0 %v5115
        %5157 = vmatprep.subr.bf16.mxu0 0
        %5158 = vmatpush1.bf16.msra.mxu0 %v5114
        %5159 = vmatprep.subr.bf16.mxu0 0
        %5160 = vmatpush1.bf16.msra.mxu0 %v5113
        %5161 = vmatprep.subr.bf16.mxu0 0
        %5162 = vmatpush2.bf16.msra.mxu0 %v5128
        %5163 = vmatprep.subr.bf16.mxu0 0
        %5164 = vmatpush2.bf16.msra.mxu0 %v5127
        %5165 = vmatprep.subr.bf16.mxu0 0
        %5166 = vmatpush2.bf16.msra.mxu0 %v5126
        %5167 = vmatprep.subr.bf16.mxu0 0
        %5168 = vmatpush2.bf16.msra.mxu0 %v5125
        %5169 = vmatprep.subr.bf16.mxu0 0
        %5170 = vmatpush2.bf16.msra.mxu0 %v5124
        %5171 = vmatprep.subr.bf16.mxu0 0
        %5172 = vmatpush2.bf16.msra.mxu0 %v5123
        %5173 = vmatprep.subr.bf16.mxu0 0
        %5174 = vmatpush2.bf16.msra.mxu0 %v5122
        %5175 = vmatprep.subr.bf16.mxu0 0
        %5176 = vmatpush2.bf16.msra.mxu0 %v5121
        %5177 = vmatprep.mubr.bf16.mxu0 %v5015
        %5178 = vmatmul.mubr.bf16.gmra.mxu0 %v5014
        %v5179 = vpop.f32.mrf.mxu0
        %v5180 = vadd.f32 %v5048, %v5179
        %v5181 = vpop.f32.mrf.mxu0
        %v5182 = vpop.f32.mrf.mxu0
        %v5183 = vpop.f32.mrf.mxu0
        %5184 = vdwg.mxu0
        %vm5185 = vcmask 65536
        %5186 = vst.msk [vmem:[%s1086] sm:$0x1] %vm5185, %v5180
        %v5187 = vlaneseq
        %v5188 = vshrl.u32 %v5187, 7
        %v5189 = vlaneseq
        %v5190 = vand.u32 %v5189, 127
        %v5191 = vmul.u32 %v5188, 3
        %vm5192 = vcmp.ge.s32.totalorder %v5190, %v5191
        %v5193 = vadd.s32 %v5191, 3
        %vm5194 = vcmp.lt.s32.totalorder %v5190, %v5193
        %vm5195 = vmand %vm5192, %vm5194
        %v5196 = vlaneseq
        %v5197 = vshrl.u32 %v5196, 7
        %v5198 = vsub.s32 0, %v5197
        %v5199 = vrot.slane %v5180, %v5198
        %v5200 = vsel %vm5195, %v5199, 0.0
        %v5201 = vpack.c.bf16 %v5200, %v5200
        %v5202 = vld [vmem:[%s27] sm:$0xf]
        %v5203 = vld [vmem:[%s27 + $0x4] sm:$0x1]
        %v5206 = vunpack.c.l.b16 %v5202
        %v5207 = vunpack.c.l.b16 %v5203
        %v5208 = vpack.c.b16 %v5207, %v5206
        %vm5209 = vcmask 72704
        %v5211 = vsel %vm5209, %v5201, 0
        %vm5213 = vcmask 1043456
        %vm5214 = vcmask 1044480
        %v5215 = vsel %vm5213, 4294967295, 65535
        %v5216 = vsel %vm5214, %v5215, 0
        %v5218 = vand.u32 %v5208, %v5216
        %5220 = vmatprep.subr.bf16.mxu0 0
        %5221 = vmatpush1.bf16.msra.mxu0 0
        %5222 = vmatprep.subr.bf16.mxu0 0
        %5223 = vmatpush1.bf16.msra.mxu0 0
        %5224 = vmatprep.subr.bf16.mxu0 0
        %5225 = vmatpush1.bf16.msra.mxu0 0
        %5226 = vmatprep.subr.bf16.mxu0 0
        %5227 = vmatpush1.bf16.msra.mxu0 0
        %5228 = vmatprep.subr.bf16.mxu0 0
        %5229 = vmatpush1.bf16.msra.mxu0 0
        %5230 = vmatprep.subr.bf16.mxu0 0
        %5231 = vmatpush1.bf16.msra.mxu0 0
        %5232 = vmatprep.subr.bf16.mxu0 0
        %5233 = vmatpush1.bf16.msra.mxu0 0
        %5234 = vmatprep.subr.bf16.mxu0 0
        %5235 = vmatpush1.bf16.msra.mxu0 %v5218
        %5236 = vmatprep.subr.bf16.mxu0 0
        %5237 = vmatpush2.bf16.msra.mxu0 0
        %5238 = vmatprep.subr.bf16.mxu0 0
        %5239 = vmatpush2.bf16.msra.mxu0 0
        %5240 = vmatprep.subr.bf16.mxu0 0
        %5241 = vmatpush2.bf16.msra.mxu0 0
        %5242 = vmatprep.subr.bf16.mxu0 0
        %5243 = vmatpush2.bf16.msra.mxu0 0
        %5244 = vmatprep.subr.bf16.mxu0 0
        %5245 = vmatpush2.bf16.msra.mxu0 0
        %5246 = vmatprep.subr.bf16.mxu0 0
        %5247 = vmatpush2.bf16.msra.mxu0 0
        %5248 = vmatprep.subr.bf16.mxu0 0
        %5249 = vmatpush2.bf16.msra.mxu0 0
        %5250 = vmatprep.subr.bf16.mxu0 0
        %5251 = vmatpush2.bf16.msra.mxu0 0
        %5252 = vmatprep.mubr.bf16.mxu0 0
        %5253 = vmatmul.mubr.bf16.gmra.mxu0 %v5211
        %v5254 = vpop.f32.mrf.mxu0
        %v5255 = vadd.f32 0.0, %v5254
        %v5256 = vpop.f32.mrf.mxu0
        %v5257 = vpop.f32.mrf.mxu0
        %v5258 = vpop.f32.mrf.mxu0
        %5259 = vdwg.mxu0
        %v5260 = vpack.c.bf16 %v5255, %v5255
        %v5261 = vld [vmem:[%s29] sm:$0x1]
        %v5263 = vlaneseq
        %v5264 = vshrl.u32 %v5263, 7
        %v5265 = vsub.s32 0, %v5264
        %v5266 = vrot.slane %v5261, %v5265
        %v5269 = vand.u32 %v5260, %v1148
        %5271 = vmatprep.subr.bf16.mxu0 0
        %5272 = vmatpush1.bf16.msra.mxu0 0
        %5273 = vmatprep.subr.bf16.mxu0 0
        %5274 = vmatpush1.bf16.msra.mxu0 0
        %5275 = vmatprep.subr.bf16.mxu0 0
        %5276 = vmatpush1.bf16.msra.mxu0 0
        %5277 = vmatprep.subr.bf16.mxu0 0
        %5278 = vmatpush1.bf16.msra.mxu0 0
        %5279 = vmatprep.subr.bf16.mxu0 0
        %5280 = vmatpush1.bf16.msra.mxu0 0
        %5281 = vmatprep.subr.bf16.mxu0 0
        %5282 = vmatpush1.bf16.msra.mxu0 0
        %5283 = vmatprep.subr.bf16.mxu0 0
        %5284 = vmatpush1.bf16.msra.mxu0 0
        %5285 = vmatprep.subr.bf16.mxu0 0
        %5286 = vmatpush1.bf16.msra.mxu0 %v5269
        %5287 = vmatprep.subr.bf16.mxu0 0
        %5288 = vmatpush2.bf16.msra.mxu0 0
        %5289 = vmatprep.subr.bf16.mxu0 0
        %5290 = vmatpush2.bf16.msra.mxu0 0
        %5291 = vmatprep.subr.bf16.mxu0 0
        %5292 = vmatpush2.bf16.msra.mxu0 0
        %5293 = vmatprep.subr.bf16.mxu0 0
        %5294 = vmatpush2.bf16.msra.mxu0 0
        %5295 = vmatprep.subr.bf16.mxu0 0
        %5296 = vmatpush2.bf16.msra.mxu0 0
        %5297 = vmatprep.subr.bf16.mxu0 0
        %5298 = vmatpush2.bf16.msra.mxu0 0
        %5299 = vmatprep.subr.bf16.mxu0 0
        %5300 = vmatpush2.bf16.msra.mxu0 0
        %5301 = vmatprep.subr.bf16.mxu0 0
        %5302 = vmatpush2.bf16.msra.mxu0 0
        %5303 = vmatprep.mubr.bf16.mxu0 0
        %5304 = vmatmul.mubr.bf16.gmra.mxu0 %v1122
        %v5305 = vpop.f32.mrf.mxu0
        %v5306 = vadd.f32 %v5266, %v5305
        %v5307 = vpop.f32.mrf.mxu0
        %v5308 = vpop.f32.mrf.mxu0
        %v5309 = vadd.f32 %v5266, %v5308
        %v5310 = vpop.f32.mrf.mxu0
        %5311 = vmatprep.mubr.bf16.mxu0 0
        %5312 = vmatmul.mubr.bf16.gmra.mxu0 %v1125
        %v5313 = vpop.f32.mrf.mxu0
        %v5314 = vadd.f32 %v5266, %v5313
        %v5315 = vpop.f32.mrf.mxu0
        %v5316 = vpop.f32.mrf.mxu0
        %v5317 = vadd.f32 %v5266, %v5316
        %v5318 = vpop.f32.mrf.mxu0
        %5319 = vmatprep.mubr.bf16.mxu0 0
        %5320 = vmatmul.mubr.bf16.gmra.mxu0 %v1128
        %v5321 = vpop.f32.mrf.mxu0
        %v5322 = vadd.f32 %v5266, %v5321
        %v5323 = vpop.f32.mrf.mxu0
        %v5324 = vpop.f32.mrf.mxu0
        %v5325 = vadd.f32 %v5266, %v5324
        %v5326 = vpop.f32.mrf.mxu0
        %5327 = vmatprep.mubr.bf16.mxu0 0
        %5328 = vmatmul.mubr.bf16.gmra.mxu0 %v1131
        %v5329 = vpop.f32.mrf.mxu0
        %v5330 = vadd.f32 %v5266, %v5329
        %v5331 = vpop.f32.mrf.mxu0
        %v5332 = vpop.f32.mrf.mxu0
        %v5333 = vadd.f32 %v5266, %v5332
        %v5334 = vpop.f32.mrf.mxu0
        %5335 = vmatprep.mubr.bf16.mxu0 0
        %5336 = vmatmul.mubr.bf16.gmra.mxu0 %v1134
        %v5337 = vpop.f32.mrf.mxu0
        %v5338 = vadd.f32 %v5266, %v5337
        %v5339 = vpop.f32.mrf.mxu0
        %v5340 = vpop.f32.mrf.mxu0
        %v5341 = vadd.f32 %v5266, %v5340
        %v5342 = vpop.f32.mrf.mxu0
        %5343 = vmatprep.mubr.bf16.mxu0 0
        %5344 = vmatmul.mubr.bf16.gmra.mxu0 %v1137
        %v5345 = vpop.f32.mrf.mxu0
        %v5346 = vadd.f32 %v5266, %v5345
        %v5347 = vpop.f32.mrf.mxu0
        %v5348 = vpop.f32.mrf.mxu0
        %v5349 = vadd.f32 %v5266, %v5348
        %v5350 = vpop.f32.mrf.mxu0
        %5351 = vmatprep.mubr.bf16.mxu0 0
        %5352 = vmatmul.mubr.bf16.gmra.mxu0 %v1140
        %v5353 = vpop.f32.mrf.mxu0
        %v5354 = vadd.f32 %v5266, %v5353
        %v5355 = vpop.f32.mrf.mxu0
        %v5356 = vpop.f32.mrf.mxu0
        %v5357 = vadd.f32 %v5266, %v5356
        %v5358 = vpop.f32.mrf.mxu0
        %5359 = vmatprep.mubr.bf16.mxu0 0
        %5360 = vmatmul.mubr.bf16.gmra.mxu0 %v1143
        %v5361 = vpop.f32.mrf.mxu0
        %v5362 = vadd.f32 %v5266, %v5361
        %v5363 = vpop.f32.mrf.mxu0
        %v5364 = vpop.f32.mrf.mxu0
        %v5365 = vadd.f32 %v5266, %v5364
        %v5366 = vpop.f32.mrf.mxu0
        %5367 = vdwg.mxu0
        %v5368 = vmax.f32 %v5306, 0.0
        %v5369 = vmax.f32 %v5309, 0.0
        %v5370 = vmax.f32 %v5314, 0.0
        %v5371 = vmax.f32 %v5317, 0.0
        %v5372 = vmax.f32 %v5322, 0.0
        %v5373 = vmax.f32 %v5325, 0.0
        %v5374 = vmax.f32 %v5330, 0.0
        %v5375 = vmax.f32 %v5333, 0.0
        %v5376 = vmax.f32 %v5338, 0.0
        %v5377 = vmax.f32 %v5341, 0.0
        %v5378 = vmax.f32 %v5346, 0.0
        %v5379 = vmax.f32 %v5349, 0.0
        %v5380 = vmax.f32 %v5354, 0.0
        %v5381 = vmax.f32 %v5357, 0.0
        %v5382 = vmax.f32 %v5362, 0.0
        %v5383 = vmax.f32 %v5365, 0.0
        %v5384 = vpack.c.bf16 %v5369, %v5368
        %v5385 = vpack.c.bf16 %v5371, %v5370
        %v5386 = vpack.c.bf16 %v5373, %v5372
        %v5387 = vpack.c.bf16 %v5375, %v5374
        %v5388 = vpack.c.bf16 %v5377, %v5376
        %v5389 = vpack.c.bf16 %v5379, %v5378
        %v5390 = vpack.c.bf16 %v5381, %v5380
        %v5391 = vpack.c.bf16 %v5383, %v5382
        %v5392 = vld [vmem:[%s31] sm:$0xf]
        %v5393 = vld [vmem:[%s31 + $0x4] sm:$0xf]
        %v5394 = vld [vmem:[%s31 + $0x8] sm:$0xf]
        %v5395 = vld [vmem:[%s31 + $0xc] sm:$0xf]
        %v5396 = vld [vmem:[%s31 + $0x10] sm:$0xf]
        %v5397 = vld [vmem:[%s31 + $0x14] sm:$0xf]
        %v5398 = vld [vmem:[%s31 + $0x18] sm:$0xf]
        %v5399 = vld [vmem:[%s31 + $0x1c] sm:$0xf]
        %v5400 = vld [vmem:[%s33] sm:$0x1]
        %v5402 = vlaneseq
        %v5403 = vshrl.u32 %v5402, 7
        %v5404 = vsub.s32 0, %v5403
        %v5405 = vrot.slane %v5400, %v5404
        %v5415 = vunpack.c.l.b16 %v5392
        %v5416 = vunpack.c.l.b16 %v5393
        %v5417 = vunpack.c.l.b16 %v5394
        %v5418 = vunpack.c.l.b16 %v5395
        %v5419 = vunpack.c.l.b16 %v5396
        %v5420 = vunpack.c.l.b16 %v5397
        %v5421 = vunpack.c.l.b16 %v5398
        %v5422 = vunpack.c.l.b16 %v5399
        %v5423 = vpack.c.b16 %v5416, %v5415
        %v5424 = vpack.c.b16 %v5418, %v5417
        %v5425 = vpack.c.b16 %v5420, %v5419
        %v5426 = vpack.c.b16 %v5422, %v5421
        %v5432 = vsel %vm1312, %v5384, 0
        %v5435 = vsel %vm1312, %v5385, 0
        %v5438 = vsel %vm1312, %v5386, 0
        %v5441 = vsel %vm1312, %v5387, 0
        %v5444 = vsel %vm1312, %v5388, 0
        %v5447 = vsel %vm1312, %v5389, 0
        %v5450 = vsel %vm1312, %v5390, 0
        %v5453 = vsel %vm1312, %v5391, 0
        %5455 = vmatprep.subr.bf16.mxu0 0
        %5456 = vmatpush1.bf16.msra.mxu0 0
        %5457 = vmatprep.subr.bf16.mxu0 0
        %5458 = vmatpush1.bf16.msra.mxu0 0
        %5459 = vmatprep.subr.bf16.mxu0 0
        %5460 = vmatpush1.bf16.msra.mxu0 0
        %5461 = vmatprep.subr.bf16.mxu0 0
        %5462 = vmatpush1.bf16.msra.mxu0 0
        %5463 = vmatprep.subr.bf16.mxu0 0
        %5464 = vmatpush1.bf16.msra.mxu0 %v5426
        %5465 = vmatprep.subr.bf16.mxu0 0
        %5466 = vmatpush1.bf16.msra.mxu0 %v5425
        %5467 = vmatprep.subr.bf16.mxu0 0
        %5468 = vmatpush1.bf16.msra.mxu0 %v5424
        %5469 = vmatprep.subr.bf16.mxu0 0
        %5470 = vmatpush1.bf16.msra.mxu0 %v5423
        %5471 = vmatprep.subr.bf16.mxu0 0
        %5472 = vmatpush2.bf16.msra.mxu0 0
        %5473 = vmatprep.subr.bf16.mxu0 0
        %5474 = vmatpush2.bf16.msra.mxu0 0
        %5475 = vmatprep.subr.bf16.mxu0 0
        %5476 = vmatpush2.bf16.msra.mxu0 0
        %5477 = vmatprep.subr.bf16.mxu0 0
        %5478 = vmatpush2.bf16.msra.mxu0 0
        %5479 = vmatprep.subr.bf16.mxu0 0
        %5480 = vmatpush2.bf16.msra.mxu0 0
        %5481 = vmatprep.subr.bf16.mxu0 0
        %5482 = vmatpush2.bf16.msra.mxu0 0
        %5483 = vmatprep.subr.bf16.mxu0 0
        %5484 = vmatpush2.bf16.msra.mxu0 0
        %5485 = vmatprep.subr.bf16.mxu0 0
        %5486 = vmatpush2.bf16.msra.mxu0 0
        %5487 = vmatprep.mubr.bf16.mxu0 0
        %5488 = vmatmul.mubr.bf16.gmra.mxu0 %v5432
        %v5489 = vpop.f32.mrf.mxu0
        %v5490 = vadd.f32 %v5405, %v5489
        %v5491 = vpop.f32.mrf.mxu0
        %v5492 = vpop.f32.mrf.mxu0
        %v5493 = vadd.f32 %v5405, %v5492
        %v5494 = vpop.f32.mrf.mxu0
        %5495 = vmatprep.mubr.bf16.mxu0 0
        %5496 = vmatmul.mubr.bf16.gmra.mxu0 %v5435
        %v5497 = vpop.f32.mrf.mxu0
        %v5498 = vadd.f32 %v5405, %v5497
        %v5499 = vpop.f32.mrf.mxu0
        %v5500 = vpop.f32.mrf.mxu0
        %v5501 = vadd.f32 %v5405, %v5500
        %v5502 = vpop.f32.mrf.mxu0
        %5503 = vmatprep.mubr.bf16.mxu0 0
        %5504 = vmatmul.mubr.bf16.gmra.mxu0 %v5438
        %v5505 = vpop.f32.mrf.mxu0
        %v5506 = vadd.f32 %v5405, %v5505
        %v5507 = vpop.f32.mrf.mxu0
        %v5508 = vpop.f32.mrf.mxu0
        %v5509 = vadd.f32 %v5405, %v5508
        %v5510 = vpop.f32.mrf.mxu0
        %5511 = vmatprep.mubr.bf16.mxu0 0
        %5512 = vmatmul.mubr.bf16.gmra.mxu0 %v5441
        %v5513 = vpop.f32.mrf.mxu0
        %v5514 = vadd.f32 %v5405, %v5513
        %v5515 = vpop.f32.mrf.mxu0
        %v5516 = vpop.f32.mrf.mxu0
        %v5517 = vadd.f32 %v5405, %v5516
        %v5518 = vpop.f32.mrf.mxu0
        %5519 = vmatprep.mubr.bf16.mxu0 0
        %5520 = vmatmul.mubr.bf16.gmra.mxu0 %v5444
        %v5521 = vpop.f32.mrf.mxu0
        %v5522 = vadd.f32 %v5405, %v5521
        %v5523 = vpop.f32.mrf.mxu0
        %v5524 = vpop.f32.mrf.mxu0
        %v5525 = vadd.f32 %v5405, %v5524
        %v5526 = vpop.f32.mrf.mxu0
        %5527 = vmatprep.mubr.bf16.mxu0 0
        %5528 = vmatmul.mubr.bf16.gmra.mxu0 %v5447
        %v5529 = vpop.f32.mrf.mxu0
        %v5530 = vadd.f32 %v5405, %v5529
        %v5531 = vpop.f32.mrf.mxu0
        %v5532 = vpop.f32.mrf.mxu0
        %v5533 = vadd.f32 %v5405, %v5532
        %v5534 = vpop.f32.mrf.mxu0
        %5535 = vmatprep.mubr.bf16.mxu0 0
        %5536 = vmatmul.mubr.bf16.gmra.mxu0 %v5450
        %v5537 = vpop.f32.mrf.mxu0
        %v5538 = vadd.f32 %v5405, %v5537
        %v5539 = vpop.f32.mrf.mxu0
        %v5540 = vpop.f32.mrf.mxu0
        %v5541 = vadd.f32 %v5405, %v5540
        %v5542 = vpop.f32.mrf.mxu0
        %5543 = vmatprep.mubr.bf16.mxu0 0
        %5544 = vmatmul.mubr.bf16.gmra.mxu0 %v5453
        %v5545 = vpop.f32.mrf.mxu0
        %v5546 = vadd.f32 %v5405, %v5545
        %v5547 = vpop.f32.mrf.mxu0
        %v5548 = vpop.f32.mrf.mxu0
        %v5549 = vadd.f32 %v5405, %v5548
        %v5550 = vpop.f32.mrf.mxu0
        %5551 = vdwg.mxu0
        %v5552 = vmax.f32 %v5490, 0.0
        %v5553 = vmax.f32 %v5493, 0.0
        %v5554 = vmax.f32 %v5498, 0.0
        %v5555 = vmax.f32 %v5501, 0.0
        %v5556 = vmax.f32 %v5506, 0.0
        %v5557 = vmax.f32 %v5509, 0.0
        %v5558 = vmax.f32 %v5514, 0.0
        %v5559 = vmax.f32 %v5517, 0.0
        %v5560 = vmax.f32 %v5522, 0.0
        %v5561 = vmax.f32 %v5525, 0.0
        %v5562 = vmax.f32 %v5530, 0.0
        %v5563 = vmax.f32 %v5533, 0.0
        %v5564 = vmax.f32 %v5538, 0.0
        %v5565 = vmax.f32 %v5541, 0.0
        %v5566 = vmax.f32 %v5546, 0.0
        %v5567 = vmax.f32 %v5549, 0.0
        %v5568 = vpack.c.bf16 %v5553, %v5552
        %v5569 = vpack.c.bf16 %v5555, %v5554
        %v5570 = vpack.c.bf16 %v5557, %v5556
        %v5571 = vpack.c.bf16 %v5559, %v5558
        %v5572 = vpack.c.bf16 %v5561, %v5560
        %v5573 = vpack.c.bf16 %v5563, %v5562
        %v5574 = vpack.c.bf16 %v5565, %v5564
        %v5575 = vpack.c.bf16 %v5567, %v5566
        %v5576 = vld [vmem:[#allocation12] sm:$0xff]
        %v5577 = vld [vmem:[#allocation12 + $0x8] sm:$0xff]
        %v5578 = vld [vmem:[#allocation12 + $0x10] sm:$0xff]
        %v5579 = vld [vmem:[#allocation12 + $0x18] sm:$0xff]
        %v5580 = vld [vmem:[#allocation12 + $0x20] sm:$0xff]
        %v5581 = vld [vmem:[#allocation12 + $0x28] sm:$0xff]
        %v5582 = vld [vmem:[#allocation12 + $0x30] sm:$0xff]
        %v5583 = vld [vmem:[#allocation12 + $0x38] sm:$0xff]
        %v5584 = vld [vmem:[#allocation12 + $0x40] sm:$0xff]
        %v5585 = vld [vmem:[#allocation12 + $0x48] sm:$0xff]
        %v5586 = vld [vmem:[#allocation12 + $0x50] sm:$0xff]
        %v5587 = vld [vmem:[#allocation12 + $0x58] sm:$0xff]
        %v5588 = vld [vmem:[#allocation12 + $0x60] sm:$0xff]
        %v5589 = vld [vmem:[#allocation12 + $0x68] sm:$0xff]
        %v5590 = vld [vmem:[#allocation12 + $0x70] sm:$0xff]
        %v5591 = vld [vmem:[#allocation12 + $0x78] sm:$0xff]
        %v5592 = vld [vmem:[#allocation12 + $0x80] sm:$0xff]
        %v5593 = vld [vmem:[#allocation12 + $0x88] sm:$0xff]
        %v5594 = vld [vmem:[#allocation12 + $0x90] sm:$0xff]
        %v5595 = vld [vmem:[#allocation12 + $0x98] sm:$0xff]
        %v5596 = vld [vmem:[#allocation12 + $0xa0] sm:$0xff]
        %v5597 = vld [vmem:[#allocation12 + $0xa8] sm:$0xff]
        %v5598 = vld [vmem:[#allocation12 + $0xb0] sm:$0xff]
        %v5599 = vld [vmem:[#allocation12 + $0xb8] sm:$0xff]
        %v5600 = vld [vmem:[#allocation12 + $0xc0] sm:$0xff]
        %v5601 = vld [vmem:[#allocation12 + $0xc8] sm:$0xff]
        %v5602 = vld [vmem:[#allocation12 + $0xd0] sm:$0xff]
        %v5603 = vld [vmem:[#allocation12 + $0xd8] sm:$0xff]
        %v5604 = vld [vmem:[#allocation12 + $0xe0] sm:$0xff]
        %v5605 = vld [vmem:[#allocation12 + $0xe8] sm:$0xff]
        %v5606 = vld [vmem:[#allocation12 + $0xf0] sm:$0xff]
        %v5607 = vld [vmem:[#allocation12 + $0xf8] sm:$0xff]
        %v5608 = vld [vmem:[#allocation12 + $0x100] sm:$0xff]
        %v5609 = vld [vmem:[#allocation12 + $0x108] sm:$0xff]
        %v5610 = vld [vmem:[#allocation12 + $0x110] sm:$0xff]
        %v5611 = vld [vmem:[#allocation12 + $0x118] sm:$0xff]
        %v5612 = vld [vmem:[#allocation12 + $0x120] sm:$0xff]
        %v5613 = vld [vmem:[#allocation12 + $0x128] sm:$0xff]
        %v5614 = vld [vmem:[#allocation12 + $0x130] sm:$0xff]
        %v5615 = vld [vmem:[#allocation12 + $0x138] sm:$0xff]
        %v5616 = vld [vmem:[#allocation12 + $0x140] sm:$0xff]
        %v5617 = vld [vmem:[#allocation12 + $0x148] sm:$0xff]
        %v5618 = vld [vmem:[#allocation12 + $0x150] sm:$0xff]
        %v5619 = vld [vmem:[#allocation12 + $0x158] sm:$0xff]
        %v5620 = vld [vmem:[#allocation12 + $0x160] sm:$0xff]
        %v5621 = vld [vmem:[#allocation12 + $0x168] sm:$0xff]
        %v5622 = vld [vmem:[#allocation12 + $0x170] sm:$0xff]
        %v5623 = vld [vmem:[#allocation12 + $0x178] sm:$0xff]
        %v5624 = vld [vmem:[#allocation12 + $0x180] sm:$0xff]
        %v5625 = vld [vmem:[#allocation12 + $0x188] sm:$0xff]
        %v5626 = vld [vmem:[#allocation12 + $0x190] sm:$0xff]
        %v5627 = vld [vmem:[#allocation12 + $0x198] sm:$0xff]
        %v5628 = vld [vmem:[#allocation12 + $0x1a0] sm:$0xff]
        %v5629 = vld [vmem:[#allocation12 + $0x1a8] sm:$0xff]
        %v5630 = vld [vmem:[#allocation12 + $0x1b0] sm:$0xff]
        %v5631 = vld [vmem:[#allocation12 + $0x1b8] sm:$0xff]
        %v5632 = vld [vmem:[#allocation12 + $0x1c0] sm:$0xff]
        %v5633 = vld [vmem:[#allocation12 + $0x1c8] sm:$0xff]
        %v5634 = vld [vmem:[#allocation12 + $0x1d0] sm:$0xff]
        %v5635 = vld [vmem:[#allocation12 + $0x1d8] sm:$0xff]
        %v5636 = vld [vmem:[#allocation12 + $0x1e0] sm:$0xff]
        %v5637 = vld [vmem:[#allocation12 + $0x1e8] sm:$0xff]
        %v5638 = vld [vmem:[#allocation12 + $0x1f0] sm:$0xff]
        %v5639 = vld [vmem:[#allocation12 + $0x1f8] sm:$0xff]
        %v5640 = vld [vmem:[%s37] sm:$0xff]
        %v5642 = vlaneseq
        %v5643 = vshrl.u32 %v5642, 7
        %v5644 = vsub.s32 0, %v5643
        %v5645 = vrot.slane %v5640, %v5644
        %v5646 = vlaneseq
        %v5647 = vshrl.u32 %v5646, 7
        %v5648 = vsub.s32 1, %v5647
        %v5649 = vrot.slane %v5640, %v5648
        %v5650 = vlaneseq
        %v5651 = vshrl.u32 %v5650, 7
        %v5652 = vsub.s32 2, %v5651
        %v5653 = vrot.slane %v5640, %v5652
        %v5654 = vlaneseq
        %v5655 = vshrl.u32 %v5654, 7
        %v5656 = vsub.s32 3, %v5655
        %v5657 = vrot.slane %v5640, %v5656
        %v5658 = vlaneseq
        %v5659 = vshrl.u32 %v5658, 7
        %v5660 = vsub.s32 4, %v5659
        %v5661 = vrot.slane %v5640, %v5660
        %v5662 = vlaneseq
        %v5663 = vshrl.u32 %v5662, 7
        %v5664 = vsub.s32 5, %v5663
        %v5665 = vrot.slane %v5640, %v5664
        %v5666 = vlaneseq
        %v5667 = vshrl.u32 %v5666, 7
        %v5668 = vsub.s32 6, %v5667
        %v5669 = vrot.slane %v5640, %v5668
        %v5670 = vlaneseq
        %v5671 = vshrl.u32 %v5670, 7
        %v5672 = vsub.s32 7, %v5671
        %v5673 = vrot.slane %v5640, %v5672
        %v5746 = vunpack.c.l.b16 %v5576
        %v5747 = vunpack.c.h.b16 %v5576
        %v5748 = vunpack.c.l.b16 %v5577
        %v5749 = vunpack.c.h.b16 %v5577
        %v5750 = vunpack.c.l.b16 %v5578
        %v5751 = vunpack.c.h.b16 %v5578
        %v5752 = vunpack.c.l.b16 %v5579
        %v5753 = vunpack.c.h.b16 %v5579
        %v5754 = vunpack.c.l.b16 %v5580
        %v5755 = vunpack.c.h.b16 %v5580
        %v5756 = vunpack.c.l.b16 %v5581
        %v5757 = vunpack.c.h.b16 %v5581
        %v5758 = vunpack.c.l.b16 %v5582
        %v5759 = vunpack.c.h.b16 %v5582
        %v5760 = vunpack.c.l.b16 %v5583
        %v5761 = vunpack.c.h.b16 %v5583
        %v5762 = vunpack.c.l.b16 %v5584
        %v5763 = vunpack.c.h.b16 %v5584
        %v5764 = vunpack.c.l.b16 %v5585
        %v5765 = vunpack.c.h.b16 %v5585
        %v5766 = vunpack.c.l.b16 %v5586
        %v5767 = vunpack.c.h.b16 %v5586
        %v5768 = vunpack.c.l.b16 %v5587
        %v5769 = vunpack.c.h.b16 %v5587
        %v5770 = vunpack.c.l.b16 %v5588
        %v5771 = vunpack.c.h.b16 %v5588
        %v5772 = vunpack.c.l.b16 %v5589
        %v5773 = vunpack.c.h.b16 %v5589
        %v5774 = vunpack.c.l.b16 %v5590
        %v5775 = vunpack.c.h.b16 %v5590
        %v5776 = vunpack.c.l.b16 %v5591
        %v5777 = vunpack.c.h.b16 %v5591
        %v5778 = vunpack.c.l.b16 %v5592
        %v5779 = vunpack.c.h.b16 %v5592
        %v5780 = vunpack.c.l.b16 %v5593
        %v5781 = vunpack.c.h.b16 %v5593
        %v5782 = vunpack.c.l.b16 %v5594
        %v5783 = vunpack.c.h.b16 %v5594
        %v5784 = vunpack.c.l.b16 %v5595
        %v5785 = vunpack.c.h.b16 %v5595
        %v5786 = vunpack.c.l.b16 %v5596
        %v5787 = vunpack.c.h.b16 %v5596
        %v5788 = vunpack.c.l.b16 %v5597
        %v5789 = vunpack.c.h.b16 %v5597
        %v5790 = vunpack.c.l.b16 %v5598
        %v5791 = vunpack.c.h.b16 %v5598
        %v5792 = vunpack.c.l.b16 %v5599
        %v5793 = vunpack.c.h.b16 %v5599
        %v5794 = vunpack.c.l.b16 %v5600
        %v5795 = vunpack.c.h.b16 %v5600
        %v5796 = vunpack.c.l.b16 %v5601
        %v5797 = vunpack.c.h.b16 %v5601
        %v5798 = vunpack.c.l.b16 %v5602
        %v5799 = vunpack.c.h.b16 %v5602
        %v5800 = vunpack.c.l.b16 %v5603
        %v5801 = vunpack.c.h.b16 %v5603
        %v5802 = vunpack.c.l.b16 %v5604
        %v5803 = vunpack.c.h.b16 %v5604
        %v5804 = vunpack.c.l.b16 %v5605
        %v5805 = vunpack.c.h.b16 %v5605
        %v5806 = vunpack.c.l.b16 %v5606
        %v5807 = vunpack.c.h.b16 %v5606
        %v5808 = vunpack.c.l.b16 %v5607
        %v5809 = vunpack.c.h.b16 %v5607
        %v5810 = vunpack.c.l.b16 %v5608
        %v5811 = vunpack.c.h.b16 %v5608
        %v5812 = vunpack.c.l.b16 %v5609
        %v5813 = vunpack.c.h.b16 %v5609
        %v5814 = vunpack.c.l.b16 %v5610
        %v5815 = vunpack.c.h.b16 %v5610
        %v5816 = vunpack.c.l.b16 %v5611
        %v5817 = vunpack.c.h.b16 %v5611
        %v5818 = vunpack.c.l.b16 %v5612
        %v5819 = vunpack.c.h.b16 %v5612
        %v5820 = vunpack.c.l.b16 %v5613
        %v5821 = vunpack.c.h.b16 %v5613
        %v5822 = vunpack.c.l.b16 %v5614
        %v5823 = vunpack.c.h.b16 %v5614
        %v5824 = vunpack.c.l.b16 %v5615
        %v5825 = vunpack.c.h.b16 %v5615
        %v5826 = vunpack.c.l.b16 %v5616
        %v5827 = vunpack.c.h.b16 %v5616
        %v5828 = vunpack.c.l.b16 %v5617
        %v5829 = vunpack.c.h.b16 %v5617
        %v5830 = vunpack.c.l.b16 %v5618
        %v5831 = vunpack.c.h.b16 %v5618
        %v5832 = vunpack.c.l.b16 %v5619
        %v5833 = vunpack.c.h.b16 %v5619
        %v5834 = vunpack.c.l.b16 %v5620
        %v5835 = vunpack.c.h.b16 %v5620
        %v5836 = vunpack.c.l.b16 %v5621
        %v5837 = vunpack.c.h.b16 %v5621
        %v5838 = vunpack.c.l.b16 %v5622
        %v5839 = vunpack.c.h.b16 %v5622
        %v5840 = vunpack.c.l.b16 %v5623
        %v5841 = vunpack.c.h.b16 %v5623
        %v5842 = vunpack.c.l.b16 %v5624
        %v5843 = vunpack.c.h.b16 %v5624
        %v5844 = vunpack.c.l.b16 %v5625
        %v5845 = vunpack.c.h.b16 %v5625
        %v5846 = vunpack.c.l.b16 %v5626
        %v5847 = vunpack.c.h.b16 %v5626
        %v5848 = vunpack.c.l.b16 %v5627
        %v5849 = vunpack.c.h.b16 %v5627
        %v5850 = vunpack.c.l.b16 %v5628
        %v5851 = vunpack.c.h.b16 %v5628
        %v5852 = vunpack.c.l.b16 %v5629
        %v5853 = vunpack.c.h.b16 %v5629
        %v5854 = vunpack.c.l.b16 %v5630
        %v5855 = vunpack.c.h.b16 %v5630
        %v5856 = vunpack.c.l.b16 %v5631
        %v5857 = vunpack.c.h.b16 %v5631
        %v5858 = vunpack.c.l.b16 %v5632
        %v5859 = vunpack.c.h.b16 %v5632
        %v5860 = vunpack.c.l.b16 %v5633
        %v5861 = vunpack.c.h.b16 %v5633
        %v5862 = vunpack.c.l.b16 %v5634
        %v5863 = vunpack.c.h.b16 %v5634
        %v5864 = vunpack.c.l.b16 %v5635
        %v5865 = vunpack.c.h.b16 %v5635
        %v5866 = vunpack.c.l.b16 %v5636
        %v5867 = vunpack.c.h.b16 %v5636
        %v5868 = vunpack.c.l.b16 %v5637
        %v5869 = vunpack.c.h.b16 %v5637
        %v5870 = vunpack.c.l.b16 %v5638
        %v5871 = vunpack.c.h.b16 %v5638
        %v5872 = vunpack.c.l.b16 %v5639
        %v5873 = vunpack.c.h.b16 %v5639
        %v5874 = vpack.c.b16 %v5754, %v5746
        %v5875 = vpack.c.b16 %v5755, %v5747
        %v5876 = vpack.c.b16 %v5756, %v5748
        %v5877 = vpack.c.b16 %v5757, %v5749
        %v5878 = vpack.c.b16 %v5758, %v5750
        %v5879 = vpack.c.b16 %v5759, %v5751
        %v5880 = vpack.c.b16 %v5760, %v5752
        %v5881 = vpack.c.b16 %v5761, %v5753
        %v5882 = vpack.c.b16 %v5770, %v5762
        %v5883 = vpack.c.b16 %v5771, %v5763
        %v5884 = vpack.c.b16 %v5772, %v5764
        %v5885 = vpack.c.b16 %v5773, %v5765
        %v5886 = vpack.c.b16 %v5774, %v5766
        %v5887 = vpack.c.b16 %v5775, %v5767
        %v5888 = vpack.c.b16 %v5776, %v5768
        %v5889 = vpack.c.b16 %v5777, %v5769
        %v5890 = vpack.c.b16 %v5786, %v5778
        %v5891 = vpack.c.b16 %v5787, %v5779
        %v5892 = vpack.c.b16 %v5788, %v5780
        %v5893 = vpack.c.b16 %v5789, %v5781
        %v5894 = vpack.c.b16 %v5790, %v5782
        %v5895 = vpack.c.b16 %v5791, %v5783
        %v5896 = vpack.c.b16 %v5792, %v5784
        %v5897 = vpack.c.b16 %v5793, %v5785
        %v5898 = vpack.c.b16 %v5802, %v5794
        %v5899 = vpack.c.b16 %v5803, %v5795
        %v5900 = vpack.c.b16 %v5804, %v5796
        %v5901 = vpack.c.b16 %v5805, %v5797
        %v5902 = vpack.c.b16 %v5806, %v5798
        %v5903 = vpack.c.b16 %v5807, %v5799
        %v5904 = vpack.c.b16 %v5808, %v5800
        %v5905 = vpack.c.b16 %v5809, %v5801
        %v5906 = vpack.c.b16 %v5818, %v5810
        %v5907 = vpack.c.b16 %v5819, %v5811
        %v5908 = vpack.c.b16 %v5820, %v5812
        %v5909 = vpack.c.b16 %v5821, %v5813
        %v5910 = vpack.c.b16 %v5822, %v5814
        %v5911 = vpack.c.b16 %v5823, %v5815
        %v5912 = vpack.c.b16 %v5824, %v5816
        %v5913 = vpack.c.b16 %v5825, %v5817
        %v5914 = vpack.c.b16 %v5834, %v5826
        %v5915 = vpack.c.b16 %v5835, %v5827
        %v5916 = vpack.c.b16 %v5836, %v5828
        %v5917 = vpack.c.b16 %v5837, %v5829
        %v5918 = vpack.c.b16 %v5838, %v5830
        %v5919 = vpack.c.b16 %v5839, %v5831
        %v5920 = vpack.c.b16 %v5840, %v5832
        %v5921 = vpack.c.b16 %v5841, %v5833
        %v5922 = vpack.c.b16 %v5850, %v5842
        %v5923 = vpack.c.b16 %v5851, %v5843
        %v5924 = vpack.c.b16 %v5852, %v5844
        %v5925 = vpack.c.b16 %v5853, %v5845
        %v5926 = vpack.c.b16 %v5854, %v5846
        %v5927 = vpack.c.b16 %v5855, %v5847
        %v5928 = vpack.c.b16 %v5856, %v5848
        %v5929 = vpack.c.b16 %v5857, %v5849
        %v5930 = vpack.c.b16 %v5866, %v5858
        %v5931 = vpack.c.b16 %v5867, %v5859
        %v5932 = vpack.c.b16 %v5868, %v5860
        %v5933 = vpack.c.b16 %v5869, %v5861
        %v5934 = vpack.c.b16 %v5870, %v5862
        %v5935 = vpack.c.b16 %v5871, %v5863
        %v5936 = vpack.c.b16 %v5872, %v5864
        %v5937 = vpack.c.b16 %v5873, %v5865
        %6002 = vmatprep.subr.bf16.mxu0 %v5931
        %6003 = vmatpush1.bf16.msra.mxu0 %v5930
        %6004 = vmatprep.subr.bf16.mxu0 %v5923
        %6005 = vmatpush1.bf16.msra.mxu0 %v5922
        %6006 = vmatprep.subr.bf16.mxu0 %v5915
        %6007 = vmatpush1.bf16.msra.mxu0 %v5914
        %6008 = vmatprep.subr.bf16.mxu0 %v5907
        %6009 = vmatpush1.bf16.msra.mxu0 %v5906
        %6010 = vmatprep.subr.bf16.mxu0 %v5899
        %6011 = vmatpush1.bf16.msra.mxu0 %v5898
        %6012 = vmatprep.subr.bf16.mxu0 %v5891
        %6013 = vmatpush1.bf16.msra.mxu0 %v5890
        %6014 = vmatprep.subr.bf16.mxu0 %v5883
        %6015 = vmatpush1.bf16.msra.mxu0 %v5882
        %6016 = vmatprep.subr.bf16.mxu0 %v5875
        %6017 = vmatpush1.bf16.msra.mxu0 %v5874
        %6018 = vmatprep.subr.bf16.mxu0 0
        %6019 = vmatpush2.bf16.msra.mxu0 0
        %6020 = vmatprep.subr.bf16.mxu0 0
        %6021 = vmatpush2.bf16.msra.mxu0 0
        %6022 = vmatprep.subr.bf16.mxu0 0
        %6023 = vmatpush2.bf16.msra.mxu0 0
        %6024 = vmatprep.subr.bf16.mxu0 0
        %6025 = vmatpush2.bf16.msra.mxu0 0
        %6026 = vmatprep.subr.bf16.mxu0 0
        %6027 = vmatpush2.bf16.msra.mxu0 0
        %6028 = vmatprep.subr.bf16.mxu0 0
        %6029 = vmatpush2.bf16.msra.mxu0 0
        %6030 = vmatprep.subr.bf16.mxu0 0
        %6031 = vmatpush2.bf16.msra.mxu0 0
        %6032 = vmatprep.subr.bf16.mxu0 0
        %6033 = vmatpush2.bf16.msra.mxu0 0
        %6034 = vmatprep.mubr.bf16.mxu0 0
        %6035 = vmatmul.mubr.bf16.gmra.mxu0 %v5568
        %v6036 = vpop.f32.mrf.mxu0
        %v6037 = vadd.f32 %v5645, %v6036
        %v6038 = vpop.f32.mrf.mxu0
        %v6039 = vadd.f32 %v5649, %v6038
        %v6040 = vpop.f32.mrf.mxu0
        %v6041 = vadd.f32 %v5645, %v6040
        %v6042 = vpop.f32.mrf.mxu0
        %v6043 = vadd.f32 %v5649, %v6042
        %6044 = vmatprep.mubr.bf16.mxu0 0
        %6045 = vmatmul.mubr.bf16.gmra.mxu0 %v5569
        %v6046 = vpop.f32.mrf.mxu0
        %v6047 = vadd.f32 %v5645, %v6046
        %v6048 = vpop.f32.mrf.mxu0
        %v6049 = vadd.f32 %v5649, %v6048
        %v6050 = vpop.f32.mrf.mxu0
        %v6051 = vadd.f32 %v5645, %v6050
        %v6052 = vpop.f32.mrf.mxu0
        %v6053 = vadd.f32 %v5649, %v6052
        %6054 = vmatprep.mubr.bf16.mxu0 0
        %6055 = vmatmul.mubr.bf16.gmra.mxu0 %v5570
        %v6056 = vpop.f32.mrf.mxu0
        %v6057 = vadd.f32 %v5645, %v6056
        %v6058 = vpop.f32.mrf.mxu0
        %v6059 = vadd.f32 %v5649, %v6058
        %v6060 = vpop.f32.mrf.mxu0
        %v6061 = vadd.f32 %v5645, %v6060
        %v6062 = vpop.f32.mrf.mxu0
        %v6063 = vadd.f32 %v5649, %v6062
        %6064 = vmatprep.mubr.bf16.mxu0 0
        %6065 = vmatmul.mubr.bf16.gmra.mxu0 %v5571
        %v6066 = vpop.f32.mrf.mxu0
        %v6067 = vadd.f32 %v5645, %v6066
        %v6068 = vpop.f32.mrf.mxu0
        %v6069 = vadd.f32 %v5649, %v6068
        %v6070 = vpop.f32.mrf.mxu0
        %v6071 = vadd.f32 %v5645, %v6070
        %v6072 = vpop.f32.mrf.mxu0
        %v6073 = vadd.f32 %v5649, %v6072
        %6074 = vmatprep.mubr.bf16.mxu0 0
        %6075 = vmatmul.mubr.bf16.gmra.mxu0 %v5572
        %v6076 = vpop.f32.mrf.mxu0
        %v6077 = vadd.f32 %v5645, %v6076
        %v6078 = vpop.f32.mrf.mxu0
        %v6079 = vadd.f32 %v5649, %v6078
        %v6080 = vpop.f32.mrf.mxu0
        %v6081 = vadd.f32 %v5645, %v6080
        %v6082 = vpop.f32.mrf.mxu0
        %v6083 = vadd.f32 %v5649, %v6082
        %6084 = vmatprep.mubr.bf16.mxu0 0
        %6085 = vmatmul.mubr.bf16.gmra.mxu0 %v5573
        %v6086 = vpop.f32.mrf.mxu0
        %v6087 = vadd.f32 %v5645, %v6086
        %v6088 = vpop.f32.mrf.mxu0
        %v6089 = vadd.f32 %v5649, %v6088
        %v6090 = vpop.f32.mrf.mxu0
        %v6091 = vadd.f32 %v5645, %v6090
        %v6092 = vpop.f32.mrf.mxu0
        %v6093 = vadd.f32 %v5649, %v6092
        %6094 = vmatprep.mubr.bf16.mxu0 0
        %6095 = vmatmul.mubr.bf16.gmra.mxu0 %v5574
        %v6096 = vpop.f32.mrf.mxu0
        %v6097 = vadd.f32 %v5645, %v6096
        %v6098 = vpop.f32.mrf.mxu0
        %v6099 = vadd.f32 %v5649, %v6098
        %v6100 = vpop.f32.mrf.mxu0
        %v6101 = vadd.f32 %v5645, %v6100
        %v6102 = vpop.f32.mrf.mxu0
        %v6103 = vadd.f32 %v5649, %v6102
        %6104 = vmatprep.mubr.bf16.mxu0 0
        %6105 = vmatmul.mubr.bf16.gmra.mxu0 %v5575
        %v6106 = vpop.f32.mrf.mxu0
        %v6107 = vadd.f32 %v5645, %v6106
        %v6108 = vpop.f32.mrf.mxu0
        %v6109 = vadd.f32 %v5649, %v6108
        %v6110 = vpop.f32.mrf.mxu0
        %v6111 = vadd.f32 %v5645, %v6110
        %v6112 = vpop.f32.mrf.mxu0
        %v6113 = vadd.f32 %v5649, %v6112
        %6114 = vdwg.mxu0
        %6115 = vmatprep.subr.bf16.mxu0 %v5933
        %6116 = vmatpush1.bf16.msra.mxu0 %v5932
        %6117 = vmatprep.subr.bf16.mxu0 %v5925
        %6118 = vmatpush1.bf16.msra.mxu0 %v5924
        %6119 = vmatprep.subr.bf16.mxu0 %v5917
        %6120 = vmatpush1.bf16.msra.mxu0 %v5916
        %6121 = vmatprep.subr.bf16.mxu0 %v5909
        %6122 = vmatpush1.bf16.msra.mxu0 %v5908
        %6123 = vmatprep.subr.bf16.mxu0 %v5901
        %6124 = vmatpush1.bf16.msra.mxu0 %v5900
        %6125 = vmatprep.subr.bf16.mxu0 %v5893
        %6126 = vmatpush1.bf16.msra.mxu0 %v5892
        %6127 = vmatprep.subr.bf16.mxu0 %v5885
        %6128 = vmatpush1.bf16.msra.mxu0 %v5884
        %6129 = vmatprep.subr.bf16.mxu0 %v5877
        %6130 = vmatpush1.bf16.msra.mxu0 %v5876
        %6131 = vmatprep.subr.bf16.mxu0 0
        %6132 = vmatpush2.bf16.msra.mxu0 0
        %6133 = vmatprep.subr.bf16.mxu0 0
        %6134 = vmatpush2.bf16.msra.mxu0 0
        %6135 = vmatprep.subr.bf16.mxu0 0
        %6136 = vmatpush2.bf16.msra.mxu0 0
        %6137 = vmatprep.subr.bf16.mxu0 0
        %6138 = vmatpush2.bf16.msra.mxu0 0
        %6139 = vmatprep.subr.bf16.mxu0 0
        %6140 = vmatpush2.bf16.msra.mxu0 0
        %6141 = vmatprep.subr.bf16.mxu0 0
        %6142 = vmatpush2.bf16.msra.mxu0 0
        %6143 = vmatprep.subr.bf16.mxu0 0
        %6144 = vmatpush2.bf16.msra.mxu0 0
        %6145 = vmatprep.subr.bf16.mxu0 0
        %6146 = vmatpush2.bf16.msra.mxu0 0
        %6147 = vmatprep.mubr.bf16.mxu0 0
        %6148 = vmatmul.mubr.bf16.gmra.mxu0 %v5568
        %v6149 = vpop.f32.mrf.mxu0
        %v6150 = vadd.f32 %v5653, %v6149
        %v6151 = vpop.f32.mrf.mxu0
        %v6152 = vadd.f32 %v5657, %v6151
        %v6153 = vpop.f32.mrf.mxu0
        %v6154 = vadd.f32 %v5653, %v6153
        %v6155 = vpop.f32.mrf.mxu0
        %v6156 = vadd.f32 %v5657, %v6155
        %6157 = vmatprep.mubr.bf16.mxu0 0
        %6158 = vmatmul.mubr.bf16.gmra.mxu0 %v5569
        %v6159 = vpop.f32.mrf.mxu0
        %v6160 = vadd.f32 %v5653, %v6159
        %v6161 = vpop.f32.mrf.mxu0
        %v6162 = vadd.f32 %v5657, %v6161
        %v6163 = vpop.f32.mrf.mxu0
        %v6164 = vadd.f32 %v5653, %v6163
        %v6165 = vpop.f32.mrf.mxu0
        %v6166 = vadd.f32 %v5657, %v6165
        %6167 = vmatprep.mubr.bf16.mxu0 0
        %6168 = vmatmul.mubr.bf16.gmra.mxu0 %v5570
        %v6169 = vpop.f32.mrf.mxu0
        %v6170 = vadd.f32 %v5653, %v6169
        %v6171 = vpop.f32.mrf.mxu0
        %v6172 = vadd.f32 %v5657, %v6171
        %v6173 = vpop.f32.mrf.mxu0
        %v6174 = vadd.f32 %v5653, %v6173
        %v6175 = vpop.f32.mrf.mxu0
        %v6176 = vadd.f32 %v5657, %v6175
        %6177 = vmatprep.mubr.bf16.mxu0 0
        %6178 = vmatmul.mubr.bf16.gmra.mxu0 %v5571
        %v6179 = vpop.f32.mrf.mxu0
        %v6180 = vadd.f32 %v5653, %v6179
        %v6181 = vpop.f32.mrf.mxu0
        %v6182 = vadd.f32 %v5657, %v6181
        %v6183 = vpop.f32.mrf.mxu0
        %v6184 = vadd.f32 %v5653, %v6183
        %v6185 = vpop.f32.mrf.mxu0
        %v6186 = vadd.f32 %v5657, %v6185
        %6187 = vmatprep.mubr.bf16.mxu0 0
        %6188 = vmatmul.mubr.bf16.gmra.mxu0 %v5572
        %v6189 = vpop.f32.mrf.mxu0
        %v6190 = vadd.f32 %v5653, %v6189
        %v6191 = vpop.f32.mrf.mxu0
        %v6192 = vadd.f32 %v5657, %v6191
        %v6193 = vpop.f32.mrf.mxu0
        %v6194 = vadd.f32 %v5653, %v6193
        %v6195 = vpop.f32.mrf.mxu0
        %v6196 = vadd.f32 %v5657, %v6195
        %6197 = vmatprep.mubr.bf16.mxu0 0
        %6198 = vmatmul.mubr.bf16.gmra.mxu0 %v5573
        %v6199 = vpop.f32.mrf.mxu0
        %v6200 = vadd.f32 %v5653, %v6199
        %v6201 = vpop.f32.mrf.mxu0
        %v6202 = vadd.f32 %v5657, %v6201
        %v6203 = vpop.f32.mrf.mxu0
        %v6204 = vadd.f32 %v5653, %v6203
        %v6205 = vpop.f32.mrf.mxu0
        %v6206 = vadd.f32 %v5657, %v6205
        %6207 = vmatprep.mubr.bf16.mxu0 0
        %6208 = vmatmul.mubr.bf16.gmra.mxu0 %v5574
        %v6209 = vpop.f32.mrf.mxu0
        %v6210 = vadd.f32 %v5653, %v6209
        %v6211 = vpop.f32.mrf.mxu0
        %v6212 = vadd.f32 %v5657, %v6211
        %v6213 = vpop.f32.mrf.mxu0
        %v6214 = vadd.f32 %v5653, %v6213
        %v6215 = vpop.f32.mrf.mxu0
        %v6216 = vadd.f32 %v5657, %v6215
        %6217 = vmatprep.mubr.bf16.mxu0 0
        %6218 = vmatmul.mubr.bf16.gmra.mxu0 %v5575
        %v6219 = vpop.f32.mrf.mxu0
        %v6220 = vadd.f32 %v5653, %v6219
        %v6221 = vpop.f32.mrf.mxu0
        %v6222 = vadd.f32 %v5657, %v6221
        %v6223 = vpop.f32.mrf.mxu0
        %v6224 = vadd.f32 %v5653, %v6223
        %v6225 = vpop.f32.mrf.mxu0
        %v6226 = vadd.f32 %v5657, %v6225
        %6227 = vdwg.mxu0
        %6228 = vmatprep.subr.bf16.mxu0 %v5935
        %6229 = vmatpush1.bf16.msra.mxu0 %v5934
        %6230 = vmatprep.subr.bf16.mxu0 %v5927
        %6231 = vmatpush1.bf16.msra.mxu0 %v5926
        %6232 = vmatprep.subr.bf16.mxu0 %v5919
        %6233 = vmatpush1.bf16.msra.mxu0 %v5918
        %6234 = vmatprep.subr.bf16.mxu0 %v5911
        %6235 = vmatpush1.bf16.msra.mxu0 %v5910
        %6236 = vmatprep.subr.bf16.mxu0 %v5903
        %6237 = vmatpush1.bf16.msra.mxu0 %v5902
        %6238 = vmatprep.subr.bf16.mxu0 %v5895
        %6239 = vmatpush1.bf16.msra.mxu0 %v5894
        %6240 = vmatprep.subr.bf16.mxu0 %v5887
        %6241 = vmatpush1.bf16.msra.mxu0 %v5886
        %6242 = vmatprep.subr.bf16.mxu0 %v5879
        %6243 = vmatpush1.bf16.msra.mxu0 %v5878
        %6244 = vmatprep.subr.bf16.mxu0 0
        %6245 = vmatpush2.bf16.msra.mxu0 0
        %6246 = vmatprep.subr.bf16.mxu0 0
        %6247 = vmatpush2.bf16.msra.mxu0 0
        %6248 = vmatprep.subr.bf16.mxu0 0
        %6249 = vmatpush2.bf16.msra.mxu0 0
        %6250 = vmatprep.subr.bf16.mxu0 0
        %6251 = vmatpush2.bf16.msra.mxu0 0
        %6252 = vmatprep.subr.bf16.mxu0 0
        %6253 = vmatpush2.bf16.msra.mxu0 0
        %6254 = vmatprep.subr.bf16.mxu0 0
        %6255 = vmatpush2.bf16.msra.mxu0 0
        %6256 = vmatprep.subr.bf16.mxu0 0
        %6257 = vmatpush2.bf16.msra.mxu0 0
        %6258 = vmatprep.subr.bf16.mxu0 0
        %6259 = vmatpush2.bf16.msra.mxu0 0
        %6260 = vmatprep.mubr.bf16.mxu0 0
        %6261 = vmatmul.mubr.bf16.gmra.mxu0 %v5568
        %v6262 = vpop.f32.mrf.mxu0
        %v6263 = vadd.f32 %v5661, %v6262
        %v6264 = vpop.f32.mrf.mxu0
        %v6265 = vadd.f32 %v5665, %v6264
        %v6266 = vpop.f32.mrf.mxu0
        %v6267 = vadd.f32 %v5661, %v6266
        %v6268 = vpop.f32.mrf.mxu0
        %v6269 = vadd.f32 %v5665, %v6268
        %6270 = vmatprep.mubr.bf16.mxu0 0
        %6271 = vmatmul.mubr.bf16.gmra.mxu0 %v5569
        %v6272 = vpop.f32.mrf.mxu0
        %v6273 = vadd.f32 %v5661, %v6272
        %v6274 = vpop.f32.mrf.mxu0
        %v6275 = vadd.f32 %v5665, %v6274
        %v6276 = vpop.f32.mrf.mxu0
        %v6277 = vadd.f32 %v5661, %v6276
        %v6278 = vpop.f32.mrf.mxu0
        %v6279 = vadd.f32 %v5665, %v6278
        %6280 = vmatprep.mubr.bf16.mxu0 0
        %6281 = vmatmul.mubr.bf16.gmra.mxu0 %v5570
        %v6282 = vpop.f32.mrf.mxu0
        %v6283 = vadd.f32 %v5661, %v6282
        %v6284 = vpop.f32.mrf.mxu0
        %v6285 = vadd.f32 %v5665, %v6284
        %v6286 = vpop.f32.mrf.mxu0
        %v6287 = vadd.f32 %v5661, %v6286
        %v6288 = vpop.f32.mrf.mxu0
        %v6289 = vadd.f32 %v5665, %v6288
        %6290 = vmatprep.mubr.bf16.mxu0 0
        %6291 = vmatmul.mubr.bf16.gmra.mxu0 %v5571
        %v6292 = vpop.f32.mrf.mxu0
        %v6293 = vadd.f32 %v5661, %v6292
        %v6294 = vpop.f32.mrf.mxu0
        %v6295 = vadd.f32 %v5665, %v6294
        %v6296 = vpop.f32.mrf.mxu0
        %v6297 = vadd.f32 %v5661, %v6296
        %v6298 = vpop.f32.mrf.mxu0
        %v6299 = vadd.f32 %v5665, %v6298
        %6300 = vmatprep.mubr.bf16.mxu0 0
        %6301 = vmatmul.mubr.bf16.gmra.mxu0 %v5572
        %v6302 = vpop.f32.mrf.mxu0
        %v6303 = vadd.f32 %v5661, %v6302
        %v6304 = vpop.f32.mrf.mxu0
        %v6305 = vadd.f32 %v5665, %v6304
        %v6306 = vpop.f32.mrf.mxu0
        %v6307 = vadd.f32 %v5661, %v6306
        %v6308 = vpop.f32.mrf.mxu0
        %v6309 = vadd.f32 %v5665, %v6308
        %6310 = vmatprep.mubr.bf16.mxu0 0
        %6311 = vmatmul.mubr.bf16.gmra.mxu0 %v5573
        %v6312 = vpop.f32.mrf.mxu0
        %v6313 = vadd.f32 %v5661, %v6312
        %v6314 = vpop.f32.mrf.mxu0
        %v6315 = vadd.f32 %v5665, %v6314
        %v6316 = vpop.f32.mrf.mxu0
        %v6317 = vadd.f32 %v5661, %v6316
        %v6318 = vpop.f32.mrf.mxu0
        %v6319 = vadd.f32 %v5665, %v6318
        %6320 = vmatprep.mubr.bf16.mxu0 0
        %6321 = vmatmul.mubr.bf16.gmra.mxu0 %v5574
        %v6322 = vpop.f32.mrf.mxu0
        %v6323 = vadd.f32 %v5661, %v6322
        %v6324 = vpop.f32.mrf.mxu0
        %v6325 = vadd.f32 %v5665, %v6324
        %v6326 = vpop.f32.mrf.mxu0
        %v6327 = vadd.f32 %v5661, %v6326
        %v6328 = vpop.f32.mrf.mxu0
        %v6329 = vadd.f32 %v5665, %v6328
        %6330 = vmatprep.mubr.bf16.mxu0 0
        %6331 = vmatmul.mubr.bf16.gmra.mxu0 %v5575
        %v6332 = vpop.f32.mrf.mxu0
        %v6333 = vadd.f32 %v5661, %v6332
        %v6334 = vpop.f32.mrf.mxu0
        %v6335 = vadd.f32 %v5665, %v6334
        %v6336 = vpop.f32.mrf.mxu0
        %v6337 = vadd.f32 %v5661, %v6336
        %v6338 = vpop.f32.mrf.mxu0
        %v6339 = vadd.f32 %v5665, %v6338
        %6340 = vdwg.mxu0
        %6341 = vmatprep.subr.bf16.mxu0 %v5937
        %6342 = vmatpush1.bf16.msra.mxu0 %v5936
        %6343 = vmatprep.subr.bf16.mxu0 %v5929
        %6344 = vmatpush1.bf16.msra.mxu0 %v5928
        %6345 = vmatprep.subr.bf16.mxu0 %v5921
        %6346 = vmatpush1.bf16.msra.mxu0 %v5920
        %6347 = vmatprep.subr.bf16.mxu0 %v5913
        %6348 = vmatpush1.bf16.msra.mxu0 %v5912
        %6349 = vmatprep.subr.bf16.mxu0 %v5905
        %6350 = vmatpush1.bf16.msra.mxu0 %v5904
        %6351 = vmatprep.subr.bf16.mxu0 %v5897
        %6352 = vmatpush1.bf16.msra.mxu0 %v5896
        %6353 = vmatprep.subr.bf16.mxu0 %v5889
        %6354 = vmatpush1.bf16.msra.mxu0 %v5888
        %6355 = vmatprep.subr.bf16.mxu0 %v5881
        %6356 = vmatpush1.bf16.msra.mxu0 %v5880
        %6357 = vmatprep.subr.bf16.mxu0 0
        %6358 = vmatpush2.bf16.msra.mxu0 0
        %6359 = vmatprep.subr.bf16.mxu0 0
        %6360 = vmatpush2.bf16.msra.mxu0 0
        %6361 = vmatprep.subr.bf16.mxu0 0
        %6362 = vmatpush2.bf16.msra.mxu0 0
        %6363 = vmatprep.subr.bf16.mxu0 0
        %6364 = vmatpush2.bf16.msra.mxu0 0
        %6365 = vmatprep.subr.bf16.mxu0 0
        %6366 = vmatpush2.bf16.msra.mxu0 0
        %6367 = vmatprep.subr.bf16.mxu0 0
        %6368 = vmatpush2.bf16.msra.mxu0 0
        %6369 = vmatprep.subr.bf16.mxu0 0
        %6370 = vmatpush2.bf16.msra.mxu0 0
        %6371 = vmatprep.subr.bf16.mxu0 0
        %6372 = vmatpush2.bf16.msra.mxu0 0
        %6373 = vmatprep.mubr.bf16.mxu0 0
        %6374 = vmatmul.mubr.bf16.gmra.mxu0 %v5568
        %v6375 = vpop.f32.mrf.mxu0
        %v6376 = vadd.f32 %v5669, %v6375
        %v6377 = vpop.f32.mrf.mxu0
        %v6378 = vadd.f32 %v5673, %v6377
        %v6379 = vpop.f32.mrf.mxu0
        %v6380 = vadd.f32 %v5669, %v6379
        %v6381 = vpop.f32.mrf.mxu0
        %v6382 = vadd.f32 %v5673, %v6381
        %6383 = vmatprep.mubr.bf16.mxu0 0
        %6384 = vmatmul.mubr.bf16.gmra.mxu0 %v5569
        %v6385 = vpop.f32.mrf.mxu0
        %v6386 = vadd.f32 %v5669, %v6385
        %v6387 = vpop.f32.mrf.mxu0
        %v6388 = vadd.f32 %v5673, %v6387
        %v6389 = vpop.f32.mrf.mxu0
        %v6390 = vadd.f32 %v5669, %v6389
        %v6391 = vpop.f32.mrf.mxu0
        %v6392 = vadd.f32 %v5673, %v6391
        %6393 = vmatprep.mubr.bf16.mxu0 0
        %6394 = vmatmul.mubr.bf16.gmra.mxu0 %v5570
        %v6395 = vpop.f32.mrf.mxu0
        %v6396 = vadd.f32 %v5669, %v6395
        %v6397 = vpop.f32.mrf.mxu0
        %v6398 = vadd.f32 %v5673, %v6397
        %v6399 = vpop.f32.mrf.mxu0
        %v6400 = vadd.f32 %v5669, %v6399
        %v6401 = vpop.f32.mrf.mxu0
        %v6402 = vadd.f32 %v5673, %v6401
        %6403 = vmatprep.mubr.bf16.mxu0 0
        %6404 = vmatmul.mubr.bf16.gmra.mxu0 %v5571
        %v6405 = vpop.f32.mrf.mxu0
        %v6406 = vadd.f32 %v5669, %v6405
        %v6407 = vpop.f32.mrf.mxu0
        %v6408 = vadd.f32 %v5673, %v6407
        %v6409 = vpop.f32.mrf.mxu0
        %v6410 = vadd.f32 %v5669, %v6409
        %v6411 = vpop.f32.mrf.mxu0
        %v6412 = vadd.f32 %v5673, %v6411
        %6413 = vmatprep.mubr.bf16.mxu0 0
        %6414 = vmatmul.mubr.bf16.gmra.mxu0 %v5572
        %v6415 = vpop.f32.mrf.mxu0
        %v6416 = vadd.f32 %v5669, %v6415
        %v6417 = vpop.f32.mrf.mxu0
        %v6418 = vadd.f32 %v5673, %v6417
        %v6419 = vpop.f32.mrf.mxu0
        %v6420 = vadd.f32 %v5669, %v6419
        %v6421 = vpop.f32.mrf.mxu0
        %v6422 = vadd.f32 %v5673, %v6421
        %6423 = vmatprep.mubr.bf16.mxu0 0
        %6424 = vmatmul.mubr.bf16.gmra.mxu0 %v5573
        %v6425 = vpop.f32.mrf.mxu0
        %v6426 = vadd.f32 %v5669, %v6425
        %v6427 = vpop.f32.mrf.mxu0
        %v6428 = vadd.f32 %v5673, %v6427
        %v6429 = vpop.f32.mrf.mxu0
        %v6430 = vadd.f32 %v5669, %v6429
        %v6431 = vpop.f32.mrf.mxu0
        %v6432 = vadd.f32 %v5673, %v6431
        %6433 = vmatprep.mubr.bf16.mxu0 0
        %6434 = vmatmul.mubr.bf16.gmra.mxu0 %v5574
        %v6435 = vpop.f32.mrf.mxu0
        %v6436 = vadd.f32 %v5669, %v6435
        %v6437 = vpop.f32.mrf.mxu0
        %v6438 = vadd.f32 %v5673, %v6437
        %v6439 = vpop.f32.mrf.mxu0
        %v6440 = vadd.f32 %v5669, %v6439
        %v6441 = vpop.f32.mrf.mxu0
        %v6442 = vadd.f32 %v5673, %v6441
        %6443 = vmatprep.mubr.bf16.mxu0 0
        %6444 = vmatmul.mubr.bf16.gmra.mxu0 %v5575
        %v6445 = vpop.f32.mrf.mxu0
        %v6446 = vadd.f32 %v5669, %v6445
        %v6447 = vpop.f32.mrf.mxu0
        %v6448 = vadd.f32 %v5673, %v6447
        %v6449 = vpop.f32.mrf.mxu0
        %v6450 = vadd.f32 %v5669, %v6449
        %v6451 = vpop.f32.mrf.mxu0
        %v6452 = vadd.f32 %v5673, %v6451
        %6453 = vdwg.mxu0
        %v6454 = vmax.f32 %v6037, %v6041
        %v6455 = vmax.f32 %v6454, %v6047
        %v6456 = vmax.f32 %v6455, %v6051
        %v6457 = vmax.f32 %v6456, %v6057
        %v6458 = vmax.f32 %v6457, %v6061
        %v6459 = vmax.f32 %v6458, %v6067
        %v6460 = vmax.f32 %v6459, %v6071
        %v6461 = vmax.f32 %v6460, %v6077
        %v6462 = vmax.f32 %v6461, %v6081
        %v6463 = vmax.f32 %v6462, %v6087
        %v6464 = vmax.f32 %v6463, %v6091
        %v6465 = vmax.f32 %v6464, %v6097
        %v6466 = vmax.f32 %v6465, %v6101
        %v6467 = vmax.f32 %v6466, %v6107
        %v6468 = vmax.f32 %v6467, %v6111
        %v6469 = vrot.slane %v6468, 4
        %v6470 = vmax.f32 %v6468, %v6469
        %v6471 = vrot.slane %v6470, 2
        %v6472 = vmax.f32 %v6470, %v6471
        %v6473 = vrot.slane %v6472, 1
        %v6474 = vmax.f32 %v6472, %v6473
        %v6475 = vmax.f32 %v6039, %v6043
        %v6476 = vmax.f32 %v6475, %v6049
        %v6477 = vmax.f32 %v6476, %v6053
        %v6478 = vmax.f32 %v6477, %v6059
        %v6479 = vmax.f32 %v6478, %v6063
        %v6480 = vmax.f32 %v6479, %v6069
        %v6481 = vmax.f32 %v6480, %v6073
        %v6482 = vmax.f32 %v6481, %v6079
        %v6483 = vmax.f32 %v6482, %v6083
        %v6484 = vmax.f32 %v6483, %v6089
        %v6485 = vmax.f32 %v6484, %v6093
        %v6486 = vmax.f32 %v6485, %v6099
        %v6487 = vmax.f32 %v6486, %v6103
        %v6488 = vmax.f32 %v6487, %v6109
        %v6489 = vmax.f32 %v6488, %v6113
        %v6490 = vrot.slane %v6489, 4
        %v6491 = vmax.f32 %v6489, %v6490
        %v6492 = vrot.slane %v6491, 2
        %v6493 = vmax.f32 %v6491, %v6492
        %v6494 = vrot.slane %v6493, 1
        %v6495 = vmax.f32 %v6493, %v6494
        %v6496 = vmax.f32 %v6150, %v6154
        %v6497 = vmax.f32 %v6496, %v6160
        %v6498 = vmax.f32 %v6497, %v6164
        %v6499 = vmax.f32 %v6498, %v6170
        %v6500 = vmax.f32 %v6499, %v6174
        %v6501 = vmax.f32 %v6500, %v6180
        %v6502 = vmax.f32 %v6501, %v6184
        %v6503 = vmax.f32 %v6502, %v6190
        %v6504 = vmax.f32 %v6503, %v6194
        %v6505 = vmax.f32 %v6504, %v6200
        %v6506 = vmax.f32 %v6505, %v6204
        %v6507 = vmax.f32 %v6506, %v6210
        %v6508 = vmax.f32 %v6507, %v6214
        %v6509 = vmax.f32 %v6508, %v6220
        %v6510 = vmax.f32 %v6509, %v6224
        %v6511 = vrot.slane %v6510, 4
        %v6512 = vmax.f32 %v6510, %v6511
        %v6513 = vrot.slane %v6512, 2
        %v6514 = vmax.f32 %v6512, %v6513
        %v6515 = vrot.slane %v6514, 1
        %v6516 = vmax.f32 %v6514, %v6515
        %v6517 = vmax.f32 %v6152, %v6156
        %v6518 = vmax.f32 %v6517, %v6162
        %v6519 = vmax.f32 %v6518, %v6166
        %v6520 = vmax.f32 %v6519, %v6172
        %v6521 = vmax.f32 %v6520, %v6176
        %v6522 = vmax.f32 %v6521, %v6182
        %v6523 = vmax.f32 %v6522, %v6186
        %v6524 = vmax.f32 %v6523, %v6192
        %v6525 = vmax.f32 %v6524, %v6196
        %v6526 = vmax.f32 %v6525, %v6202
        %v6527 = vmax.f32 %v6526, %v6206
        %v6528 = vmax.f32 %v6527, %v6212
        %v6529 = vmax.f32 %v6528, %v6216
        %v6530 = vmax.f32 %v6529, %v6222
        %v6531 = vmax.f32 %v6530, %v6226
        %v6532 = vrot.slane %v6531, 4
        %v6533 = vmax.f32 %v6531, %v6532
        %v6534 = vrot.slane %v6533, 2
        %v6535 = vmax.f32 %v6533, %v6534
        %v6536 = vrot.slane %v6535, 1
        %v6537 = vmax.f32 %v6535, %v6536
        %v6538 = vmax.f32 %v6263, %v6267
        %v6539 = vmax.f32 %v6538, %v6273
        %v6540 = vmax.f32 %v6539, %v6277
        %v6541 = vmax.f32 %v6540, %v6283
        %v6542 = vmax.f32 %v6541, %v6287
        %v6543 = vmax.f32 %v6542, %v6293
        %v6544 = vmax.f32 %v6543, %v6297
        %v6545 = vmax.f32 %v6544, %v6303
        %v6546 = vmax.f32 %v6545, %v6307
        %v6547 = vmax.f32 %v6546, %v6313
        %v6548 = vmax.f32 %v6547, %v6317
        %v6549 = vmax.f32 %v6548, %v6323
        %v6550 = vmax.f32 %v6549, %v6327
        %v6551 = vmax.f32 %v6550, %v6333
        %v6552 = vmax.f32 %v6551, %v6337
        %v6553 = vrot.slane %v6552, 4
        %v6554 = vmax.f32 %v6552, %v6553
        %v6555 = vrot.slane %v6554, 2
        %v6556 = vmax.f32 %v6554, %v6555
        %v6557 = vrot.slane %v6556, 1
        %v6558 = vmax.f32 %v6556, %v6557
        %v6559 = vmax.f32 %v6265, %v6269
        %v6560 = vmax.f32 %v6559, %v6275
        %v6561 = vmax.f32 %v6560, %v6279
        %v6562 = vmax.f32 %v6561, %v6285
        %v6563 = vmax.f32 %v6562, %v6289
        %v6564 = vmax.f32 %v6563, %v6295
        %v6565 = vmax.f32 %v6564, %v6299
        %v6566 = vmax.f32 %v6565, %v6305
        %v6567 = vmax.f32 %v6566, %v6309
        %v6568 = vmax.f32 %v6567, %v6315
        %v6569 = vmax.f32 %v6568, %v6319
        %v6570 = vmax.f32 %v6569, %v6325
        %v6571 = vmax.f32 %v6570, %v6329
        %v6572 = vmax.f32 %v6571, %v6335
        %v6573 = vmax.f32 %v6572, %v6339
        %v6574 = vrot.slane %v6573, 4
        %v6575 = vmax.f32 %v6573, %v6574
        %v6576 = vrot.slane %v6575, 2
        %v6577 = vmax.f32 %v6575, %v6576
        %v6578 = vrot.slane %v6577, 1
        %v6579 = vmax.f32 %v6577, %v6578
        %v6580 = vmax.f32 %v6376, %v6380
        %v6581 = vmax.f32 %v6580, %v6386
        %v6582 = vmax.f32 %v6581, %v6390
        %v6583 = vmax.f32 %v6582, %v6396
        %v6584 = vmax.f32 %v6583, %v6400
        %v6585 = vmax.f32 %v6584, %v6406
        %v6586 = vmax.f32 %v6585, %v6410
        %v6587 = vmax.f32 %v6586, %v6416
        %v6588 = vmax.f32 %v6587, %v6420
        %v6589 = vmax.f32 %v6588, %v6426
        %v6590 = vmax.f32 %v6589, %v6430
        %v6591 = vmax.f32 %v6590, %v6436
        %v6592 = vmax.f32 %v6591, %v6440
        %v6593 = vmax.f32 %v6592, %v6446
        %v6594 = vmax.f32 %v6593, %v6450
        %v6595 = vrot.slane %v6594, 4
        %v6596 = vmax.f32 %v6594, %v6595
        %v6597 = vrot.slane %v6596, 2
        %v6598 = vmax.f32 %v6596, %v6597
        %v6599 = vrot.slane %v6598, 1
        %v6600 = vmax.f32 %v6598, %v6599
        %v6601 = vmax.f32 %v6378, %v6382
        %v6602 = vmax.f32 %v6601, %v6388
        %v6603 = vmax.f32 %v6602, %v6392
        %v6604 = vmax.f32 %v6603, %v6398
        %v6605 = vmax.f32 %v6604, %v6402
        %v6606 = vmax.f32 %v6605, %v6408
        %v6607 = vmax.f32 %v6606, %v6412
        %v6608 = vmax.f32 %v6607, %v6418
        %v6609 = vmax.f32 %v6608, %v6422
        %v6610 = vmax.f32 %v6609, %v6428
        %v6611 = vmax.f32 %v6610, %v6432
        %v6612 = vmax.f32 %v6611, %v6438
        %v6613 = vmax.f32 %v6612, %v6442
        %v6614 = vmax.f32 %v6613, %v6448
        %v6615 = vmax.f32 %v6614, %v6452
        %v6616 = vrot.slane %v6615, 4
        %v6617 = vmax.f32 %v6615, %v6616
        %v6618 = vrot.slane %v6617, 2
        %v6619 = vmax.f32 %v6617, %v6618
        %v6620 = vrot.slane %v6619, 1
        %v6621 = vmax.f32 %v6619, %v6620
        %v6622 = vpack.c.bf16 %v6474, %v6474
        %v6623 = vpack.c.bf16 %v6495, %v6495
        %v6624 = vpack.c.bf16 %v6516, %v6516
        %v6625 = vpack.c.bf16 %v6537, %v6537
        %v6626 = vpack.c.bf16 %v6558, %v6558
        %v6627 = vpack.c.bf16 %v6579, %v6579
        %v6628 = vpack.c.bf16 %v6600, %v6600
        %v6629 = vpack.c.bf16 %v6621, %v6621
        %v6630 = vld [vmem:[#allocation13] sm:$0xff]
        %v6631 = vld [vmem:[#allocation13 + $0x8] sm:$0xff]
        %v6632 = vld [vmem:[#allocation13 + $0x10] sm:$0xff]
        %v6633 = vld [vmem:[#allocation13 + $0x18] sm:$0xff]
        %v6634 = vld [vmem:[#allocation13 + $0x20] sm:$0xff]
        %v6635 = vld [vmem:[#allocation13 + $0x28] sm:$0xff]
        %v6636 = vld [vmem:[#allocation13 + $0x30] sm:$0xff]
        %v6637 = vld [vmem:[#allocation13 + $0x38] sm:$0xff]
        %v6638 = vld [vmem:[#allocation13 + $0x40] sm:$0xff]
        %v6639 = vld [vmem:[#allocation13 + $0x48] sm:$0xff]
        %v6640 = vld [vmem:[#allocation13 + $0x50] sm:$0xff]
        %v6641 = vld [vmem:[#allocation13 + $0x58] sm:$0xff]
        %v6642 = vld [vmem:[#allocation13 + $0x60] sm:$0xff]
        %v6643 = vld [vmem:[#allocation13 + $0x68] sm:$0xff]
        %v6644 = vld [vmem:[#allocation13 + $0x70] sm:$0xff]
        %v6645 = vld [vmem:[#allocation13 + $0x78] sm:$0xff]
        %v6646 = vld [vmem:[#allocation13 + $0x80] sm:$0xff]
        %v6647 = vld [vmem:[#allocation13 + $0x88] sm:$0xff]
        %v6648 = vld [vmem:[#allocation13 + $0x90] sm:$0xff]
        %v6649 = vld [vmem:[#allocation13 + $0x98] sm:$0xff]
        %v6650 = vld [vmem:[#allocation13 + $0xa0] sm:$0xff]
        %v6651 = vld [vmem:[#allocation13 + $0xa8] sm:$0xff]
        %v6652 = vld [vmem:[#allocation13 + $0xb0] sm:$0xff]
        %v6653 = vld [vmem:[#allocation13 + $0xb8] sm:$0xff]
        %v6654 = vld [vmem:[#allocation13 + $0xc0] sm:$0xff]
        %v6655 = vld [vmem:[#allocation13 + $0xc8] sm:$0xff]
        %v6656 = vld [vmem:[#allocation13 + $0xd0] sm:$0xff]
        %v6657 = vld [vmem:[#allocation13 + $0xd8] sm:$0xff]
        %v6658 = vld [vmem:[#allocation13 + $0xe0] sm:$0xff]
        %v6659 = vld [vmem:[#allocation13 + $0xe8] sm:$0xff]
        %v6660 = vld [vmem:[#allocation13 + $0xf0] sm:$0xff]
        %v6661 = vld [vmem:[#allocation13 + $0xf8] sm:$0xff]
        %v6662 = vld [vmem:[#allocation13 + $0x100] sm:$0xff]
        %v6663 = vld [vmem:[#allocation13 + $0x108] sm:$0xff]
        %v6664 = vld [vmem:[#allocation13 + $0x110] sm:$0xff]
        %v6665 = vld [vmem:[#allocation13 + $0x118] sm:$0xff]
        %v6666 = vld [vmem:[#allocation13 + $0x120] sm:$0xff]
        %v6667 = vld [vmem:[#allocation13 + $0x128] sm:$0xff]
        %v6668 = vld [vmem:[#allocation13 + $0x130] sm:$0xff]
        %v6669 = vld [vmem:[#allocation13 + $0x138] sm:$0xff]
        %v6670 = vld [vmem:[#allocation13 + $0x140] sm:$0xff]
        %v6671 = vld [vmem:[#allocation13 + $0x148] sm:$0xff]
        %v6672 = vld [vmem:[#allocation13 + $0x150] sm:$0xff]
        %v6673 = vld [vmem:[#allocation13 + $0x158] sm:$0xff]
        %v6674 = vld [vmem:[#allocation13 + $0x160] sm:$0xff]
        %v6675 = vld [vmem:[#allocation13 + $0x168] sm:$0xff]
        %v6676 = vld [vmem:[#allocation13 + $0x170] sm:$0xff]
        %v6677 = vld [vmem:[#allocation13 + $0x178] sm:$0xff]
        %v6678 = vld [vmem:[#allocation13 + $0x180] sm:$0xff]
        %v6679 = vld [vmem:[#allocation13 + $0x188] sm:$0xff]
        %v6680 = vld [vmem:[#allocation13 + $0x190] sm:$0xff]
        %v6681 = vld [vmem:[#allocation13 + $0x198] sm:$0xff]
        %v6682 = vld [vmem:[#allocation13 + $0x1a0] sm:$0xff]
        %v6683 = vld [vmem:[#allocation13 + $0x1a8] sm:$0xff]
        %v6684 = vld [vmem:[#allocation13 + $0x1b0] sm:$0xff]
        %v6685 = vld [vmem:[#allocation13 + $0x1b8] sm:$0xff]
        %v6686 = vld [vmem:[#allocation13 + $0x1c0] sm:$0xff]
        %v6687 = vld [vmem:[#allocation13 + $0x1c8] sm:$0xff]
        %v6688 = vld [vmem:[#allocation13 + $0x1d0] sm:$0xff]
        %v6689 = vld [vmem:[#allocation13 + $0x1d8] sm:$0xff]
        %v6690 = vld [vmem:[#allocation13 + $0x1e0] sm:$0xff]
        %v6691 = vld [vmem:[#allocation13 + $0x1e8] sm:$0xff]
        %v6692 = vld [vmem:[#allocation13 + $0x1f0] sm:$0xff]
        %v6693 = vld [vmem:[#allocation13 + $0x1f8] sm:$0xff]
        %v6694 = vld [vmem:[#allocation13 + $0x200] sm:$0xff]
        %v6695 = vld [vmem:[#allocation13 + $0x208] sm:$0xff]
        %v6696 = vld [vmem:[#allocation13 + $0x210] sm:$0xff]
        %v6697 = vld [vmem:[#allocation13 + $0x218] sm:$0xff]
        %v6698 = vld [vmem:[#allocation13 + $0x220] sm:$0xff]
        %v6699 = vld [vmem:[#allocation13 + $0x228] sm:$0xff]
        %v6700 = vld [vmem:[#allocation13 + $0x230] sm:$0xff]
        %v6701 = vld [vmem:[#allocation13 + $0x238] sm:$0xff]
        %v6702 = vld [vmem:[#allocation13 + $0x240] sm:$0xff]
        %v6703 = vld [vmem:[#allocation13 + $0x248] sm:$0xff]
        %v6704 = vld [vmem:[#allocation13 + $0x250] sm:$0xff]
        %v6705 = vld [vmem:[#allocation13 + $0x258] sm:$0xff]
        %v6706 = vld [vmem:[#allocation13 + $0x260] sm:$0xff]
        %v6707 = vld [vmem:[#allocation13 + $0x268] sm:$0xff]
        %v6708 = vld [vmem:[#allocation13 + $0x270] sm:$0xff]
        %v6709 = vld [vmem:[#allocation13 + $0x278] sm:$0xff]
        %v6710 = vld [vmem:[#allocation13 + $0x280] sm:$0xff]
        %v6711 = vld [vmem:[#allocation13 + $0x288] sm:$0xff]
        %v6712 = vld [vmem:[#allocation13 + $0x290] sm:$0xff]
        %v6713 = vld [vmem:[#allocation13 + $0x298] sm:$0xff]
        %v6714 = vld [vmem:[#allocation13 + $0x2a0] sm:$0xff]
        %v6715 = vld [vmem:[#allocation13 + $0x2a8] sm:$0xff]
        %v6716 = vld [vmem:[#allocation13 + $0x2b0] sm:$0xff]
        %v6717 = vld [vmem:[#allocation13 + $0x2b8] sm:$0xff]
        %v6718 = vld [vmem:[#allocation13 + $0x2c0] sm:$0xff]
        %v6719 = vld [vmem:[#allocation13 + $0x2c8] sm:$0xff]
        %v6720 = vld [vmem:[#allocation13 + $0x2d0] sm:$0xff]
        %v6721 = vld [vmem:[#allocation13 + $0x2d8] sm:$0xff]
        %v6722 = vld [vmem:[#allocation13 + $0x2e0] sm:$0xff]
        %v6723 = vld [vmem:[#allocation13 + $0x2e8] sm:$0xff]
        %v6724 = vld [vmem:[#allocation13 + $0x2f0] sm:$0xff]
        %v6725 = vld [vmem:[#allocation13 + $0x2f8] sm:$0xff]
        %v6726 = vld [vmem:[#allocation13 + $0x300] sm:$0xff]
        %v6727 = vld [vmem:[#allocation13 + $0x308] sm:$0xff]
        %v6728 = vld [vmem:[#allocation13 + $0x310] sm:$0xff]
        %v6729 = vld [vmem:[#allocation13 + $0x318] sm:$0xff]
        %v6730 = vld [vmem:[#allocation13 + $0x320] sm:$0xff]
        %v6731 = vld [vmem:[#allocation13 + $0x328] sm:$0xff]
        %v6732 = vld [vmem:[#allocation13 + $0x330] sm:$0xff]
        %v6733 = vld [vmem:[#allocation13 + $0x338] sm:$0xff]
        %v6734 = vld [vmem:[#allocation13 + $0x340] sm:$0xff]
        %v6735 = vld [vmem:[#allocation13 + $0x348] sm:$0xff]
        %v6736 = vld [vmem:[#allocation13 + $0x350] sm:$0xff]
        %v6737 = vld [vmem:[#allocation13 + $0x358] sm:$0xff]
        %v6738 = vld [vmem:[#allocation13 + $0x360] sm:$0xff]
        %v6739 = vld [vmem:[#allocation13 + $0x368] sm:$0xff]
        %v6740 = vld [vmem:[#allocation13 + $0x370] sm:$0xff]
        %v6741 = vld [vmem:[#allocation13 + $0x378] sm:$0xff]
        %v6742 = vld [vmem:[#allocation13 + $0x380] sm:$0xff]
        %v6743 = vld [vmem:[#allocation13 + $0x388] sm:$0xff]
        %v6744 = vld [vmem:[#allocation13 + $0x390] sm:$0xff]
        %v6745 = vld [vmem:[#allocation13 + $0x398] sm:$0xff]
        %v6746 = vld [vmem:[#allocation13 + $0x3a0] sm:$0xff]
        %v6747 = vld [vmem:[#allocation13 + $0x3a8] sm:$0xff]
        %v6748 = vld [vmem:[#allocation13 + $0x3b0] sm:$0xff]
        %v6749 = vld [vmem:[#allocation13 + $0x3b8] sm:$0xff]
        %v6750 = vld [vmem:[#allocation13 + $0x3c0] sm:$0xff]
        %v6751 = vld [vmem:[#allocation13 + $0x3c8] sm:$0xff]
        %v6752 = vld [vmem:[#allocation13 + $0x3d0] sm:$0xff]
        %v6753 = vld [vmem:[#allocation13 + $0x3d8] sm:$0xff]
        %v6754 = vld [vmem:[#allocation13 + $0x3e0] sm:$0xff]
        %v6755 = vld [vmem:[#allocation13 + $0x3e8] sm:$0xff]
        %v6756 = vld [vmem:[#allocation13 + $0x3f0] sm:$0xff]
        %v6757 = vld [vmem:[#allocation13 + $0x3f8] sm:$0xff]
        %v6758 = vld [vmem:[#allocation13 + $0x400] sm:$0xff]
        %v6759 = vld [vmem:[#allocation13 + $0x408] sm:$0xff]
        %v6760 = vld [vmem:[#allocation13 + $0x410] sm:$0xff]
        %v6761 = vld [vmem:[#allocation13 + $0x418] sm:$0xff]
        %v6762 = vld [vmem:[#allocation13 + $0x420] sm:$0xff]
        %v6763 = vld [vmem:[#allocation13 + $0x428] sm:$0xff]
        %v6764 = vld [vmem:[#allocation13 + $0x430] sm:$0xff]
        %v6765 = vld [vmem:[#allocation13 + $0x438] sm:$0xff]
        %v6766 = vld [vmem:[#allocation13 + $0x440] sm:$0xff]
        %v6767 = vld [vmem:[#allocation13 + $0x448] sm:$0xff]
        %v6768 = vld [vmem:[#allocation13 + $0x450] sm:$0xff]
        %v6769 = vld [vmem:[#allocation13 + $0x458] sm:$0xff]
        %v6770 = vld [vmem:[#allocation13 + $0x460] sm:$0xff]
        %v6771 = vld [vmem:[#allocation13 + $0x468] sm:$0xff]
        %v6772 = vld [vmem:[#allocation13 + $0x470] sm:$0xff]
        %v6773 = vld [vmem:[#allocation13 + $0x478] sm:$0xff]
        %v6774 = vld [vmem:[#allocation13 + $0x480] sm:$0xff]
        %v6775 = vld [vmem:[#allocation13 + $0x488] sm:$0xff]
        %v6776 = vld [vmem:[#allocation13 + $0x490] sm:$0xff]
        %v6777 = vld [vmem:[#allocation13 + $0x498] sm:$0xff]
        %v6778 = vld [vmem:[#allocation13 + $0x4a0] sm:$0xff]
        %v6779 = vld [vmem:[#allocation13 + $0x4a8] sm:$0xff]
        %v6780 = vld [vmem:[#allocation13 + $0x4b0] sm:$0xff]
        %v6781 = vld [vmem:[#allocation13 + $0x4b8] sm:$0xff]
        %v6782 = vld [vmem:[#allocation13 + $0x4c0] sm:$0xff]
        %v6783 = vld [vmem:[#allocation13 + $0x4c8] sm:$0xff]
        %v6784 = vld [vmem:[#allocation13 + $0x4d0] sm:$0xff]
        %v6785 = vld [vmem:[#allocation13 + $0x4d8] sm:$0xff]
        %v6786 = vld [vmem:[#allocation13 + $0x4e0] sm:$0xff]
        %v6787 = vld [vmem:[#allocation13 + $0x4e8] sm:$0xff]
        %v6788 = vld [vmem:[#allocation13 + $0x4f0] sm:$0xff]
        %v6789 = vld [vmem:[#allocation13 + $0x4f8] sm:$0xff]
        %v6790 = vld [vmem:[#allocation13 + $0x500] sm:$0xff]
        %v6791 = vld [vmem:[#allocation13 + $0x508] sm:$0xff]
        %v6792 = vld [vmem:[#allocation13 + $0x510] sm:$0xff]
        %v6793 = vld [vmem:[#allocation13 + $0x518] sm:$0xff]
        %v6794 = vld [vmem:[#allocation13 + $0x520] sm:$0xff]
        %v6795 = vld [vmem:[#allocation13 + $0x528] sm:$0xff]
        %v6796 = vld [vmem:[#allocation13 + $0x530] sm:$0xff]
        %v6797 = vld [vmem:[#allocation13 + $0x538] sm:$0xff]
        %v6798 = vld [vmem:[#allocation13 + $0x540] sm:$0xff]
        %v6799 = vld [vmem:[#allocation13 + $0x548] sm:$0xff]
        %v6800 = vld [vmem:[#allocation13 + $0x550] sm:$0xff]
        %v6801 = vld [vmem:[#allocation13 + $0x558] sm:$0xff]
        %v6802 = vld [vmem:[#allocation13 + $0x560] sm:$0xff]
        %v6803 = vld [vmem:[#allocation13 + $0x568] sm:$0xff]
        %v6804 = vld [vmem:[#allocation13 + $0x570] sm:$0xff]
        %v6805 = vld [vmem:[#allocation13 + $0x578] sm:$0xff]
        %v6806 = vld [vmem:[#allocation13 + $0x580] sm:$0xff]
        %v6807 = vld [vmem:[#allocation13 + $0x588] sm:$0xff]
        %v6808 = vld [vmem:[#allocation13 + $0x590] sm:$0xff]
        %v6809 = vld [vmem:[#allocation13 + $0x598] sm:$0xff]
        %v6810 = vld [vmem:[#allocation13 + $0x5a0] sm:$0xff]
        %v6811 = vld [vmem:[#allocation13 + $0x5a8] sm:$0xff]
        %v6812 = vld [vmem:[#allocation13 + $0x5b0] sm:$0xff]
        %v6813 = vld [vmem:[#allocation13 + $0x5b8] sm:$0xff]
        %v6814 = vld [vmem:[#allocation13 + $0x5c0] sm:$0xff]
        %v6815 = vld [vmem:[#allocation13 + $0x5c8] sm:$0xff]
        %v6816 = vld [vmem:[#allocation13 + $0x5d0] sm:$0xff]
        %v6817 = vld [vmem:[#allocation13 + $0x5d8] sm:$0xff]
        %v6818 = vld [vmem:[#allocation13 + $0x5e0] sm:$0xff]
        %v6819 = vld [vmem:[#allocation13 + $0x5e8] sm:$0xff]
        %v6820 = vld [vmem:[#allocation13 + $0x5f0] sm:$0xff]
        %v6821 = vld [vmem:[#allocation13 + $0x5f8] sm:$0xff]
        %v6822 = vld [vmem:[#allocation13 + $0x600] sm:$0xff]
        %v6823 = vld [vmem:[#allocation13 + $0x608] sm:$0xff]
        %v6824 = vld [vmem:[#allocation13 + $0x610] sm:$0xff]
        %v6825 = vld [vmem:[#allocation13 + $0x618] sm:$0xff]
        %v6826 = vld [vmem:[#allocation13 + $0x620] sm:$0xff]
        %v6827 = vld [vmem:[#allocation13 + $0x628] sm:$0xff]
        %v6828 = vld [vmem:[#allocation13 + $0x630] sm:$0xff]
        %v6829 = vld [vmem:[#allocation13 + $0x638] sm:$0xff]
        %v6830 = vld [vmem:[#allocation13 + $0x640] sm:$0xff]
        %v6831 = vld [vmem:[#allocation13 + $0x648] sm:$0xff]
        %v6832 = vld [vmem:[#allocation13 + $0x650] sm:$0xff]
        %v6833 = vld [vmem:[#allocation13 + $0x658] sm:$0xff]
        %v6834 = vld [vmem:[#allocation13 + $0x660] sm:$0xff]
        %v6835 = vld [vmem:[#allocation13 + $0x668] sm:$0xff]
        %v6836 = vld [vmem:[#allocation13 + $0x670] sm:$0xff]
        %v6837 = vld [vmem:[#allocation13 + $0x678] sm:$0xff]
        %v6838 = vld [vmem:[#allocation13 + $0x680] sm:$0xff]
        %v6839 = vld [vmem:[#allocation13 + $0x688] sm:$0xff]
        %v6840 = vld [vmem:[#allocation13 + $0x690] sm:$0xff]
        %v6841 = vld [vmem:[#allocation13 + $0x698] sm:$0xff]
        %v6842 = vld [vmem:[#allocation13 + $0x6a0] sm:$0xff]
        %v6843 = vld [vmem:[#allocation13 + $0x6a8] sm:$0xff]
        %v6844 = vld [vmem:[#allocation13 + $0x6b0] sm:$0xff]
        %v6845 = vld [vmem:[#allocation13 + $0x6b8] sm:$0xff]
        %v6846 = vld [vmem:[#allocation13 + $0x6c0] sm:$0xff]
        %v6847 = vld [vmem:[#allocation13 + $0x6c8] sm:$0xff]
        %v6848 = vld [vmem:[#allocation13 + $0x6d0] sm:$0xff]
        %v6849 = vld [vmem:[#allocation13 + $0x6d8] sm:$0xff]
        %v6850 = vld [vmem:[#allocation13 + $0x6e0] sm:$0xff]
        %v6851 = vld [vmem:[#allocation13 + $0x6e8] sm:$0xff]
        %v6852 = vld [vmem:[#allocation13 + $0x6f0] sm:$0xff]
        %v6853 = vld [vmem:[#allocation13 + $0x6f8] sm:$0xff]
        %v6854 = vld [vmem:[#allocation13 + $0x700] sm:$0xff]
        %v6855 = vld [vmem:[#allocation13 + $0x708] sm:$0xff]
        %v6856 = vld [vmem:[#allocation13 + $0x710] sm:$0xff]
        %v6857 = vld [vmem:[#allocation13 + $0x718] sm:$0xff]
        %v6858 = vld [vmem:[#allocation13 + $0x720] sm:$0xff]
        %v6859 = vld [vmem:[#allocation13 + $0x728] sm:$0xff]
        %v6860 = vld [vmem:[#allocation13 + $0x730] sm:$0xff]
        %v6861 = vld [vmem:[#allocation13 + $0x738] sm:$0xff]
        %v6862 = vld [vmem:[#allocation13 + $0x740] sm:$0xff]
        %v6863 = vld [vmem:[#allocation13 + $0x748] sm:$0xff]
        %v6864 = vld [vmem:[#allocation13 + $0x750] sm:$0xff]
        %v6865 = vld [vmem:[#allocation13 + $0x758] sm:$0xff]
        %v6866 = vld [vmem:[#allocation13 + $0x760] sm:$0xff]
        %v6867 = vld [vmem:[#allocation13 + $0x768] sm:$0xff]
        %v6868 = vld [vmem:[#allocation13 + $0x770] sm:$0xff]
        %v6869 = vld [vmem:[#allocation13 + $0x778] sm:$0xff]
        %v6870 = vld [vmem:[#allocation13 + $0x780] sm:$0xff]
        %v6871 = vld [vmem:[#allocation13 + $0x788] sm:$0xff]
        %v6872 = vld [vmem:[#allocation13 + $0x790] sm:$0xff]
        %v6873 = vld [vmem:[#allocation13 + $0x798] sm:$0xff]
        %v6874 = vld [vmem:[#allocation13 + $0x7a0] sm:$0xff]
        %v6875 = vld [vmem:[#allocation13 + $0x7a8] sm:$0xff]
        %v6876 = vld [vmem:[#allocation13 + $0x7b0] sm:$0xff]
        %v6877 = vld [vmem:[#allocation13 + $0x7b8] sm:$0xff]
        %v6878 = vld [vmem:[#allocation13 + $0x7c0] sm:$0xff]
        %v6879 = vld [vmem:[#allocation13 + $0x7c8] sm:$0xff]
        %v6880 = vld [vmem:[#allocation13 + $0x7d0] sm:$0xff]
        %v6881 = vld [vmem:[#allocation13 + $0x7d8] sm:$0xff]
        %v6882 = vld [vmem:[#allocation13 + $0x7e0] sm:$0xff]
        %v6883 = vld [vmem:[#allocation13 + $0x7e8] sm:$0xff]
        %v6884 = vld [vmem:[#allocation13 + $0x7f0] sm:$0xff]
        %v6885 = vld [vmem:[#allocation13 + $0x7f8] sm:$0xff]
        %v6886 = vld [vmem:[#allocation15] sm:$0xf]
        %v7143 = vunpack.c.l.b16 %v6630
        %v7144 = vunpack.c.h.b16 %v6630
        %v7145 = vunpack.c.l.b16 %v6631
        %v7146 = vunpack.c.h.b16 %v6631
        %v7147 = vunpack.c.l.b16 %v6632
        %v7148 = vunpack.c.h.b16 %v6632
        %v7149 = vunpack.c.l.b16 %v6633
        %v7150 = vunpack.c.h.b16 %v6633
        %v7151 = vunpack.c.l.b16 %v6634
        %v7152 = vunpack.c.h.b16 %v6634
        %v7153 = vunpack.c.l.b16 %v6635
        %v7154 = vunpack.c.h.b16 %v6635
        %v7155 = vunpack.c.l.b16 %v6636
        %v7156 = vunpack.c.h.b16 %v6636
        %v7157 = vunpack.c.l.b16 %v6637
        %v7158 = vunpack.c.h.b16 %v6637
        %v7159 = vunpack.c.l.b16 %v6638
        %v7160 = vunpack.c.h.b16 %v6638
        %v7161 = vunpack.c.l.b16 %v6639
        %v7162 = vunpack.c.h.b16 %v6639
        %v7163 = vunpack.c.l.b16 %v6640
        %v7164 = vunpack.c.h.b16 %v6640
        %v7165 = vunpack.c.l.b16 %v6641
        %v7166 = vunpack.c.h.b16 %v6641
        %v7167 = vunpack.c.l.b16 %v6642
        %v7168 = vunpack.c.h.b16 %v6642
        %v7169 = vunpack.c.l.b16 %v6643
        %v7170 = vunpack.c.h.b16 %v6643
        %v7171 = vunpack.c.l.b16 %v6644
        %v7172 = vunpack.c.h.b16 %v6644
        %v7173 = vunpack.c.l.b16 %v6645
        %v7174 = vunpack.c.h.b16 %v6645
        %v7175 = vunpack.c.l.b16 %v6646
        %v7176 = vunpack.c.h.b16 %v6646
        %v7177 = vunpack.c.l.b16 %v6647
        %v7178 = vunpack.c.h.b16 %v6647
        %v7179 = vunpack.c.l.b16 %v6648
        %v7180 = vunpack.c.h.b16 %v6648
        %v7181 = vunpack.c.l.b16 %v6649
        %v7182 = vunpack.c.h.b16 %v6649
        %v7183 = vunpack.c.l.b16 %v6650
        %v7184 = vunpack.c.h.b16 %v6650
        %v7185 = vunpack.c.l.b16 %v6651
        %v7186 = vunpack.c.h.b16 %v6651
        %v7187 = vunpack.c.l.b16 %v6652
        %v7188 = vunpack.c.h.b16 %v6652
        %v7189 = vunpack.c.l.b16 %v6653
        %v7190 = vunpack.c.h.b16 %v6653
        %v7191 = vunpack.c.l.b16 %v6654
        %v7192 = vunpack.c.h.b16 %v6654
        %v7193 = vunpack.c.l.b16 %v6655
        %v7194 = vunpack.c.h.b16 %v6655
        %v7195 = vunpack.c.l.b16 %v6656
        %v7196 = vunpack.c.h.b16 %v6656
        %v7197 = vunpack.c.l.b16 %v6657
        %v7198 = vunpack.c.h.b16 %v6657
        %v7199 = vunpack.c.l.b16 %v6658
        %v7200 = vunpack.c.h.b16 %v6658
        %v7201 = vunpack.c.l.b16 %v6659
        %v7202 = vunpack.c.h.b16 %v6659
        %v7203 = vunpack.c.l.b16 %v6660
        %v7204 = vunpack.c.h.b16 %v6660
        %v7205 = vunpack.c.l.b16 %v6661
        %v7206 = vunpack.c.h.b16 %v6661
        %v7207 = vunpack.c.l.b16 %v6662
        %v7208 = vunpack.c.h.b16 %v6662
        %v7209 = vunpack.c.l.b16 %v6663
        %v7210 = vunpack.c.h.b16 %v6663
        %v7211 = vunpack.c.l.b16 %v6664
        %v7212 = vunpack.c.h.b16 %v6664
        %v7213 = vunpack.c.l.b16 %v6665
        %v7214 = vunpack.c.h.b16 %v6665
        %v7215 = vunpack.c.l.b16 %v6666
        %v7216 = vunpack.c.h.b16 %v6666
        %v7217 = vunpack.c.l.b16 %v6667
        %v7218 = vunpack.c.h.b16 %v6667
        %v7219 = vunpack.c.l.b16 %v6668
        %v7220 = vunpack.c.h.b16 %v6668
        %v7221 = vunpack.c.l.b16 %v6669
        %v7222 = vunpack.c.h.b16 %v6669
        %v7223 = vunpack.c.l.b16 %v6670
        %v7224 = vunpack.c.h.b16 %v6670
        %v7225 = vunpack.c.l.b16 %v6671
        %v7226 = vunpack.c.h.b16 %v6671
        %v7227 = vunpack.c.l.b16 %v6672
        %v7228 = vunpack.c.h.b16 %v6672
        %v7229 = vunpack.c.l.b16 %v6673
        %v7230 = vunpack.c.h.b16 %v6673
        %v7231 = vunpack.c.l.b16 %v6674
        %v7232 = vunpack.c.h.b16 %v6674
        %v7233 = vunpack.c.l.b16 %v6675
        %v7234 = vunpack.c.h.b16 %v6675
        %v7235 = vunpack.c.l.b16 %v6676
        %v7236 = vunpack.c.h.b16 %v6676
        %v7237 = vunpack.c.l.b16 %v6677
        %v7238 = vunpack.c.h.b16 %v6677
        %v7239 = vunpack.c.l.b16 %v6678
        %v7240 = vunpack.c.h.b16 %v6678
        %v7241 = vunpack.c.l.b16 %v6679
        %v7242 = vunpack.c.h.b16 %v6679
        %v7243 = vunpack.c.l.b16 %v6680
        %v7244 = vunpack.c.h.b16 %v6680
        %v7245 = vunpack.c.l.b16 %v6681
        %v7246 = vunpack.c.h.b16 %v6681
        %v7247 = vunpack.c.l.b16 %v6682
        %v7248 = vunpack.c.h.b16 %v6682
        %v7249 = vunpack.c.l.b16 %v6683
        %v7250 = vunpack.c.h.b16 %v6683
        %v7251 = vunpack.c.l.b16 %v6684
        %v7252 = vunpack.c.h.b16 %v6684
        %v7253 = vunpack.c.l.b16 %v6685
        %v7254 = vunpack.c.h.b16 %v6685
        %v7255 = vunpack.c.l.b16 %v6686
        %v7256 = vunpack.c.h.b16 %v6686
        %v7257 = vunpack.c.l.b16 %v6687
        %v7258 = vunpack.c.h.b16 %v6687
        %v7259 = vunpack.c.l.b16 %v6688
        %v7260 = vunpack.c.h.b16 %v6688
        %v7261 = vunpack.c.l.b16 %v6689
        %v7262 = vunpack.c.h.b16 %v6689
        %v7263 = vunpack.c.l.b16 %v6690
        %v7264 = vunpack.c.h.b16 %v6690
        %v7265 = vunpack.c.l.b16 %v6691
        %v7266 = vunpack.c.h.b16 %v6691
        %v7267 = vunpack.c.l.b16 %v6692
        %v7268 = vunpack.c.h.b16 %v6692
        %v7269 = vunpack.c.l.b16 %v6693
        %v7270 = vunpack.c.h.b16 %v6693
        %v7271 = vunpack.c.l.b16 %v6694
        %v7272 = vunpack.c.h.b16 %v6694
        %v7273 = vunpack.c.l.b16 %v6695
        %v7274 = vunpack.c.h.b16 %v6695
        %v7275 = vunpack.c.l.b16 %v6696
        %v7276 = vunpack.c.h.b16 %v6696
        %v7277 = vunpack.c.l.b16 %v6697
        %v7278 = vunpack.c.h.b16 %v6697
        %v7279 = vunpack.c.l.b16 %v6698
        %v7280 = vunpack.c.h.b16 %v6698
        %v7281 = vunpack.c.l.b16 %v6699
        %v7282 = vunpack.c.h.b16 %v6699
        %v7283 = vunpack.c.l.b16 %v6700
        %v7284 = vunpack.c.h.b16 %v6700
        %v7285 = vunpack.c.l.b16 %v6701
        %v7286 = vunpack.c.h.b16 %v6701
        %v7287 = vunpack.c.l.b16 %v6702
        %v7288 = vunpack.c.h.b16 %v6702
        %v7289 = vunpack.c.l.b16 %v6703
        %v7290 = vunpack.c.h.b16 %v6703
        %v7291 = vunpack.c.l.b16 %v6704
        %v7292 = vunpack.c.h.b16 %v6704
        %v7293 = vunpack.c.l.b16 %v6705
        %v7294 = vunpack.c.h.b16 %v6705
        %v7295 = vunpack.c.l.b16 %v6706
        %v7296 = vunpack.c.h.b16 %v6706
        %v7297 = vunpack.c.l.b16 %v6707
        %v7298 = vunpack.c.h.b16 %v6707
        %v7299 = vunpack.c.l.b16 %v6708
        %v7300 = vunpack.c.h.b16 %v6708
        %v7301 = vunpack.c.l.b16 %v6709
        %v7302 = vunpack.c.h.b16 %v6709
        %v7303 = vunpack.c.l.b16 %v6710
        %v7304 = vunpack.c.h.b16 %v6710
        %v7305 = vunpack.c.l.b16 %v6711
        %v7306 = vunpack.c.h.b16 %v6711
        %v7307 = vunpack.c.l.b16 %v6712
        %v7308 = vunpack.c.h.b16 %v6712
        %v7309 = vunpack.c.l.b16 %v6713
        %v7310 = vunpack.c.h.b16 %v6713
        %v7311 = vunpack.c.l.b16 %v6714
        %v7312 = vunpack.c.h.b16 %v6714
        %v7313 = vunpack.c.l.b16 %v6715
        %v7314 = vunpack.c.h.b16 %v6715
        %v7315 = vunpack.c.l.b16 %v6716
        %v7316 = vunpack.c.h.b16 %v6716
        %v7317 = vunpack.c.l.b16 %v6717
        %v7318 = vunpack.c.h.b16 %v6717
        %v7319 = vunpack.c.l.b16 %v6718
        %v7320 = vunpack.c.h.b16 %v6718
        %v7321 = vunpack.c.l.b16 %v6719
        %v7322 = vunpack.c.h.b16 %v6719
        %v7323 = vunpack.c.l.b16 %v6720
        %v7324 = vunpack.c.h.b16 %v6720
        %v7325 = vunpack.c.l.b16 %v6721
        %v7326 = vunpack.c.h.b16 %v6721
        %v7327 = vunpack.c.l.b16 %v6722
        %v7328 = vunpack.c.h.b16 %v6722
        %v7329 = vunpack.c.l.b16 %v6723
        %v7330 = vunpack.c.h.b16 %v6723
        %v7331 = vunpack.c.l.b16 %v6724
        %v7332 = vunpack.c.h.b16 %v6724
        %v7333 = vunpack.c.l.b16 %v6725
        %v7334 = vunpack.c.h.b16 %v6725
        %v7335 = vunpack.c.l.b16 %v6726
        %v7336 = vunpack.c.h.b16 %v6726
        %v7337 = vunpack.c.l.b16 %v6727
        %v7338 = vunpack.c.h.b16 %v6727
        %v7339 = vunpack.c.l.b16 %v6728
        %v7340 = vunpack.c.h.b16 %v6728
        %v7341 = vunpack.c.l.b16 %v6729
        %v7342 = vunpack.c.h.b16 %v6729
        %v7343 = vunpack.c.l.b16 %v6730
        %v7344 = vunpack.c.h.b16 %v6730
        %v7345 = vunpack.c.l.b16 %v6731
        %v7346 = vunpack.c.h.b16 %v6731
        %v7347 = vunpack.c.l.b16 %v6732
        %v7348 = vunpack.c.h.b16 %v6732
        %v7349 = vunpack.c.l.b16 %v6733
        %v7350 = vunpack.c.h.b16 %v6733
        %v7351 = vunpack.c.l.b16 %v6734
        %v7352 = vunpack.c.h.b16 %v6734
        %v7353 = vunpack.c.l.b16 %v6735
        %v7354 = vunpack.c.h.b16 %v6735
        %v7355 = vunpack.c.l.b16 %v6736
        %v7356 = vunpack.c.h.b16 %v6736
        %v7357 = vunpack.c.l.b16 %v6737
        %v7358 = vunpack.c.h.b16 %v6737
        %v7359 = vunpack.c.l.b16 %v6738
        %v7360 = vunpack.c.h.b16 %v6738
        %v7361 = vunpack.c.l.b16 %v6739
        %v7362 = vunpack.c.h.b16 %v6739
        %v7363 = vunpack.c.l.b16 %v6740
        %v7364 = vunpack.c.h.b16 %v6740
        %v7365 = vunpack.c.l.b16 %v6741
        %v7366 = vunpack.c.h.b16 %v6741
        %v7367 = vunpack.c.l.b16 %v6742
        %v7368 = vunpack.c.h.b16 %v6742
        %v7369 = vunpack.c.l.b16 %v6743
        %v7370 = vunpack.c.h.b16 %v6743
        %v7371 = vunpack.c.l.b16 %v6744
        %v7372 = vunpack.c.h.b16 %v6744
        %v7373 = vunpack.c.l.b16 %v6745
        %v7374 = vunpack.c.h.b16 %v6745
        %v7375 = vunpack.c.l.b16 %v6746
        %v7376 = vunpack.c.h.b16 %v6746
        %v7377 = vunpack.c.l.b16 %v6747
        %v7378 = vunpack.c.h.b16 %v6747
        %v7379 = vunpack.c.l.b16 %v6748
        %v7380 = vunpack.c.h.b16 %v6748
        %v7381 = vunpack.c.l.b16 %v6749
        %v7382 = vunpack.c.h.b16 %v6749
        %v7383 = vunpack.c.l.b16 %v6750
        %v7384 = vunpack.c.h.b16 %v6750
        %v7385 = vunpack.c.l.b16 %v6751
        %v7386 = vunpack.c.h.b16 %v6751
        %v7387 = vunpack.c.l.b16 %v6752
        %v7388 = vunpack.c.h.b16 %v6752
        %v7389 = vunpack.c.l.b16 %v6753
        %v7390 = vunpack.c.h.b16 %v6753
        %v7391 = vunpack.c.l.b16 %v6754
        %v7392 = vunpack.c.h.b16 %v6754
        %v7393 = vunpack.c.l.b16 %v6755
        %v7394 = vunpack.c.h.b16 %v6755
        %v7395 = vunpack.c.l.b16 %v6756
        %v7396 = vunpack.c.h.b16 %v6756
        %v7397 = vunpack.c.l.b16 %v6757
        %v7398 = vunpack.c.h.b16 %v6757
        %v7399 = vunpack.c.l.b16 %v6758
        %v7400 = vunpack.c.h.b16 %v6758
        %v7401 = vunpack.c.l.b16 %v6759
        %v7402 = vunpack.c.h.b16 %v6759
        %v7403 = vunpack.c.l.b16 %v6760
        %v7404 = vunpack.c.h.b16 %v6760
        %v7405 = vunpack.c.l.b16 %v6761
        %v7406 = vunpack.c.h.b16 %v6761
        %v7407 = vunpack.c.l.b16 %v6762
        %v7408 = vunpack.c.h.b16 %v6762
        %v7409 = vunpack.c.l.b16 %v6763
        %v7410 = vunpack.c.h.b16 %v6763
        %v7411 = vunpack.c.l.b16 %v6764
        %v7412 = vunpack.c.h.b16 %v6764
        %v7413 = vunpack.c.l.b16 %v6765
        %v7414 = vunpack.c.h.b16 %v6765
        %v7415 = vunpack.c.l.b16 %v6766
        %v7416 = vunpack.c.h.b16 %v6766
        %v7417 = vunpack.c.l.b16 %v6767
        %v7418 = vunpack.c.h.b16 %v6767
        %v7419 = vunpack.c.l.b16 %v6768
        %v7420 = vunpack.c.h.b16 %v6768
        %v7421 = vunpack.c.l.b16 %v6769
        %v7422 = vunpack.c.h.b16 %v6769
        %v7423 = vunpack.c.l.b16 %v6770
        %v7424 = vunpack.c.h.b16 %v6770
        %v7425 = vunpack.c.l.b16 %v6771
        %v7426 = vunpack.c.h.b16 %v6771
        %v7427 = vunpack.c.l.b16 %v6772
        %v7428 = vunpack.c.h.b16 %v6772
        %v7429 = vunpack.c.l.b16 %v6773
        %v7430 = vunpack.c.h.b16 %v6773
        %v7431 = vunpack.c.l.b16 %v6774
        %v7432 = vunpack.c.h.b16 %v6774
        %v7433 = vunpack.c.l.b16 %v6775
        %v7434 = vunpack.c.h.b16 %v6775
        %v7435 = vunpack.c.l.b16 %v6776
        %v7436 = vunpack.c.h.b16 %v6776
        %v7437 = vunpack.c.l.b16 %v6777
        %v7438 = vunpack.c.h.b16 %v6777
        %v7439 = vunpack.c.l.b16 %v6778
        %v7440 = vunpack.c.h.b16 %v6778
        %v7441 = vunpack.c.l.b16 %v6779
        %v7442 = vunpack.c.h.b16 %v6779
        %v7443 = vunpack.c.l.b16 %v6780
        %v7444 = vunpack.c.h.b16 %v6780
        %v7445 = vunpack.c.l.b16 %v6781
        %v7446 = vunpack.c.h.b16 %v6781
        %v7447 = vunpack.c.l.b16 %v6782
        %v7448 = vunpack.c.h.b16 %v6782
        %v7449 = vunpack.c.l.b16 %v6783
        %v7450 = vunpack.c.h.b16 %v6783
        %v7451 = vunpack.c.l.b16 %v6784
        %v7452 = vunpack.c.h.b16 %v6784
        %v7453 = vunpack.c.l.b16 %v6785
        %v7454 = vunpack.c.h.b16 %v6785
        %v7455 = vunpack.c.l.b16 %v6786
        %v7456 = vunpack.c.h.b16 %v6786
        %v7457 = vunpack.c.l.b16 %v6787
        %v7458 = vunpack.c.h.b16 %v6787
        %v7459 = vunpack.c.l.b16 %v6788
        %v7460 = vunpack.c.h.b16 %v6788
        %v7461 = vunpack.c.l.b16 %v6789
        %v7462 = vunpack.c.h.b16 %v6789
        %v7463 = vunpack.c.l.b16 %v6790
        %v7464 = vunpack.c.h.b16 %v6790
        %v7465 = vunpack.c.l.b16 %v6791
        %v7466 = vunpack.c.h.b16 %v6791
        %v7467 = vunpack.c.l.b16 %v6792
        %v7468 = vunpack.c.h.b16 %v6792
        %v7469 = vunpack.c.l.b16 %v6793
        %v7470 = vunpack.c.h.b16 %v6793
        %v7471 = vunpack.c.l.b16 %v6794
        %v7472 = vunpack.c.h.b16 %v6794
        %v7473 = vunpack.c.l.b16 %v6795
        %v7474 = vunpack.c.h.b16 %v6795
        %v7475 = vunpack.c.l.b16 %v6796
        %v7476 = vunpack.c.h.b16 %v6796
        %v7477 = vunpack.c.l.b16 %v6797
        %v7478 = vunpack.c.h.b16 %v6797
        %v7479 = vunpack.c.l.b16 %v6798
        %v7480 = vunpack.c.h.b16 %v6798
        %v7481 = vunpack.c.l.b16 %v6799
        %v7482 = vunpack.c.h.b16 %v6799
        %v7483 = vunpack.c.l.b16 %v6800
        %v7484 = vunpack.c.h.b16 %v6800
        %v7485 = vunpack.c.l.b16 %v6801
        %v7486 = vunpack.c.h.b16 %v6801
        %v7487 = vunpack.c.l.b16 %v6802
        %v7488 = vunpack.c.h.b16 %v6802
        %v7489 = vunpack.c.l.b16 %v6803
        %v7490 = vunpack.c.h.b16 %v6803
        %v7491 = vunpack.c.l.b16 %v6804
        %v7492 = vunpack.c.h.b16 %v6804
        %v7493 = vunpack.c.l.b16 %v6805
        %v7494 = vunpack.c.h.b16 %v6805
        %v7495 = vunpack.c.l.b16 %v6806
        %v7496 = vunpack.c.h.b16 %v6806
        %v7497 = vunpack.c.l.b16 %v6807
        %v7498 = vunpack.c.h.b16 %v6807
        %v7499 = vunpack.c.l.b16 %v6808
        %v7500 = vunpack.c.h.b16 %v6808
        %v7501 = vunpack.c.l.b16 %v6809
        %v7502 = vunpack.c.h.b16 %v6809
        %v7503 = vunpack.c.l.b16 %v6810
        %v7504 = vunpack.c.h.b16 %v6810
        %v7505 = vunpack.c.l.b16 %v6811
        %v7506 = vunpack.c.h.b16 %v6811
        %v7507 = vunpack.c.l.b16 %v6812
        %v7508 = vunpack.c.h.b16 %v6812
        %v7509 = vunpack.c.l.b16 %v6813
        %v7510 = vunpack.c.h.b16 %v6813
        %v7511 = vunpack.c.l.b16 %v6814
        %v7512 = vunpack.c.h.b16 %v6814
        %v7513 = vunpack.c.l.b16 %v6815
        %v7514 = vunpack.c.h.b16 %v6815
        %v7515 = vunpack.c.l.b16 %v6816
        %v7516 = vunpack.c.h.b16 %v6816
        %v7517 = vunpack.c.l.b16 %v6817
        %v7518 = vunpack.c.h.b16 %v6817
        %v7519 = vunpack.c.l.b16 %v6818
        %v7520 = vunpack.c.h.b16 %v6818
        %v7521 = vunpack.c.l.b16 %v6819
        %v7522 = vunpack.c.h.b16 %v6819
        %v7523 = vunpack.c.l.b16 %v6820
        %v7524 = vunpack.c.h.b16 %v6820
        %v7525 = vunpack.c.l.b16 %v6821
        %v7526 = vunpack.c.h.b16 %v6821
        %v7527 = vunpack.c.l.b16 %v6822
        %v7528 = vunpack.c.h.b16 %v6822
        %v7529 = vunpack.c.l.b16 %v6823
        %v7530 = vunpack.c.h.b16 %v6823
        %v7531 = vunpack.c.l.b16 %v6824
        %v7532 = vunpack.c.h.b16 %v6824
        %v7533 = vunpack.c.l.b16 %v6825
        %v7534 = vunpack.c.h.b16 %v6825
        %v7535 = vunpack.c.l.b16 %v6826
        %v7536 = vunpack.c.h.b16 %v6826
        %v7537 = vunpack.c.l.b16 %v6827
        %v7538 = vunpack.c.h.b16 %v6827
        %v7539 = vunpack.c.l.b16 %v6828
        %v7540 = vunpack.c.h.b16 %v6828
        %v7541 = vunpack.c.l.b16 %v6829
        %v7542 = vunpack.c.h.b16 %v6829
        %v7543 = vunpack.c.l.b16 %v6830
        %v7544 = vunpack.c.h.b16 %v6830
        %v7545 = vunpack.c.l.b16 %v6831
        %v7546 = vunpack.c.h.b16 %v6831
        %v7547 = vunpack.c.l.b16 %v6832
        %v7548 = vunpack.c.h.b16 %v6832
        %v7549 = vunpack.c.l.b16 %v6833
        %v7550 = vunpack.c.h.b16 %v6833
        %v7551 = vunpack.c.l.b16 %v6834
        %v7552 = vunpack.c.h.b16 %v6834
        %v7553 = vunpack.c.l.b16 %v6835
        %v7554 = vunpack.c.h.b16 %v6835
        %v7555 = vunpack.c.l.b16 %v6836
        %v7556 = vunpack.c.h.b16 %v6836
        %v7557 = vunpack.c.l.b16 %v6837
        %v7558 = vunpack.c.h.b16 %v6837
        %v7559 = vunpack.c.l.b16 %v6838
        %v7560 = vunpack.c.h.b16 %v6838
        %v7561 = vunpack.c.l.b16 %v6839
        %v7562 = vunpack.c.h.b16 %v6839
        %v7563 = vunpack.c.l.b16 %v6840
        %v7564 = vunpack.c.h.b16 %v6840
        %v7565 = vunpack.c.l.b16 %v6841
        %v7566 = vunpack.c.h.b16 %v6841
        %v7567 = vunpack.c.l.b16 %v6842
        %v7568 = vunpack.c.h.b16 %v6842
        %v7569 = vunpack.c.l.b16 %v6843
        %v7570 = vunpack.c.h.b16 %v6843
        %v7571 = vunpack.c.l.b16 %v6844
        %v7572 = vunpack.c.h.b16 %v6844
        %v7573 = vunpack.c.l.b16 %v6845
        %v7574 = vunpack.c.h.b16 %v6845
        %v7575 = vunpack.c.l.b16 %v6846
        %v7576 = vunpack.c.h.b16 %v6846
        %v7577 = vunpack.c.l.b16 %v6847
        %v7578 = vunpack.c.h.b16 %v6847
        %v7579 = vunpack.c.l.b16 %v6848
        %v7580 = vunpack.c.h.b16 %v6848
        %v7581 = vunpack.c.l.b16 %v6849
        %v7582 = vunpack.c.h.b16 %v6849
        %v7583 = vunpack.c.l.b16 %v6850
        %v7584 = vunpack.c.h.b16 %v6850
        %v7585 = vunpack.c.l.b16 %v6851
        %v7586 = vunpack.c.h.b16 %v6851
        %v7587 = vunpack.c.l.b16 %v6852
        %v7588 = vunpack.c.h.b16 %v6852
        %v7589 = vunpack.c.l.b16 %v6853
        %v7590 = vunpack.c.h.b16 %v6853
        %v7591 = vunpack.c.l.b16 %v6854
        %v7592 = vunpack.c.h.b16 %v6854
        %v7593 = vunpack.c.l.b16 %v6855
        %v7594 = vunpack.c.h.b16 %v6855
        %v7595 = vunpack.c.l.b16 %v6856
        %v7596 = vunpack.c.h.b16 %v6856
        %v7597 = vunpack.c.l.b16 %v6857
        %v7598 = vunpack.c.h.b16 %v6857
        %v7599 = vunpack.c.l.b16 %v6858
        %v7600 = vunpack.c.h.b16 %v6858
        %v7601 = vunpack.c.l.b16 %v6859
        %v7602 = vunpack.c.h.b16 %v6859
        %v7603 = vunpack.c.l.b16 %v6860
        %v7604 = vunpack.c.h.b16 %v6860
        %v7605 = vunpack.c.l.b16 %v6861
        %v7606 = vunpack.c.h.b16 %v6861
        %v7607 = vunpack.c.l.b16 %v6862
        %v7608 = vunpack.c.h.b16 %v6862
        %v7609 = vunpack.c.l.b16 %v6863
        %v7610 = vunpack.c.h.b16 %v6863
        %v7611 = vunpack.c.l.b16 %v6864
        %v7612 = vunpack.c.h.b16 %v6864
        %v7613 = vunpack.c.l.b16 %v6865
        %v7614 = vunpack.c.h.b16 %v6865
        %v7615 = vunpack.c.l.b16 %v6866
        %v7616 = vunpack.c.h.b16 %v6866
        %v7617 = vunpack.c.l.b16 %v6867
        %v7618 = vunpack.c.h.b16 %v6867
        %v7619 = vunpack.c.l.b16 %v6868
        %v7620 = vunpack.c.h.b16 %v6868
        %v7621 = vunpack.c.l.b16 %v6869
        %v7622 = vunpack.c.h.b16 %v6869
        %v7623 = vunpack.c.l.b16 %v6870
        %v7624 = vunpack.c.h.b16 %v6870
        %v7625 = vunpack.c.l.b16 %v6871
        %v7626 = vunpack.c.h.b16 %v6871
        %v7627 = vunpack.c.l.b16 %v6872
        %v7628 = vunpack.c.h.b16 %v6872
        %v7629 = vunpack.c.l.b16 %v6873
        %v7630 = vunpack.c.h.b16 %v6873
        %v7631 = vunpack.c.l.b16 %v6874
        %v7632 = vunpack.c.h.b16 %v6874
        %v7633 = vunpack.c.l.b16 %v6875
        %v7634 = vunpack.c.h.b16 %v6875
        %v7635 = vunpack.c.l.b16 %v6876
        %v7636 = vunpack.c.h.b16 %v6876
        %v7637 = vunpack.c.l.b16 %v6877
        %v7638 = vunpack.c.h.b16 %v6877
        %v7639 = vunpack.c.l.b16 %v6878
        %v7640 = vunpack.c.h.b16 %v6878
        %v7641 = vunpack.c.l.b16 %v6879
        %v7642 = vunpack.c.h.b16 %v6879
        %v7643 = vunpack.c.l.b16 %v6880
        %v7644 = vunpack.c.h.b16 %v6880
        %v7645 = vunpack.c.l.b16 %v6881
        %v7646 = vunpack.c.h.b16 %v6881
        %v7647 = vunpack.c.l.b16 %v6882
        %v7648 = vunpack.c.h.b16 %v6882
        %v7649 = vunpack.c.l.b16 %v6883
        %v7650 = vunpack.c.h.b16 %v6883
        %v7651 = vunpack.c.l.b16 %v6884
        %v7652 = vunpack.c.h.b16 %v6884
        %v7653 = vunpack.c.l.b16 %v6885
        %v7654 = vunpack.c.h.b16 %v6885
        %v7655 = vpack.c.b16 %v7147, %v7143
        %v7656 = vpack.c.b16 %v7148, %v7144
        %v7657 = vpack.c.b16 %v7149, %v7145
        %v7658 = vpack.c.b16 %v7150, %v7146
        %v7659 = vpack.c.b16 %v7155, %v7151
        %v7660 = vpack.c.b16 %v7156, %v7152
        %v7661 = vpack.c.b16 %v7157, %v7153
        %v7662 = vpack.c.b16 %v7158, %v7154
        %v7663 = vpack.c.b16 %v7163, %v7159
        %v7664 = vpack.c.b16 %v7164, %v7160
        %v7665 = vpack.c.b16 %v7165, %v7161
        %v7666 = vpack.c.b16 %v7166, %v7162
        %v7667 = vpack.c.b16 %v7171, %v7167
        %v7668 = vpack.c.b16 %v7172, %v7168
        %v7669 = vpack.c.b16 %v7173, %v7169
        %v7670 = vpack.c.b16 %v7174, %v7170
        %v7671 = vpack.c.b16 %v7179, %v7175
        %v7672 = vpack.c.b16 %v7180, %v7176
        %v7673 = vpack.c.b16 %v7181, %v7177
        %v7674 = vpack.c.b16 %v7182, %v7178
        %v7675 = vpack.c.b16 %v7187, %v7183
        %v7676 = vpack.c.b16 %v7188, %v7184
        %v7677 = vpack.c.b16 %v7189, %v7185
        %v7678 = vpack.c.b16 %v7190, %v7186
        %v7679 = vpack.c.b16 %v7195, %v7191
        %v7680 = vpack.c.b16 %v7196, %v7192
        %v7681 = vpack.c.b16 %v7197, %v7193
        %v7682 = vpack.c.b16 %v7198, %v7194
        %v7683 = vpack.c.b16 %v7203, %v7199
        %v7684 = vpack.c.b16 %v7204, %v7200
        %v7685 = vpack.c.b16 %v7205, %v7201
        %v7686 = vpack.c.b16 %v7206, %v7202
        %v7687 = vpack.c.b16 %v7211, %v7207
        %v7688 = vpack.c.b16 %v7212, %v7208
        %v7689 = vpack.c.b16 %v7213, %v7209
        %v7690 = vpack.c.b16 %v7214, %v7210
        %v7691 = vpack.c.b16 %v7219, %v7215
        %v7692 = vpack.c.b16 %v7220, %v7216
        %v7693 = vpack.c.b16 %v7221, %v7217
        %v7694 = vpack.c.b16 %v7222, %v7218
        %v7695 = vpack.c.b16 %v7227, %v7223
        %v7696 = vpack.c.b16 %v7228, %v7224
        %v7697 = vpack.c.b16 %v7229, %v7225
        %v7698 = vpack.c.b16 %v7230, %v7226
        %v7699 = vpack.c.b16 %v7235, %v7231
        %v7700 = vpack.c.b16 %v7236, %v7232
        %v7701 = vpack.c.b16 %v7237, %v7233
        %v7702 = vpack.c.b16 %v7238, %v7234
        %v7703 = vpack.c.b16 %v7243, %v7239
        %v7704 = vpack.c.b16 %v7244, %v7240
        %v7705 = vpack.c.b16 %v7245, %v7241
        %v7706 = vpack.c.b16 %v7246, %v7242
        %v7707 = vpack.c.b16 %v7251, %v7247
        %v7708 = vpack.c.b16 %v7252, %v7248
        %v7709 = vpack.c.b16 %v7253, %v7249
        %v7710 = vpack.c.b16 %v7254, %v7250
        %v7711 = vpack.c.b16 %v7259, %v7255
        %v7712 = vpack.c.b16 %v7260, %v7256
        %v7713 = vpack.c.b16 %v7261, %v7257
        %v7714 = vpack.c.b16 %v7262, %v7258
        %v7715 = vpack.c.b16 %v7267, %v7263
        %v7716 = vpack.c.b16 %v7268, %v7264
        %v7717 = vpack.c.b16 %v7269, %v7265
        %v7718 = vpack.c.b16 %v7270, %v7266
        %v7719 = vpack.c.b16 %v7275, %v7271
        %v7720 = vpack.c.b16 %v7276, %v7272
        %v7721 = vpack.c.b16 %v7277, %v7273
        %v7722 = vpack.c.b16 %v7278, %v7274
        %v7723 = vpack.c.b16 %v7283, %v7279
        %v7724 = vpack.c.b16 %v7284, %v7280
        %v7725 = vpack.c.b16 %v7285, %v7281
        %v7726 = vpack.c.b16 %v7286, %v7282
        %v7727 = vpack.c.b16 %v7291, %v7287
        %v7728 = vpack.c.b16 %v7292, %v7288
        %v7729 = vpack.c.b16 %v7293, %v7289
        %v7730 = vpack.c.b16 %v7294, %v7290
        %v7731 = vpack.c.b16 %v7299, %v7295
        %v7732 = vpack.c.b16 %v7300, %v7296
        %v7733 = vpack.c.b16 %v7301, %v7297
        %v7734 = vpack.c.b16 %v7302, %v7298
        %v7735 = vpack.c.b16 %v7307, %v7303
        %v7736 = vpack.c.b16 %v7308, %v7304
        %v7737 = vpack.c.b16 %v7309, %v7305
        %v7738 = vpack.c.b16 %v7310, %v7306
        %v7739 = vpack.c.b16 %v7315, %v7311
        %v7740 = vpack.c.b16 %v7316, %v7312
        %v7741 = vpack.c.b16 %v7317, %v7313
        %v7742 = vpack.c.b16 %v7318, %v7314
        %v7743 = vpack.c.b16 %v7323, %v7319
        %v7744 = vpack.c.b16 %v7324, %v7320
        %v7745 = vpack.c.b16 %v7325, %v7321
        %v7746 = vpack.c.b16 %v7326, %v7322
        %v7747 = vpack.c.b16 %v7331, %v7327
        %v7748 = vpack.c.b16 %v7332, %v7328
        %v7749 = vpack.c.b16 %v7333, %v7329
        %v7750 = vpack.c.b16 %v7334, %v7330
        %v7751 = vpack.c.b16 %v7339, %v7335
        %v7752 = vpack.c.b16 %v7340, %v7336
        %v7753 = vpack.c.b16 %v7341, %v7337
        %v7754 = vpack.c.b16 %v7342, %v7338
        %v7755 = vpack.c.b16 %v7347, %v7343
        %v7756 = vpack.c.b16 %v7348, %v7344
        %v7757 = vpack.c.b16 %v7349, %v7345
        %v7758 = vpack.c.b16 %v7350, %v7346
        %v7759 = vpack.c.b16 %v7355, %v7351
        %v7760 = vpack.c.b16 %v7356, %v7352
        %v7761 = vpack.c.b16 %v7357, %v7353
        %v7762 = vpack.c.b16 %v7358, %v7354
        %v7763 = vpack.c.b16 %v7363, %v7359
        %v7764 = vpack.c.b16 %v7364, %v7360
        %v7765 = vpack.c.b16 %v7365, %v7361
        %v7766 = vpack.c.b16 %v7366, %v7362
        %v7767 = vpack.c.b16 %v7371, %v7367
        %v7768 = vpack.c.b16 %v7372, %v7368
        %v7769 = vpack.c.b16 %v7373, %v7369
        %v7770 = vpack.c.b16 %v7374, %v7370
        %v7771 = vpack.c.b16 %v7379, %v7375
        %v7772 = vpack.c.b16 %v7380, %v7376
        %v7773 = vpack.c.b16 %v7381, %v7377
        %v7774 = vpack.c.b16 %v7382, %v7378
        %v7775 = vpack.c.b16 %v7387, %v7383
        %v7776 = vpack.c.b16 %v7388, %v7384
        %v7777 = vpack.c.b16 %v7389, %v7385
        %v7778 = vpack.c.b16 %v7390, %v7386
        %v7779 = vpack.c.b16 %v7395, %v7391
        %v7780 = vpack.c.b16 %v7396, %v7392
        %v7781 = vpack.c.b16 %v7397, %v7393
        %v7782 = vpack.c.b16 %v7398, %v7394
        %v7783 = vpack.c.b16 %v7403, %v7399
        %v7784 = vpack.c.b16 %v7404, %v7400
        %v7785 = vpack.c.b16 %v7405, %v7401
        %v7786 = vpack.c.b16 %v7406, %v7402
        %v7787 = vpack.c.b16 %v7411, %v7407
        %v7788 = vpack.c.b16 %v7412, %v7408
        %v7789 = vpack.c.b16 %v7413, %v7409
        %v7790 = vpack.c.b16 %v7414, %v7410
        %v7791 = vpack.c.b16 %v7419, %v7415
        %v7792 = vpack.c.b16 %v7420, %v7416
        %v7793 = vpack.c.b16 %v7421, %v7417
        %v7794 = vpack.c.b16 %v7422, %v7418
        %v7795 = vpack.c.b16 %v7427, %v7423
        %v7796 = vpack.c.b16 %v7428, %v7424
        %v7797 = vpack.c.b16 %v7429, %v7425
        %v7798 = vpack.c.b16 %v7430, %v7426
        %v7799 = vpack.c.b16 %v7435, %v7431
        %v7800 = vpack.c.b16 %v7436, %v7432
        %v7801 = vpack.c.b16 %v7437, %v7433
        %v7802 = vpack.c.b16 %v7438, %v7434
        %v7803 = vpack.c.b16 %v7443, %v7439
        %v7804 = vpack.c.b16 %v7444, %v7440
        %v7805 = vpack.c.b16 %v7445, %v7441
        %v7806 = vpack.c.b16 %v7446, %v7442
        %v7807 = vpack.c.b16 %v7451, %v7447
        %v7808 = vpack.c.b16 %v7452, %v7448
        %v7809 = vpack.c.b16 %v7453, %v7449
        %v7810 = vpack.c.b16 %v7454, %v7450
        %v7811 = vpack.c.b16 %v7459, %v7455
        %v7812 = vpack.c.b16 %v7460, %v7456
        %v7813 = vpack.c.b16 %v7461, %v7457
        %v7814 = vpack.c.b16 %v7462, %v7458
        %v7815 = vpack.c.b16 %v7467, %v7463
        %v7816 = vpack.c.b16 %v7468, %v7464
        %v7817 = vpack.c.b16 %v7469, %v7465
        %v7818 = vpack.c.b16 %v7470, %v7466
        %v7819 = vpack.c.b16 %v7475, %v7471
        %v7820 = vpack.c.b16 %v7476, %v7472
        %v7821 = vpack.c.b16 %v7477, %v7473
        %v7822 = vpack.c.b16 %v7478, %v7474
        %v7823 = vpack.c.b16 %v7483, %v7479
        %v7824 = vpack.c.b16 %v7484, %v7480
        %v7825 = vpack.c.b16 %v7485, %v7481
        %v7826 = vpack.c.b16 %v7486, %v7482
        %v7827 = vpack.c.b16 %v7491, %v7487
        %v7828 = vpack.c.b16 %v7492, %v7488
        %v7829 = vpack.c.b16 %v7493, %v7489
        %v7830 = vpack.c.b16 %v7494, %v7490
        %v7831 = vpack.c.b16 %v7499, %v7495
        %v7832 = vpack.c.b16 %v7500, %v7496
        %v7833 = vpack.c.b16 %v7501, %v7497
        %v7834 = vpack.c.b16 %v7502, %v7498
        %v7835 = vpack.c.b16 %v7507, %v7503
        %v7836 = vpack.c.b16 %v7508, %v7504
        %v7837 = vpack.c.b16 %v7509, %v7505
        %v7838 = vpack.c.b16 %v7510, %v7506
        %v7839 = vpack.c.b16 %v7515, %v7511
        %v7840 = vpack.c.b16 %v7516, %v7512
        %v7841 = vpack.c.b16 %v7517, %v7513
        %v7842 = vpack.c.b16 %v7518, %v7514
        %v7843 = vpack.c.b16 %v7523, %v7519
        %v7844 = vpack.c.b16 %v7524, %v7520
        %v7845 = vpack.c.b16 %v7525, %v7521
        %v7846 = vpack.c.b16 %v7526, %v7522
        %v7847 = vpack.c.b16 %v7531, %v7527
        %v7848 = vpack.c.b16 %v7532, %v7528
        %v7849 = vpack.c.b16 %v7533, %v7529
        %v7850 = vpack.c.b16 %v7534, %v7530
        %v7851 = vpack.c.b16 %v7539, %v7535
        %v7852 = vpack.c.b16 %v7540, %v7536
        %v7853 = vpack.c.b16 %v7541, %v7537
        %v7854 = vpack.c.b16 %v7542, %v7538
        %v7855 = vpack.c.b16 %v7547, %v7543
        %v7856 = vpack.c.b16 %v7548, %v7544
        %v7857 = vpack.c.b16 %v7549, %v7545
        %v7858 = vpack.c.b16 %v7550, %v7546
        %v7859 = vpack.c.b16 %v7555, %v7551
        %v7860 = vpack.c.b16 %v7556, %v7552
        %v7861 = vpack.c.b16 %v7557, %v7553
        %v7862 = vpack.c.b16 %v7558, %v7554
        %v7863 = vpack.c.b16 %v7563, %v7559
        %v7864 = vpack.c.b16 %v7564, %v7560
        %v7865 = vpack.c.b16 %v7565, %v7561
        %v7866 = vpack.c.b16 %v7566, %v7562
        %v7867 = vpack.c.b16 %v7571, %v7567
        %v7868 = vpack.c.b16 %v7572, %v7568
        %v7869 = vpack.c.b16 %v7573, %v7569
        %v7870 = vpack.c.b16 %v7574, %v7570
        %v7871 = vpack.c.b16 %v7579, %v7575
        %v7872 = vpack.c.b16 %v7580, %v7576
        %v7873 = vpack.c.b16 %v7581, %v7577
        %v7874 = vpack.c.b16 %v7582, %v7578
        %v7875 = vpack.c.b16 %v7587, %v7583
        %v7876 = vpack.c.b16 %v7588, %v7584
        %v7877 = vpack.c.b16 %v7589, %v7585
        %v7878 = vpack.c.b16 %v7590, %v7586
        %v7879 = vpack.c.b16 %v7595, %v7591
        %v7880 = vpack.c.b16 %v7596, %v7592
        %v7881 = vpack.c.b16 %v7597, %v7593
        %v7882 = vpack.c.b16 %v7598, %v7594
        %v7883 = vpack.c.b16 %v7603, %v7599
        %v7884 = vpack.c.b16 %v7604, %v7600
        %v7885 = vpack.c.b16 %v7605, %v7601
        %v7886 = vpack.c.b16 %v7606, %v7602
        %v7887 = vpack.c.b16 %v7611, %v7607
        %v7888 = vpack.c.b16 %v7612, %v7608
        %v7889 = vpack.c.b16 %v7613, %v7609
        %v7890 = vpack.c.b16 %v7614, %v7610
        %v7891 = vpack.c.b16 %v7619, %v7615
        %v7892 = vpack.c.b16 %v7620, %v7616
        %v7893 = vpack.c.b16 %v7621, %v7617
        %v7894 = vpack.c.b16 %v7622, %v7618
        %v7895 = vpack.c.b16 %v7627, %v7623
        %v7896 = vpack.c.b16 %v7628, %v7624
        %v7897 = vpack.c.b16 %v7629, %v7625
        %v7898 = vpack.c.b16 %v7630, %v7626
        %v7899 = vpack.c.b16 %v7635, %v7631
        %v7900 = vpack.c.b16 %v7636, %v7632
        %v7901 = vpack.c.b16 %v7637, %v7633
        %v7902 = vpack.c.b16 %v7638, %v7634
        %v7903 = vpack.c.b16 %v7643, %v7639
        %v7904 = vpack.c.b16 %v7644, %v7640
        %v7905 = vpack.c.b16 %v7645, %v7641
        %v7906 = vpack.c.b16 %v7646, %v7642
        %v7907 = vpack.c.b16 %v7651, %v7647
        %v7908 = vpack.c.b16 %v7652, %v7648
        %v7909 = vpack.c.b16 %v7653, %v7649
        %v7910 = vpack.c.b16 %v7654, %v7650
        %v8168 = vlaneseq
        %v8169 = vshrl.u32 %v8168, 7
        %v8170 = vsub.s32 0, %v8169
        %v8171 = vrot.slane %v6886, %v8170
        %v8172 = vlaneseq
        %v8173 = vshrl.u32 %v8172, 7
        %v8174 = vsub.s32 1, %v8173
        %v8175 = vrot.slane %v6886, %v8174
        %v8176 = vlaneseq
        %v8177 = vshrl.u32 %v8176, 7
        %v8178 = vsub.s32 2, %v8177
        %v8179 = vrot.slane %v6886, %v8178
        %v8180 = vlaneseq
        %v8181 = vshrl.u32 %v8180, 7
        %v8182 = vsub.s32 3, %v8181
        %v8183 = vrot.slane %v6886, %v8182
        %8188 = vmatprep.subr.bf16.mxu0 %v7684
        %8189 = vmatpush1.bf16.msra.mxu0 %v7683
        %8190 = vmatprep.subr.bf16.mxu0 %v7680
        %8191 = vmatpush1.bf16.msra.mxu0 %v7679
        %8192 = vmatprep.subr.bf16.mxu0 %v7676
        %8193 = vmatpush1.bf16.msra.mxu0 %v7675
        %8194 = vmatprep.subr.bf16.mxu0 %v7672
        %8195 = vmatpush1.bf16.msra.mxu0 %v7671
        %8196 = vmatprep.subr.bf16.mxu0 %v7668
        %8197 = vmatpush1.bf16.msra.mxu0 %v7667
        %8198 = vmatprep.subr.bf16.mxu0 %v7664
        %8199 = vmatpush1.bf16.msra.mxu0 %v7663
        %8200 = vmatprep.subr.bf16.mxu0 %v7660
        %8201 = vmatpush1.bf16.msra.mxu0 %v7659
        %8202 = vmatprep.subr.bf16.mxu0 %v7656
        %8203 = vmatpush1.bf16.msra.mxu0 %v7655
        %8204 = vmatprep.subr.bf16.mxu0 %v7716
        %8205 = vmatpush2.bf16.msra.mxu0 %v7715
        %8206 = vmatprep.subr.bf16.mxu0 %v7712
        %8207 = vmatpush2.bf16.msra.mxu0 %v7711
        %8208 = vmatprep.subr.bf16.mxu0 %v7708
        %8209 = vmatpush2.bf16.msra.mxu0 %v7707
        %8210 = vmatprep.subr.bf16.mxu0 %v7704
        %8211 = vmatpush2.bf16.msra.mxu0 %v7703
        %8212 = vmatprep.subr.bf16.mxu0 %v7700
        %8213 = vmatpush2.bf16.msra.mxu0 %v7699
        %8214 = vmatprep.subr.bf16.mxu0 %v7696
        %8215 = vmatpush2.bf16.msra.mxu0 %v7695
        %8216 = vmatprep.subr.bf16.mxu0 %v7692
        %8217 = vmatpush2.bf16.msra.mxu0 %v7691
        %8218 = vmatprep.subr.bf16.mxu0 %v7688
        %8219 = vmatpush2.bf16.msra.mxu0 %v7687
        %8220 = vmatprep.mubr.bf16.mxu0 %v6623
        %8221 = vmatmul.mubr.bf16.gmra.mxu0 %v6622
        %v8222 = vpop.f32.mrf.mxu0
        %v8223 = vadd.f32 %v8171, %v8222
        %v8224 = vpop.f32.mrf.mxu0
        %v8225 = vadd.f32 %v8175, %v8224
        %v8226 = vpop.f32.mrf.mxu0
        %v8227 = vpop.f32.mrf.mxu0
        %8228 = vdwg.mxu0
        %8229 = vmatprep.subr.bf16.mxu0 %v7748
        %8230 = vmatpush1.bf16.msra.mxu0 %v7747
        %8231 = vmatprep.subr.bf16.mxu0 %v7744
        %8232 = vmatpush1.bf16.msra.mxu0 %v7743
        %8233 = vmatprep.subr.bf16.mxu0 %v7740
        %8234 = vmatpush1.bf16.msra.mxu0 %v7739
        %8235 = vmatprep.subr.bf16.mxu0 %v7736
        %8236 = vmatpush1.bf16.msra.mxu0 %v7735
        %8237 = vmatprep.subr.bf16.mxu0 %v7732
        %8238 = vmatpush1.bf16.msra.mxu0 %v7731
        %8239 = vmatprep.subr.bf16.mxu0 %v7728
        %8240 = vmatpush1.bf16.msra.mxu0 %v7727
        %8241 = vmatprep.subr.bf16.mxu0 %v7724
        %8242 = vmatpush1.bf16.msra.mxu0 %v7723
        %8243 = vmatprep.subr.bf16.mxu0 %v7720
        %8244 = vmatpush1.bf16.msra.mxu0 %v7719
        %8245 = vmatprep.subr.bf16.mxu0 %v7780
        %8246 = vmatpush2.bf16.msra.mxu0 %v7779
        %8247 = vmatprep.subr.bf16.mxu0 %v7776
        %8248 = vmatpush2.bf16.msra.mxu0 %v7775
        %8249 = vmatprep.subr.bf16.mxu0 %v7772
        %8250 = vmatpush2.bf16.msra.mxu0 %v7771
        %8251 = vmatprep.subr.bf16.mxu0 %v7768
        %8252 = vmatpush2.bf16.msra.mxu0 %v7767
        %8253 = vmatprep.subr.bf16.mxu0 %v7764
        %8254 = vmatpush2.bf16.msra.mxu0 %v7763
        %8255 = vmatprep.subr.bf16.mxu0 %v7760
        %8256 = vmatpush2.bf16.msra.mxu0 %v7759
        %8257 = vmatprep.subr.bf16.mxu0 %v7756
        %8258 = vmatpush2.bf16.msra.mxu0 %v7755
        %8259 = vmatprep.subr.bf16.mxu0 %v7752
        %8260 = vmatpush2.bf16.msra.mxu0 %v7751
        %8261 = vmatprep.mubr.bf16.mxu0 %v6625
        %8262 = vmatmul.mubr.bf16.gmra.mxu0 %v6624
        %v8263 = vpop.f32.mrf.mxu0
        %v8264 = vadd.f32 %v8223, %v8263
        %v8265 = vpop.f32.mrf.mxu0
        %v8266 = vadd.f32 %v8225, %v8265
        %v8267 = vpop.f32.mrf.mxu0
        %v8268 = vpop.f32.mrf.mxu0
        %8269 = vdwg.mxu0
        %8270 = vmatprep.subr.bf16.mxu0 %v7812
        %8271 = vmatpush1.bf16.msra.mxu0 %v7811
        %8272 = vmatprep.subr.bf16.mxu0 %v7808
        %8273 = vmatpush1.bf16.msra.mxu0 %v7807
        %8274 = vmatprep.subr.bf16.mxu0 %v7804
        %8275 = vmatpush1.bf16.msra.mxu0 %v7803
        %8276 = vmatprep.subr.bf16.mxu0 %v7800
        %8277 = vmatpush1.bf16.msra.mxu0 %v7799
        %8278 = vmatprep.subr.bf16.mxu0 %v7796
        %8279 = vmatpush1.bf16.msra.mxu0 %v7795
        %8280 = vmatprep.subr.bf16.mxu0 %v7792
        %8281 = vmatpush1.bf16.msra.mxu0 %v7791
        %8282 = vmatprep.subr.bf16.mxu0 %v7788
        %8283 = vmatpush1.bf16.msra.mxu0 %v7787
        %8284 = vmatprep.subr.bf16.mxu0 %v7784
        %8285 = vmatpush1.bf16.msra.mxu0 %v7783
        %8286 = vmatprep.subr.bf16.mxu0 %v7844
        %8287 = vmatpush2.bf16.msra.mxu0 %v7843
        %8288 = vmatprep.subr.bf16.mxu0 %v7840
        %8289 = vmatpush2.bf16.msra.mxu0 %v7839
        %8290 = vmatprep.subr.bf16.mxu0 %v7836
        %8291 = vmatpush2.bf16.msra.mxu0 %v7835
        %8292 = vmatprep.subr.bf16.mxu0 %v7832
        %8293 = vmatpush2.bf16.msra.mxu0 %v7831
        %8294 = vmatprep.subr.bf16.mxu0 %v7828
        %8295 = vmatpush2.bf16.msra.mxu0 %v7827
        %8296 = vmatprep.subr.bf16.mxu0 %v7824
        %8297 = vmatpush2.bf16.msra.mxu0 %v7823
        %8298 = vmatprep.subr.bf16.mxu0 %v7820
        %8299 = vmatpush2.bf16.msra.mxu0 %v7819
        %8300 = vmatprep.subr.bf16.mxu0 %v7816
        %8301 = vmatpush2.bf16.msra.mxu0 %v7815
        %8302 = vmatprep.mubr.bf16.mxu0 %v6627
        %8303 = vmatmul.mubr.bf16.gmra.mxu0 %v6626
        %v8304 = vpop.f32.mrf.mxu0
        %v8305 = vadd.f32 %v8264, %v8304
        %v8306 = vpop.f32.mrf.mxu0
        %v8307 = vadd.f32 %v8266, %v8306
        %v8308 = vpop.f32.mrf.mxu0
        %v8309 = vpop.f32.mrf.mxu0
        %8310 = vdwg.mxu0
        %8311 = vmatprep.subr.bf16.mxu0 %v7876
        %8312 = vmatpush1.bf16.msra.mxu0 %v7875
        %8313 = vmatprep.subr.bf16.mxu0 %v7872
        %8314 = vmatpush1.bf16.msra.mxu0 %v7871
        %8315 = vmatprep.subr.bf16.mxu0 %v7868
        %8316 = vmatpush1.bf16.msra.mxu0 %v7867
        %8317 = vmatprep.subr.bf16.mxu0 %v7864
        %8318 = vmatpush1.bf16.msra.mxu0 %v7863
        %8319 = vmatprep.subr.bf16.mxu0 %v7860
        %8320 = vmatpush1.bf16.msra.mxu0 %v7859
        %8321 = vmatprep.subr.bf16.mxu0 %v7856
        %8322 = vmatpush1.bf16.msra.mxu0 %v7855
        %8323 = vmatprep.subr.bf16.mxu0 %v7852
        %8324 = vmatpush1.bf16.msra.mxu0 %v7851
        %8325 = vmatprep.subr.bf16.mxu0 %v7848
        %8326 = vmatpush1.bf16.msra.mxu0 %v7847
        %8327 = vmatprep.subr.bf16.mxu0 %v7908
        %8328 = vmatpush2.bf16.msra.mxu0 %v7907
        %8329 = vmatprep.subr.bf16.mxu0 %v7904
        %8330 = vmatpush2.bf16.msra.mxu0 %v7903
        %8331 = vmatprep.subr.bf16.mxu0 %v7900
        %8332 = vmatpush2.bf16.msra.mxu0 %v7899
        %8333 = vmatprep.subr.bf16.mxu0 %v7896
        %8334 = vmatpush2.bf16.msra.mxu0 %v7895
        %8335 = vmatprep.subr.bf16.mxu0 %v7892
        %8336 = vmatpush2.bf16.msra.mxu0 %v7891
        %8337 = vmatprep.subr.bf16.mxu0 %v7888
        %8338 = vmatpush2.bf16.msra.mxu0 %v7887
        %8339 = vmatprep.subr.bf16.mxu0 %v7884
        %8340 = vmatpush2.bf16.msra.mxu0 %v7883
        %8341 = vmatprep.subr.bf16.mxu0 %v7880
        %8342 = vmatpush2.bf16.msra.mxu0 %v7879
        %8343 = vmatprep.mubr.bf16.mxu0 %v6629
        %8344 = vmatmul.mubr.bf16.gmra.mxu0 %v6628
        %v8345 = vpop.f32.mrf.mxu0
        %v8346 = vadd.f32 %v8305, %v8345
        %v8347 = vpop.f32.mrf.mxu0
        %v8348 = vadd.f32 %v8307, %v8347
        %v8349 = vpop.f32.mrf.mxu0
        %v8350 = vpop.f32.mrf.mxu0
        %8351 = vdwg.mxu0
        %8352 = vmatprep.subr.bf16.mxu0 %v7686
        %8353 = vmatpush1.bf16.msra.mxu0 %v7685
        %8354 = vmatprep.subr.bf16.mxu0 %v7682
        %8355 = vmatpush1.bf16.msra.mxu0 %v7681
        %8356 = vmatprep.subr.bf16.mxu0 %v7678
        %8357 = vmatpush1.bf16.msra.mxu0 %v7677
        %8358 = vmatprep.subr.bf16.mxu0 %v7674
        %8359 = vmatpush1.bf16.msra.mxu0 %v7673
        %8360 = vmatprep.subr.bf16.mxu0 %v7670
        %8361 = vmatpush1.bf16.msra.mxu0 %v7669
        %8362 = vmatprep.subr.bf16.mxu0 %v7666
        %8363 = vmatpush1.bf16.msra.mxu0 %v7665
        %8364 = vmatprep.subr.bf16.mxu0 %v7662
        %8365 = vmatpush1.bf16.msra.mxu0 %v7661
        %8366 = vmatprep.subr.bf16.mxu0 %v7658
        %8367 = vmatpush1.bf16.msra.mxu0 %v7657
        %8368 = vmatprep.subr.bf16.mxu0 %v7718
        %8369 = vmatpush2.bf16.msra.mxu0 %v7717
        %8370 = vmatprep.subr.bf16.mxu0 %v7714
        %8371 = vmatpush2.bf16.msra.mxu0 %v7713
        %8372 = vmatprep.subr.bf16.mxu0 %v7710
        %8373 = vmatpush2.bf16.msra.mxu0 %v7709
        %8374 = vmatprep.subr.bf16.mxu0 %v7706
        %8375 = vmatpush2.bf16.msra.mxu0 %v7705
        %8376 = vmatprep.subr.bf16.mxu0 %v7702
        %8377 = vmatpush2.bf16.msra.mxu0 %v7701
        %8378 = vmatprep.subr.bf16.mxu0 %v7698
        %8379 = vmatpush2.bf16.msra.mxu0 %v7697
        %8380 = vmatprep.subr.bf16.mxu0 %v7694
        %8381 = vmatpush2.bf16.msra.mxu0 %v7693
        %8382 = vmatprep.subr.bf16.mxu0 %v7690
        %8383 = vmatpush2.bf16.msra.mxu0 %v7689
        %8384 = vmatprep.mubr.bf16.mxu0 %v6623
        %8385 = vmatmul.mubr.bf16.gmra.mxu0 %v6622
        %v8386 = vpop.f32.mrf.mxu0
        %v8387 = vadd.f32 %v8179, %v8386
        %v8388 = vpop.f32.mrf.mxu0
        %v8389 = vadd.f32 %v8183, %v8388
        %v8390 = vpop.f32.mrf.mxu0
        %v8391 = vpop.f32.mrf.mxu0
        %8392 = vdwg.mxu0
        %8393 = vmatprep.subr.bf16.mxu0 %v7750
        %8394 = vmatpush1.bf16.msra.mxu0 %v7749
        %8395 = vmatprep.subr.bf16.mxu0 %v7746
        %8396 = vmatpush1.bf16.msra.mxu0 %v7745
        %8397 = vmatprep.subr.bf16.mxu0 %v7742
        %8398 = vmatpush1.bf16.msra.mxu0 %v7741
        %8399 = vmatprep.subr.bf16.mxu0 %v7738
        %8400 = vmatpush1.bf16.msra.mxu0 %v7737
        %8401 = vmatprep.subr.bf16.mxu0 %v7734
        %8402 = vmatpush1.bf16.msra.mxu0 %v7733
        %8403 = vmatprep.subr.bf16.mxu0 %v7730
        %8404 = vmatpush1.bf16.msra.mxu0 %v7729
        %8405 = vmatprep.subr.bf16.mxu0 %v7726
        %8406 = vmatpush1.bf16.msra.mxu0 %v7725
        %8407 = vmatprep.subr.bf16.mxu0 %v7722
        %8408 = vmatpush1.bf16.msra.mxu0 %v7721
        %8409 = vmatprep.subr.bf16.mxu0 %v7782
        %8410 = vmatpush2.bf16.msra.mxu0 %v7781
        %8411 = vmatprep.subr.bf16.mxu0 %v7778
        %8412 = vmatpush2.bf16.msra.mxu0 %v7777
        %8413 = vmatprep.subr.bf16.mxu0 %v7774
        %8414 = vmatpush2.bf16.msra.mxu0 %v7773
        %8415 = vmatprep.subr.bf16.mxu0 %v7770
        %8416 = vmatpush2.bf16.msra.mxu0 %v7769
        %8417 = vmatprep.subr.bf16.mxu0 %v7766
        %8418 = vmatpush2.bf16.msra.mxu0 %v7765
        %8419 = vmatprep.subr.bf16.mxu0 %v7762
        %8420 = vmatpush2.bf16.msra.mxu0 %v7761
        %8421 = vmatprep.subr.bf16.mxu0 %v7758
        %8422 = vmatpush2.bf16.msra.mxu0 %v7757
        %8423 = vmatprep.subr.bf16.mxu0 %v7754
        %8424 = vmatpush2.bf16.msra.mxu0 %v7753
        %8425 = vmatprep.mubr.bf16.mxu0 %v6625
        %8426 = vmatmul.mubr.bf16.gmra.mxu0 %v6624
        %v8427 = vpop.f32.mrf.mxu0
        %v8428 = vadd.f32 %v8387, %v8427
        %v8429 = vpop.f32.mrf.mxu0
        %v8430 = vadd.f32 %v8389, %v8429
        %v8431 = vpop.f32.mrf.mxu0
        %v8432 = vpop.f32.mrf.mxu0
        %8433 = vdwg.mxu0
        %8434 = vmatprep.subr.bf16.mxu0 %v7814
        %8435 = vmatpush1.bf16.msra.mxu0 %v7813
        %8436 = vmatprep.subr.bf16.mxu0 %v7810
        %8437 = vmatpush1.bf16.msra.mxu0 %v7809
        %8438 = vmatprep.subr.bf16.mxu0 %v7806
        %8439 = vmatpush1.bf16.msra.mxu0 %v7805
        %8440 = vmatprep.subr.bf16.mxu0 %v7802
        %8441 = vmatpush1.bf16.msra.mxu0 %v7801
        %8442 = vmatprep.subr.bf16.mxu0 %v7798
        %8443 = vmatpush1.bf16.msra.mxu0 %v7797
        %8444 = vmatprep.subr.bf16.mxu0 %v7794
        %8445 = vmatpush1.bf16.msra.mxu0 %v7793
        %8446 = vmatprep.subr.bf16.mxu0 %v7790
        %8447 = vmatpush1.bf16.msra.mxu0 %v7789
        %8448 = vmatprep.subr.bf16.mxu0 %v7786
        %8449 = vmatpush1.bf16.msra.mxu0 %v7785
        %8450 = vmatprep.subr.bf16.mxu0 %v7846
        %8451 = vmatpush2.bf16.msra.mxu0 %v7845
        %8452 = vmatprep.subr.bf16.mxu0 %v7842
        %8453 = vmatpush2.bf16.msra.mxu0 %v7841
        %8454 = vmatprep.subr.bf16.mxu0 %v7838
        %8455 = vmatpush2.bf16.msra.mxu0 %v7837
        %8456 = vmatprep.subr.bf16.mxu0 %v7834
        %8457 = vmatpush2.bf16.msra.mxu0 %v7833
        %8458 = vmatprep.subr.bf16.mxu0 %v7830
        %8459 = vmatpush2.bf16.msra.mxu0 %v7829
        %8460 = vmatprep.subr.bf16.mxu0 %v7826
        %8461 = vmatpush2.bf16.msra.mxu0 %v7825
        %8462 = vmatprep.subr.bf16.mxu0 %v7822
        %8463 = vmatpush2.bf16.msra.mxu0 %v7821
        %8464 = vmatprep.subr.bf16.mxu0 %v7818
        %8465 = vmatpush2.bf16.msra.mxu0 %v7817
        %8466 = vmatprep.mubr.bf16.mxu0 %v6627
        %8467 = vmatmul.mubr.bf16.gmra.mxu0 %v6626
        %v8468 = vpop.f32.mrf.mxu0
        %v8469 = vadd.f32 %v8428, %v8468
        %v8470 = vpop.f32.mrf.mxu0
        %v8471 = vadd.f32 %v8430, %v8470
        %v8472 = vpop.f32.mrf.mxu0
        %v8473 = vpop.f32.mrf.mxu0
        %8474 = vdwg.mxu0
        %8475 = vmatprep.subr.bf16.mxu0 %v7878
        %8476 = vmatpush1.bf16.msra.mxu0 %v7877
        %8477 = vmatprep.subr.bf16.mxu0 %v7874
        %8478 = vmatpush1.bf16.msra.mxu0 %v7873
        %8479 = vmatprep.subr.bf16.mxu0 %v7870
        %8480 = vmatpush1.bf16.msra.mxu0 %v7869
        %8481 = vmatprep.subr.bf16.mxu0 %v7866
        %8482 = vmatpush1.bf16.msra.mxu0 %v7865
        %8483 = vmatprep.subr.bf16.mxu0 %v7862
        %8484 = vmatpush1.bf16.msra.mxu0 %v7861
        %8485 = vmatprep.subr.bf16.mxu0 %v7858
        %8486 = vmatpush1.bf16.msra.mxu0 %v7857
        %8487 = vmatprep.subr.bf16.mxu0 %v7854
        %8488 = vmatpush1.bf16.msra.mxu0 %v7853
        %8489 = vmatprep.subr.bf16.mxu0 %v7850
        %8490 = vmatpush1.bf16.msra.mxu0 %v7849
        %8491 = vmatprep.subr.bf16.mxu0 %v7910
        %8492 = vmatpush2.bf16.msra.mxu0 %v7909
        %8493 = vmatprep.subr.bf16.mxu0 %v7906
        %8494 = vmatpush2.bf16.msra.mxu0 %v7905
        %8495 = vmatprep.subr.bf16.mxu0 %v7902
        %8496 = vmatpush2.bf16.msra.mxu0 %v7901
        %8497 = vmatprep.subr.bf16.mxu0 %v7898
        %8498 = vmatpush2.bf16.msra.mxu0 %v7897
        %8499 = vmatprep.subr.bf16.mxu0 %v7894
        %8500 = vmatpush2.bf16.msra.mxu0 %v7893
        %8501 = vmatprep.subr.bf16.mxu0 %v7890
        %8502 = vmatpush2.bf16.msra.mxu0 %v7889
        %8503 = vmatprep.subr.bf16.mxu0 %v7886
        %8504 = vmatpush2.bf16.msra.mxu0 %v7885
        %8505 = vmatprep.subr.bf16.mxu0 %v7882
        %8506 = vmatpush2.bf16.msra.mxu0 %v7881
        %8507 = vmatprep.mubr.bf16.mxu0 %v6629
        %8508 = vmatmul.mubr.bf16.gmra.mxu0 %v6628
        %v8509 = vpop.f32.mrf.mxu0
        %v8510 = vadd.f32 %v8469, %v8509
        %v8511 = vpop.f32.mrf.mxu0
        %v8512 = vadd.f32 %v8471, %v8511
        %v8513 = vpop.f32.mrf.mxu0
        %v8514 = vpop.f32.mrf.mxu0
        %8515 = vdwg.mxu0
        %v8516 = vld [vmem:[%s41] sm:$0xff]
        %v8517 = vld [vmem:[%s41 + $0x8] sm:$0xff]
        %v8518 = vld [vmem:[%s41 + $0x10] sm:$0xff]
        %v8519 = vld [vmem:[%s41 + $0x18] sm:$0xff]
        %v8520 = vld [vmem:[%s41 + $0x20] sm:$0xff]
        %v8521 = vld [vmem:[%s41 + $0x28] sm:$0xff]
        %v8522 = vld [vmem:[%s41 + $0x30] sm:$0xff]
        %v8523 = vld [vmem:[%s41 + $0x38] sm:$0xff]
        %v8524 = vld [vmem:[%s41 + $0x40] sm:$0xff]
        %v8525 = vld [vmem:[%s41 + $0x48] sm:$0xff]
        %v8526 = vld [vmem:[%s41 + $0x50] sm:$0xff]
        %v8527 = vld [vmem:[%s41 + $0x58] sm:$0xff]
        %v8528 = vld [vmem:[%s41 + $0x60] sm:$0xff]
        %v8529 = vld [vmem:[%s41 + $0x68] sm:$0xff]
        %v8530 = vld [vmem:[%s41 + $0x70] sm:$0xff]
        %v8531 = vld [vmem:[%s41 + $0x78] sm:$0xff]
        %v8532 = vlaneseq
        %v8533 = vshrl.u32 %v8532, 7
        %v8534 = vsub.s32 0, %v8533
        %v8535 = vrot.slane %v8346, %v8534
        %v8536 = vlaneseq
        %v8537 = vshrl.u32 %v8536, 7
        %v8538 = vsub.s32 0, %v8537
        %v8539 = vrot.slane %v8348, %v8538
        %v8540 = vlaneseq
        %v8541 = vshrl.u32 %v8540, 7
        %v8542 = vsub.s32 0, %v8541
        %v8543 = vrot.slane %v8510, %v8542
        %v8544 = vlaneseq
        %v8545 = vshrl.u32 %v8544, 7
        %v8546 = vsub.s32 0, %v8545
        %v8547 = vrot.slane %v8512, %v8546
        %v8564 = vunpack.c.l.b16 %v8516
        %v8565 = vunpack.c.h.b16 %v8516
        %v8566 = vunpack.c.l.b16 %v8517
        %v8567 = vunpack.c.h.b16 %v8517
        %v8568 = vunpack.c.l.b16 %v8518
        %v8569 = vunpack.c.h.b16 %v8518
        %v8570 = vunpack.c.l.b16 %v8519
        %v8571 = vunpack.c.h.b16 %v8519
        %v8572 = vunpack.c.l.b16 %v8520
        %v8573 = vunpack.c.h.b16 %v8520
        %v8574 = vunpack.c.l.b16 %v8521
        %v8575 = vunpack.c.h.b16 %v8521
        %v8576 = vunpack.c.l.b16 %v8522
        %v8577 = vunpack.c.h.b16 %v8522
        %v8578 = vunpack.c.l.b16 %v8523
        %v8579 = vunpack.c.h.b16 %v8523
        %v8580 = vunpack.c.l.b16 %v8524
        %v8581 = vunpack.c.h.b16 %v8524
        %v8582 = vunpack.c.l.b16 %v8525
        %v8583 = vunpack.c.h.b16 %v8525
        %v8584 = vunpack.c.l.b16 %v8526
        %v8585 = vunpack.c.h.b16 %v8526
        %v8586 = vunpack.c.l.b16 %v8527
        %v8587 = vunpack.c.h.b16 %v8527
        %v8588 = vunpack.c.l.b16 %v8528
        %v8589 = vunpack.c.h.b16 %v8528
        %v8590 = vunpack.c.l.b16 %v8529
        %v8591 = vunpack.c.h.b16 %v8529
        %v8592 = vunpack.c.l.b16 %v8530
        %v8593 = vunpack.c.h.b16 %v8530
        %v8594 = vunpack.c.l.b16 %v8531
        %v8595 = vunpack.c.h.b16 %v8531
        %v8596 = vpack.c.b16 %v8568, %v8564
        %v8597 = vpack.c.b16 %v8569, %v8565
        %v8598 = vpack.c.b16 %v8570, %v8566
        %v8599 = vpack.c.b16 %v8571, %v8567
        %v8600 = vpack.c.b16 %v8576, %v8572
        %v8601 = vpack.c.b16 %v8577, %v8573
        %v8602 = vpack.c.b16 %v8578, %v8574
        %v8603 = vpack.c.b16 %v8579, %v8575
        %v8604 = vpack.c.b16 %v8584, %v8580
        %v8605 = vpack.c.b16 %v8585, %v8581
        %v8606 = vpack.c.b16 %v8586, %v8582
        %v8607 = vpack.c.b16 %v8587, %v8583
        %v8608 = vpack.c.b16 %v8592, %v8588
        %v8609 = vpack.c.b16 %v8593, %v8589
        %v8610 = vpack.c.b16 %v8594, %v8590
        %v8611 = vpack.c.b16 %v8595, %v8591
        %8628 = vmatprep.subr.bf16.mxu0 0
        %8629 = vmatpush1.bf16.msra.mxu0 0
        %8630 = vmatprep.subr.bf16.mxu0 0
        %8631 = vmatpush1.bf16.msra.mxu0 0
        %8632 = vmatprep.subr.bf16.mxu0 0
        %8633 = vmatpush1.bf16.msra.mxu0 0
        %8634 = vmatprep.subr.bf16.mxu0 0
        %8635 = vmatpush1.bf16.msra.mxu0 0
        %8636 = vmatprep.subr.bf16.mxu0 %v8609
        %8637 = vmatpush1.bf16.msra.mxu0 %v8608
        %8638 = vmatprep.subr.bf16.mxu0 %v8605
        %8639 = vmatpush1.bf16.msra.mxu0 %v8604
        %8640 = vmatprep.subr.bf16.mxu0 %v8601
        %8641 = vmatpush1.bf16.msra.mxu0 %v8600
        %8642 = vmatprep.subr.bf16.mxu0 %v8597
        %8643 = vmatpush1.bf16.msra.mxu0 %v8596
        %8644 = vmatprep.subr.bf16.mxu0 0
        %8645 = vmatpush2.bf16.msra.mxu0 0
        %8646 = vmatprep.subr.bf16.mxu0 0
        %8647 = vmatpush2.bf16.msra.mxu0 0
        %8648 = vmatprep.subr.bf16.mxu0 0
        %8649 = vmatpush2.bf16.msra.mxu0 0
        %8650 = vmatprep.subr.bf16.mxu0 0
        %8651 = vmatpush2.bf16.msra.mxu0 0
        %8652 = vmatprep.subr.bf16.mxu0 0
        %8653 = vmatpush2.bf16.msra.mxu0 0
        %8654 = vmatprep.subr.bf16.mxu0 0
        %8655 = vmatpush2.bf16.msra.mxu0 0
        %8656 = vmatprep.subr.bf16.mxu0 0
        %8657 = vmatpush2.bf16.msra.mxu0 0
        %8658 = vmatprep.subr.bf16.mxu0 0
        %8659 = vmatpush2.bf16.msra.mxu0 0
        %8660 = vmatprep.mubr.bf16.mxu0 0
        %8661 = vmatmul.mubr.bf16.gmra.mxu0 %v5432
        %v8662 = vpop.f32.mrf.mxu0
        %v8663 = vadd.f32 %v8535, %v8662
        %v8664 = vpop.f32.mrf.mxu0
        %v8665 = vadd.f32 %v8539, %v8664
        %v8666 = vpop.f32.mrf.mxu0
        %v8667 = vadd.f32 %v8535, %v8666
        %v8668 = vpop.f32.mrf.mxu0
        %v8669 = vadd.f32 %v8539, %v8668
        %8670 = vmatprep.mubr.bf16.mxu0 0
        %8671 = vmatmul.mubr.bf16.gmra.mxu0 %v5435
        %v8672 = vpop.f32.mrf.mxu0
        %v8673 = vadd.f32 %v8535, %v8672
        %v8674 = vpop.f32.mrf.mxu0
        %v8675 = vadd.f32 %v8539, %v8674
        %v8676 = vpop.f32.mrf.mxu0
        %v8677 = vadd.f32 %v8535, %v8676
        %v8678 = vpop.f32.mrf.mxu0
        %v8679 = vadd.f32 %v8539, %v8678
        %8680 = vmatprep.mubr.bf16.mxu0 0
        %8681 = vmatmul.mubr.bf16.gmra.mxu0 %v5438
        %v8682 = vpop.f32.mrf.mxu0
        %v8683 = vadd.f32 %v8535, %v8682
        %v8684 = vpop.f32.mrf.mxu0
        %v8685 = vadd.f32 %v8539, %v8684
        %v8686 = vpop.f32.mrf.mxu0
        %v8687 = vadd.f32 %v8535, %v8686
        %v8688 = vpop.f32.mrf.mxu0
        %v8689 = vadd.f32 %v8539, %v8688
        %8690 = vmatprep.mubr.bf16.mxu0 0
        %8691 = vmatmul.mubr.bf16.gmra.mxu0 %v5441
        %v8692 = vpop.f32.mrf.mxu0
        %v8693 = vadd.f32 %v8535, %v8692
        %v8694 = vpop.f32.mrf.mxu0
        %v8695 = vadd.f32 %v8539, %v8694
        %v8696 = vpop.f32.mrf.mxu0
        %v8697 = vadd.f32 %v8535, %v8696
        %v8698 = vpop.f32.mrf.mxu0
        %v8699 = vadd.f32 %v8539, %v8698
        %8700 = vmatprep.mubr.bf16.mxu0 0
        %8701 = vmatmul.mubr.bf16.gmra.mxu0 %v5444
        %v8702 = vpop.f32.mrf.mxu0
        %v8703 = vadd.f32 %v8535, %v8702
        %v8704 = vpop.f32.mrf.mxu0
        %v8705 = vadd.f32 %v8539, %v8704
        %v8706 = vpop.f32.mrf.mxu0
        %v8707 = vadd.f32 %v8535, %v8706
        %v8708 = vpop.f32.mrf.mxu0
        %v8709 = vadd.f32 %v8539, %v8708
        %8710 = vmatprep.mubr.bf16.mxu0 0
        %8711 = vmatmul.mubr.bf16.gmra.mxu0 %v5447
        %v8712 = vpop.f32.mrf.mxu0
        %v8713 = vadd.f32 %v8535, %v8712
        %v8714 = vpop.f32.mrf.mxu0
        %v8715 = vadd.f32 %v8539, %v8714
        %v8716 = vpop.f32.mrf.mxu0
        %v8717 = vadd.f32 %v8535, %v8716
        %v8718 = vpop.f32.mrf.mxu0
        %v8719 = vadd.f32 %v8539, %v8718
        %8720 = vmatprep.mubr.bf16.mxu0 0
        %8721 = vmatmul.mubr.bf16.gmra.mxu0 %v5450
        %v8722 = vpop.f32.mrf.mxu0
        %v8723 = vadd.f32 %v8535, %v8722
        %v8724 = vpop.f32.mrf.mxu0
        %v8725 = vadd.f32 %v8539, %v8724
        %v8726 = vpop.f32.mrf.mxu0
        %v8727 = vadd.f32 %v8535, %v8726
        %v8728 = vpop.f32.mrf.mxu0
        %v8729 = vadd.f32 %v8539, %v8728
        %8730 = vmatprep.mubr.bf16.mxu0 0
        %8731 = vmatmul.mubr.bf16.gmra.mxu0 %v5453
        %v8732 = vpop.f32.mrf.mxu0
        %v8733 = vadd.f32 %v8535, %v8732
        %v8734 = vpop.f32.mrf.mxu0
        %v8735 = vadd.f32 %v8539, %v8734
        %v8736 = vpop.f32.mrf.mxu0
        %v8737 = vadd.f32 %v8535, %v8736
        %v8738 = vpop.f32.mrf.mxu0
        %v8739 = vadd.f32 %v8539, %v8738
        %8740 = vdwg.mxu0
        %8741 = vmatprep.subr.bf16.mxu0 0
        %8742 = vmatpush1.bf16.msra.mxu0 0
        %8743 = vmatprep.subr.bf16.mxu0 0
        %8744 = vmatpush1.bf16.msra.mxu0 0
        %8745 = vmatprep.subr.bf16.mxu0 0
        %8746 = vmatpush1.bf16.msra.mxu0 0
        %8747 = vmatprep.subr.bf16.mxu0 0
        %8748 = vmatpush1.bf16.msra.mxu0 0
        %8749 = vmatprep.subr.bf16.mxu0 %v8611
        %8750 = vmatpush1.bf16.msra.mxu0 %v8610
        %8751 = vmatprep.subr.bf16.mxu0 %v8607
        %8752 = vmatpush1.bf16.msra.mxu0 %v8606
        %8753 = vmatprep.subr.bf16.mxu0 %v8603
        %8754 = vmatpush1.bf16.msra.mxu0 %v8602
        %8755 = vmatprep.subr.bf16.mxu0 %v8599
        %8756 = vmatpush1.bf16.msra.mxu0 %v8598
        %8757 = vmatprep.subr.bf16.mxu0 0
        %8758 = vmatpush2.bf16.msra.mxu0 0
        %8759 = vmatprep.subr.bf16.mxu0 0
        %8760 = vmatpush2.bf16.msra.mxu0 0
        %8761 = vmatprep.subr.bf16.mxu0 0
        %8762 = vmatpush2.bf16.msra.mxu0 0
        %8763 = vmatprep.subr.bf16.mxu0 0
        %8764 = vmatpush2.bf16.msra.mxu0 0
        %8765 = vmatprep.subr.bf16.mxu0 0
        %8766 = vmatpush2.bf16.msra.mxu0 0
        %8767 = vmatprep.subr.bf16.mxu0 0
        %8768 = vmatpush2.bf16.msra.mxu0 0
        %8769 = vmatprep.subr.bf16.mxu0 0
        %8770 = vmatpush2.bf16.msra.mxu0 0
        %8771 = vmatprep.subr.bf16.mxu0 0
        %8772 = vmatpush2.bf16.msra.mxu0 0
        %8773 = vmatprep.mubr.bf16.mxu0 0
        %8774 = vmatmul.mubr.bf16.gmra.mxu0 %v5432
        %v8775 = vpop.f32.mrf.mxu0
        %v8776 = vadd.f32 %v8543, %v8775
        %v8777 = vpop.f32.mrf.mxu0
        %v8778 = vadd.f32 %v8547, %v8777
        %v8779 = vpop.f32.mrf.mxu0
        %v8780 = vadd.f32 %v8543, %v8779
        %v8781 = vpop.f32.mrf.mxu0
        %v8782 = vadd.f32 %v8547, %v8781
        %8783 = vmatprep.mubr.bf16.mxu0 0
        %8784 = vmatmul.mubr.bf16.gmra.mxu0 %v5435
        %v8785 = vpop.f32.mrf.mxu0
        %v8786 = vadd.f32 %v8543, %v8785
        %v8787 = vpop.f32.mrf.mxu0
        %v8788 = vadd.f32 %v8547, %v8787
        %v8789 = vpop.f32.mrf.mxu0
        %v8790 = vadd.f32 %v8543, %v8789
        %v8791 = vpop.f32.mrf.mxu0
        %v8792 = vadd.f32 %v8547, %v8791
        %8793 = vmatprep.mubr.bf16.mxu0 0
        %8794 = vmatmul.mubr.bf16.gmra.mxu0 %v5438
        %v8795 = vpop.f32.mrf.mxu0
        %v8796 = vadd.f32 %v8543, %v8795
        %v8797 = vpop.f32.mrf.mxu0
        %v8798 = vadd.f32 %v8547, %v8797
        %v8799 = vpop.f32.mrf.mxu0
        %v8800 = vadd.f32 %v8543, %v8799
        %v8801 = vpop.f32.mrf.mxu0
        %v8802 = vadd.f32 %v8547, %v8801
        %8803 = vmatprep.mubr.bf16.mxu0 0
        %8804 = vmatmul.mubr.bf16.gmra.mxu0 %v5441
        %v8805 = vpop.f32.mrf.mxu0
        %v8806 = vadd.f32 %v8543, %v8805
        %v8807 = vpop.f32.mrf.mxu0
        %v8808 = vadd.f32 %v8547, %v8807
        %v8809 = vpop.f32.mrf.mxu0
        %v8810 = vadd.f32 %v8543, %v8809
        %v8811 = vpop.f32.mrf.mxu0
        %v8812 = vadd.f32 %v8547, %v8811
        %8813 = vmatprep.mubr.bf16.mxu0 0
        %8814 = vmatmul.mubr.bf16.gmra.mxu0 %v5444
        %v8815 = vpop.f32.mrf.mxu0
        %v8816 = vadd.f32 %v8543, %v8815
        %v8817 = vpop.f32.mrf.mxu0
        %v8818 = vadd.f32 %v8547, %v8817
        %v8819 = vpop.f32.mrf.mxu0
        %v8820 = vadd.f32 %v8543, %v8819
        %v8821 = vpop.f32.mrf.mxu0
        %v8822 = vadd.f32 %v8547, %v8821
        %8823 = vmatprep.mubr.bf16.mxu0 0
        %8824 = vmatmul.mubr.bf16.gmra.mxu0 %v5447
        %v8825 = vpop.f32.mrf.mxu0
        %v8826 = vadd.f32 %v8543, %v8825
        %v8827 = vpop.f32.mrf.mxu0
        %v8828 = vadd.f32 %v8547, %v8827
        %v8829 = vpop.f32.mrf.mxu0
        %v8830 = vadd.f32 %v8543, %v8829
        %v8831 = vpop.f32.mrf.mxu0
        %v8832 = vadd.f32 %v8547, %v8831
        %8833 = vmatprep.mubr.bf16.mxu0 0
        %8834 = vmatmul.mubr.bf16.gmra.mxu0 %v5450
        %v8835 = vpop.f32.mrf.mxu0
        %v8836 = vadd.f32 %v8543, %v8835
        %v8837 = vpop.f32.mrf.mxu0
        %v8838 = vadd.f32 %v8547, %v8837
        %v8839 = vpop.f32.mrf.mxu0
        %v8840 = vadd.f32 %v8543, %v8839
        %v8841 = vpop.f32.mrf.mxu0
        %v8842 = vadd.f32 %v8547, %v8841
        %8843 = vmatprep.mubr.bf16.mxu0 0
        %8844 = vmatmul.mubr.bf16.gmra.mxu0 %v5453
        %v8845 = vpop.f32.mrf.mxu0
        %v8846 = vadd.f32 %v8543, %v8845
        %v8847 = vpop.f32.mrf.mxu0
        %v8848 = vadd.f32 %v8547, %v8847
        %v8849 = vpop.f32.mrf.mxu0
        %v8850 = vadd.f32 %v8543, %v8849
        %v8851 = vpop.f32.mrf.mxu0
        %v8852 = vadd.f32 %v8547, %v8851
        %8853 = vdwg.mxu0
        %v8854 = vmax.f32 %v8663, 0.0
        %v8855 = vmax.f32 %v8665, 0.0
        %v8856 = vmax.f32 %v8776, 0.0
        %v8857 = vmax.f32 %v8778, 0.0
        %v8858 = vmax.f32 %v8667, 0.0
        %v8859 = vmax.f32 %v8669, 0.0
        %v8860 = vmax.f32 %v8780, 0.0
        %v8861 = vmax.f32 %v8782, 0.0
        %v8862 = vmax.f32 %v8673, 0.0
        %v8863 = vmax.f32 %v8675, 0.0
        %v8864 = vmax.f32 %v8786, 0.0
        %v8865 = vmax.f32 %v8788, 0.0
        %v8866 = vmax.f32 %v8677, 0.0
        %v8867 = vmax.f32 %v8679, 0.0
        %v8868 = vmax.f32 %v8790, 0.0
        %v8869 = vmax.f32 %v8792, 0.0
        %v8870 = vmax.f32 %v8683, 0.0
        %v8871 = vmax.f32 %v8685, 0.0
        %v8872 = vmax.f32 %v8796, 0.0
        %v8873 = vmax.f32 %v8798, 0.0
        %v8874 = vmax.f32 %v8687, 0.0
        %v8875 = vmax.f32 %v8689, 0.0
        %v8876 = vmax.f32 %v8800, 0.0
        %v8877 = vmax.f32 %v8802, 0.0
        %v8878 = vmax.f32 %v8693, 0.0
        %v8879 = vmax.f32 %v8695, 0.0
        %v8880 = vmax.f32 %v8806, 0.0
        %v8881 = vmax.f32 %v8808, 0.0
        %v8882 = vmax.f32 %v8697, 0.0
        %v8883 = vmax.f32 %v8699, 0.0
        %v8884 = vmax.f32 %v8810, 0.0
        %v8885 = vmax.f32 %v8812, 0.0
        %v8886 = vmax.f32 %v8703, 0.0
        %v8887 = vmax.f32 %v8705, 0.0
        %v8888 = vmax.f32 %v8816, 0.0
        %v8889 = vmax.f32 %v8818, 0.0
        %v8890 = vmax.f32 %v8707, 0.0
        %v8891 = vmax.f32 %v8709, 0.0
        %v8892 = vmax.f32 %v8820, 0.0
        %v8893 = vmax.f32 %v8822, 0.0
        %v8894 = vmax.f32 %v8713, 0.0
        %v8895 = vmax.f32 %v8715, 0.0
        %v8896 = vmax.f32 %v8826, 0.0
        %v8897 = vmax.f32 %v8828, 0.0
        %v8898 = vmax.f32 %v8717, 0.0
        %v8899 = vmax.f32 %v8719, 0.0
        %v8900 = vmax.f32 %v8830, 0.0
        %v8901 = vmax.f32 %v8832, 0.0
        %v8902 = vmax.f32 %v8723, 0.0
        %v8903 = vmax.f32 %v8725, 0.0
        %v8904 = vmax.f32 %v8836, 0.0
        %v8905 = vmax.f32 %v8838, 0.0
        %v8906 = vmax.f32 %v8727, 0.0
        %v8907 = vmax.f32 %v8729, 0.0
        %v8908 = vmax.f32 %v8840, 0.0
        %v8909 = vmax.f32 %v8842, 0.0
        %v8910 = vmax.f32 %v8733, 0.0
        %v8911 = vmax.f32 %v8735, 0.0
        %v8912 = vmax.f32 %v8846, 0.0
        %v8913 = vmax.f32 %v8848, 0.0
        %v8914 = vmax.f32 %v8737, 0.0
        %v8915 = vmax.f32 %v8739, 0.0
        %v8916 = vmax.f32 %v8850, 0.0
        %v8917 = vmax.f32 %v8852, 0.0
        %v8918 = vpack.c.bf16 %v8858, %v8854
        %v8919 = vpack.c.bf16 %v8859, %v8855
        %v8920 = vpack.c.bf16 %v8860, %v8856
        %v8921 = vpack.c.bf16 %v8861, %v8857
        %v8922 = vpack.c.bf16 %v8866, %v8862
        %v8923 = vpack.c.bf16 %v8867, %v8863
        %v8924 = vpack.c.bf16 %v8868, %v8864
        %v8925 = vpack.c.bf16 %v8869, %v8865
        %v8926 = vpack.c.bf16 %v8874, %v8870
        %v8927 = vpack.c.bf16 %v8875, %v8871
        %v8928 = vpack.c.bf16 %v8876, %v8872
        %v8929 = vpack.c.bf16 %v8877, %v8873
        %v8930 = vpack.c.bf16 %v8882, %v8878
        %v8931 = vpack.c.bf16 %v8883, %v8879
        %v8932 = vpack.c.bf16 %v8884, %v8880
        %v8933 = vpack.c.bf16 %v8885, %v8881
        %v8934 = vpack.c.bf16 %v8890, %v8886
        %v8935 = vpack.c.bf16 %v8891, %v8887
        %v8936 = vpack.c.bf16 %v8892, %v8888
        %v8937 = vpack.c.bf16 %v8893, %v8889
        %v8938 = vpack.c.bf16 %v8898, %v8894
        %v8939 = vpack.c.bf16 %v8899, %v8895
        %v8940 = vpack.c.bf16 %v8900, %v8896
        %v8941 = vpack.c.bf16 %v8901, %v8897
        %v8942 = vpack.c.bf16 %v8906, %v8902
        %v8943 = vpack.c.bf16 %v8907, %v8903
        %v8944 = vpack.c.bf16 %v8908, %v8904
        %v8945 = vpack.c.bf16 %v8909, %v8905
        %v8946 = vpack.c.bf16 %v8914, %v8910
        %v8947 = vpack.c.bf16 %v8915, %v8911
        %v8948 = vpack.c.bf16 %v8916, %v8912
        %v8949 = vpack.c.bf16 %v8917, %v8913
        %v8950 = vld [vmem:[#allocation16] sm:$0xff]
        %v8951 = vld [vmem:[#allocation16 + $0x8] sm:$0xff]
        %v8952 = vld [vmem:[#allocation16 + $0x10] sm:$0xff]
        %v8953 = vld [vmem:[#allocation16 + $0x18] sm:$0xff]
        %v8954 = vld [vmem:[#allocation16 + $0x20] sm:$0xff]
        %v8955 = vld [vmem:[#allocation16 + $0x28] sm:$0xff]
        %v8956 = vld [vmem:[#allocation16 + $0x30] sm:$0xff]
        %v8957 = vld [vmem:[#allocation16 + $0x38] sm:$0xff]
        %v8958 = vld [vmem:[#allocation16 + $0x40] sm:$0xff]
        %v8959 = vld [vmem:[#allocation16 + $0x48] sm:$0xff]
        %v8960 = vld [vmem:[#allocation16 + $0x50] sm:$0xff]
        %v8961 = vld [vmem:[#allocation16 + $0x58] sm:$0xff]
        %v8962 = vld [vmem:[#allocation16 + $0x60] sm:$0xff]
        %v8963 = vld [vmem:[#allocation16 + $0x68] sm:$0xff]
        %v8964 = vld [vmem:[#allocation16 + $0x70] sm:$0xff]
        %v8965 = vld [vmem:[#allocation16 + $0x78] sm:$0xff]
        %v8966 = vld [vmem:[#allocation16 + $0x80] sm:$0xff]
        %v8967 = vld [vmem:[#allocation16 + $0x88] sm:$0xff]
        %v8968 = vld [vmem:[#allocation16 + $0x90] sm:$0xff]
        %v8969 = vld [vmem:[#allocation16 + $0x98] sm:$0xff]
        %v8970 = vld [vmem:[#allocation16 + $0xa0] sm:$0xff]
        %v8971 = vld [vmem:[#allocation16 + $0xa8] sm:$0xff]
        %v8972 = vld [vmem:[#allocation16 + $0xb0] sm:$0xff]
        %v8973 = vld [vmem:[#allocation16 + $0xb8] sm:$0xff]
        %v8974 = vld [vmem:[#allocation16 + $0xc0] sm:$0xff]
        %v8975 = vld [vmem:[#allocation16 + $0xc8] sm:$0xff]
        %v8976 = vld [vmem:[#allocation16 + $0xd0] sm:$0xff]
        %v8977 = vld [vmem:[#allocation16 + $0xd8] sm:$0xff]
        %v8978 = vld [vmem:[#allocation16 + $0xe0] sm:$0xff]
        %v8979 = vld [vmem:[#allocation16 + $0xe8] sm:$0xff]
        %v8980 = vld [vmem:[#allocation16 + $0xf0] sm:$0xff]
        %v8981 = vld [vmem:[#allocation16 + $0xf8] sm:$0xff]
        %v8982 = vld [vmem:[#allocation16 + $0x100] sm:$0xff]
        %v8983 = vld [vmem:[#allocation16 + $0x108] sm:$0xff]
        %v8984 = vld [vmem:[#allocation16 + $0x110] sm:$0xff]
        %v8985 = vld [vmem:[#allocation16 + $0x118] sm:$0xff]
        %v8986 = vld [vmem:[#allocation16 + $0x120] sm:$0xff]
        %v8987 = vld [vmem:[#allocation16 + $0x128] sm:$0xff]
        %v8988 = vld [vmem:[#allocation16 + $0x130] sm:$0xff]
        %v8989 = vld [vmem:[#allocation16 + $0x138] sm:$0xff]
        %v8990 = vld [vmem:[#allocation16 + $0x140] sm:$0xff]
        %v8991 = vld [vmem:[#allocation16 + $0x148] sm:$0xff]
        %v8992 = vld [vmem:[#allocation16 + $0x150] sm:$0xff]
        %v8993 = vld [vmem:[#allocation16 + $0x158] sm:$0xff]
        %v8994 = vld [vmem:[#allocation16 + $0x160] sm:$0xff]
        %v8995 = vld [vmem:[#allocation16 + $0x168] sm:$0xff]
        %v8996 = vld [vmem:[#allocation16 + $0x170] sm:$0xff]
        %v8997 = vld [vmem:[#allocation16 + $0x178] sm:$0xff]
        %v8998 = vld [vmem:[#allocation16 + $0x180] sm:$0xff]
        %v8999 = vld [vmem:[#allocation16 + $0x188] sm:$0xff]
        %v9000 = vld [vmem:[#allocation16 + $0x190] sm:$0xff]
        %v9001 = vld [vmem:[#allocation16 + $0x198] sm:$0xff]
        %v9002 = vld [vmem:[#allocation16 + $0x1a0] sm:$0xff]
        %v9003 = vld [vmem:[#allocation16 + $0x1a8] sm:$0xff]
        %v9004 = vld [vmem:[#allocation16 + $0x1b0] sm:$0xff]
        %v9005 = vld [vmem:[#allocation16 + $0x1b8] sm:$0xff]
        %v9006 = vld [vmem:[#allocation16 + $0x1c0] sm:$0xff]
        %v9007 = vld [vmem:[#allocation16 + $0x1c8] sm:$0xff]
        %v9008 = vld [vmem:[#allocation16 + $0x1d0] sm:$0xff]
        %v9009 = vld [vmem:[#allocation16 + $0x1d8] sm:$0xff]
        %v9010 = vld [vmem:[#allocation16 + $0x1e0] sm:$0xff]
        %v9011 = vld [vmem:[#allocation16 + $0x1e8] sm:$0xff]
        %v9012 = vld [vmem:[#allocation16 + $0x1f0] sm:$0xff]
        %v9013 = vld [vmem:[#allocation16 + $0x1f8] sm:$0xff]
        %v9014 = vld [vmem:[#allocation18] sm:$0x3]
        %v9016 = vlaneseq
        %v9017 = vshrl.u32 %v9016, 7
        %v9018 = vsub.s32 0, %v9017
        %v9019 = vrot.slane %v9014, %v9018
        %v9020 = vlaneseq
        %v9021 = vshrl.u32 %v9020, 7
        %v9022 = vsub.s32 1, %v9021
        %v9023 = vrot.slane %v9014, %v9022
        %v9090 = vunpack.c.l.b16 %v8950
        %v9091 = vunpack.c.h.b16 %v8950
        %v9092 = vunpack.c.l.b16 %v8951
        %v9093 = vunpack.c.h.b16 %v8951
        %v9094 = vunpack.c.l.b16 %v8952
        %v9095 = vunpack.c.h.b16 %v8952
        %v9096 = vunpack.c.l.b16 %v8953
        %v9097 = vunpack.c.h.b16 %v8953
        %v9098 = vunpack.c.l.b16 %v8954
        %v9099 = vunpack.c.h.b16 %v8954
        %v9100 = vunpack.c.l.b16 %v8955
        %v9101 = vunpack.c.h.b16 %v8955
        %v9102 = vunpack.c.l.b16 %v8956
        %v9103 = vunpack.c.h.b16 %v8956
        %v9104 = vunpack.c.l.b16 %v8957
        %v9105 = vunpack.c.h.b16 %v8957
        %v9106 = vunpack.c.l.b16 %v8958
        %v9107 = vunpack.c.h.b16 %v8958
        %v9108 = vunpack.c.l.b16 %v8959
        %v9109 = vunpack.c.h.b16 %v8959
        %v9110 = vunpack.c.l.b16 %v8960
        %v9111 = vunpack.c.h.b16 %v8960
        %v9112 = vunpack.c.l.b16 %v8961
        %v9113 = vunpack.c.h.b16 %v8961
        %v9114 = vunpack.c.l.b16 %v8962
        %v9115 = vunpack.c.h.b16 %v8962
        %v9116 = vunpack.c.l.b16 %v8963
        %v9117 = vunpack.c.h.b16 %v8963
        %v9118 = vunpack.c.l.b16 %v8964
        %v9119 = vunpack.c.h.b16 %v8964
        %v9120 = vunpack.c.l.b16 %v8965
        %v9121 = vunpack.c.h.b16 %v8965
        %v9122 = vunpack.c.l.b16 %v8966
        %v9123 = vunpack.c.h.b16 %v8966
        %v9124 = vunpack.c.l.b16 %v8967
        %v9125 = vunpack.c.h.b16 %v8967
        %v9126 = vunpack.c.l.b16 %v8968
        %v9127 = vunpack.c.h.b16 %v8968
        %v9128 = vunpack.c.l.b16 %v8969
        %v9129 = vunpack.c.h.b16 %v8969
        %v9130 = vunpack.c.l.b16 %v8970
        %v9131 = vunpack.c.h.b16 %v8970
        %v9132 = vunpack.c.l.b16 %v8971
        %v9133 = vunpack.c.h.b16 %v8971
        %v9134 = vunpack.c.l.b16 %v8972
        %v9135 = vunpack.c.h.b16 %v8972
        %v9136 = vunpack.c.l.b16 %v8973
        %v9137 = vunpack.c.h.b16 %v8973
        %v9138 = vunpack.c.l.b16 %v8974
        %v9139 = vunpack.c.h.b16 %v8974
        %v9140 = vunpack.c.l.b16 %v8975
        %v9141 = vunpack.c.h.b16 %v8975
        %v9142 = vunpack.c.l.b16 %v8976
        %v9143 = vunpack.c.h.b16 %v8976
        %v9144 = vunpack.c.l.b16 %v8977
        %v9145 = vunpack.c.h.b16 %v8977
        %v9146 = vunpack.c.l.b16 %v8978
        %v9147 = vunpack.c.h.b16 %v8978
        %v9148 = vunpack.c.l.b16 %v8979
        %v9149 = vunpack.c.h.b16 %v8979
        %v9150 = vunpack.c.l.b16 %v8980
        %v9151 = vunpack.c.h.b16 %v8980
        %v9152 = vunpack.c.l.b16 %v8981
        %v9153 = vunpack.c.h.b16 %v8981
        %v9154 = vunpack.c.l.b16 %v8982
        %v9155 = vunpack.c.h.b16 %v8982
        %v9156 = vunpack.c.l.b16 %v8983
        %v9157 = vunpack.c.h.b16 %v8983
        %v9158 = vunpack.c.l.b16 %v8984
        %v9159 = vunpack.c.h.b16 %v8984
        %v9160 = vunpack.c.l.b16 %v8985
        %v9161 = vunpack.c.h.b16 %v8985
        %v9162 = vunpack.c.l.b16 %v8986
        %v9163 = vunpack.c.h.b16 %v8986
        %v9164 = vunpack.c.l.b16 %v8987
        %v9165 = vunpack.c.h.b16 %v8987
        %v9166 = vunpack.c.l.b16 %v8988
        %v9167 = vunpack.c.h.b16 %v8988
        %v9168 = vunpack.c.l.b16 %v8989
        %v9169 = vunpack.c.h.b16 %v8989
        %v9170 = vunpack.c.l.b16 %v8990
        %v9171 = vunpack.c.h.b16 %v8990
        %v9172 = vunpack.c.l.b16 %v8991
        %v9173 = vunpack.c.h.b16 %v8991
        %v9174 = vunpack.c.l.b16 %v8992
        %v9175 = vunpack.c.h.b16 %v8992
        %v9176 = vunpack.c.l.b16 %v8993
        %v9177 = vunpack.c.h.b16 %v8993
        %v9178 = vunpack.c.l.b16 %v8994
        %v9179 = vunpack.c.h.b16 %v8994
        %v9180 = vunpack.c.l.b16 %v8995
        %v9181 = vunpack.c.h.b16 %v8995
        %v9182 = vunpack.c.l.b16 %v8996
        %v9183 = vunpack.c.h.b16 %v8996
        %v9184 = vunpack.c.l.b16 %v8997
        %v9185 = vunpack.c.h.b16 %v8997
        %v9186 = vunpack.c.l.b16 %v8998
        %v9187 = vunpack.c.h.b16 %v8998
        %v9188 = vunpack.c.l.b16 %v8999
        %v9189 = vunpack.c.h.b16 %v8999
        %v9190 = vunpack.c.l.b16 %v9000
        %v9191 = vunpack.c.h.b16 %v9000
        %v9192 = vunpack.c.l.b16 %v9001
        %v9193 = vunpack.c.h.b16 %v9001
        %v9194 = vunpack.c.l.b16 %v9002
        %v9195 = vunpack.c.h.b16 %v9002
        %v9196 = vunpack.c.l.b16 %v9003
        %v9197 = vunpack.c.h.b16 %v9003
        %v9198 = vunpack.c.l.b16 %v9004
        %v9199 = vunpack.c.h.b16 %v9004
        %v9200 = vunpack.c.l.b16 %v9005
        %v9201 = vunpack.c.h.b16 %v9005
        %v9202 = vunpack.c.l.b16 %v9006
        %v9203 = vunpack.c.h.b16 %v9006
        %v9204 = vunpack.c.l.b16 %v9007
        %v9205 = vunpack.c.h.b16 %v9007
        %v9206 = vunpack.c.l.b16 %v9008
        %v9207 = vunpack.c.h.b16 %v9008
        %v9208 = vunpack.c.l.b16 %v9009
        %v9209 = vunpack.c.h.b16 %v9009
        %v9210 = vunpack.c.l.b16 %v9010
        %v9211 = vunpack.c.h.b16 %v9010
        %v9212 = vunpack.c.l.b16 %v9011
        %v9213 = vunpack.c.h.b16 %v9011
        %v9214 = vunpack.c.l.b16 %v9012
        %v9215 = vunpack.c.h.b16 %v9012
        %v9216 = vunpack.c.l.b16 %v9013
        %v9217 = vunpack.c.h.b16 %v9013
        %v9218 = vpack.c.b16 %v9092, %v9090
        %v9219 = vpack.c.b16 %v9093, %v9091
        %v9220 = vpack.c.b16 %v9096, %v9094
        %v9221 = vpack.c.b16 %v9097, %v9095
        %v9222 = vpack.c.b16 %v9100, %v9098
        %v9223 = vpack.c.b16 %v9101, %v9099
        %v9224 = vpack.c.b16 %v9104, %v9102
        %v9225 = vpack.c.b16 %v9105, %v9103
        %v9226 = vpack.c.b16 %v9108, %v9106
        %v9227 = vpack.c.b16 %v9109, %v9107
        %v9228 = vpack.c.b16 %v9112, %v9110
        %v9229 = vpack.c.b16 %v9113, %v9111
        %v9230 = vpack.c.b16 %v9116, %v9114
        %v9231 = vpack.c.b16 %v9117, %v9115
        %v9232 = vpack.c.b16 %v9120, %v9118
        %v9233 = vpack.c.b16 %v9121, %v9119
        %v9234 = vpack.c.b16 %v9124, %v9122
        %v9235 = vpack.c.b16 %v9125, %v9123
        %v9236 = vpack.c.b16 %v9128, %v9126
        %v9237 = vpack.c.b16 %v9129, %v9127
        %v9238 = vpack.c.b16 %v9132, %v9130
        %v9239 = vpack.c.b16 %v9133, %v9131
        %v9240 = vpack.c.b16 %v9136, %v9134
        %v9241 = vpack.c.b16 %v9137, %v9135
        %v9242 = vpack.c.b16 %v9140, %v9138
        %v9243 = vpack.c.b16 %v9141, %v9139
        %v9244 = vpack.c.b16 %v9144, %v9142
        %v9245 = vpack.c.b16 %v9145, %v9143
        %v9246 = vpack.c.b16 %v9148, %v9146
        %v9247 = vpack.c.b16 %v9149, %v9147
        %v9248 = vpack.c.b16 %v9152, %v9150
        %v9249 = vpack.c.b16 %v9153, %v9151
        %v9250 = vpack.c.b16 %v9156, %v9154
        %v9251 = vpack.c.b16 %v9157, %v9155
        %v9252 = vpack.c.b16 %v9160, %v9158
        %v9253 = vpack.c.b16 %v9161, %v9159
        %v9254 = vpack.c.b16 %v9164, %v9162
        %v9255 = vpack.c.b16 %v9165, %v9163
        %v9256 = vpack.c.b16 %v9168, %v9166
        %v9257 = vpack.c.b16 %v9169, %v9167
        %v9258 = vpack.c.b16 %v9172, %v9170
        %v9259 = vpack.c.b16 %v9173, %v9171
        %v9260 = vpack.c.b16 %v9176, %v9174
        %v9261 = vpack.c.b16 %v9177, %v9175
        %v9262 = vpack.c.b16 %v9180, %v9178
        %v9263 = vpack.c.b16 %v9181, %v9179
        %v9264 = vpack.c.b16 %v9184, %v9182
        %v9265 = vpack.c.b16 %v9185, %v9183
        %v9266 = vpack.c.b16 %v9188, %v9186
        %v9267 = vpack.c.b16 %v9189, %v9187
        %v9268 = vpack.c.b16 %v9192, %v9190
        %v9269 = vpack.c.b16 %v9193, %v9191
        %v9270 = vpack.c.b16 %v9196, %v9194
        %v9271 = vpack.c.b16 %v9197, %v9195
        %v9272 = vpack.c.b16 %v9200, %v9198
        %v9273 = vpack.c.b16 %v9201, %v9199
        %v9274 = vpack.c.b16 %v9204, %v9202
        %v9275 = vpack.c.b16 %v9205, %v9203
        %v9276 = vpack.c.b16 %v9208, %v9206
        %v9277 = vpack.c.b16 %v9209, %v9207
        %v9278 = vpack.c.b16 %v9212, %v9210
        %v9279 = vpack.c.b16 %v9213, %v9211
        %v9280 = vpack.c.b16 %v9216, %v9214
        %v9281 = vpack.c.b16 %v9217, %v9215
        %9346 = vmatprep.subr.bf16.mxu0 %v9233
        %9347 = vmatpush1.bf16.msra.mxu0 %v9232
        %9348 = vmatprep.subr.bf16.mxu0 %v9231
        %9349 = vmatpush1.bf16.msra.mxu0 %v9230
        %9350 = vmatprep.subr.bf16.mxu0 %v9229
        %9351 = vmatpush1.bf16.msra.mxu0 %v9228
        %9352 = vmatprep.subr.bf16.mxu0 %v9227
        %9353 = vmatpush1.bf16.msra.mxu0 %v9226
        %9354 = vmatprep.subr.bf16.mxu0 %v9225
        %9355 = vmatpush1.bf16.msra.mxu0 %v9224
        %9356 = vmatprep.subr.bf16.mxu0 %v9223
        %9357 = vmatpush1.bf16.msra.mxu0 %v9222
        %9358 = vmatprep.subr.bf16.mxu0 %v9221
        %9359 = vmatpush1.bf16.msra.mxu0 %v9220
        %9360 = vmatprep.subr.bf16.mxu0 %v9219
        %9361 = vmatpush1.bf16.msra.mxu0 %v9218
        %9362 = vmatprep.subr.bf16.mxu0 %v9249
        %9363 = vmatpush2.bf16.msra.mxu0 %v9248
        %9364 = vmatprep.subr.bf16.mxu0 %v9247
        %9365 = vmatpush2.bf16.msra.mxu0 %v9246
        %9366 = vmatprep.subr.bf16.mxu0 %v9245
        %9367 = vmatpush2.bf16.msra.mxu0 %v9244
        %9368 = vmatprep.subr.bf16.mxu0 %v9243
        %9369 = vmatpush2.bf16.msra.mxu0 %v9242
        %9370 = vmatprep.subr.bf16.mxu0 %v9241
        %9371 = vmatpush2.bf16.msra.mxu0 %v9240
        %9372 = vmatprep.subr.bf16.mxu0 %v9239
        %9373 = vmatpush2.bf16.msra.mxu0 %v9238
        %9374 = vmatprep.subr.bf16.mxu0 %v9237
        %9375 = vmatpush2.bf16.msra.mxu0 %v9236
        %9376 = vmatprep.subr.bf16.mxu0 %v9235
        %9377 = vmatpush2.bf16.msra.mxu0 %v9234
        %9378 = vmatprep.mubr.bf16.mxu0 %v8919
        %9379 = vmatmul.mubr.bf16.gmra.mxu0 %v8918
        %v9380 = vpop.f32.mrf.mxu0
        %v9381 = vadd.f32 %v9019, %v9380
        %v9382 = vpop.f32.mrf.mxu0
        %v9383 = vadd.f32 %v9023, %v9382
        %v9384 = vpop.f32.mrf.mxu0
        %v9385 = vadd.f32 %v9019, %v9384
        %v9386 = vpop.f32.mrf.mxu0
        %v9387 = vadd.f32 %v9023, %v9386
        %9388 = vmatprep.mubr.bf16.mxu0 %v8923
        %9389 = vmatmul.mubr.bf16.gmra.mxu0 %v8922
        %v9390 = vpop.f32.mrf.mxu0
        %v9391 = vadd.f32 %v9019, %v9390
        %v9392 = vpop.f32.mrf.mxu0
        %v9393 = vadd.f32 %v9023, %v9392
        %v9394 = vpop.f32.mrf.mxu0
        %v9395 = vadd.f32 %v9019, %v9394
        %v9396 = vpop.f32.mrf.mxu0
        %v9397 = vadd.f32 %v9023, %v9396
        %9398 = vmatprep.mubr.bf16.mxu0 %v8927
        %9399 = vmatmul.mubr.bf16.gmra.mxu0 %v8926
        %v9400 = vpop.f32.mrf.mxu0
        %v9401 = vadd.f32 %v9019, %v9400
        %v9402 = vpop.f32.mrf.mxu0
        %v9403 = vadd.f32 %v9023, %v9402
        %v9404 = vpop.f32.mrf.mxu0
        %v9405 = vadd.f32 %v9019, %v9404
        %v9406 = vpop.f32.mrf.mxu0
        %v9407 = vadd.f32 %v9023, %v9406
        %9408 = vmatprep.mubr.bf16.mxu0 %v8931
        %9409 = vmatmul.mubr.bf16.gmra.mxu0 %v8930
        %v9410 = vpop.f32.mrf.mxu0
        %v9411 = vadd.f32 %v9019, %v9410
        %v9412 = vpop.f32.mrf.mxu0
        %v9413 = vadd.f32 %v9023, %v9412
        %v9414 = vpop.f32.mrf.mxu0
        %v9415 = vadd.f32 %v9019, %v9414
        %v9416 = vpop.f32.mrf.mxu0
        %v9417 = vadd.f32 %v9023, %v9416
        %9418 = vmatprep.mubr.bf16.mxu0 %v8935
        %9419 = vmatmul.mubr.bf16.gmra.mxu0 %v8934
        %v9420 = vpop.f32.mrf.mxu0
        %v9421 = vadd.f32 %v9019, %v9420
        %v9422 = vpop.f32.mrf.mxu0
        %v9423 = vadd.f32 %v9023, %v9422
        %v9424 = vpop.f32.mrf.mxu0
        %v9425 = vadd.f32 %v9019, %v9424
        %v9426 = vpop.f32.mrf.mxu0
        %v9427 = vadd.f32 %v9023, %v9426
        %9428 = vmatprep.mubr.bf16.mxu0 %v8939
        %9429 = vmatmul.mubr.bf16.gmra.mxu0 %v8938
        %v9430 = vpop.f32.mrf.mxu0
        %v9431 = vadd.f32 %v9019, %v9430
        %v9432 = vpop.f32.mrf.mxu0
        %v9433 = vadd.f32 %v9023, %v9432
        %v9434 = vpop.f32.mrf.mxu0
        %v9435 = vadd.f32 %v9019, %v9434
        %v9436 = vpop.f32.mrf.mxu0
        %v9437 = vadd.f32 %v9023, %v9436
        %9438 = vmatprep.mubr.bf16.mxu0 %v8943
        %9439 = vmatmul.mubr.bf16.gmra.mxu0 %v8942
        %v9440 = vpop.f32.mrf.mxu0
        %v9441 = vadd.f32 %v9019, %v9440
        %v9442 = vpop.f32.mrf.mxu0
        %v9443 = vadd.f32 %v9023, %v9442
        %v9444 = vpop.f32.mrf.mxu0
        %v9445 = vadd.f32 %v9019, %v9444
        %v9446 = vpop.f32.mrf.mxu0
        %v9447 = vadd.f32 %v9023, %v9446
        %9448 = vmatprep.mubr.bf16.mxu0 %v8947
        %9449 = vmatmul.mubr.bf16.gmra.mxu0 %v8946
        %v9450 = vpop.f32.mrf.mxu0
        %v9451 = vadd.f32 %v9019, %v9450
        %v9452 = vpop.f32.mrf.mxu0
        %v9453 = vadd.f32 %v9023, %v9452
        %v9454 = vpop.f32.mrf.mxu0
        %v9455 = vadd.f32 %v9019, %v9454
        %v9456 = vpop.f32.mrf.mxu0
        %v9457 = vadd.f32 %v9023, %v9456
        %9458 = vdwg.mxu0
        %9459 = vmatprep.subr.bf16.mxu0 %v9265
        %9460 = vmatpush1.bf16.msra.mxu0 %v9264
        %9461 = vmatprep.subr.bf16.mxu0 %v9263
        %9462 = vmatpush1.bf16.msra.mxu0 %v9262
        %9463 = vmatprep.subr.bf16.mxu0 %v9261
        %9464 = vmatpush1.bf16.msra.mxu0 %v9260
        %9465 = vmatprep.subr.bf16.mxu0 %v9259
        %9466 = vmatpush1.bf16.msra.mxu0 %v9258
        %9467 = vmatprep.subr.bf16.mxu0 %v9257
        %9468 = vmatpush1.bf16.msra.mxu0 %v9256
        %9469 = vmatprep.subr.bf16.mxu0 %v9255
        %9470 = vmatpush1.bf16.msra.mxu0 %v9254
        %9471 = vmatprep.subr.bf16.mxu0 %v9253
        %9472 = vmatpush1.bf16.msra.mxu0 %v9252
        %9473 = vmatprep.subr.bf16.mxu0 %v9251
        %9474 = vmatpush1.bf16.msra.mxu0 %v9250
        %9475 = vmatprep.subr.bf16.mxu0 %v9281
        %9476 = vmatpush2.bf16.msra.mxu0 %v9280
        %9477 = vmatprep.subr.bf16.mxu0 %v9279
        %9478 = vmatpush2.bf16.msra.mxu0 %v9278
        %9479 = vmatprep.subr.bf16.mxu0 %v9277
        %9480 = vmatpush2.bf16.msra.mxu0 %v9276
        %9481 = vmatprep.subr.bf16.mxu0 %v9275
        %9482 = vmatpush2.bf16.msra.mxu0 %v9274
        %9483 = vmatprep.subr.bf16.mxu0 %v9273
        %9484 = vmatpush2.bf16.msra.mxu0 %v9272
        %9485 = vmatprep.subr.bf16.mxu0 %v9271
        %9486 = vmatpush2.bf16.msra.mxu0 %v9270
        %9487 = vmatprep.subr.bf16.mxu0 %v9269
        %9488 = vmatpush2.bf16.msra.mxu0 %v9268
        %9489 = vmatprep.subr.bf16.mxu0 %v9267
        %9490 = vmatpush2.bf16.msra.mxu0 %v9266
        %9491 = vmatprep.mubr.bf16.mxu0 %v8921
        %9492 = vmatmul.mubr.bf16.gmra.mxu0 %v8920
        %v9493 = vpop.f32.mrf.mxu0
        %v9494 = vadd.f32 %v9381, %v9493
        %v9495 = vpop.f32.mrf.mxu0
        %v9496 = vadd.f32 %v9383, %v9495
        %v9497 = vpop.f32.mrf.mxu0
        %v9498 = vadd.f32 %v9385, %v9497
        %v9499 = vpop.f32.mrf.mxu0
        %v9500 = vadd.f32 %v9387, %v9499
        %9501 = vmatprep.mubr.bf16.mxu0 %v8925
        %9502 = vmatmul.mubr.bf16.gmra.mxu0 %v8924
        %v9503 = vpop.f32.mrf.mxu0
        %v9504 = vadd.f32 %v9391, %v9503
        %v9505 = vpop.f32.mrf.mxu0
        %v9506 = vadd.f32 %v9393, %v9505
        %v9507 = vpop.f32.mrf.mxu0
        %v9508 = vadd.f32 %v9395, %v9507
        %v9509 = vpop.f32.mrf.mxu0
        %v9510 = vadd.f32 %v9397, %v9509
        %9511 = vmatprep.mubr.bf16.mxu0 %v8929
        %9512 = vmatmul.mubr.bf16.gmra.mxu0 %v8928
        %v9513 = vpop.f32.mrf.mxu0
        %v9514 = vadd.f32 %v9401, %v9513
        %v9515 = vpop.f32.mrf.mxu0
        %v9516 = vadd.f32 %v9403, %v9515
        %v9517 = vpop.f32.mrf.mxu0
        %v9518 = vadd.f32 %v9405, %v9517
        %v9519 = vpop.f32.mrf.mxu0
        %v9520 = vadd.f32 %v9407, %v9519
        %9521 = vmatprep.mubr.bf16.mxu0 %v8933
        %9522 = vmatmul.mubr.bf16.gmra.mxu0 %v8932
        %v9523 = vpop.f32.mrf.mxu0
        %v9524 = vadd.f32 %v9411, %v9523
        %v9525 = vpop.f32.mrf.mxu0
        %v9526 = vadd.f32 %v9413, %v9525
        %v9527 = vpop.f32.mrf.mxu0
        %v9528 = vadd.f32 %v9415, %v9527
        %v9529 = vpop.f32.mrf.mxu0
        %v9530 = vadd.f32 %v9417, %v9529
        %9531 = vmatprep.mubr.bf16.mxu0 %v8937
        %9532 = vmatmul.mubr.bf16.gmra.mxu0 %v8936
        %v9533 = vpop.f32.mrf.mxu0
        %v9534 = vadd.f32 %v9421, %v9533
        %v9535 = vpop.f32.mrf.mxu0
        %v9536 = vadd.f32 %v9423, %v9535
        %v9537 = vpop.f32.mrf.mxu0
        %v9538 = vadd.f32 %v9425, %v9537
        %v9539 = vpop.f32.mrf.mxu0
        %v9540 = vadd.f32 %v9427, %v9539
        %9541 = vmatprep.mubr.bf16.mxu0 %v8941
        %9542 = vmatmul.mubr.bf16.gmra.mxu0 %v8940
        %v9543 = vpop.f32.mrf.mxu0
        %v9544 = vadd.f32 %v9431, %v9543
        %v9545 = vpop.f32.mrf.mxu0
        %v9546 = vadd.f32 %v9433, %v9545
        %v9547 = vpop.f32.mrf.mxu0
        %v9548 = vadd.f32 %v9435, %v9547
        %v9549 = vpop.f32.mrf.mxu0
        %v9550 = vadd.f32 %v9437, %v9549
        %9551 = vmatprep.mubr.bf16.mxu0 %v8945
        %9552 = vmatmul.mubr.bf16.gmra.mxu0 %v8944
        %v9553 = vpop.f32.mrf.mxu0
        %v9554 = vadd.f32 %v9441, %v9553
        %v9555 = vpop.f32.mrf.mxu0
        %v9556 = vadd.f32 %v9443, %v9555
        %v9557 = vpop.f32.mrf.mxu0
        %v9558 = vadd.f32 %v9445, %v9557
        %v9559 = vpop.f32.mrf.mxu0
        %v9560 = vadd.f32 %v9447, %v9559
        %9561 = vmatprep.mubr.bf16.mxu0 %v8949
        %9562 = vmatmul.mubr.bf16.gmra.mxu0 %v8948
        %v9563 = vpop.f32.mrf.mxu0
        %v9564 = vadd.f32 %v9451, %v9563
        %v9565 = vpop.f32.mrf.mxu0
        %v9566 = vadd.f32 %v9453, %v9565
        %v9567 = vpop.f32.mrf.mxu0
        %v9568 = vadd.f32 %v9455, %v9567
        %v9569 = vpop.f32.mrf.mxu0
        %v9570 = vadd.f32 %v9457, %v9569
        %9571 = vdwg.mxu0
        %v9572 = vmax.f32 %v9494, 0.0
        %v9573 = vmax.f32 %v9496, 0.0
        %v9574 = vmax.f32 %v9498, 0.0
        %v9575 = vmax.f32 %v9500, 0.0
        %v9576 = vmax.f32 %v9504, 0.0
        %v9577 = vmax.f32 %v9506, 0.0
        %v9578 = vmax.f32 %v9508, 0.0
        %v9579 = vmax.f32 %v9510, 0.0
        %v9580 = vmax.f32 %v9514, 0.0
        %v9581 = vmax.f32 %v9516, 0.0
        %v9582 = vmax.f32 %v9518, 0.0
        %v9583 = vmax.f32 %v9520, 0.0
        %v9584 = vmax.f32 %v9524, 0.0
        %v9585 = vmax.f32 %v9526, 0.0
        %v9586 = vmax.f32 %v9528, 0.0
        %v9587 = vmax.f32 %v9530, 0.0
        %v9588 = vmax.f32 %v9534, 0.0
        %v9589 = vmax.f32 %v9536, 0.0
        %v9590 = vmax.f32 %v9538, 0.0
        %v9591 = vmax.f32 %v9540, 0.0
        %v9592 = vmax.f32 %v9544, 0.0
        %v9593 = vmax.f32 %v9546, 0.0
        %v9594 = vmax.f32 %v9548, 0.0
        %v9595 = vmax.f32 %v9550, 0.0
        %v9596 = vmax.f32 %v9554, 0.0
        %v9597 = vmax.f32 %v9556, 0.0
        %v9598 = vmax.f32 %v9558, 0.0
        %v9599 = vmax.f32 %v9560, 0.0
        %v9600 = vmax.f32 %v9564, 0.0
        %v9601 = vmax.f32 %v9566, 0.0
        %v9602 = vmax.f32 %v9568, 0.0
        %v9603 = vmax.f32 %v9570, 0.0
        %v9604 = vpack.c.bf16 %v9574, %v9572
        %v9605 = vpack.c.bf16 %v9575, %v9573
        %v9606 = vpack.c.bf16 %v9578, %v9576
        %v9607 = vpack.c.bf16 %v9579, %v9577
        %v9608 = vpack.c.bf16 %v9582, %v9580
        %v9609 = vpack.c.bf16 %v9583, %v9581
        %v9610 = vpack.c.bf16 %v9586, %v9584
        %v9611 = vpack.c.bf16 %v9587, %v9585
        %v9612 = vpack.c.bf16 %v9590, %v9588
        %v9613 = vpack.c.bf16 %v9591, %v9589
        %v9614 = vpack.c.bf16 %v9594, %v9592
        %v9615 = vpack.c.bf16 %v9595, %v9593
        %v9616 = vpack.c.bf16 %v9598, %v9596
        %v9617 = vpack.c.bf16 %v9599, %v9597
        %v9618 = vpack.c.bf16 %v9602, %v9600
        %v9619 = vpack.c.bf16 %v9603, %v9601
        %v9620 = vld [vmem:[%s49] sm:$0xf]
        %v9621 = vld [vmem:[%s49 + $0x4] sm:$0xf]
        %v9622 = vld [vmem:[%s49 + $0x8] sm:$0xf]
        %v9623 = vld [vmem:[%s49 + $0xc] sm:$0xf]
        %v9624 = vld [vmem:[%s49 + $0x10] sm:$0xf]
        %v9625 = vld [vmem:[%s49 + $0x14] sm:$0xf]
        %v9626 = vld [vmem:[%s49 + $0x18] sm:$0xf]
        %v9627 = vld [vmem:[%s49 + $0x1c] sm:$0xf]
        %v9628 = vld [vmem:[%s49 + $0x20] sm:$0xf]
        %v9629 = vld [vmem:[%s49 + $0x24] sm:$0xf]
        %v9630 = vld [vmem:[%s49 + $0x28] sm:$0xf]
        %v9631 = vld [vmem:[%s49 + $0x2c] sm:$0xf]
        %v9632 = vld [vmem:[%s49 + $0x30] sm:$0xf]
        %v9633 = vld [vmem:[%s49 + $0x34] sm:$0xf]
        %v9634 = vld [vmem:[%s49 + $0x38] sm:$0xf]
        %v9635 = vld [vmem:[%s49 + $0x3c] sm:$0xf]
        %v9636 = vld [vmem:[%s49 + $0x40] sm:$0xf]
        %v9637 = vld [vmem:[%s49 + $0x44] sm:$0xf]
        %v9638 = vld [vmem:[%s49 + $0x48] sm:$0xf]
        %v9639 = vld [vmem:[%s49 + $0x4c] sm:$0xf]
        %v9640 = vld [vmem:[%s49 + $0x50] sm:$0xf]
        %v9641 = vld [vmem:[%s49 + $0x54] sm:$0xf]
        %v9642 = vld [vmem:[%s49 + $0x58] sm:$0xf]
        %v9643 = vld [vmem:[%s49 + $0x5c] sm:$0xf]
        %v9644 = vld [vmem:[%s49 + $0x60] sm:$0xf]
        %v9645 = vld [vmem:[%s49 + $0x64] sm:$0xf]
        %v9646 = vld [vmem:[%s49 + $0x68] sm:$0xf]
        %v9647 = vld [vmem:[%s49 + $0x6c] sm:$0xf]
        %v9648 = vld [vmem:[%s49 + $0x70] sm:$0xf]
        %v9649 = vld [vmem:[%s49 + $0x74] sm:$0xf]
        %v9650 = vld [vmem:[%s49 + $0x78] sm:$0xf]
        %v9651 = vld [vmem:[%s49 + $0x7c] sm:$0xf]
        %v9652 = vld [vmem:[#allocation19] sm:$0x1]
        %v9654 = vlaneseq
        %v9655 = vshrl.u32 %v9654, 7
        %v9656 = vsub.s32 0, %v9655
        %v9657 = vrot.slane %v9652, %v9656
        %v9691 = vunpack.c.l.b16 %v9620
        %v9692 = vunpack.c.l.b16 %v9621
        %v9693 = vunpack.c.l.b16 %v9622
        %v9694 = vunpack.c.l.b16 %v9623
        %v9695 = vunpack.c.l.b16 %v9624
        %v9696 = vunpack.c.l.b16 %v9625
        %v9697 = vunpack.c.l.b16 %v9626
        %v9698 = vunpack.c.l.b16 %v9627
        %v9699 = vunpack.c.l.b16 %v9628
        %v9700 = vunpack.c.l.b16 %v9629
        %v9701 = vunpack.c.l.b16 %v9630
        %v9702 = vunpack.c.l.b16 %v9631
        %v9703 = vunpack.c.l.b16 %v9632
        %v9704 = vunpack.c.l.b16 %v9633
        %v9705 = vunpack.c.l.b16 %v9634
        %v9706 = vunpack.c.l.b16 %v9635
        %v9707 = vunpack.c.l.b16 %v9636
        %v9708 = vunpack.c.l.b16 %v9637
        %v9709 = vunpack.c.l.b16 %v9638
        %v9710 = vunpack.c.l.b16 %v9639
        %v9711 = vunpack.c.l.b16 %v9640
        %v9712 = vunpack.c.l.b16 %v9641
        %v9713 = vunpack.c.l.b16 %v9642
        %v9714 = vunpack.c.l.b16 %v9643
        %v9715 = vunpack.c.l.b16 %v9644
        %v9716 = vunpack.c.l.b16 %v9645
        %v9717 = vunpack.c.l.b16 %v9646
        %v9718 = vunpack.c.l.b16 %v9647
        %v9719 = vunpack.c.l.b16 %v9648
        %v9720 = vunpack.c.l.b16 %v9649
        %v9721 = vunpack.c.l.b16 %v9650
        %v9722 = vunpack.c.l.b16 %v9651
        %v9723 = vpack.c.b16 %v9692, %v9691
        %v9724 = vpack.c.b16 %v9694, %v9693
        %v9725 = vpack.c.b16 %v9696, %v9695
        %v9726 = vpack.c.b16 %v9698, %v9697
        %v9727 = vpack.c.b16 %v9700, %v9699
        %v9728 = vpack.c.b16 %v9702, %v9701
        %v9729 = vpack.c.b16 %v9704, %v9703
        %v9730 = vpack.c.b16 %v9706, %v9705
        %v9731 = vpack.c.b16 %v9708, %v9707
        %v9732 = vpack.c.b16 %v9710, %v9709
        %v9733 = vpack.c.b16 %v9712, %v9711
        %v9734 = vpack.c.b16 %v9714, %v9713
        %v9735 = vpack.c.b16 %v9716, %v9715
        %v9736 = vpack.c.b16 %v9718, %v9717
        %v9737 = vpack.c.b16 %v9720, %v9719
        %v9738 = vpack.c.b16 %v9722, %v9721
        %9755 = vmatprep.subr.bf16.mxu0 0
        %9756 = vmatpush1.bf16.msra.mxu0 %v9730
        %9757 = vmatprep.subr.bf16.mxu0 0
        %9758 = vmatpush1.bf16.msra.mxu0 %v9729
        %9759 = vmatprep.subr.bf16.mxu0 0
        %9760 = vmatpush1.bf16.msra.mxu0 %v9728
        %9761 = vmatprep.subr.bf16.mxu0 0
        %9762 = vmatpush1.bf16.msra.mxu0 %v9727
        %9763 = vmatprep.subr.bf16.mxu0 0
        %9764 = vmatpush1.bf16.msra.mxu0 %v9726
        %9765 = vmatprep.subr.bf16.mxu0 0
        %9766 = vmatpush1.bf16.msra.mxu0 %v9725
        %9767 = vmatprep.subr.bf16.mxu0 0
        %9768 = vmatpush1.bf16.msra.mxu0 %v9724
        %9769 = vmatprep.subr.bf16.mxu0 0
        %9770 = vmatpush1.bf16.msra.mxu0 %v9723
        %9771 = vmatprep.subr.bf16.mxu0 0
        %9772 = vmatpush2.bf16.msra.mxu0 %v9738
        %9773 = vmatprep.subr.bf16.mxu0 0
        %9774 = vmatpush2.bf16.msra.mxu0 %v9737
        %9775 = vmatprep.subr.bf16.mxu0 0
        %9776 = vmatpush2.bf16.msra.mxu0 %v9736
        %9777 = vmatprep.subr.bf16.mxu0 0
        %9778 = vmatpush2.bf16.msra.mxu0 %v9735
        %9779 = vmatprep.subr.bf16.mxu0 0
        %9780 = vmatpush2.bf16.msra.mxu0 %v9734
        %9781 = vmatprep.subr.bf16.mxu0 0
        %9782 = vmatpush2.bf16.msra.mxu0 %v9733
        %9783 = vmatprep.subr.bf16.mxu0 0
        %9784 = vmatpush2.bf16.msra.mxu0 %v9732
        %9785 = vmatprep.subr.bf16.mxu0 0
        %9786 = vmatpush2.bf16.msra.mxu0 %v9731
        %9787 = vmatprep.mubr.bf16.mxu0 %v9605
        %9788 = vmatmul.mubr.bf16.gmra.mxu0 %v9604
        %v9789 = vpop.f32.mrf.mxu0
        %v9790 = vadd.f32 %v9657, %v9789
        %v9791 = vpop.f32.mrf.mxu0
        %v9792 = vpop.f32.mrf.mxu0
        %v9793 = vadd.f32 %v9657, %v9792
        %v9794 = vpop.f32.mrf.mxu0
        %9795 = vmatprep.mubr.bf16.mxu0 %v9607
        %9796 = vmatmul.mubr.bf16.gmra.mxu0 %v9606
        %v9797 = vpop.f32.mrf.mxu0
        %v9798 = vadd.f32 %v9657, %v9797
        %v9799 = vpop.f32.mrf.mxu0
        %v9800 = vpop.f32.mrf.mxu0
        %v9801 = vadd.f32 %v9657, %v9800
        %v9802 = vpop.f32.mrf.mxu0
        %9803 = vmatprep.mubr.bf16.mxu0 %v9609
        %9804 = vmatmul.mubr.bf16.gmra.mxu0 %v9608
        %v9805 = vpop.f32.mrf.mxu0
        %v9806 = vadd.f32 %v9657, %v9805
        %v9807 = vpop.f32.mrf.mxu0
        %v9808 = vpop.f32.mrf.mxu0
        %v9809 = vadd.f32 %v9657, %v9808
        %v9810 = vpop.f32.mrf.mxu0
        %9811 = vmatprep.mubr.bf16.mxu0 %v9611
        %9812 = vmatmul.mubr.bf16.gmra.mxu0 %v9610
        %v9813 = vpop.f32.mrf.mxu0
        %v9814 = vadd.f32 %v9657, %v9813
        %v9815 = vpop.f32.mrf.mxu0
        %v9816 = vpop.f32.mrf.mxu0
        %v9817 = vadd.f32 %v9657, %v9816
        %v9818 = vpop.f32.mrf.mxu0
        %9819 = vmatprep.mubr.bf16.mxu0 %v9613
        %9820 = vmatmul.mubr.bf16.gmra.mxu0 %v9612
        %v9821 = vpop.f32.mrf.mxu0
        %v9822 = vadd.f32 %v9657, %v9821
        %v9823 = vpop.f32.mrf.mxu0
        %v9824 = vpop.f32.mrf.mxu0
        %v9825 = vadd.f32 %v9657, %v9824
        %v9826 = vpop.f32.mrf.mxu0
        %9827 = vmatprep.mubr.bf16.mxu0 %v9615
        %9828 = vmatmul.mubr.bf16.gmra.mxu0 %v9614
        %v9829 = vpop.f32.mrf.mxu0
        %v9830 = vadd.f32 %v9657, %v9829
        %v9831 = vpop.f32.mrf.mxu0
        %v9832 = vpop.f32.mrf.mxu0
        %v9833 = vadd.f32 %v9657, %v9832
        %v9834 = vpop.f32.mrf.mxu0
        %9835 = vmatprep.mubr.bf16.mxu0 %v9617
        %9836 = vmatmul.mubr.bf16.gmra.mxu0 %v9616
        %v9837 = vpop.f32.mrf.mxu0
        %v9838 = vadd.f32 %v9657, %v9837
        %v9839 = vpop.f32.mrf.mxu0
        %v9840 = vpop.f32.mrf.mxu0
        %v9841 = vadd.f32 %v9657, %v9840
        %v9842 = vpop.f32.mrf.mxu0
        %9843 = vmatprep.mubr.bf16.mxu0 %v9619
        %9844 = vmatmul.mubr.bf16.gmra.mxu0 %v9618
        %v9845 = vpop.f32.mrf.mxu0
        %v9846 = vadd.f32 %v9657, %v9845
        %v9847 = vpop.f32.mrf.mxu0
        %v9848 = vpop.f32.mrf.mxu0
        %v9849 = vadd.f32 %v9657, %v9848
        %v9850 = vpop.f32.mrf.mxu0
        %9851 = vdwg.mxu0
        %v9852 = vmax.f32 %v9790, 0.0
        %v9853 = vmax.f32 %v9793, 0.0
        %v9854 = vmax.f32 %v9798, 0.0
        %v9855 = vmax.f32 %v9801, 0.0
        %v9856 = vmax.f32 %v9806, 0.0
        %v9857 = vmax.f32 %v9809, 0.0
        %v9858 = vmax.f32 %v9814, 0.0
        %v9859 = vmax.f32 %v9817, 0.0
        %v9860 = vmax.f32 %v9822, 0.0
        %v9861 = vmax.f32 %v9825, 0.0
        %v9862 = vmax.f32 %v9830, 0.0
        %v9863 = vmax.f32 %v9833, 0.0
        %v9864 = vmax.f32 %v9838, 0.0
        %v9865 = vmax.f32 %v9841, 0.0
        %v9866 = vmax.f32 %v9846, 0.0
        %v9867 = vmax.f32 %v9849, 0.0
        %v9868 = vpack.c.bf16 %v9853, %v9852
        %v9869 = vpack.c.bf16 %v9855, %v9854
        %v9870 = vpack.c.bf16 %v9857, %v9856
        %v9871 = vpack.c.bf16 %v9859, %v9858
        %v9872 = vpack.c.bf16 %v9861, %v9860
        %v9873 = vpack.c.bf16 %v9863, %v9862
        %v9874 = vpack.c.bf16 %v9865, %v9864
        %v9875 = vpack.c.bf16 %v9867, %v9866
        %v9876 = vld [vmem:[%s53] sm:$0xf]
        %v9877 = vld [vmem:[%s53 + $0x4] sm:$0xf]
        %v9878 = vld [vmem:[%s53 + $0x8] sm:$0xf]
        %v9879 = vld [vmem:[%s53 + $0xc] sm:$0xf]
        %v9880 = vld [vmem:[%s53 + $0x10] sm:$0xf]
        %v9881 = vld [vmem:[%s53 + $0x14] sm:$0xf]
        %v9882 = vld [vmem:[%s53 + $0x18] sm:$0xf]
        %v9883 = vld [vmem:[%s53 + $0x1c] sm:$0xf]
        %v9884 = vld [vmem:[%s53 + $0x20] sm:$0xf]
        %v9885 = vld [vmem:[%s53 + $0x24] sm:$0xf]
        %v9886 = vld [vmem:[%s53 + $0x28] sm:$0xf]
        %v9887 = vld [vmem:[%s53 + $0x2c] sm:$0xf]
        %v9888 = vld [vmem:[%s53 + $0x30] sm:$0xf]
        %v9889 = vld [vmem:[%s53 + $0x34] sm:$0xf]
        %v9890 = vld [vmem:[%s53 + $0x38] sm:$0xf]
        %v9891 = vld [vmem:[%s53 + $0x3c] sm:$0xf]
        %v9892 = vld [vmem:[#allocation21] sm:$0x1]
        %v9894 = vlaneseq
        %v9895 = vshrl.u32 %v9894, 7
        %v9896 = vsub.s32 0, %v9895
        %v9897 = vrot.slane %v9892, %v9896
        %v9915 = vunpack.c.l.b16 %v9876
        %v9916 = vunpack.c.l.b16 %v9877
        %v9917 = vunpack.c.l.b16 %v9878
        %v9918 = vunpack.c.l.b16 %v9879
        %v9919 = vunpack.c.l.b16 %v9880
        %v9920 = vunpack.c.l.b16 %v9881
        %v9921 = vunpack.c.l.b16 %v9882
        %v9922 = vunpack.c.l.b16 %v9883
        %v9923 = vunpack.c.l.b16 %v9884
        %v9924 = vunpack.c.l.b16 %v9885
        %v9925 = vunpack.c.l.b16 %v9886
        %v9926 = vunpack.c.l.b16 %v9887
        %v9927 = vunpack.c.l.b16 %v9888
        %v9928 = vunpack.c.l.b16 %v9889
        %v9929 = vunpack.c.l.b16 %v9890
        %v9930 = vunpack.c.l.b16 %v9891
        %v9931 = vpack.c.b16 %v9916, %v9915
        %v9932 = vpack.c.b16 %v9918, %v9917
        %v9933 = vpack.c.b16 %v9920, %v9919
        %v9934 = vpack.c.b16 %v9922, %v9921
        %v9935 = vpack.c.b16 %v9924, %v9923
        %v9936 = vpack.c.b16 %v9926, %v9925
        %v9937 = vpack.c.b16 %v9928, %v9927
        %v9938 = vpack.c.b16 %v9930, %v9929
        %9947 = vmatprep.subr.bf16.mxu0 0
        %9948 = vmatpush1.bf16.msra.mxu0 %v9938
        %9949 = vmatprep.subr.bf16.mxu0 0
        %9950 = vmatpush1.bf16.msra.mxu0 %v9937
        %9951 = vmatprep.subr.bf16.mxu0 0
        %9952 = vmatpush1.bf16.msra.mxu0 %v9936
        %9953 = vmatprep.subr.bf16.mxu0 0
        %9954 = vmatpush1.bf16.msra.mxu0 %v9935
        %9955 = vmatprep.subr.bf16.mxu0 0
        %9956 = vmatpush1.bf16.msra.mxu0 %v9934
        %9957 = vmatprep.subr.bf16.mxu0 0
        %9958 = vmatpush1.bf16.msra.mxu0 %v9933
        %9959 = vmatprep.subr.bf16.mxu0 0
        %9960 = vmatpush1.bf16.msra.mxu0 %v9932
        %9961 = vmatprep.subr.bf16.mxu0 0
        %9962 = vmatpush1.bf16.msra.mxu0 %v9931
        %9963 = vmatprep.subr.bf16.mxu0 0
        %9964 = vmatpush2.bf16.msra.mxu0 0
        %9965 = vmatprep.subr.bf16.mxu0 0
        %9966 = vmatpush2.bf16.msra.mxu0 0
        %9967 = vmatprep.subr.bf16.mxu0 0
        %9968 = vmatpush2.bf16.msra.mxu0 0
        %9969 = vmatprep.subr.bf16.mxu0 0
        %9970 = vmatpush2.bf16.msra.mxu0 0
        %9971 = vmatprep.subr.bf16.mxu0 0
        %9972 = vmatpush2.bf16.msra.mxu0 0
        %9973 = vmatprep.subr.bf16.mxu0 0
        %9974 = vmatpush2.bf16.msra.mxu0 0
        %9975 = vmatprep.subr.bf16.mxu0 0
        %9976 = vmatpush2.bf16.msra.mxu0 0
        %9977 = vmatprep.subr.bf16.mxu0 0
        %9978 = vmatpush2.bf16.msra.mxu0 0
        %9979 = vmatprep.mubr.bf16.mxu0 0
        %9980 = vmatmul.mubr.bf16.gmra.mxu0 %v9868
        %v9981 = vpop.f32.mrf.mxu0
        %v9982 = vadd.f32 %v9897, %v9981
        %v9983 = vpop.f32.mrf.mxu0
        %v9984 = vpop.f32.mrf.mxu0
        %v9985 = vadd.f32 %v9897, %v9984
        %v9986 = vpop.f32.mrf.mxu0
        %9987 = vmatprep.mubr.bf16.mxu0 0
        %9988 = vmatmul.mubr.bf16.gmra.mxu0 %v9869
        %v9989 = vpop.f32.mrf.mxu0
        %v9990 = vadd.f32 %v9897, %v9989
        %v9991 = vpop.f32.mrf.mxu0
        %v9992 = vpop.f32.mrf.mxu0
        %v9993 = vadd.f32 %v9897, %v9992
        %v9994 = vpop.f32.mrf.mxu0
        %9995 = vmatprep.mubr.bf16.mxu0 0
        %9996 = vmatmul.mubr.bf16.gmra.mxu0 %v9870
        %v9997 = vpop.f32.mrf.mxu0
        %v9998 = vadd.f32 %v9897, %v9997
        %v9999 = vpop.f32.mrf.mxu0
        %v10000 = vpop.f32.mrf.mxu0
        %v10001 = vadd.f32 %v9897, %v10000
        %v10002 = vpop.f32.mrf.mxu0
        %10003 = vmatprep.mubr.bf16.mxu0 0
        %10004 = vmatmul.mubr.bf16.gmra.mxu0 %v9871
        %v10005 = vpop.f32.mrf.mxu0
        %v10006 = vadd.f32 %v9897, %v10005
        %v10007 = vpop.f32.mrf.mxu0
        %v10008 = vpop.f32.mrf.mxu0
        %v10009 = vadd.f32 %v9897, %v10008
        %v10010 = vpop.f32.mrf.mxu0
        %10011 = vmatprep.mubr.bf16.mxu0 0
        %10012 = vmatmul.mubr.bf16.gmra.mxu0 %v9872
        %v10013 = vpop.f32.mrf.mxu0
        %v10014 = vadd.f32 %v9897, %v10013
        %v10015 = vpop.f32.mrf.mxu0
        %v10016 = vpop.f32.mrf.mxu0
        %v10017 = vadd.f32 %v9897, %v10016
        %v10018 = vpop.f32.mrf.mxu0
        %10019 = vmatprep.mubr.bf16.mxu0 0
        %10020 = vmatmul.mubr.bf16.gmra.mxu0 %v9873
        %v10021 = vpop.f32.mrf.mxu0
        %v10022 = vadd.f32 %v9897, %v10021
        %v10023 = vpop.f32.mrf.mxu0
        %v10024 = vpop.f32.mrf.mxu0
        %v10025 = vadd.f32 %v9897, %v10024
        %v10026 = vpop.f32.mrf.mxu0
        %10027 = vmatprep.mubr.bf16.mxu0 0
        %10028 = vmatmul.mubr.bf16.gmra.mxu0 %v9874
        %v10029 = vpop.f32.mrf.mxu0
        %v10030 = vadd.f32 %v9897, %v10029
        %v10031 = vpop.f32.mrf.mxu0
        %v10032 = vpop.f32.mrf.mxu0
        %v10033 = vadd.f32 %v9897, %v10032
        %v10034 = vpop.f32.mrf.mxu0
        %10035 = vmatprep.mubr.bf16.mxu0 0
        %10036 = vmatmul.mubr.bf16.gmra.mxu0 %v9875
        %v10037 = vpop.f32.mrf.mxu0
        %v10038 = vadd.f32 %v9897, %v10037
        %v10039 = vpop.f32.mrf.mxu0
        %v10040 = vpop.f32.mrf.mxu0
        %v10041 = vadd.f32 %v9897, %v10040
        %v10042 = vpop.f32.mrf.mxu0
        %10043 = vdwg.mxu0
        %10044 = vmax.xlane.f32.xlu0 %v9982
        %v10045 = vpop.xlane.xlu0 %10044
        %10046 = vmax.xlane.f32.xlu0 %v9985
        %v10047 = vpop.xlane.xlu0 %10046
        %10048 = vmax.xlane.f32.xlu0 %v9990
        %v10049 = vpop.xlane.xlu0 %10048
        %10050 = vmax.xlane.f32.xlu0 %v9993
        %v10051 = vpop.xlane.xlu0 %10050
        %10052 = vmax.xlane.f32.xlu0 %v9998
        %v10053 = vpop.xlane.xlu0 %10052
        %10054 = vmax.xlane.f32.xlu0 %v10001
        %v10055 = vpop.xlane.xlu0 %10054
        %10056 = vmax.xlane.f32.xlu0 %v10006
        %v10057 = vpop.xlane.xlu0 %10056
        %10058 = vmax.xlane.f32.xlu0 %v10009
        %v10059 = vpop.xlane.xlu0 %10058
        %10060 = vmax.xlane.f32.xlu0 %v10014
        %v10061 = vpop.xlane.xlu0 %10060
        %10062 = vmax.xlane.f32.xlu0 %v10017
        %v10063 = vpop.xlane.xlu0 %10062
        %10064 = vmax.xlane.f32.xlu0 %v10022
        %v10065 = vpop.xlane.xlu0 %10064
        %10066 = vmax.xlane.f32.xlu0 %v10025
        %v10067 = vpop.xlane.xlu0 %10066
        %10068 = vmax.xlane.f32.xlu0 %v10030
        %v10069 = vpop.xlane.xlu0 %10068
        %10070 = vmax.xlane.f32.xlu0 %v10033
        %v10071 = vpop.xlane.xlu0 %10070
        %10072 = vmax.xlane.f32.xlu0 %v10038
        %v10073 = vpop.xlane.xlu0 %10072
        %10074 = vmax.xlane.f32.xlu0 %v10041
        %v10075 = vpop.xlane.xlu0 %10074
        %v10076 = vsub.f32 %v9982, %v10045
        %v10077 = vsub.f32 %v9985, %v10047
        %v10078 = vsub.f32 %v9990, %v10049
        %v10079 = vsub.f32 %v9993, %v10051
        %v10080 = vsub.f32 %v9998, %v10053
        %v10081 = vsub.f32 %v10001, %v10055
        %v10082 = vsub.f32 %v10006, %v10057
        %v10083 = vsub.f32 %v10009, %v10059
        %v10084 = vsub.f32 %v10014, %v10061
        %v10085 = vsub.f32 %v10017, %v10063
        %v10086 = vsub.f32 %v10022, %v10065
        %v10087 = vsub.f32 %v10025, %v10067
        %v10088 = vsub.f32 %v10030, %v10069
        %v10089 = vsub.f32 %v10033, %v10071
        %v10090 = vsub.f32 %v10038, %v10073
        %v10091 = vsub.f32 %v10041, %v10075
        %v10092 = vmul.f32 %v10076, 1.442695
        %v10093 = vpow.pop %v10092
        %v10094 = vmul.f32 %v10077, 1.442695
        %v10095 = vpow.pop %v10094
        %v10096 = vmul.f32 %v10078, 1.442695
        %v10097 = vpow.pop %v10096
        %v10098 = vmul.f32 %v10079, 1.442695
        %v10099 = vpow.pop %v10098
        %v10100 = vmul.f32 %v10080, 1.442695
        %v10101 = vpow.pop %v10100
        %v10102 = vmul.f32 %v10081, 1.442695
        %v10103 = vpow.pop %v10102
        %v10104 = vmul.f32 %v10082, 1.442695
        %v10105 = vpow.pop %v10104
        %v10106 = vmul.f32 %v10083, 1.442695
        %v10107 = vpow.pop %v10106
        %v10108 = vmul.f32 %v10084, 1.442695
        %v10109 = vpow.pop %v10108
        %v10110 = vmul.f32 %v10085, 1.442695
        %v10111 = vpow.pop %v10110
        %v10112 = vmul.f32 %v10086, 1.442695
        %v10113 = vpow.pop %v10112
        %v10114 = vmul.f32 %v10087, 1.442695
        %v10115 = vpow.pop %v10114
        %v10116 = vmul.f32 %v10088, 1.442695
        %v10117 = vpow.pop %v10116
        %v10118 = vmul.f32 %v10089, 1.442695
        %v10119 = vpow.pop %v10118
        %v10120 = vmul.f32 %v10090, 1.442695
        %v10121 = vpow.pop %v10120
        %v10122 = vmul.f32 %v10091, 1.442695
        %v10123 = vpow.pop %v10122
        %10124 = vadd.xlane.f32.xlu0 %v10093
        %v10125 = vpop.xlane.xlu0 %10124
        %10126 = vadd.xlane.f32.xlu0 %v10095
        %v10127 = vpop.xlane.xlu0 %10126
        %10128 = vadd.xlane.f32.xlu0 %v10097
        %v10129 = vpop.xlane.xlu0 %10128
        %10130 = vadd.xlane.f32.xlu0 %v10099
        %v10131 = vpop.xlane.xlu0 %10130
        %10132 = vadd.xlane.f32.xlu0 %v10101
        %v10133 = vpop.xlane.xlu0 %10132
        %10134 = vadd.xlane.f32.xlu0 %v10103
        %v10135 = vpop.xlane.xlu0 %10134
        %10136 = vadd.xlane.f32.xlu0 %v10105
        %v10137 = vpop.xlane.xlu0 %10136
        %10138 = vadd.xlane.f32.xlu0 %v10107
        %v10139 = vpop.xlane.xlu0 %10138
        %10140 = vadd.xlane.f32.xlu0 %v10109
        %v10141 = vpop.xlane.xlu0 %10140
        %10142 = vadd.xlane.f32.xlu0 %v10111
        %v10143 = vpop.xlane.xlu0 %10142
        %10144 = vadd.xlane.f32.xlu0 %v10113
        %v10145 = vpop.xlane.xlu0 %10144
        %10146 = vadd.xlane.f32.xlu0 %v10115
        %v10147 = vpop.xlane.xlu0 %10146
        %10148 = vadd.xlane.f32.xlu0 %v10117
        %v10149 = vpop.xlane.xlu0 %10148
        %10150 = vadd.xlane.f32.xlu0 %v10119
        %v10151 = vpop.xlane.xlu0 %10150
        %10152 = vadd.xlane.f32.xlu0 %v10121
        %v10153 = vpop.xlane.xlu0 %10152
        %10154 = vadd.xlane.f32.xlu0 %v10123
        %v10155 = vpop.xlane.xlu0 %10154
        %v10156 = vlog2.pop %v10125
        %v10157 = vmul.f32 %v10156, 0.6931472
        %v10158 = vlog2.pop %v10127
        %v10159 = vmul.f32 %v10158, 0.6931472
        %v10160 = vlog2.pop %v10129
        %v10161 = vmul.f32 %v10160, 0.6931472
        %v10162 = vlog2.pop %v10131
        %v10163 = vmul.f32 %v10162, 0.6931472
        %v10164 = vlog2.pop %v10133
        %v10165 = vmul.f32 %v10164, 0.6931472
        %v10166 = vlog2.pop %v10135
        %v10167 = vmul.f32 %v10166, 0.6931472
        %v10168 = vlog2.pop %v10137
        %v10169 = vmul.f32 %v10168, 0.6931472
        %v10170 = vlog2.pop %v10139
        %v10171 = vmul.f32 %v10170, 0.6931472
        %v10172 = vlog2.pop %v10141
        %v10173 = vmul.f32 %v10172, 0.6931472
        %v10174 = vlog2.pop %v10143
        %v10175 = vmul.f32 %v10174, 0.6931472
        %v10176 = vlog2.pop %v10145
        %v10177 = vmul.f32 %v10176, 0.6931472
        %v10178 = vlog2.pop %v10147
        %v10179 = vmul.f32 %v10178, 0.6931472
        %v10180 = vlog2.pop %v10149
        %v10181 = vmul.f32 %v10180, 0.6931472
        %v10182 = vlog2.pop %v10151
        %v10183 = vmul.f32 %v10182, 0.6931472
        %v10184 = vlog2.pop %v10153
        %v10185 = vmul.f32 %v10184, 0.6931472
        %v10186 = vlog2.pop %v10155
        %v10187 = vmul.f32 %v10186, 0.6931472
        %v10188 = vsub.f32 %v10076, %v10157
        %v10189 = vsub.f32 %v10077, %v10159
        %v10190 = vsub.f32 %v10078, %v10161
        %v10191 = vsub.f32 %v10079, %v10163
        %v10192 = vsub.f32 %v10080, %v10165
        %v10193 = vsub.f32 %v10081, %v10167
        %v10194 = vsub.f32 %v10082, %v10169
        %v10195 = vsub.f32 %v10083, %v10171
        %v10196 = vsub.f32 %v10084, %v10173
        %v10197 = vsub.f32 %v10085, %v10175
        %v10198 = vsub.f32 %v10086, %v10177
        %v10199 = vsub.f32 %v10087, %v10179
        %v10200 = vsub.f32 %v10088, %v10181
        %v10201 = vsub.f32 %v10089, %v10183
        %v10202 = vsub.f32 %v10090, %v10185
        %v10203 = vsub.f32 %v10091, %v10187
        %10204 = vst [vmem:[%s1083] sm:$0xff] %v10188
        %10205 = vst [vmem:[%s1083 + $0x8] sm:$0xff] %v10189
        %10206 = vst [vmem:[%s1083 + $0x10] sm:$0xff] %v10190
        %10207 = vst [vmem:[%s1083 + $0x18] sm:$0xff] %v10191
        %10208 = vst [vmem:[%s1083 + $0x20] sm:$0xff] %v10192
        %10209 = vst [vmem:[%s1083 + $0x28] sm:$0xff] %v10193
        %10210 = vst [vmem:[%s1083 + $0x30] sm:$0xff] %v10194
        %10211 = vst [vmem:[%s1083 + $0x38] sm:$0xff] %v10195
        %10212 = vst [vmem:[%s1083 + $0x40] sm:$0xff] %v10196
        %10213 = vst [vmem:[%s1083 + $0x48] sm:$0xff] %v10197
        %10214 = vst [vmem:[%s1083 + $0x50] sm:$0xff] %v10198
        %10215 = vst [vmem:[%s1083 + $0x58] sm:$0xff] %v10199
        %10216 = vst [vmem:[%s1083 + $0x60] sm:$0xff] %v10200
        %10217 = vst [vmem:[%s1083 + $0x68] sm:$0xff] %v10201
        %10218 = vst [vmem:[%s1083 + $0x70] sm:$0xff] %v10202
        %10219 = vst [vmem:[%s1083 + $0x78] sm:$0xff] %v10203
        %p10220 = scmp.lt.s32.totalorder %s78, 1
        %s10221 = scalar_select %p10220, %s78, 1
        %s10222 = smul.addr %s10221, 16
        %s10223 = smul.addr %s10222, 8
        %s10224 = scalar_lea.vmem %s57, %s10223
        %p10225 = scmp.lt.s32.totalorder %s78, 1
        %s10226 = scalar_select %p10225, %s78, 1
        %s10227 = scalar_lea.vmem %s59, %s10226
        // Predicated region
        $region185: #{pointnet_dense_cls.1} parent=131 // pred_check
          %p10228 = pneg %p689
        $region186: #{pointnet_dense_cls.1} parent=131 // pred_check_branch
          %10230 = sbr.rel (%p10228) target = $region188
        $region187: #{pointnet_dense_cls.1} parent=131 // pred_region
          _
        $region188: #{pointnet_dense_cls.1} parent=131 // pred_fallthru
          _
        // Predicated region
        $region189: #{pointnet_dense_cls.1} parent=131 // pred_check
          %p10231 = pneg %p715
        $region190: #{pointnet_dense_cls.1} parent=131 // pred_check_branch
          %10233 = sbr.rel (%p10231) target = $region192
        $region191: #{pointnet_dense_cls.1} parent=131 // pred_region
          _
        $region192: #{pointnet_dense_cls.1} parent=131 // pred_fallthru
          _
      $region132: #{pointnet_dense_cls.1} parent=5 // pred_fallthru
        _
      %p10234 = scmp.le.s32.totalorder 2, %s73
      // Predicated region
      $region193: #{pointnet_dense_cls.1} parent=5 // pred_check
        %p10235 = pneg %p10234
      $region194: #{pointnet_dense_cls.1} parent=5 // pred_check_branch
        %10237 = sbr.rel (%p10235) target = $region196
      $region195: #{pointnet_dense_cls.1} parent=5 // pred_region
        %s10238 = ssub.s32 %s73, 2
        // Predicated region
        $region197: #{pointnet_dense_cls.1} parent=195 // pred_check
          %p10239 = pneg %p695
        $region198: #{pointnet_dense_cls.1} parent=195 // pred_check_branch
          %10241 = sbr.rel (%p10239) target = $region200
        $region199: #{pointnet_dense_cls.1} parent=195 // pred_region
          %p10242 = scmp.lt.s32.totalorder %s79, 1
          %s10243 = scalar_select %p10242, %s79, 1
          %s10244 = smul.addr %s10243, 16
          %s10245 = smul.addr %s10244, 8
          %s10246 = scalar_lea.vmem %s57, %s10245
        $region200: #{pointnet_dense_cls.1} parent=195 // pred_fallthru
          _
        // Predicated region
        $region201: #{pointnet_dense_cls.1} parent=195 // pred_check
          %p10247 = pneg %p721
        $region202: #{pointnet_dense_cls.1} parent=195 // pred_check_branch
          %10249 = sbr.rel (%p10247) target = $region204
        $region203: #{pointnet_dense_cls.1} parent=195 // pred_region
          %p10250 = scmp.lt.s32.totalorder %s79, 1
          %s10251 = scalar_select %p10250, %s79, 1
          %s10252 = scalar_lea.vmem %s59, %s10251
        $region204: #{pointnet_dense_cls.1} parent=195 // pred_fallthru
          _
      $region196: #{pointnet_dense_cls.1} parent=5 // pred_fallthru
        _
    $region6: #{pointnet_dense_cls.1} parent=1 // loop_footer
      %s77 = sadd.s32 1, %s73
    $region7: #{pointnet_dense_cls.1} parent=1 // loop_footer_branch
      %72 = sbr.rel target = $region3
    $region8: #{pointnet_dense_cls.1} parent=1 // loop_exit
      _
    %10253 = vsyncpa [#allocation3], 1
    %s10254 = scalar_lea.sflag [#allocation3], 1
    %10255 = vsyncpa %s10254, 1
    %10256 = vsyncpa [#allocation5], 1
    %10257 = vsyncpa [#allocation8], 1
    %10258 = vsyncpa [#allocation11], 1
    %10259 = vsyncpa [#allocation14], 1
    %10260 = vsyncpa [#allocation17], 1
    %10261 = vsyncpa [#allocation20], 1

</llo_original>
